<compile_context>
chip_gen: v6e
topology: v6e:2x2x1
jax: 0.10.0
libtpu: 0.0.40
codegen_flags: <defaults>
</compile_context>

<pallas_src>
import functools

import jax
import jax.numpy as jnp
from jax.experimental import pallas as pl
from jax.experimental.pallas import tpu as pltpu


def _layernorm(x, gamma, beta, eps=1e-5):
    mean = jnp.mean(x, axis=-1, keepdims=True)
    var = jnp.mean((x - mean) ** 2, axis=-1, keepdims=True)
    return (x - mean) * jax.lax.rsqrt(var + eps) * gamma + beta


# ---------------------------------------------------------------------------
# Pallas kernel: one grid step == `batch_block` batch elements, full (S, E)
# activations resident in VMEM.  All weights arrive pre-transposed; the fc_out
# weight arrives head-major (H, D, E); 1/sqrt(E) is folded into wq.
# ---------------------------------------------------------------------------
def transformer_block_kernel(
    q_ref, k_ref, v_ref, bias_ref,
    wq_ref, wk_ref, wv_ref, fcw_ref, fcb_ref,
    ff1w_ref, ff1b_ref, ff2w_ref, ff2b_ref,
    ln1g_ref, ln1b_ref, ln2g_ref, ln2b_ref,
    o_ref,
    qh_ref, kh_ref, vh_ref, attn_ref,
    *, heads):
    Nb, S, E = q_ref.shape
    D = E // heads
    M = Nb * S
    f32 = jnp.float32

    # ---- Per-head Q/K/V projections with the real (D, D) weights ---------
    # Static loop over heads: lane-slice boundaries h*D are compile-time
    # constants.  Results are written head-major so the attention loop below
    # only uses leading-axis (free) indexing.
    q2 = q_ref[...].reshape(M, E)
    k2 = k_ref[...].reshape(M, E)
    v2 = v_ref[...].reshape(M, E)
    wq = wq_ref[...]   # (D, D), 1/sqrt(E) folded in by the wrapper
    wk = wk_ref[...]
    wv = wv_ref[...]
    for h in range(heads):
        c0 = h * D
        qp = jnp.dot(q2[:, c0:c0 + D], wq, preferred_element_type=f32)  # (M, D)
        kp = jnp.dot(k2[:, c0:c0 + D], wk, preferred_element_type=f32)
        vp = jnp.dot(v2[:, c0:c0 + D], wv, preferred_element_type=f32)
        for nb in range(Nb):                       # head-major scratch layout
            r0 = nb * S
            qh_ref[nb * heads + h] = qp[r0:r0 + S, :]
            kh_ref[nb * heads + h] = kp[r0:r0 + S, :]
            vh_ref[nb * heads + h] = vp[r0:r0 + S, :]

    # ---- Attention + fused output projection ------------------------------
    # attn_ref accumulates fc_out(concat_h attn_h) = fc_b + sum_h attn_h @ W_h
    attn_ref[...] = jnp.broadcast_to(fcb_ref[...], (Nb, S, E))

    for nb in range(Nb):                           # static; Nb == batch_block
        base = nb * heads
        # Additive mask bias; (1,S)->(S,S) broadcast hoisted out of head loop.
        bias = jnp.broadcast_to(bias_ref[nb], (S, S))

        def head_body(h, carry):
            q_h = qh_ref[base + h]                 # (S, D) leading-axis views
            k_h = kh_ref[base + h]
            v_h = vh_ref[base + h]
            s = jax.lax.dot_general(               # (S, S), contract on D
                q_h, k_h, (((1,), (1,)), ((), ())),
                preferred_element_type=f32)
            s = s + bias
            s = s - jnp.max(s, axis=-1, keepdims=True)
            p = jnp.exp(s)
            denom = jnp.sum(p, axis=-1, keepdims=True)
            r = pl.reciprocal(denom, approx=True)  # EUP slot
            r = r * (2.0 - denom * r)              # Newton step -> ~f32 accuracy
            pv = jnp.dot(p * r, v_h, preferred_element_type=f32)       # (S, D)
            # Fused head-slice of the output projection (lane-dense store).
            attn_ref[nb] += jnp.dot(pv, fcw_ref[h], preferred_element_type=f32)
            return carry

        jax.lax.fori_loop(0, heads, head_body, 0, unroll=True)

    # ---- Residual + LN1 + FFN + residual + LN2 ----------------------------
    q_res = q2                                     # residual uses the query
    x = _layernorm(attn_ref[...].reshape(M, E) + q_res,
                   ln1g_ref[...], ln1b_ref[...])
    h1 = jnp.maximum(
        jnp.dot(x, ff1w_ref[...], preferred_element_type=f32) + ff1b_ref[...],
        0.0)
    ff = jnp.dot(h1, ff2w_ref[...], preferred_element_type=f32) + ff2b_ref[...]
    out = _layernorm(ff + x, ln2g_ref[...], ln2b_ref[...])
    o_ref[...] = out.reshape(Nb, S, E)


# ---------------------------------------------------------------------------
# Wrapper: weight layout plumbing done once here (free), per-generation VMEM
# limit, and >=2 parallel grid steps guaranteed.
# ---------------------------------------------------------------------------
def _vmem_limit_bytes():
    """~75% of physical VMEM (headroom for compiler-internal scratch)."""
    try:
        cap = int(pltpu.get_tpu_info().vmem_capacity_bytes)
    except Exception:
        cap = 64 * 1024 * 1024                     # conservative (v7x) fallback
    return (cap * 3) // 4


def _pick_batch_block(n, requested):
    """Largest divisor of n that is <= requested and leaves >= 2 grid steps."""
    cap = n // 2 if n >= 2 else 1                  # 2 TCs per chip on v7x
    b = max(1, min(requested, cap))
    while n % b:
        b -= 1
    return b


def transformer_block(q, k, v, mask, params, *, heads, batch_block=1):
    N, S, E = q.shape
    assert E % heads == 0
    D = E // heads
    f32 = jnp.float32
    Nb = _pick_batch_block(N, batch_block)
    scale = 1.0 / (float(E) ** 0.5)

    # PyTorch Linear convention (x @ W.T) -> pre-transpose once, outside the
    # kernel.  1/sqrt(E) folded into wq; fc_out weight reshaped head-major so
    # the kernel's per-head slice is a free leading-axis index.
    wq_t = (params["wq"].T * scale).astype(f32)               # (D, D)
    wk_t = params["wk"].T.astype(f32)                         # (D, D)
    wv_t = params["wv"].T.astype(f32)                         # (D, D)
    fcw = params["fc_w"].T.astype(f32).reshape(heads, D, E)   # (H, D, E)
    fcb = params["fc_b"].astype(f32).reshape(1, E)
    ff1w = params["ff1_w"].T.astype(f32)                      # (E, 2E)
    ff1b = params["ff1_b"].astype(f32).reshape(1, 2 * E)
    ff2w = params["ff2_w"].T.astype(f32)                      # (2E, E)
    ff2b = params["ff2_b"].astype(f32).reshape(1, E)
    ln1g = params["ln1_g"].astype(f32).reshape(1, E)
    ln1b = params["ln1_b"].astype(f32).reshape(1, E)
    ln2g = params["ln2_g"].astype(f32).reshape(1, E)
    ln2b = params["ln2_b"].astype(f32).reshape(1, E)
    # Additive mask bias (matches masked_fill(-1e20) then /sqrt(E)).
    mask_bias = jnp.where(mask == 0, jnp.float32(-1e20 * scale),
                          jnp.float32(0.0)).astype(f32)       # (N, 1, S)

    kern = functools.partial(transformer_block_kernel, heads=heads)
    act_spec = pl.BlockSpec((Nb, S, E), lambda n: (n, 0, 0))
    bias_spec = pl.BlockSpec((Nb, 1, S), lambda n: (n, 0, 0))

    def build(weight_pipeline_mode):
        def const_spec(shape):
            nd = len(shape)
            if weight_pipeline_mode is None:
                return pl.BlockSpec(shape, lambda n, _nd=nd: (0,) * _nd)
            return pl.BlockSpec(shape, lambda n, _nd=nd: (0,) * _nd,
                                pipeline_mode=weight_pipeline_mode)

        in_specs = [
            act_spec, act_spec, act_spec, bias_spec,
            const_spec((D, D)), const_spec((D, D)), const_spec((D, D)),
            const_spec((heads, D, E)), const_spec((1, E)),
            const_spec((E, 2 * E)), const_spec((1, 2 * E)),
            const_spec((2 * E, E)), const_spec((1, E)),
            const_spec((1, E)), const_spec((1, E)),
            const_spec((1, E)), const_spec((1, E)),
        ]
        return pl.pallas_call(
            kern,
            out_shape=jax.ShapeDtypeStruct((N, S, E), f32),
            grid_spec=pltpu.PrefetchScalarGridSpec(
                num_scalar_prefetch=0,
                grid=(N // Nb,),
                in_specs=in_specs,
                out_specs=act_spec,
                scratch_shapes=[
                    pltpu.VMEM((Nb * heads, S, D), f32),   # qh (head-major)
                    pltpu.VMEM((Nb * heads, S, D), f32),   # kh
                    pltpu.VMEM((Nb * heads, S, D), f32),   # vh
                    pltpu.VMEM((Nb, S, E), f32),           # attn accumulator
                ],
            ),
            compiler_params=pltpu.CompilerParams(
                dimension_semantics=("parallel",),
                vmem_limit_bytes=_vmem_limit_bytes(),
            ),
        )

    args = (q.astype(f32), k.astype(f32), v.astype(f32), mask_bias,
            wq_t, wk_t, wv_t, fcw, fcb, ff1w, ff1b, ff2w, ff2b,
            ln1g, ln1b, ln2g, ln2b)
    try:
        # Weights/biases never change block index -> single-buffer them
        # (halves weight VMEM residency; matters most on v7x's 64 MiB VMEM).
        return jax.block_until_ready(build(pl.Buffered(1))(*args))
    except Exception:
        # JAX without BlockSpec.pipeline_mode support: default double-buffer.
        return jax.block_until_ready(build(None)(*args))


# ---------------------------------------------------------------------------
# Pure-JAX reference (mirrors PyTorch semantics exactly) for sanity checking.
# ---------------------------------------------------------------------------
def reference_block(q, k, v, mask, p, *, heads):
    N, S, E = q.shape
    D = E // heads
    qh = q.reshape(N, S, heads, D) @ p["wq"].T
    kh = k.reshape(N, S, heads, D) @ p["wk"].T
    vh = v.reshape(N, S, heads, D) @ p["wv"].T
    att = jnp.einsum("nqhd,nkhd->nhqk", qh, kh)
    m = mask[:, :, None, :]  # (N,1,1,S)
    att = jnp.where(m == 0, -1e20, att)
    att = jax.nn.softmax(att / (E ** 0.5), axis=3)
    out = jnp.einsum("nhqk,nkhd->nqhd", att, vh).reshape(N, S, E)
    out = out @ p["fc_w"].T + p["fc_b"][0]

    def ln(x, g, b, eps=1e-5):
        mu = x.mean(-1, keepdims=True)
        var = ((x - mu) ** 2).mean(-1, keepdims=True)
        return (x - mu) / jnp.sqrt(var + eps) * g[0] + b[0]

    x = ln(out + q, p["ln1_g"], p["ln1_b"])
    h1 = jnp.maximum(x @ p["ff1_w"].T + p["ff1_b"][0], 0.0)
    ff = h1 @ p["ff2_w"].T + p["ff2_b"][0]
    return ln(ff + x, p["ln2_g"], p["ln2_b"])


if __name__ == "__main__":
    N, S, E, H = 4, 8, 32, 4
    D = E // H

    key = jax.random.PRNGKey(0)
    ks = jax.random.split(key, 16)

    def rnd(k_, shape, sc=0.05):
        return (sc * jax.random.normal(k_, shape)).astype(jnp.float32)

    params = {
        "wq": rnd(ks[0], (D, D)),
        "wk": rnd(ks[1], (D, D)),
        "wv": rnd(ks[2], (D, D)),
        "fc_w": rnd(ks[3], (E, E)),
        "fc_b": rnd(ks[4], (1, E)),
        "ff1_w": rnd(ks[5], (2 * E, E)),
        "ff1_b": rnd(ks[6], (1, 2 * E)),
        "ff2_w": rnd(ks[7], (E, 2 * E)),
        "ff2_b": rnd(ks[8], (1, E)),
        "ln1_g": (1.0 + rnd(ks[9], (1, E))),
        "ln1_b": rnd(ks[10], (1, E)),
        "ln2_g": (1.0 + rnd(ks[11], (1, E))),
        "ln2_b": rnd(ks[12], (1, E)),
    }

    q = jax.random.normal(ks[13], (N, S, E), dtype=jnp.float32)
    # Encoder self-attention: value = key = query.
    k_in, v_in = q, q
    # Mask mimicking (x != 0): per-row number of valid tokens.
    mask = jnp.array(
        [[1, 1, 1, 1, 1, 0, 0, 0],
         [1, 1, 0, 0, 0, 0, 0, 0],
         [1, 1, 1, 1, 1, 1, 1, 1],
         [1, 0, 0, 0, 0, 0, 0, 0]], dtype=jnp.int32
    ).reshape(N, 1, S)

    ref = reference_block(q, k_in, v_in, mask, params, heads=H)

    # batch_block=1 -> grid=(4,); batch_block=2 -> grid=(2,).  Either way the
    # grid has >= 2 parallel steps, so both v7x TensorCores stay busy.
    out1 = jax.block_until_ready(
        transformer_block(q, k_in, v_in, mask, params, heads=H, batch_block=1))
    out2 = jax.block_until_ready(
        transformer_block(q, k_in, v_in, mask, params, heads=H, batch_block=2))

    for out in (out1, out2):
        assert out.shape == (N, S, E) and out.dtype == jnp.float32
        assert jnp.allclose(out, ref, atol=1e-4, rtol=1e-4), (
            f"max abs err {jnp.max(jnp.abs(out - ref))}"
        )
    print("KERNEL_OK")
</pallas_src>

<mosaic_0001>
module attributes {stable_mosaic.version = 11 : i64} {
  func.func @transformer_block_kernel(%arg0: i32, %arg1: memref<1x8x32xf32, #tpu.memory_space<vmem>>, %arg2: memref<1x8x32xf32, #tpu.memory_space<vmem>>, %arg3: memref<1x8x32xf32, #tpu.memory_space<vmem>>, %arg4: memref<1x1x8xf32, #tpu.memory_space<vmem>>, %arg5: memref<8x8xf32, #tpu.memory_space<vmem>>, %arg6: memref<8x8xf32, #tpu.memory_space<vmem>>, %arg7: memref<8x8xf32, #tpu.memory_space<vmem>>, %arg8: memref<4x8x32xf32, #tpu.memory_space<vmem>>, %arg9: memref<1x32xf32, #tpu.memory_space<vmem>>, %arg10: memref<32x64xf32, #tpu.memory_space<vmem>>, %arg11: memref<1x64xf32, #tpu.memory_space<vmem>>, %arg12: memref<64x32xf32, #tpu.memory_space<vmem>>, %arg13: memref<1x32xf32, #tpu.memory_space<vmem>>, %arg14: memref<1x32xf32, #tpu.memory_space<vmem>>, %arg15: memref<1x32xf32, #tpu.memory_space<vmem>>, %arg16: memref<1x32xf32, #tpu.memory_space<vmem>>, %arg17: memref<1x32xf32, #tpu.memory_space<vmem>>, %arg18: memref<1x8x32xf32, #tpu.memory_space<vmem>>, %arg19: memref<4x8x8xf32, #tpu.memory_space<vmem>>, %arg20: memref<4x8x8xf32, #tpu.memory_space<vmem>>, %arg21: memref<4x8x8xf32, #tpu.memory_space<vmem>>, %arg22: memref<1x8x32xf32, #tpu.memory_space<vmem>>) attributes {dimension_semantics = [#tpu.dimension_semantics<parallel>], iteration_bounds = array<i64: 4>, scalar_prefetch = 0 : i64, scratch_operands = 4 : i64, tpu.core_type = #tpu.core_type<tc>, window_params = [{transform_indices = @transform_0, window_bounds = array<i64: 1, 8, 32>}, {transform_indices = @transform_1, window_bounds = array<i64: 1, 8, 32>}, {transform_indices = @transform_2, window_bounds = array<i64: 1, 8, 32>}, {transform_indices = @transform_3, window_bounds = array<i64: 1, 1, 8>}, {pipeline_mode = #tpu.pipeline_mode<synchronous>, transform_indices = @transform_4, window_bounds = array<i64: 8, 8>}, {pipeline_mode = #tpu.pipeline_mode<synchronous>, transform_indices = @transform_5, window_bounds = array<i64: 8, 8>}, {pipeline_mode = #tpu.pipeline_mode<synchronous>, transform_indices = @transform_6, window_bounds = array<i64: 8, 8>}, {pipeline_mode = #tpu.pipeline_mode<synchronous>, transform_indices = @transform_7, window_bounds = array<i64: 4, 8, 32>}, {pipeline_mode = #tpu.pipeline_mode<synchronous>, transform_indices = @transform_8, window_bounds = array<i64: 1, 32>}, {pipeline_mode = #tpu.pipeline_mode<synchronous>, transform_indices = @transform_9, window_bounds = array<i64: 32, 64>}, {pipeline_mode = #tpu.pipeline_mode<synchronous>, transform_indices = @transform_10, window_bounds = array<i64: 1, 64>}, {pipeline_mode = #tpu.pipeline_mode<synchronous>, transform_indices = @transform_11, window_bounds = array<i64: 64, 32>}, {pipeline_mode = #tpu.pipeline_mode<synchronous>, transform_indices = @transform_12, window_bounds = array<i64: 1, 32>}, {pipeline_mode = #tpu.pipeline_mode<synchronous>, transform_indices = @transform_13, window_bounds = array<i64: 1, 32>}, {pipeline_mode = #tpu.pipeline_mode<synchronous>, transform_indices = @transform_14, window_bounds = array<i64: 1, 32>}, {pipeline_mode = #tpu.pipeline_mode<synchronous>, transform_indices = @transform_15, window_bounds = array<i64: 1, 32>}, {pipeline_mode = #tpu.pipeline_mode<synchronous>, transform_indices = @transform_16, window_bounds = array<i64: 1, 32>}, {transform_indices = @transform_17, window_bounds = array<i64: 1, 8, 32>}]} {
    %c0 = arith.constant 0 : index
    %c0_0 = arith.constant 0 : index
    %c0_1 = arith.constant 0 : index
    %0 = vector.load %arg1[%c0, %c0_0, %c0_1] : memref<1x8x32xf32, #tpu.memory_space<vmem>>, vector<1x8x32xf32>
    %1 = vector.shape_cast %0 : vector<1x8x32xf32> to vector<8x32xf32>
    %c0_2 = arith.constant 0 : index
    %c0_3 = arith.constant 0 : index
    %c0_4 = arith.constant 0 : index
    %2 = vector.load %arg2[%c0_2, %c0_3, %c0_4] : memref<1x8x32xf32, #tpu.memory_space<vmem>>, vector<1x8x32xf32>
    %3 = vector.shape_cast %2 : vector<1x8x32xf32> to vector<8x32xf32>
    %c0_5 = arith.constant 0 : index
    %c0_6 = arith.constant 0 : index
    %c0_7 = arith.constant 0 : index
    %4 = vector.load %arg3[%c0_5, %c0_6, %c0_7] : memref<1x8x32xf32, #tpu.memory_space<vmem>>, vector<1x8x32xf32>
    %5 = vector.shape_cast %4 : vector<1x8x32xf32> to vector<8x32xf32>
    %c0_8 = arith.constant 0 : index
    %c0_9 = arith.constant 0 : index
    %6 = vector.load %arg5[%c0_8, %c0_9] : memref<8x8xf32, #tpu.memory_space<vmem>>, vector<8x8xf32>
    %c0_10 = arith.constant 0 : index
    %c0_11 = arith.constant 0 : index
    %7 = vector.load %arg6[%c0_10, %c0_11] : memref<8x8xf32, #tpu.memory_space<vmem>>, vector<8x8xf32>
    %c0_12 = arith.constant 0 : index
    %c0_13 = arith.constant 0 : index
    %8 = vector.load %arg7[%c0_12, %c0_13] : memref<8x8xf32, #tpu.memory_space<vmem>>, vector<8x8xf32>
    %9 = vector.extract_strided_slice %1 {offsets = [0, 0], sizes = [8, 8], strides = [1, 1]} : vector<8x32xf32> to vector<8x8xf32>
    %cst = arith.constant dense<0.000000e+00> : vector<8x8xf32>
    %10 = tpu.matmul %9, %6, %cst {dimension_numbers = #tpu.dot_dimension_numbers<[1], [0], [0], [1], [0, 0, 1, 1], [], []>} : vector<8x8xf32>, vector<8x8xf32>, vector<8x8xf32> -> vector<8x8xf32>
    %11 = vector.extract_strided_slice %3 {offsets = [0, 0], sizes = [8, 8], strides = [1, 1]} : vector<8x32xf32> to vector<8x8xf32>
    %cst_14 = arith.constant dense<0.000000e+00> : vector<8x8xf32>
    %12 = tpu.matmul %11, %7, %cst_14 {dimension_numbers = #tpu.dot_dimension_numbers<[1], [0], [0], [1], [0, 0, 1, 1], [], []>} : vector<8x8xf32>, vector<8x8xf32>, vector<8x8xf32> -> vector<8x8xf32>
    %13 = vector.extract_strided_slice %5 {offsets = [0, 0], sizes = [8, 8], strides = [1, 1]} : vector<8x32xf32> to vector<8x8xf32>
    %cst_15 = arith.constant dense<0.000000e+00> : vector<8x8xf32>
    %14 = tpu.matmul %13, %8, %cst_15 {dimension_numbers = #tpu.dot_dimension_numbers<[1], [0], [0], [1], [0, 0, 1, 1], [], []>} : vector<8x8xf32>, vector<8x8xf32>, vector<8x8xf32> -> vector<8x8xf32>
    %c0_16 = arith.constant 0 : index
    %c0_17 = arith.constant 0 : index
    %c0_18 = arith.constant 0 : index
    %15 = vector.load %arg19[%c0_16, %c0_17, %c0_18] : memref<4x8x8xf32, #tpu.memory_space<vmem>>, vector<1x8x8xf32>
    %16 = vector.shape_cast %15 : vector<1x8x8xf32> to vector<8x8xf32>
    %17 = vector.shape_cast %10 : vector<8x8xf32> to vector<1x8x8xf32>
    tpu.vector_store %arg19[%c0_16, %c0_17, %c0_18], %17 {strides = array<i32>} : memref<4x8x8xf32, #tpu.memory_space<vmem>>, vector<1x8x8xf32>,
    %c0_19 = arith.constant 0 : index
    %c0_20 = arith.constant 0 : index
    %c0_21 = arith.constant 0 : index
    %18 = vector.load %arg20[%c0_19, %c0_20, %c0_21] : memref<4x8x8xf32, #tpu.memory_space<vmem>>, vector<1x8x8xf32>
    %19 = vector.shape_cast %18 : vector<1x8x8xf32> to vector<8x8xf32>
    %20 = vector.shape_cast %12 : vector<8x8xf32> to vector<1x8x8xf32>
    tpu.vector_store %arg20[%c0_19, %c0_20, %c0_21], %20 {strides = array<i32>} : memref<4x8x8xf32, #tpu.memory_space<vmem>>, vector<1x8x8xf32>,
    %c0_22 = arith.constant 0 : index
    %c0_23 = arith.constant 0 : index
    %c0_24 = arith.constant 0 : index
    %21 = vector.load %arg21[%c0_22, %c0_23, %c0_24] : memref<4x8x8xf32, #tpu.memory_space<vmem>>, vector<1x8x8xf32>
    %22 = vector.shape_cast %21 : vector<1x8x8xf32> to vector<8x8xf32>
    %23 = vector.shape_cast %14 : vector<8x8xf32> to vector<1x8x8xf32>
    tpu.vector_store %arg21[%c0_22, %c0_23, %c0_24], %23 {strides = array<i32>} : memref<4x8x8xf32, #tpu.memory_space<vmem>>, vector<1x8x8xf32>,
    %24 = vector.extract_strided_slice %1 {offsets = [0, 8], sizes = [8, 8], strides = [1, 1]} : vector<8x32xf32> to vector<8x8xf32>
    %cst_25 = arith.constant dense<0.000000e+00> : vector<8x8xf32>
    %25 = tpu.matmul %24, %6, %cst_25 {dimension_numbers = #tpu.dot_dimension_numbers<[1], [0], [0], [1], [0, 0, 1, 1], [], []>} : vector<8x8xf32>, vector<8x8xf32>, vector<8x8xf32> -> vector<8x8xf32>
    %26 = vector.extract_strided_slice %3 {offsets = [0, 8], sizes = [8, 8], strides = [1, 1]} : vector<8x32xf32> to vector<8x8xf32>
    %cst_26 = arith.constant dense<0.000000e+00> : vector<8x8xf32>
    %27 = tpu.matmul %26, %7, %cst_26 {dimension_numbers = #tpu.dot_dimension_numbers<[1], [0], [0], [1], [0, 0, 1, 1], [], []>} : vector<8x8xf32>, vector<8x8xf32>, vector<8x8xf32> -> vector<8x8xf32>
    %28 = vector.extract_strided_slice %5 {offsets = [0, 8], sizes = [8, 8], strides = [1, 1]} : vector<8x32xf32> to vector<8x8xf32>
    %cst_27 = arith.constant dense<0.000000e+00> : vector<8x8xf32>
    %29 = tpu.matmul %28, %8, %cst_27 {dimension_numbers = #tpu.dot_dimension_numbers<[1], [0], [0], [1], [0, 0, 1, 1], [], []>} : vector<8x8xf32>, vector<8x8xf32>, vector<8x8xf32> -> vector<8x8xf32>
    %c1 = arith.constant 1 : index
    %c0_28 = arith.constant 0 : index
    %c0_29 = arith.constant 0 : index
    %30 = vector.load %arg19[%c1, %c0_28, %c0_29] : memref<4x8x8xf32, #tpu.memory_space<vmem>>, vector<1x8x8xf32>
    %31 = vector.shape_cast %30 : vector<1x8x8xf32> to vector<8x8xf32>
    %32 = vector.shape_cast %25 : vector<8x8xf32> to vector<1x8x8xf32>
    tpu.vector_store %arg19[%c1, %c0_28, %c0_29], %32 {strides = array<i32>} : memref<4x8x8xf32, #tpu.memory_space<vmem>>, vector<1x8x8xf32>,
    %c1_30 = arith.constant 1 : index
    %c0_31 = arith.constant 0 : index
    %c0_32 = arith.constant 0 : index
    %33 = vector.load %arg20[%c1_30, %c0_31, %c0_32] : memref<4x8x8xf32, #tpu.memory_space<vmem>>, vector<1x8x8xf32>
    %34 = vector.shape_cast %33 : vector<1x8x8xf32> to vector<8x8xf32>
    %35 = vector.shape_cast %27 : vector<8x8xf32> to vector<1x8x8xf32>
    tpu.vector_store %arg20[%c1_30, %c0_31, %c0_32], %35 {strides = array<i32>} : memref<4x8x8xf32, #tpu.memory_space<vmem>>, vector<1x8x8xf32>,
    %c1_33 = arith.constant 1 : index
    %c0_34 = arith.constant 0 : index
    %c0_35 = arith.constant 0 : index
    %36 = vector.load %arg21[%c1_33, %c0_34, %c0_35] : memref<4x8x8xf32, #tpu.memory_space<vmem>>, vector<1x8x8xf32>
    %37 = vector.shape_cast %36 : vector<1x8x8xf32> to vector<8x8xf32>
    %38 = vector.shape_cast %29 : vector<8x8xf32> to vector<1x8x8xf32>
    tpu.vector_store %arg21[%c1_33, %c0_34, %c0_35], %38 {strides = array<i32>} : memref<4x8x8xf32, #tpu.memory_space<vmem>>, vector<1x8x8xf32>,
    %39 = vector.extract_strided_slice %1 {offsets = [0, 16], sizes = [8, 8], strides = [1, 1]} : vector<8x32xf32> to vector<8x8xf32>
    %cst_36 = arith.constant dense<0.000000e+00> : vector<8x8xf32>
    %40 = tpu.matmul %39, %6, %cst_36 {dimension_numbers = #tpu.dot_dimension_numbers<[1], [0], [0], [1], [0, 0, 1, 1], [], []>} : vector<8x8xf32>, vector<8x8xf32>, vector<8x8xf32> -> vector<8x8xf32>
    %41 = vector.extract_strided_slice %3 {offsets = [0, 16], sizes = [8, 8], strides = [1, 1]} : vector<8x32xf32> to vector<8x8xf32>
    %cst_37 = arith.constant dense<0.000000e+00> : vector<8x8xf32>
    %42 = tpu.matmul %41, %7, %cst_37 {dimension_numbers = #tpu.dot_dimension_numbers<[1], [0], [0], [1], [0, 0, 1, 1], [], []>} : vector<8x8xf32>, vector<8x8xf32>, vector<8x8xf32> -> vector<8x8xf32>
    %43 = vector.extract_strided_slice %5 {offsets = [0, 16], sizes = [8, 8], strides = [1, 1]} : vector<8x32xf32> to vector<8x8xf32>
    %cst_38 = arith.constant dense<0.000000e+00> : vector<8x8xf32>
    %44 = tpu.matmul %43, %8, %cst_38 {dimension_numbers = #tpu.dot_dimension_numbers<[1], [0], [0], [1], [0, 0, 1, 1], [], []>} : vector<8x8xf32>, vector<8x8xf32>, vector<8x8xf32> -> vector<8x8xf32>
    %c2 = arith.constant 2 : index
    %c0_39 = arith.constant 0 : index
    %c0_40 = arith.constant 0 : index
    %45 = vector.load %arg19[%c2, %c0_39, %c0_40] : memref<4x8x8xf32, #tpu.memory_space<vmem>>, vector<1x8x8xf32>
    %46 = vector.shape_cast %45 : vector<1x8x8xf32> to vector<8x8xf32>
    %47 = vector.shape_cast %40 : vector<8x8xf32> to vector<1x8x8xf32>
    tpu.vector_store %arg19[%c2, %c0_39, %c0_40], %47 {strides = array<i32>} : memref<4x8x8xf32, #tpu.memory_space<vmem>>, vector<1x8x8xf32>,
    %c2_41 = arith.constant 2 : index
    %c0_42 = arith.constant 0 : index
    %c0_43 = arith.constant 0 : index
    %48 = vector.load %arg20[%c2_41, %c0_42, %c0_43] : memref<4x8x8xf32, #tpu.memory_space<vmem>>, vector<1x8x8xf32>
    %49 = vector.shape_cast %48 : vector<1x8x8xf32> to vector<8x8xf32>
    %50 = vector.shape_cast %42 : vector<8x8xf32> to vector<1x8x8xf32>
    tpu.vector_store %arg20[%c2_41, %c0_42, %c0_43], %50 {strides = array<i32>} : memref<4x8x8xf32, #tpu.memory_space<vmem>>, vector<1x8x8xf32>,
    %c2_44 = arith.constant 2 : index
    %c0_45 = arith.constant 0 : index
    %c0_46 = arith.constant 0 : index
    %51 = vector.load %arg21[%c2_44, %c0_45, %c0_46] : memref<4x8x8xf32, #tpu.memory_space<vmem>>, vector<1x8x8xf32>
    %52 = vector.shape_cast %51 : vector<1x8x8xf32> to vector<8x8xf32>
    %53 = vector.shape_cast %44 : vector<8x8xf32> to vector<1x8x8xf32>
    tpu.vector_store %arg21[%c2_44, %c0_45, %c0_46], %53 {strides = array<i32>} : memref<4x8x8xf32, #tpu.memory_space<vmem>>, vector<1x8x8xf32>,
    %54 = vector.extract_strided_slice %1 {offsets = [0, 24], sizes = [8, 8], strides = [1, 1]} : vector<8x32xf32> to vector<8x8xf32>
    %cst_47 = arith.constant dense<0.000000e+00> : vector<8x8xf32>
    %55 = tpu.matmul %54, %6, %cst_47 {dimension_numbers = #tpu.dot_dimension_numbers<[1], [0], [0], [1], [0, 0, 1, 1], [], []>} : vector<8x8xf32>, vector<8x8xf32>, vector<8x8xf32> -> vector<8x8xf32>
    %56 = vector.extract_strided_slice %3 {offsets = [0, 24], sizes = [8, 8], strides = [1, 1]} : vector<8x32xf32> to vector<8x8xf32>
    %cst_48 = arith.constant dense<0.000000e+00> : vector<8x8xf32>
    %57 = tpu.matmul %56, %7, %cst_48 {dimension_numbers = #tpu.dot_dimension_numbers<[1], [0], [0], [1], [0, 0, 1, 1], [], []>} : vector<8x8xf32>, vector<8x8xf32>, vector<8x8xf32> -> vector<8x8xf32>
    %58 = vector.extract_strided_slice %5 {offsets = [0, 24], sizes = [8, 8], strides = [1, 1]} : vector<8x32xf32> to vector<8x8xf32>
    %cst_49 = arith.constant dense<0.000000e+00> : vector<8x8xf32>
    %59 = tpu.matmul %58, %8, %cst_49 {dimension_numbers = #tpu.dot_dimension_numbers<[1], [0], [0], [1], [0, 0, 1, 1], [], []>} : vector<8x8xf32>, vector<8x8xf32>, vector<8x8xf32> -> vector<8x8xf32>
    %c3 = arith.constant 3 : index
    %c0_50 = arith.constant 0 : index
    %c0_51 = arith.constant 0 : index
    %60 = vector.load %arg19[%c3, %c0_50, %c0_51] : memref<4x8x8xf32, #tpu.memory_space<vmem>>, vector<1x8x8xf32>
    %61 = vector.shape_cast %60 : vector<1x8x8xf32> to vector<8x8xf32>
    %62 = vector.shape_cast %55 : vector<8x8xf32> to vector<1x8x8xf32>
    tpu.vector_store %arg19[%c3, %c0_50, %c0_51], %62 {strides = array<i32>} : memref<4x8x8xf32, #tpu.memory_space<vmem>>, vector<1x8x8xf32>,
    %c3_52 = arith.constant 3 : index
    %c0_53 = arith.constant 0 : index
    %c0_54 = arith.constant 0 : index
    %63 = vector.load %arg20[%c3_52, %c0_53, %c0_54] : memref<4x8x8xf32, #tpu.memory_space<vmem>>, vector<1x8x8xf32>
    %64 = vector.shape_cast %63 : vector<1x8x8xf32> to vector<8x8xf32>
    %65 = vector.shape_cast %57 : vector<8x8xf32> to vector<1x8x8xf32>
    tpu.vector_store %arg20[%c3_52, %c0_53, %c0_54], %65 {strides = array<i32>} : memref<4x8x8xf32, #tpu.memory_space<vmem>>, vector<1x8x8xf32>,
    %c3_55 = arith.constant 3 : index
    %c0_56 = arith.constant 0 : index
    %c0_57 = arith.constant 0 : index
    %66 = vector.load %arg21[%c3_55, %c0_56, %c0_57] : memref<4x8x8xf32, #tpu.memory_space<vmem>>, vector<1x8x8xf32>
    %67 = vector.shape_cast %66 : vector<1x8x8xf32> to vector<8x8xf32>
    %68 = vector.shape_cast %59 : vector<8x8xf32> to vector<1x8x8xf32>
    tpu.vector_store %arg21[%c3_55, %c0_56, %c0_57], %68 {strides = array<i32>} : memref<4x8x8xf32, #tpu.memory_space<vmem>>, vector<1x8x8xf32>,
    %c0_58 = arith.constant 0 : index
    %c0_59 = arith.constant 0 : index
    %69 = vector.load %arg9[%c0_58, %c0_59] : memref<1x32xf32, #tpu.memory_space<vmem>>, vector<1x32xf32>
    %70 = vector.shape_cast %69 : vector<1x32xf32> to vector<1x1x32xf32>
    %71 = vector.broadcast %70 : vector<1x1x32xf32> to vector<1x8x32xf32>
    %c0_60 = arith.constant 0 : index
    %c0_61 = arith.constant 0 : index
    %c0_62 = arith.constant 0 : index
    %72 = vector.load %arg22[%c0_60, %c0_61, %c0_62] : memref<1x8x32xf32, #tpu.memory_space<vmem>>, vector<1x8x32xf32>
    tpu.vector_store %arg22[%c0_60, %c0_61, %c0_62], %71 {strides = array<i32>} : memref<1x8x32xf32, #tpu.memory_space<vmem>>, vector<1x8x32xf32>,
    %c0_63 = arith.constant 0 : index
    %c0_64 = arith.constant 0 : index
    %c0_65 = arith.constant 0 : index
    %73 = vector.load %arg4[%c0_63, %c0_64, %c0_65] : memref<1x1x8xf32, #tpu.memory_space<vmem>>, vector<1x1x8xf32>
    %74 = vector.shape_cast %73 : vector<1x1x8xf32> to vector<1x8xf32>
    %75 = vector.shape_cast %74 : vector<1x8xf32> to vector<1x8xf32>
    %76 = vector.broadcast %75 : vector<1x8xf32> to vector<8x8xf32>
    %c0_i32 = arith.constant 0 : i32
    %c0_i32_66 = arith.constant 0 : i32
    %77 = arith.addi %c0_i32_66, %c0_i32 : i32
    %78 = arith.index_cast %77 : i32 to index
    %c0_67 = arith.constant 0 : index
    %c0_68 = arith.constant 0 : index
    %79 = vector.load %arg19[%78, %c0_67, %c0_68] : memref<4x8x8xf32, #tpu.memory_space<vmem>>, vector<1x8x8xf32>
    %80 = vector.shape_cast %79 : vector<1x8x8xf32> to vector<8x8xf32>
    %c0_i32_69 = arith.constant 0 : i32
    %81 = arith.addi %c0_i32_69, %c0_i32 : i32
    %82 = arith.index_cast %81 : i32 to index
    %c0_70 = arith.constant 0 : index
    %c0_71 = arith.constant 0 : index
    %83 = vector.load %arg20[%82, %c0_70, %c0_71] : memref<4x8x8xf32, #tpu.memory_space<vmem>>, vector<1x8x8xf32>
    %84 = vector.shape_cast %83 : vector<1x8x8xf32> to vector<8x8xf32>
    %c0_i32_72 = arith.constant 0 : i32
    %85 = arith.addi %c0_i32_72, %c0_i32 : i32
    %86 = arith.index_cast %85 : i32 to index
    %c0_73 = arith.constant 0 : index
    %c0_74 = arith.constant 0 : index
    %87 = vector.load %arg21[%86, %c0_73, %c0_74] : memref<4x8x8xf32, #tpu.memory_space<vmem>>, vector<1x8x8xf32>
    %88 = vector.shape_cast %87 : vector<1x8x8xf32> to vector<8x8xf32>
    %cst_75 = arith.constant dense<0.000000e+00> : vector<8x8xf32>
    %89 = tpu.matmul %80, %84, %cst_75 {dimension_numbers = #tpu.dot_dimension_numbers<[1], [1], [0], [0], [0, 0, 1, 0], [], []>} : vector<8x8xf32>, vector<8x8xf32>, vector<8x8xf32> -> vector<8x8xf32>
    %90 = arith.addf %89, %76 : vector<8x8xf32>
    %cst_76 = arith.constant dense<0xFF800000> : vector<8xf32>
    %91 = vector.multi_reduction <maximumf>, %90, %cst_76 [1] : vector<8x8xf32> to vector<8xf32>
    %92 = vector.shape_cast %91 : vector<8xf32> to vector<8x1xf32>
    %93 = vector.broadcast %92 : vector<8x1xf32> to vector<8x8xf32>
    %94 = arith.subf %90, %93 : vector<8x8xf32>
    %95 = math.exp %94 : vector<8x8xf32>
    %cst_77 = arith.constant dense<0.000000e+00> : vector<8xf32>
    %96 = vector.multi_reduction <add>, %95, %cst_77 [1] : vector<8x8xf32> to vector<8xf32>
    %97 = vector.shape_cast %96 : vector<8xf32> to vector<8x1xf32>
    %98 = tpu.reciprocal %97 {approx = true} : vector<8x1xf32> -> vector<8x1xf32>
    %99 = arith.mulf %97, %98 : vector<8x1xf32>
    %cst_78 = arith.constant 2.000000e+00 : f32
    %100 = vector.broadcast %cst_78 : f32 to vector<8x1xf32>
    %101 = arith.subf %100, %99 : vector<8x1xf32>
    %102 = arith.mulf %98, %101 : vector<8x1xf32>
    %103 = vector.broadcast %102 : vector<8x1xf32> to vector<8x8xf32>
    %104 = arith.mulf %95, %103 : vector<8x8xf32>
    %cst_79 = arith.constant dense<0.000000e+00> : vector<8x8xf32>
    %105 = tpu.matmul %104, %88, %cst_79 {dimension_numbers = #tpu.dot_dimension_numbers<[1], [0], [0], [1], [0, 0, 1, 1], [], []>} : vector<8x8xf32>, vector<8x8xf32>, vector<8x8xf32> -> vector<8x8xf32>
    %c0_80 = arith.constant 0 : index
    %c0_81 = arith.constant 0 : index
    %c0_82 = arith.constant 0 : index
    %106 = vector.load %arg22[%c0_80, %c0_81, %c0_82] : memref<1x8x32xf32, #tpu.memory_space<vmem>>, vector<1x8x32xf32>
    %107 = vector.shape_cast %106 : vector<1x8x32xf32> to vector<8x32xf32>
    %108 = arith.index_cast %c0_i32 : i32 to index
    %c0_83 = arith.constant 0 : index
    %c0_84 = arith.constant 0 : index
    %109 = vector.load %arg8[%108, %c0_83, %c0_84] : memref<4x8x32xf32, #tpu.memory_space<vmem>>, vector<1x8x32xf32>
    %110 = vector.shape_cast %109 : vector<1x8x32xf32> to vector<8x32xf32>
    %cst_85 = arith.constant dense<0.000000e+00> : vector<8x32xf32>
    %111 = tpu.matmul %105, %110, %cst_85 {dimension_numbers = #tpu.dot_dimension_numbers<[1], [0], [0], [1], [0, 0, 1, 1], [], []>} : vector<8x8xf32>, vector<8x32xf32>, vector<8x32xf32> -> vector<8x32xf32>
    %112 = arith.addf %107, %111 : vector<8x32xf32>
    %c0_86 = arith.constant 0 : index
    %c0_87 = arith.constant 0 : index
    %c0_88 = arith.constant 0 : index
    %113 = vector.load %arg22[%c0_86, %c0_87, %c0_88] : memref<1x8x32xf32, #tpu.memory_space<vmem>>, vector<1x8x32xf32>
    %114 = vector.shape_cast %113 : vector<1x8x32xf32> to vector<8x32xf32>
    %115 = vector.shape_cast %112 : vector<8x32xf32> to vector<1x8x32xf32>
    tpu.vector_store %arg22[%c0_86, %c0_87, %c0_88], %115 {strides = array<i32>} : memref<1x8x32xf32, #tpu.memory_space<vmem>>, vector<1x8x32xf32>,
    %c1_i32 = arith.constant 1 : i32
    %c0_i32_89 = arith.constant 0 : i32
    %116 = arith.addi %c0_i32_89, %c1_i32 : i32
    %117 = arith.index_cast %116 : i32 to index
    %c0_90 = arith.constant 0 : index
    %c0_91 = arith.constant 0 : index
    %118 = vector.load %arg19[%117, %c0_90, %c0_91] : memref<4x8x8xf32, #tpu.memory_space<vmem>>, vector<1x8x8xf32>
    %119 = vector.shape_cast %118 : vector<1x8x8xf32> to vector<8x8xf32>
    %c0_i32_92 = arith.constant 0 : i32
    %120 = arith.addi %c0_i32_92, %c1_i32 : i32
    %121 = arith.index_cast %120 : i32 to index
    %c0_93 = arith.constant 0 : index
    %c0_94 = arith.constant 0 : index
    %122 = vector.load %arg20[%121, %c0_93, %c0_94] : memref<4x8x8xf32, #tpu.memory_space<vmem>>, vector<1x8x8xf32>
    %123 = vector.shape_cast %122 : vector<1x8x8xf32> to vector<8x8xf32>
    %c0_i32_95 = arith.constant 0 : i32
    %124 = arith.addi %c0_i32_95, %c1_i32 : i32
    %125 = arith.index_cast %124 : i32 to index
    %c0_96 = arith.constant 0 : index
    %c0_97 = arith.constant 0 : index
    %126 = vector.load %arg21[%125, %c0_96, %c0_97] : memref<4x8x8xf32, #tpu.memory_space<vmem>>, vector<1x8x8xf32>
    %127 = vector.shape_cast %126 : vector<1x8x8xf32> to vector<8x8xf32>
    %cst_98 = arith.constant dense<0.000000e+00> : vector<8x8xf32>
    %128 = tpu.matmul %119, %123, %cst_98 {dimension_numbers = #tpu.dot_dimension_numbers<[1], [1], [0], [0], [0, 0, 1, 0], [], []>} : vector<8x8xf32>, vector<8x8xf32>, vector<8x8xf32> -> vector<8x8xf32>
    %129 = arith.addf %128, %76 : vector<8x8xf32>
    %cst_99 = arith.constant dense<0xFF800000> : vector<8xf32>
    %130 = vector.multi_reduction <maximumf>, %129, %cst_99 [1] : vector<8x8xf32> to vector<8xf32>
    %131 = vector.shape_cast %130 : vector<8xf32> to vector<8x1xf32>
    %132 = vector.broadcast %131 : vector<8x1xf32> to vector<8x8xf32>
    %133 = arith.subf %129, %132 : vector<8x8xf32>
    %134 = math.exp %133 : vector<8x8xf32>
    %cst_100 = arith.constant dense<0.000000e+00> : vector<8xf32>
    %135 = vector.multi_reduction <add>, %134, %cst_100 [1] : vector<8x8xf32> to vector<8xf32>
    %136 = vector.shape_cast %135 : vector<8xf32> to vector<8x1xf32>
    %137 = tpu.reciprocal %136 {approx = true} : vector<8x1xf32> -> vector<8x1xf32>
    %138 = arith.mulf %136, %137 : vector<8x1xf32>
    %cst_101 = arith.constant 2.000000e+00 : f32
    %139 = vector.broadcast %cst_101 : f32 to vector<8x1xf32>
    %140 = arith.subf %139, %138 : vector<8x1xf32>
    %141 = arith.mulf %137, %140 : vector<8x1xf32>
    %142 = vector.broadcast %141 : vector<8x1xf32> to vector<8x8xf32>
    %143 = arith.mulf %134, %142 : vector<8x8xf32>
    %cst_102 = arith.constant dense<0.000000e+00> : vector<8x8xf32>
    %144 = tpu.matmul %143, %127, %cst_102 {dimension_numbers = #tpu.dot_dimension_numbers<[1], [0], [0], [1], [0, 0, 1, 1], [], []>} : vector<8x8xf32>, vector<8x8xf32>, vector<8x8xf32> -> vector<8x8xf32>
    %c0_103 = arith.constant 0 : index
    %c0_104 = arith.constant 0 : index
    %c0_105 = arith.constant 0 : index
    %145 = vector.load %arg22[%c0_103, %c0_104, %c0_105] : memref<1x8x32xf32, #tpu.memory_space<vmem>>, vector<1x8x32xf32>
    %146 = vector.shape_cast %145 : vector<1x8x32xf32> to vector<8x32xf32>
    %147 = arith.index_cast %c1_i32 : i32 to index
    %c0_106 = arith.constant 0 : index
    %c0_107 = arith.constant 0 : index
    %148 = vector.load %arg8[%147, %c0_106, %c0_107] : memref<4x8x32xf32, #tpu.memory_space<vmem>>, vector<1x8x32xf32>
    %149 = vector.shape_cast %148 : vector<1x8x32xf32> to vector<8x32xf32>
    %cst_108 = arith.constant dense<0.000000e+00> : vector<8x32xf32>
    %150 = tpu.matmul %144, %149, %cst_108 {dimension_numbers = #tpu.dot_dimension_numbers<[1], [0], [0], [1], [0, 0, 1, 1], [], []>} : vector<8x8xf32>, vector<8x32xf32>, vector<8x32xf32> -> vector<8x32xf32>
    %151 = arith.addf %146, %150 : vector<8x32xf32>
    %c0_109 = arith.constant 0 : index
    %c0_110 = arith.constant 0 : index
    %c0_111 = arith.constant 0 : index
    %152 = vector.load %arg22[%c0_109, %c0_110, %c0_111] : memref<1x8x32xf32, #tpu.memory_space<vmem>>, vector<1x8x32xf32>
    %153 = vector.shape_cast %152 : vector<1x8x32xf32> to vector<8x32xf32>
    %154 = vector.shape_cast %151 : vector<8x32xf32> to vector<1x8x32xf32>
    tpu.vector_store %arg22[%c0_109, %c0_110, %c0_111], %154 {strides = array<i32>} : memref<1x8x32xf32, #tpu.memory_space<vmem>>, vector<1x8x32xf32>,
    %c2_i32 = arith.constant 2 : i32
    %c0_i32_112 = arith.constant 0 : i32
    %155 = arith.addi %c0_i32_112, %c2_i32 : i32
    %156 = arith.index_cast %155 : i32 to index
    %c0_113 = arith.constant 0 : index
    %c0_114 = arith.constant 0 : index
    %157 = vector.load %arg19[%156, %c0_113, %c0_114] : memref<4x8x8xf32, #tpu.memory_space<vmem>>, vector<1x8x8xf32>
    %158 = vector.shape_cast %157 : vector<1x8x8xf32> to vector<8x8xf32>
    %c0_i32_115 = arith.constant 0 : i32
    %159 = arith.addi %c0_i32_115, %c2_i32 : i32
    %160 = arith.index_cast %159 : i32 to index
    %c0_116 = arith.constant 0 : index
    %c0_117 = arith.constant 0 : index
    %161 = vector.load %arg20[%160, %c0_116, %c0_117] : memref<4x8x8xf32, #tpu.memory_space<vmem>>, vector<1x8x8xf32>
    %162 = vector.shape_cast %161 : vector<1x8x8xf32> to vector<8x8xf32>
    %c0_i32_118 = arith.constant 0 : i32
    %163 = arith.addi %c0_i32_118, %c2_i32 : i32
    %164 = arith.index_cast %163 : i32 to index
    %c0_119 = arith.constant 0 : index
    %c0_120 = arith.constant 0 : index
    %165 = vector.load %arg21[%164, %c0_119, %c0_120] : memref<4x8x8xf32, #tpu.memory_space<vmem>>, vector<1x8x8xf32>
    %166 = vector.shape_cast %165 : vector<1x8x8xf32> to vector<8x8xf32>
    %cst_121 = arith.constant dense<0.000000e+00> : vector<8x8xf32>
    %167 = tpu.matmul %158, %162, %cst_121 {dimension_numbers = #tpu.dot_dimension_numbers<[1], [1], [0], [0], [0, 0, 1, 0], [], []>} : vector<8x8xf32>, vector<8x8xf32>, vector<8x8xf32> -> vector<8x8xf32>
    %168 = arith.addf %167, %76 : vector<8x8xf32>
    %cst_122 = arith.constant dense<0xFF800000> : vector<8xf32>
    %169 = vector.multi_reduction <maximumf>, %168, %cst_122 [1] : vector<8x8xf32> to vector<8xf32>
    %170 = vector.shape_cast %169 : vector<8xf32> to vector<8x1xf32>
    %171 = vector.broadcast %170 : vector<8x1xf32> to vector<8x8xf32>
    %172 = arith.subf %168, %171 : vector<8x8xf32>
    %173 = math.exp %172 : vector<8x8xf32>
    %cst_123 = arith.constant dense<0.000000e+00> : vector<8xf32>
    %174 = vector.multi_reduction <add>, %173, %cst_123 [1] : vector<8x8xf32> to vector<8xf32>
    %175 = vector.shape_cast %174 : vector<8xf32> to vector<8x1xf32>
    %176 = tpu.reciprocal %175 {approx = true} : vector<8x1xf32> -> vector<8x1xf32>
    %177 = arith.mulf %175, %176 : vector<8x1xf32>
    %cst_124 = arith.constant 2.000000e+00 : f32
    %178 = vector.broadcast %cst_124 : f32 to vector<8x1xf32>
    %179 = arith.subf %178, %177 : vector<8x1xf32>
    %180 = arith.mulf %176, %179 : vector<8x1xf32>
    %181 = vector.broadcast %180 : vector<8x1xf32> to vector<8x8xf32>
    %182 = arith.mulf %173, %181 : vector<8x8xf32>
    %cst_125 = arith.constant dense<0.000000e+00> : vector<8x8xf32>
    %183 = tpu.matmul %182, %166, %cst_125 {dimension_numbers = #tpu.dot_dimension_numbers<[1], [0], [0], [1], [0, 0, 1, 1], [], []>} : vector<8x8xf32>, vector<8x8xf32>, vector<8x8xf32> -> vector<8x8xf32>
    %c0_126 = arith.constant 0 : index
    %c0_127 = arith.constant 0 : index
    %c0_128 = arith.constant 0 : index
    %184 = vector.load %arg22[%c0_126, %c0_127, %c0_128] : memref<1x8x32xf32, #tpu.memory_space<vmem>>, vector<1x8x32xf32>
    %185 = vector.shape_cast %184 : vector<1x8x32xf32> to vector<8x32xf32>
    %186 = arith.index_cast %c2_i32 : i32 to index
    %c0_129 = arith.constant 0 : index
    %c0_130 = arith.constant 0 : index
    %187 = vector.load %arg8[%186, %c0_129, %c0_130] : memref<4x8x32xf32, #tpu.memory_space<vmem>>, vector<1x8x32xf32>
    %188 = vector.shape_cast %187 : vector<1x8x32xf32> to vector<8x32xf32>
    %cst_131 = arith.constant dense<0.000000e+00> : vector<8x32xf32>
    %189 = tpu.matmul %183, %188, %cst_131 {dimension_numbers = #tpu.dot_dimension_numbers<[1], [0], [0], [1], [0, 0, 1, 1], [], []>} : vector<8x8xf32>, vector<8x32xf32>, vector<8x32xf32> -> vector<8x32xf32>
    %190 = arith.addf %185, %189 : vector<8x32xf32>
    %c0_132 = arith.constant 0 : index
    %c0_133 = arith.constant 0 : index
    %c0_134 = arith.constant 0 : index
    %191 = vector.load %arg22[%c0_132, %c0_133, %c0_134] : memref<1x8x32xf32, #tpu.memory_space<vmem>>, vector<1x8x32xf32>
    %192 = vector.shape_cast %191 : vector<1x8x32xf32> to vector<8x32xf32>
    %193 = vector.shape_cast %190 : vector<8x32xf32> to vector<1x8x32xf32>
    tpu.vector_store %arg22[%c0_132, %c0_133, %c0_134], %193 {strides = array<i32>} : memref<1x8x32xf32, #tpu.memory_space<vmem>>, vector<1x8x32xf32>,
    %c3_i32 = arith.constant 3 : i32
    %c0_i32_135 = arith.constant 0 : i32
    %194 = arith.addi %c0_i32_135, %c3_i32 : i32
    %195 = arith.index_cast %194 : i32 to index
    %c0_136 = arith.constant 0 : index
    %c0_137 = arith.constant 0 : index
    %196 = vector.load %arg19[%195, %c0_136, %c0_137] : memref<4x8x8xf32, #tpu.memory_space<vmem>>, vector<1x8x8xf32>
    %197 = vector.shape_cast %196 : vector<1x8x8xf32> to vector<8x8xf32>
    %c0_i32_138 = arith.constant 0 : i32
    %198 = arith.addi %c0_i32_138, %c3_i32 : i32
    %199 = arith.index_cast %198 : i32 to index
    %c0_139 = arith.constant 0 : index
    %c0_140 = arith.constant 0 : index
    %200 = vector.load %arg20[%199, %c0_139, %c0_140] : memref<4x8x8xf32, #tpu.memory_space<vmem>>, vector<1x8x8xf32>
    %201 = vector.shape_cast %200 : vector<1x8x8xf32> to vector<8x8xf32>
    %c0_i32_141 = arith.constant 0 : i32
    %202 = arith.addi %c0_i32_141, %c3_i32 : i32
    %203 = arith.index_cast %202 : i32 to index
    %c0_142 = arith.constant 0 : index
    %c0_143 = arith.constant 0 : index
    %204 = vector.load %arg21[%203, %c0_142, %c0_143] : memref<4x8x8xf32, #tpu.memory_space<vmem>>, vector<1x8x8xf32>
    %205 = vector.shape_cast %204 : vector<1x8x8xf32> to vector<8x8xf32>
    %cst_144 = arith.constant dense<0.000000e+00> : vector<8x8xf32>
    %206 = tpu.matmul %197, %201, %cst_144 {dimension_numbers = #tpu.dot_dimension_numbers<[1], [1], [0], [0], [0, 0, 1, 0], [], []>} : vector<8x8xf32>, vector<8x8xf32>, vector<8x8xf32> -> vector<8x8xf32>
    %207 = arith.addf %206, %76 : vector<8x8xf32>
    %cst_145 = arith.constant dense<0xFF800000> : vector<8xf32>
    %208 = vector.multi_reduction <maximumf>, %207, %cst_145 [1] : vector<8x8xf32> to vector<8xf32>
    %209 = vector.shape_cast %208 : vector<8xf32> to vector<8x1xf32>
    %210 = vector.broadcast %209 : vector<8x1xf32> to vector<8x8xf32>
    %211 = arith.subf %207, %210 : vector<8x8xf32>
    %212 = math.exp %211 : vector<8x8xf32>
    %cst_146 = arith.constant dense<0.000000e+00> : vector<8xf32>
    %213 = vector.multi_reduction <add>, %212, %cst_146 [1] : vector<8x8xf32> to vector<8xf32>
    %214 = vector.shape_cast %213 : vector<8xf32> to vector<8x1xf32>
    %215 = tpu.reciprocal %214 {approx = true} : vector<8x1xf32> -> vector<8x1xf32>
    %216 = arith.mulf %214, %215 : vector<8x1xf32>
    %cst_147 = arith.constant 2.000000e+00 : f32
    %217 = vector.broadcast %cst_147 : f32 to vector<8x1xf32>
    %218 = arith.subf %217, %216 : vector<8x1xf32>
    %219 = arith.mulf %215, %218 : vector<8x1xf32>
    %220 = vector.broadcast %219 : vector<8x1xf32> to vector<8x8xf32>
    %221 = arith.mulf %212, %220 : vector<8x8xf32>
    %cst_148 = arith.constant dense<0.000000e+00> : vector<8x8xf32>
    %222 = tpu.matmul %221, %205, %cst_148 {dimension_numbers = #tpu.dot_dimension_numbers<[1], [0], [0], [1], [0, 0, 1, 1], [], []>} : vector<8x8xf32>, vector<8x8xf32>, vector<8x8xf32> -> vector<8x8xf32>
    %c0_149 = arith.constant 0 : index
    %c0_150 = arith.constant 0 : index
    %c0_151 = arith.constant 0 : index
    %223 = vector.load %arg22[%c0_149, %c0_150, %c0_151] : memref<1x8x32xf32, #tpu.memory_space<vmem>>, vector<1x8x32xf32>
    %224 = vector.shape_cast %223 : vector<1x8x32xf32> to vector<8x32xf32>
    %225 = arith.index_cast %c3_i32 : i32 to index
    %c0_152 = arith.constant 0 : index
    %c0_153 = arith.constant 0 : index
    %226 = vector.load %arg8[%225, %c0_152, %c0_153] : memref<4x8x32xf32, #tpu.memory_space<vmem>>, vector<1x8x32xf32>
    %227 = vector.shape_cast %226 : vector<1x8x32xf32> to vector<8x32xf32>
    %cst_154 = arith.constant dense<0.000000e+00> : vector<8x32xf32>
    %228 = tpu.matmul %222, %227, %cst_154 {dimension_numbers = #tpu.dot_dimension_numbers<[1], [0], [0], [1], [0, 0, 1, 1], [], []>} : vector<8x8xf32>, vector<8x32xf32>, vector<8x32xf32> -> vector<8x32xf32>
    %229 = arith.addf %224, %228 : vector<8x32xf32>
    %c0_155 = arith.constant 0 : index
    %c0_156 = arith.constant 0 : index
    %c0_157 = arith.constant 0 : index
    %230 = vector.load %arg22[%c0_155, %c0_156, %c0_157] : memref<1x8x32xf32, #tpu.memory_space<vmem>>, vector<1x8x32xf32>
    %231 = vector.shape_cast %230 : vector<1x8x32xf32> to vector<8x32xf32>
    %232 = vector.shape_cast %229 : vector<8x32xf32> to vector<1x8x32xf32>
    tpu.vector_store %arg22[%c0_155, %c0_156, %c0_157], %232 {strides = array<i32>} : memref<1x8x32xf32, #tpu.memory_space<vmem>>, vector<1x8x32xf32>,
    %c4_i32 = arith.constant 4 : i32
    %c0_158 = arith.constant 0 : index
    %c0_159 = arith.constant 0 : index
    %c0_160 = arith.constant 0 : index
    %233 = vector.load %arg22[%c0_158, %c0_159, %c0_160] : memref<1x8x32xf32, #tpu.memory_space<vmem>>, vector<1x8x32xf32>
    %234 = vector.shape_cast %233 : vector<1x8x32xf32> to vector<8x32xf32>
    %235 = arith.addf %234, %1 : vector<8x32xf32>
    %c0_161 = arith.constant 0 : index
    %c0_162 = arith.constant 0 : index
    %236 = vector.load %arg14[%c0_161, %c0_162] : memref<1x32xf32, #tpu.memory_space<vmem>>, vector<1x32xf32>
    %c0_163 = arith.constant 0 : index
    %c0_164 = arith.constant 0 : index
    %237 = vector.load %arg15[%c0_163, %c0_164] : memref<1x32xf32, #tpu.memory_space<vmem>>, vector<1x32xf32>
    %cst_165 = arith.constant dense<0.000000e+00> : vector<8xf32>
    %238 = vector.multi_reduction <add>, %235, %cst_165 [1] : vector<8x32xf32> to vector<8xf32>
    %239 = vector.shape_cast %238 : vector<8xf32> to vector<8x1xf32>
    %cst_166 = arith.constant 3.200000e+01 : f32
    %240 = vector.broadcast %cst_166 : f32 to vector<8x1xf32>
    %241 = arith.divf %239, %240 : vector<8x1xf32>
    %242 = vector.broadcast %241 : vector<8x1xf32> to vector<8x32xf32>
    %243 = arith.subf %235, %242 : vector<8x32xf32>
    %244 = arith.mulf %243, %243 : vector<8x32xf32>
    %cst_167 = arith.constant dense<0.000000e+00> : vector<8xf32>
    %245 = vector.multi_reduction <add>, %244, %cst_167 [1] : vector<8x32xf32> to vector<8xf32>
    %246 = vector.shape_cast %245 : vector<8xf32> to vector<8x1xf32>
    %cst_168 = arith.constant 3.200000e+01 : f32
    %247 = vector.broadcast %cst_168 : f32 to vector<8x1xf32>
    %248 = arith.divf %246, %247 : vector<8x1xf32>
    %249 = vector.broadcast %241 : vector<8x1xf32> to vector<8x32xf32>
    %250 = arith.subf %235, %249 : vector<8x32xf32>
    %cst_169 = arith.constant 9.99999974E-6 : f32
    %251 = vector.broadcast %cst_169 : f32 to vector<8x1xf32>
    %252 = arith.addf %248, %251 : vector<8x1xf32>
    %253 = math.rsqrt %252 : vector<8x1xf32>
    %254 = vector.broadcast %253 : vector<8x1xf32> to vector<8x32xf32>
    %255 = arith.mulf %250, %254 : vector<8x32xf32>
    %256 = vector.broadcast %236 : vector<1x32xf32> to vector<8x32xf32>
    %257 = arith.mulf %255, %256 : vector<8x32xf32>
    %258 = vector.broadcast %237 : vector<1x32xf32> to vector<8x32xf32>
    %259 = arith.addf %257, %258 : vector<8x32xf32>
    %c0_170 = arith.constant 0 : index
    %c0_171 = arith.constant 0 : index
    %260 = vector.load %arg10[%c0_170, %c0_171] : memref<32x64xf32, #tpu.memory_space<vmem>>, vector<32x64xf32>
    %cst_172 = arith.constant dense<0.000000e+00> : vector<8x64xf32>
    %261 = tpu.matmul %259, %260, %cst_172 {dimension_numbers = #tpu.dot_dimension_numbers<[1], [0], [0], [1], [0, 0, 1, 1], [], []>} : vector<8x32xf32>, vector<32x64xf32>, vector<8x64xf32> -> vector<8x64xf32>
    %c0_173 = arith.constant 0 : index
    %c0_174 = arith.constant 0 : index
    %262 = vector.load %arg11[%c0_173, %c0_174] : memref<1x64xf32, #tpu.memory_space<vmem>>, vector<1x64xf32>
    %263 = vector.broadcast %262 : vector<1x64xf32> to vector<8x64xf32>
    %264 = arith.addf %261, %263 : vector<8x64xf32>
    %cst_175 = arith.constant 0.000000e+00 : f32
    %265 = vector.broadcast %cst_175 : f32 to vector<8x64xf32>
    %266 = arith.maximumf %264, %265 : vector<8x64xf32>
    %c0_176 = arith.constant 0 : index
    %c0_177 = arith.constant 0 : index
    %267 = vector.load %arg12[%c0_176, %c0_177] : memref<64x32xf32, #tpu.memory_space<vmem>>, vector<64x32xf32>
    %cst_178 = arith.constant dense<0.000000e+00> : vector<8x32xf32>
    %268 = tpu.matmul %266, %267, %cst_178 {dimension_numbers = #tpu.dot_dimension_numbers<[1], [0], [0], [1], [0, 0, 1, 1], [], []>} : vector<8x64xf32>, vector<64x32xf32>, vector<8x32xf32> -> vector<8x32xf32>
    %c0_179 = arith.constant 0 : index
    %c0_180 = arith.constant 0 : index
    %269 = vector.load %arg13[%c0_179, %c0_180] : memref<1x32xf32, #tpu.memory_space<vmem>>, vector<1x32xf32>
    %270 = vector.broadcast %269 : vector<1x32xf32> to vector<8x32xf32>
    %271 = arith.addf %268, %270 : vector<8x32xf32>
    %272 = arith.addf %271, %259 : vector<8x32xf32>
    %c0_181 = arith.constant 0 : index
    %c0_182 = arith.constant 0 : index
    %273 = vector.load %arg16[%c0_181, %c0_182] : memref<1x32xf32, #tpu.memory_space<vmem>>, vector<1x32xf32>
    %c0_183 = arith.constant 0 : index
    %c0_184 = arith.constant 0 : index
    %274 = vector.load %arg17[%c0_183, %c0_184] : memref<1x32xf32, #tpu.memory_space<vmem>>, vector<1x32xf32>
    %cst_185 = arith.constant dense<0.000000e+00> : vector<8xf32>
    %275 = vector.multi_reduction <add>, %272, %cst_185 [1] : vector<8x32xf32> to vector<8xf32>
    %276 = vector.shape_cast %275 : vector<8xf32> to vector<8x1xf32>
    %cst_186 = arith.constant 3.200000e+01 : f32
    %277 = vector.broadcast %cst_186 : f32 to vector<8x1xf32>
    %278 = arith.divf %276, %277 : vector<8x1xf32>
    %279 = vector.broadcast %278 : vector<8x1xf32> to vector<8x32xf32>
    %280 = arith.subf %272, %279 : vector<8x32xf32>
    %281 = arith.mulf %280, %280 : vector<8x32xf32>
    %cst_187 = arith.constant dense<0.000000e+00> : vector<8xf32>
    %282 = vector.multi_reduction <add>, %281, %cst_187 [1] : vector<8x32xf32> to vector<8xf32>
    %283 = vector.shape_cast %282 : vector<8xf32> to vector<8x1xf32>
    %cst_188 = arith.constant 3.200000e+01 : f32
    %284 = vector.broadcast %cst_188 : f32 to vector<8x1xf32>
    %285 = arith.divf %283, %284 : vector<8x1xf32>
    %286 = vector.broadcast %278 : vector<8x1xf32> to vector<8x32xf32>
    %287 = arith.subf %272, %286 : vector<8x32xf32>
    %cst_189 = arith.constant 9.99999974E-6 : f32
    %288 = vector.broadcast %cst_189 : f32 to vector<8x1xf32>
    %289 = arith.addf %285, %288 : vector<8x1xf32>
    %290 = math.rsqrt %289 : vector<8x1xf32>
    %291 = vector.broadcast %290 : vector<8x1xf32> to vector<8x32xf32>
    %292 = arith.mulf %287, %291 : vector<8x32xf32>
    %293 = vector.broadcast %273 : vector<1x32xf32> to vector<8x32xf32>
    %294 = arith.mulf %292, %293 : vector<8x32xf32>
    %295 = vector.broadcast %274 : vector<1x32xf32> to vector<8x32xf32>
    %296 = arith.addf %294, %295 : vector<8x32xf32>
    %297 = vector.shape_cast %296 : vector<8x32xf32> to vector<1x8x32xf32>
    %c0_190 = arith.constant 0 : index
    %c0_191 = arith.constant 0 : index
    %c0_192 = arith.constant 0 : index
    %298 = vector.load %arg18[%c0_190, %c0_191, %c0_192] : memref<1x8x32xf32, #tpu.memory_space<vmem>>, vector<1x8x32xf32>
    tpu.vector_store %arg18[%c0_190, %c0_191, %c0_192], %297 {strides = array<i32>} : memref<1x8x32xf32, #tpu.memory_space<vmem>>, vector<1x8x32xf32>,
    return
  }
  func.func @transform_0(%arg0: i32) -> (i32, i32, i32) {
    %c0_i32 = arith.constant 0 : i32
    %c0_i32_0 = arith.constant 0 : i32
    %c0_i32_1 = arith.constant 0 : i32
    return %arg0, %c0_i32, %c0_i32_0 : i32, i32, i32
  }
  func.func @transform_1(%arg0: i32) -> (i32, i32, i32) {
    %c0_i32 = arith.constant 0 : i32
    %c0_i32_0 = arith.constant 0 : i32
    %c0_i32_1 = arith.constant 0 : i32
    return %arg0, %c0_i32, %c0_i32_0 : i32, i32, i32
  }
  func.func @transform_2(%arg0: i32) -> (i32, i32, i32) {
    %c0_i32 = arith.constant 0 : i32
    %c0_i32_0 = arith.constant 0 : i32
    %c0_i32_1 = arith.constant 0 : i32
    return %arg0, %c0_i32, %c0_i32_0 : i32, i32, i32
  }
  func.func @transform_3(%arg0: i32) -> (i32, i32, i32) {
    %c0_i32 = arith.constant 0 : i32
    %c0_i32_0 = arith.constant 0 : i32
    %c0_i32_1 = arith.constant 0 : i32
    return %arg0, %c0_i32, %c0_i32_0 : i32, i32, i32
  }
  func.func @transform_4(%arg0: i32) -> (i32, i32) {
    %c0_i32 = arith.constant 0 : i32
    %c0_i32_0 = arith.constant 0 : i32
    %c0_i32_1 = arith.constant 0 : i32
    return %c0_i32, %c0_i32_0 : i32, i32
  }
  func.func @transform_5(%arg0: i32) -> (i32, i32) {
    %c0_i32 = arith.constant 0 : i32
    %c0_i32_0 = arith.constant 0 : i32
    %c0_i32_1 = arith.constant 0 : i32
    return %c0_i32, %c0_i32_0 : i32, i32
  }
  func.func @transform_6(%arg0: i32) -> (i32, i32) {
    %c0_i32 = arith.constant 0 : i32
    %c0_i32_0 = arith.constant 0 : i32
    %c0_i32_1 = arith.constant 0 : i32
    return %c0_i32, %c0_i32_0 : i32, i32
  }
  func.func @transform_7(%arg0: i32) -> (i32, i32, i32) {
    %c0_i32 = arith.constant 0 : i32
    %c0_i32_0 = arith.constant 0 : i32
    %c0_i32_1 = arith.constant 0 : i32
    %c0_i32_2 = arith.constant 0 : i32
    return %c0_i32, %c0_i32_0, %c0_i32_1 : i32, i32, i32
  }
  func.func @transform_8(%arg0: i32) -> (i32, i32) {
    %c0_i32 = arith.constant 0 : i32
    %c0_i32_0 = arith.constant 0 : i32
    %c0_i32_1 = arith.constant 0 : i32
    return %c0_i32, %c0_i32_0 : i32, i32
  }
  func.func @transform_9(%arg0: i32) -> (i32, i32) {
    %c0_i32 = arith.constant 0 : i32
    %c0_i32_0 = arith.constant 0 : i32
    %c0_i32_1 = arith.constant 0 : i32
    return %c0_i32, %c0_i32_0 : i32, i32
  }
  func.func @transform_10(%arg0: i32) -> (i32, i32) {
    %c0_i32 = arith.constant 0 : i32
    %c0_i32_0 = arith.constant 0 : i32
    %c0_i32_1 = arith.constant 0 : i32
    return %c0_i32, %c0_i32_0 : i32, i32
  }
  func.func @transform_11(%arg0: i32) -> (i32, i32) {
    %c0_i32 = arith.constant 0 : i32
    %c0_i32_0 = arith.constant 0 : i32
    %c0_i32_1 = arith.constant 0 : i32
    return %c0_i32, %c0_i32_0 : i32, i32
  }
  func.func @transform_12(%arg0: i32) -> (i32, i32) {
    %c0_i32 = arith.constant 0 : i32
    %c0_i32_0 = arith.constant 0 : i32
    %c0_i32_1 = arith.constant 0 : i32
    return %c0_i32, %c0_i32_0 : i32, i32
  }
  func.func @transform_13(%arg0: i32) -> (i32, i32) {
    %c0_i32 = arith.constant 0 : i32
    %c0_i32_0 = arith.constant 0 : i32
    %c0_i32_1 = arith.constant 0 : i32
    return %c0_i32, %c0_i32_0 : i32, i32
  }
  func.func @transform_14(%arg0: i32) -> (i32, i32) {
    %c0_i32 = arith.constant 0 : i32
    %c0_i32_0 = arith.constant 0 : i32
    %c0_i32_1 = arith.constant 0 : i32
    return %c0_i32, %c0_i32_0 : i32, i32
  }
  func.func @transform_15(%arg0: i32) -> (i32, i32) {
    %c0_i32 = arith.constant 0 : i32
    %c0_i32_0 = arith.constant 0 : i32
    %c0_i32_1 = arith.constant 0 : i32
    return %c0_i32, %c0_i32_0 : i32, i32
  }
  func.func @transform_16(%arg0: i32) -> (i32, i32) {
    %c0_i32 = arith.constant 0 : i32
    %c0_i32_0 = arith.constant 0 : i32
    %c0_i32_1 = arith.constant 0 : i32
    return %c0_i32, %c0_i32_0 : i32, i32
  }
  func.func @transform_17(%arg0: i32) -> (i32, i32, i32) {
    %c0_i32 = arith.constant 0 : i32
    %c0_i32_0 = arith.constant 0 : i32
    %c0_i32_1 = arith.constant 0 : i32
    return %arg0, %c0_i32, %c0_i32_0 : i32, i32, i32
  }
}

module attributes {stable_mosaic.version = 11 : i64} {
  func.func @transformer_block_kernel(%arg0: i32, %arg1: memref<1x8x32xf32, #tpu.memory_space<vmem>>, %arg2: memref<1x8x32xf32, #tpu.memory_space<vmem>>, %arg3: memref<1x8x32xf32, #tpu.memory_space<vmem>>, %arg4: memref<1x1x8xf32, #tpu.memory_space<vmem>>, %arg5: memref<8x8xf32, #tpu.memory_space<vmem>>, %arg6: memref<8x8xf32, #tpu.memory_space<vmem>>, %arg7: memref<8x8xf32, #tpu.memory_space<vmem>>, %arg8: memref<4x8x32xf32, #tpu.memory_space<vmem>>, %arg9: memref<1x32xf32, #tpu.memory_space<vmem>>, %arg10: memref<32x64xf32, #tpu.memory_space<vmem>>, %arg11: memref<1x64xf32, #tpu.memory_space<vmem>>, %arg12: memref<64x32xf32, #tpu.memory_space<vmem>>, %arg13: memref<1x32xf32, #tpu.memory_space<vmem>>, %arg14: memref<1x32xf32, #tpu.memory_space<vmem>>, %arg15: memref<1x32xf32, #tpu.memory_space<vmem>>, %arg16: memref<1x32xf32, #tpu.memory_space<vmem>>, %arg17: memref<1x32xf32, #tpu.memory_space<vmem>>, %arg18: memref<1x8x32xf32, #tpu.memory_space<vmem>>, %arg19: memref<4x8x8xf32, #tpu.memory_space<vmem>>, %arg20: memref<4x8x8xf32, #tpu.memory_space<vmem>>, %arg21: memref<4x8x8xf32, #tpu.memory_space<vmem>>, %arg22: memref<1x8x32xf32, #tpu.memory_space<vmem>>) attributes {dimension_semantics = [#tpu.dimension_semantics<parallel>], iteration_bounds = array<i64: 4>, scalar_prefetch = 0 : i64, scratch_operands = 4 : i64, tpu.core_type = #tpu.core_type<tc>, window_params = [{transform_indices = @transform_0, window_bounds = array<i64: 1, 8, 32>}, {transform_indices = @transform_1, window_bounds = array<i64: 1, 8, 32>}, {transform_indices = @transform_2, window_bounds = array<i64: 1, 8, 32>}, {transform_indices = @transform_3, window_bounds = array<i64: 1, 1, 8>}, {pipeline_mode = #tpu.pipeline_mode<synchronous>, transform_indices = @transform_4, window_bounds = array<i64: 8, 8>}, {pipeline_mode = #tpu.pipeline_mode<synchronous>, transform_indices = @transform_5, window_bounds = array<i64: 8, 8>}, {pipeline_mode = #tpu.pipeline_mode<synchronous>, transform_indices = @transform_6, window_bounds = array<i64: 8, 8>}, {pipeline_mode = #tpu.pipeline_mode<synchronous>, transform_indices = @transform_7, window_bounds = array<i64: 4, 8, 32>}, {pipeline_mode = #tpu.pipeline_mode<synchronous>, transform_indices = @transform_8, window_bounds = array<i64: 1, 32>}, {pipeline_mode = #tpu.pipeline_mode<synchronous>, transform_indices = @transform_9, window_bounds = array<i64: 32, 64>}, {pipeline_mode = #tpu.pipeline_mode<synchronous>, transform_indices = @transform_10, window_bounds = array<i64: 1, 64>}, {pipeline_mode = #tpu.pipeline_mode<synchronous>, transform_indices = @transform_11, window_bounds = array<i64: 64, 32>}, {pipeline_mode = #tpu.pipeline_mode<synchronous>, transform_indices = @transform_12, window_bounds = array<i64: 1, 32>}, {pipeline_mode = #tpu.pipeline_mode<synchronous>, transform_indices = @transform_13, window_bounds = array<i64: 1, 32>}, {pipeline_mode = #tpu.pipeline_mode<synchronous>, transform_indices = @transform_14, window_bounds = array<i64: 1, 32>}, {pipeline_mode = #tpu.pipeline_mode<synchronous>, transform_indices = @transform_15, window_bounds = array<i64: 1, 32>}, {pipeline_mode = #tpu.pipeline_mode<synchronous>, transform_indices = @transform_16, window_bounds = array<i64: 1, 32>}, {transform_indices = @transform_17, window_bounds = array<i64: 1, 8, 32>}]} {
    %c0 = arith.constant 0 : index
    %c0_0 = arith.constant 0 : index
    %c0_1 = arith.constant 0 : index
    %0 = vector.load %arg1[%c0, %c0_0, %c0_1] : memref<1x8x32xf32, #tpu.memory_space<vmem>>, vector<1x8x32xf32>
    %1 = vector.shape_cast %0 : vector<1x8x32xf32> to vector<8x32xf32>
    %c0_2 = arith.constant 0 : index
    %c0_3 = arith.constant 0 : index
    %c0_4 = arith.constant 0 : index
    %2 = vector.load %arg2[%c0_2, %c0_3, %c0_4] : memref<1x8x32xf32, #tpu.memory_space<vmem>>, vector<1x8x32xf32>
    %3 = vector.shape_cast %2 : vector<1x8x32xf32> to vector<8x32xf32>
    %c0_5 = arith.constant 0 : index
    %c0_6 = arith.constant 0 : index
    %c0_7 = arith.constant 0 : index
    %4 = vector.load %arg3[%c0_5, %c0_6, %c0_7] : memref<1x8x32xf32, #tpu.memory_space<vmem>>, vector<1x8x32xf32>
    %5 = vector.shape_cast %4 : vector<1x8x32xf32> to vector<8x32xf32>
    %c0_8 = arith.constant 0 : index
    %c0_9 = arith.constant 0 : index
    %6 = vector.load %arg5[%c0_8, %c0_9] : memref<8x8xf32, #tpu.memory_space<vmem>>, vector<8x8xf32>
    %c0_10 = arith.constant 0 : index
    %c0_11 = arith.constant 0 : index
    %7 = vector.load %arg6[%c0_10, %c0_11] : memref<8x8xf32, #tpu.memory_space<vmem>>, vector<8x8xf32>
    %c0_12 = arith.constant 0 : index
    %c0_13 = arith.constant 0 : index
    %8 = vector.load %arg7[%c0_12, %c0_13] : memref<8x8xf32, #tpu.memory_space<vmem>>, vector<8x8xf32>
    %9 = vector.extract_strided_slice %1 {offsets = [0, 0], sizes = [8, 8], strides = [1, 1]} : vector<8x32xf32> to vector<8x8xf32>
    %cst = arith.constant dense<0.000000e+00> : vector<8x8xf32>
    %10 = tpu.matmul %9, %6, %cst {dimension_numbers = #tpu.dot_dimension_numbers<[1], [0], [0], [1], [0, 0, 1, 1], [], []>} : vector<8x8xf32>, vector<8x8xf32>, vector<8x8xf32> -> vector<8x8xf32>
    %11 = vector.extract_strided_slice %3 {offsets = [0, 0], sizes = [8, 8], strides = [1, 1]} : vector<8x32xf32> to vector<8x8xf32>
    %cst_14 = arith.constant dense<0.000000e+00> : vector<8x8xf32>
    %12 = tpu.matmul %11, %7, %cst_14 {dimension_numbers = #tpu.dot_dimension_numbers<[1], [0], [0], [1], [0, 0, 1, 1], [], []>} : vector<8x8xf32>, vector<8x8xf32>, vector<8x8xf32> -> vector<8x8xf32>
    %13 = vector.extract_strided_slice %5 {offsets = [0, 0], sizes = [8, 8], strides = [1, 1]} : vector<8x32xf32> to vector<8x8xf32>
    %cst_15 = arith.constant dense<0.000000e+00> : vector<8x8xf32>
    %14 = tpu.matmul %13, %8, %cst_15 {dimension_numbers = #tpu.dot_dimension_numbers<[1], [0], [0], [1], [0, 0, 1, 1], [], []>} : vector<8x8xf32>, vector<8x8xf32>, vector<8x8xf32> -> vector<8x8xf32>
    %c0_16 = arith.constant 0 : index
    %c0_17 = arith.constant 0 : index
    %c0_18 = arith.constant 0 : index
    %15 = vector.load %arg19[%c0_16, %c0_17, %c0_18] : memref<4x8x8xf32, #tpu.memory_space<vmem>>, vector<1x8x8xf32>
    %16 = vector.shape_cast %15 : vector<1x8x8xf32> to vector<8x8xf32>
    %17 = vector.shape_cast %10 : vector<8x8xf32> to vector<1x8x8xf32>
    tpu.vector_store %arg19[%c0_16, %c0_17, %c0_18], %17 {strides = array<i32>} : memref<4x8x8xf32, #tpu.memory_space<vmem>>, vector<1x8x8xf32>,
    %c0_19 = arith.constant 0 : index
    %c0_20 = arith.constant 0 : index
    %c0_21 = arith.constant 0 : index
    %18 = vector.load %arg20[%c0_19, %c0_20, %c0_21] : memref<4x8x8xf32, #tpu.memory_space<vmem>>, vector<1x8x8xf32>
    %19 = vector.shape_cast %18 : vector<1x8x8xf32> to vector<8x8xf32>
    %20 = vector.shape_cast %12 : vector<8x8xf32> to vector<1x8x8xf32>
    tpu.vector_store %arg20[%c0_19, %c0_20, %c0_21], %20 {strides = array<i32>} : memref<4x8x8xf32, #tpu.memory_space<vmem>>, vector<1x8x8xf32>,
    %c0_22 = arith.constant 0 : index
    %c0_23 = arith.constant 0 : index
    %c0_24 = arith.constant 0 : index
    %21 = vector.load %arg21[%c0_22, %c0_23, %c0_24] : memref<4x8x8xf32, #tpu.memory_space<vmem>>, vector<1x8x8xf32>
    %22 = vector.shape_cast %21 : vector<1x8x8xf32> to vector<8x8xf32>
    %23 = vector.shape_cast %14 : vector<8x8xf32> to vector<1x8x8xf32>
    tpu.vector_store %arg21[%c0_22, %c0_23, %c0_24], %23 {strides = array<i32>} : memref<4x8x8xf32, #tpu.memory_space<vmem>>, vector<1x8x8xf32>,
    %24 = vector.extract_strided_slice %1 {offsets = [0, 8], sizes = [8, 8], strides = [1, 1]} : vector<8x32xf32> to vector<8x8xf32>
    %cst_25 = arith.constant dense<0.000000e+00> : vector<8x8xf32>
    %25 = tpu.matmul %24, %6, %cst_25 {dimension_numbers = #tpu.dot_dimension_numbers<[1], [0], [0], [1], [0, 0, 1, 1], [], []>} : vector<8x8xf32>, vector<8x8xf32>, vector<8x8xf32> -> vector<8x8xf32>
    %26 = vector.extract_strided_slice %3 {offsets = [0, 8], sizes = [8, 8], strides = [1, 1]} : vector<8x32xf32> to vector<8x8xf32>
    %cst_26 = arith.constant dense<0.000000e+00> : vector<8x8xf32>
    %27 = tpu.matmul %26, %7, %cst_26 {dimension_numbers = #tpu.dot_dimension_numbers<[1], [0], [0], [1], [0, 0, 1, 1], [], []>} : vector<8x8xf32>, vector<8x8xf32>, vector<8x8xf32> -> vector<8x8xf32>
    %28 = vector.extract_strided_slice %5 {offsets = [0, 8], sizes = [8, 8], strides = [1, 1]} : vector<8x32xf32> to vector<8x8xf32>
    %cst_27 = arith.constant dense<0.000000e+00> : vector<8x8xf32>
    %29 = tpu.matmul %28, %8, %cst_27 {dimension_numbers = #tpu.dot_dimension_numbers<[1], [0], [0], [1], [0, 0, 1, 1], [], []>} : vector<8x8xf32>, vector<8x8xf32>, vector<8x8xf32> -> vector<8x8xf32>
    %c1 = arith.constant 1 : index
    %c0_28 = arith.constant 0 : index
    %c0_29 = arith.constant 0 : index
    %30 = vector.load %arg19[%c1, %c0_28, %c0_29] : memref<4x8x8xf32, #tpu.memory_space<vmem>>, vector<1x8x8xf32>
    %31 = vector.shape_cast %30 : vector<1x8x8xf32> to vector<8x8xf32>
    %32 = vector.shape_cast %25 : vector<8x8xf32> to vector<1x8x8xf32>
    tpu.vector_store %arg19[%c1, %c0_28, %c0_29], %32 {strides = array<i32>} : memref<4x8x8xf32, #tpu.memory_space<vmem>>, vector<1x8x8xf32>,
    %c1_30 = arith.constant 1 : index
    %c0_31 = arith.constant 0 : index
    %c0_32 = arith.constant 0 : index
    %33 = vector.load %arg20[%c1_30, %c0_31, %c0_32] : memref<4x8x8xf32, #tpu.memory_space<vmem>>, vector<1x8x8xf32>
    %34 = vector.shape_cast %33 : vector<1x8x8xf32> to vector<8x8xf32>
    %35 = vector.shape_cast %27 : vector<8x8xf32> to vector<1x8x8xf32>
    tpu.vector_store %arg20[%c1_30, %c0_31, %c0_32], %35 {strides = array<i32>} : memref<4x8x8xf32, #tpu.memory_space<vmem>>, vector<1x8x8xf32>,
    %c1_33 = arith.constant 1 : index
    %c0_34 = arith.constant 0 : index
    %c0_35 = arith.constant 0 : index
    %36 = vector.load %arg21[%c1_33, %c0_34, %c0_35] : memref<4x8x8xf32, #tpu.memory_space<vmem>>, vector<1x8x8xf32>
    %37 = vector.shape_cast %36 : vector<1x8x8xf32> to vector<8x8xf32>
    %38 = vector.shape_cast %29 : vector<8x8xf32> to vector<1x8x8xf32>
    tpu.vector_store %arg21[%c1_33, %c0_34, %c0_35], %38 {strides = array<i32>} : memref<4x8x8xf32, #tpu.memory_space<vmem>>, vector<1x8x8xf32>,
    %39 = vector.extract_strided_slice %1 {offsets = [0, 16], sizes = [8, 8], strides = [1, 1]} : vector<8x32xf32> to vector<8x8xf32>
    %cst_36 = arith.constant dense<0.000000e+00> : vector<8x8xf32>
    %40 = tpu.matmul %39, %6, %cst_36 {dimension_numbers = #tpu.dot_dimension_numbers<[1], [0], [0], [1], [0, 0, 1, 1], [], []>} : vector<8x8xf32>, vector<8x8xf32>, vector<8x8xf32> -> vector<8x8xf32>
    %41 = vector.extract_strided_slice %3 {offsets = [0, 16], sizes = [8, 8], strides = [1, 1]} : vector<8x32xf32> to vector<8x8xf32>
    %cst_37 = arith.constant dense<0.000000e+00> : vector<8x8xf32>
    %42 = tpu.matmul %41, %7, %cst_37 {dimension_numbers = #tpu.dot_dimension_numbers<[1], [0], [0], [1], [0, 0, 1, 1], [], []>} : vector<8x8xf32>, vector<8x8xf32>, vector<8x8xf32> -> vector<8x8xf32>
    %43 = vector.extract_strided_slice %5 {offsets = [0, 16], sizes = [8, 8], strides = [1, 1]} : vector<8x32xf32> to vector<8x8xf32>
    %cst_38 = arith.constant dense<0.000000e+00> : vector<8x8xf32>
    %44 = tpu.matmul %43, %8, %cst_38 {dimension_numbers = #tpu.dot_dimension_numbers<[1], [0], [0], [1], [0, 0, 1, 1], [], []>} : vector<8x8xf32>, vector<8x8xf32>, vector<8x8xf32> -> vector<8x8xf32>
    %c2 = arith.constant 2 : index
    %c0_39 = arith.constant 0 : index
    %c0_40 = arith.constant 0 : index
    %45 = vector.load %arg19[%c2, %c0_39, %c0_40] : memref<4x8x8xf32, #tpu.memory_space<vmem>>, vector<1x8x8xf32>
    %46 = vector.shape_cast %45 : vector<1x8x8xf32> to vector<8x8xf32>
    %47 = vector.shape_cast %40 : vector<8x8xf32> to vector<1x8x8xf32>
    tpu.vector_store %arg19[%c2, %c0_39, %c0_40], %47 {strides = array<i32>} : memref<4x8x8xf32, #tpu.memory_space<vmem>>, vector<1x8x8xf32>,
    %c2_41 = arith.constant 2 : index
    %c0_42 = arith.constant 0 : index
    %c0_43 = arith.constant 0 : index
    %48 = vector.load %arg20[%c2_41, %c0_42, %c0_43] : memref<4x8x8xf32, #tpu.memory_space<vmem>>, vector<1x8x8xf32>
    %49 = vector.shape_cast %48 : vector<1x8x8xf32> to vector<8x8xf32>
    %50 = vector.shape_cast %42 : vector<8x8xf32> to vector<1x8x8xf32>
    tpu.vector_store %arg20[%c2_41, %c0_42, %c0_43], %50 {strides = array<i32>} : memref<4x8x8xf32, #tpu.memory_space<vmem>>, vector<1x8x8xf32>,
    %c2_44 = arith.constant 2 : index
    %c0_45 = arith.constant 0 : index
    %c0_46 = arith.constant 0 : index
    %51 = vector.load %arg21[%c2_44, %c0_45, %c0_46] : memref<4x8x8xf32, #tpu.memory_space<vmem>>, vector<1x8x8xf32>
    %52 = vector.shape_cast %51 : vector<1x8x8xf32> to vector<8x8xf32>
    %53 = vector.shape_cast %44 : vector<8x8xf32> to vector<1x8x8xf32>
    tpu.vector_store %arg21[%c2_44, %c0_45, %c0_46], %53 {strides = array<i32>} : memref<4x8x8xf32, #tpu.memory_space<vmem>>, vector<1x8x8xf32>,
    %54 = vector.extract_strided_slice %1 {offsets = [0, 24], sizes = [8, 8], strides = [1, 1]} : vector<8x32xf32> to vector<8x8xf32>
    %cst_47 = arith.constant dense<0.000000e+00> : vector<8x8xf32>
    %55 = tpu.matmul %54, %6, %cst_47 {dimension_numbers = #tpu.dot_dimension_numbers<[1], [0], [0], [1], [0, 0, 1, 1], [], []>} : vector<8x8xf32>, vector<8x8xf32>, vector<8x8xf32> -> vector<8x8xf32>
    %56 = vector.extract_strided_slice %3 {offsets = [0, 24], sizes = [8, 8], strides = [1, 1]} : vector<8x32xf32> to vector<8x8xf32>
    %cst_48 = arith.constant dense<0.000000e+00> : vector<8x8xf32>
    %57 = tpu.matmul %56, %7, %cst_48 {dimension_numbers = #tpu.dot_dimension_numbers<[1], [0], [0], [1], [0, 0, 1, 1], [], []>} : vector<8x8xf32>, vector<8x8xf32>, vector<8x8xf32> -> vector<8x8xf32>
    %58 = vector.extract_strided_slice %5 {offsets = [0, 24], sizes = [8, 8], strides = [1, 1]} : vector<8x32xf32> to vector<8x8xf32>
    %cst_49 = arith.constant dense<0.000000e+00> : vector<8x8xf32>
    %59 = tpu.matmul %58, %8, %cst_49 {dimension_numbers = #tpu.dot_dimension_numbers<[1], [0], [0], [1], [0, 0, 1, 1], [], []>} : vector<8x8xf32>, vector<8x8xf32>, vector<8x8xf32> -> vector<8x8xf32>
    %c3 = arith.constant 3 : index
    %c0_50 = arith.constant 0 : index
    %c0_51 = arith.constant 0 : index
    %60 = vector.load %arg19[%c3, %c0_50, %c0_51] : memref<4x8x8xf32, #tpu.memory_space<vmem>>, vector<1x8x8xf32>
    %61 = vector.shape_cast %60 : vector<1x8x8xf32> to vector<8x8xf32>
    %62 = vector.shape_cast %55 : vector<8x8xf32> to vector<1x8x8xf32>
    tpu.vector_store %arg19[%c3, %c0_50, %c0_51], %62 {strides = array<i32>} : memref<4x8x8xf32, #tpu.memory_space<vmem>>, vector<1x8x8xf32>,
    %c3_52 = arith.constant 3 : index
    %c0_53 = arith.constant 0 : index
    %c0_54 = arith.constant 0 : index
    %63 = vector.load %arg20[%c3_52, %c0_53, %c0_54] : memref<4x8x8xf32, #tpu.memory_space<vmem>>, vector<1x8x8xf32>
    %64 = vector.shape_cast %63 : vector<1x8x8xf32> to vector<8x8xf32>
    %65 = vector.shape_cast %57 : vector<8x8xf32> to vector<1x8x8xf32>
    tpu.vector_store %arg20[%c3_52, %c0_53, %c0_54], %65 {strides = array<i32>} : memref<4x8x8xf32, #tpu.memory_space<vmem>>, vector<1x8x8xf32>,
    %c3_55 = arith.constant 3 : index
    %c0_56 = arith.constant 0 : index
    %c0_57 = arith.constant 0 : index
    %66 = vector.load %arg21[%c3_55, %c0_56, %c0_57] : memref<4x8x8xf32, #tpu.memory_space<vmem>>, vector<1x8x8xf32>
    %67 = vector.shape_cast %66 : vector<1x8x8xf32> to vector<8x8xf32>
    %68 = vector.shape_cast %59 : vector<8x8xf32> to vector<1x8x8xf32>
    tpu.vector_store %arg21[%c3_55, %c0_56, %c0_57], %68 {strides = array<i32>} : memref<4x8x8xf32, #tpu.memory_space<vmem>>, vector<1x8x8xf32>,
    %c0_58 = arith.constant 0 : index
    %c0_59 = arith.constant 0 : index
    %69 = vector.load %arg9[%c0_58, %c0_59] : memref<1x32xf32, #tpu.memory_space<vmem>>, vector<1x32xf32>
    %70 = vector.shape_cast %69 : vector<1x32xf32> to vector<1x1x32xf32>
    %71 = vector.broadcast %70 : vector<1x1x32xf32> to vector<1x8x32xf32>
    %c0_60 = arith.constant 0 : index
    %c0_61 = arith.constant 0 : index
    %c0_62 = arith.constant 0 : index
    %72 = vector.load %arg22[%c0_60, %c0_61, %c0_62] : memref<1x8x32xf32, #tpu.memory_space<vmem>>, vector<1x8x32xf32>
    tpu.vector_store %arg22[%c0_60, %c0_61, %c0_62], %71 {strides = array<i32>} : memref<1x8x32xf32, #tpu.memory_space<vmem>>, vector<1x8x32xf32>,
    %c0_63 = arith.constant 0 : index
    %c0_64 = arith.constant 0 : index
    %c0_65 = arith.constant 0 : index
    %73 = vector.load %arg4[%c0_63, %c0_64, %c0_65] : memref<1x1x8xf32, #tpu.memory_space<vmem>>, vector<1x1x8xf32>
    %74 = vector.shape_cast %73 : vector<1x1x8xf32> to vector<1x8xf32>
    %75 = vector.shape_cast %74 : vector<1x8xf32> to vector<1x8xf32>
    %76 = vector.broadcast %75 : vector<1x8xf32> to vector<8x8xf32>
    %c0_i32 = arith.constant 0 : i32
    %c0_i32_66 = arith.constant 0 : i32
    %77 = arith.addi %c0_i32_66, %c0_i32 : i32
    %78 = arith.index_cast %77 : i32 to index
    %c0_67 = arith.constant 0 : index
    %c0_68 = arith.constant 0 : index
    %79 = vector.load %arg19[%78, %c0_67, %c0_68] : memref<4x8x8xf32, #tpu.memory_space<vmem>>, vector<1x8x8xf32>
    %80 = vector.shape_cast %79 : vector<1x8x8xf32> to vector<8x8xf32>
    %c0_i32_69 = arith.constant 0 : i32
    %81 = arith.addi %c0_i32_69, %c0_i32 : i32
    %82 = arith.index_cast %81 : i32 to index
    %c0_70 = arith.constant 0 : index
    %c0_71 = arith.constant 0 : index
    %83 = vector.load %arg20[%82, %c0_70, %c0_71] : memref<4x8x8xf32, #tpu.memory_space<vmem>>, vector<1x8x8xf32>
    %84 = vector.shape_cast %83 : vector<1x8x8xf32> to vector<8x8xf32>
    %c0_i32_72 = arith.constant 0 : i32
    %85 = arith.addi %c0_i32_72, %c0_i32 : i32
    %86 = arith.index_cast %85 : i32 to index
    %c0_73 = arith.constant 0 : index
    %c0_74 = arith.constant 0 : index
    %87 = vector.load %arg21[%86, %c0_73, %c0_74] : memref<4x8x8xf32, #tpu.memory_space<vmem>>, vector<1x8x8xf32>
    %88 = vector.shape_cast %87 : vector<1x8x8xf32> to vector<8x8xf32>
    %cst_75 = arith.constant dense<0.000000e+00> : vector<8x8xf32>
    %89 = tpu.matmul %80, %84, %cst_75 {dimension_numbers = #tpu.dot_dimension_numbers<[1], [1], [0], [0], [0, 0, 1, 0], [], []>} : vector<8x8xf32>, vector<8x8xf32>, vector<8x8xf32> -> vector<8x8xf32>
    %90 = arith.addf %89, %76 : vector<8x8xf32>
    %cst_76 = arith.constant dense<0xFF800000> : vector<8xf32>
    %91 = vector.multi_reduction <maximumf>, %90, %cst_76 [1] : vector<8x8xf32> to vector<8xf32>
    %92 = vector.shape_cast %91 : vector<8xf32> to vector<8x1xf32>
    %93 = vector.broadcast %92 : vector<8x1xf32> to vector<8x8xf32>
    %94 = arith.subf %90, %93 : vector<8x8xf32>
    %95 = math.exp %94 : vector<8x8xf32>
    %cst_77 = arith.constant dense<0.000000e+00> : vector<8xf32>
    %96 = vector.multi_reduction <add>, %95, %cst_77 [1] : vector<8x8xf32> to vector<8xf32>
    %97 = vector.shape_cast %96 : vector<8xf32> to vector<8x1xf32>
    %98 = tpu.reciprocal %97 {approx = true} : vector<8x1xf32> -> vector<8x1xf32>
    %99 = arith.mulf %97, %98 : vector<8x1xf32>
    %cst_78 = arith.constant 2.000000e+00 : f32
    %100 = vector.broadcast %cst_78 : f32 to vector<8x1xf32>
    %101 = arith.subf %100, %99 : vector<8x1xf32>
    %102 = arith.mulf %98, %101 : vector<8x1xf32>
    %103 = vector.broadcast %102 : vector<8x1xf32> to vector<8x8xf32>
    %104 = arith.mulf %95, %103 : vector<8x8xf32>
    %cst_79 = arith.constant dense<0.000000e+00> : vector<8x8xf32>
    %105 = tpu.matmul %104, %88, %cst_79 {dimension_numbers = #tpu.dot_dimension_numbers<[1], [0], [0], [1], [0, 0, 1, 1], [], []>} : vector<8x8xf32>, vector<8x8xf32>, vector<8x8xf32> -> vector<8x8xf32>
    %c0_80 = arith.constant 0 : index
    %c0_81 = arith.constant 0 : index
    %c0_82 = arith.constant 0 : index
    %106 = vector.load %arg22[%c0_80, %c0_81, %c0_82] : memref<1x8x32xf32, #tpu.memory_space<vmem>>, vector<1x8x32xf32>
    %107 = vector.shape_cast %106 : vector<1x8x32xf32> to vector<8x32xf32>
    %108 = arith.index_cast %c0_i32 : i32 to index
    %c0_83 = arith.constant 0 : index
    %c0_84 = arith.constant 0 : index
    %109 = vector.load %arg8[%108, %c0_83, %c0_84] : memref<4x8x32xf32, #tpu.memory_space<vmem>>, vector<1x8x32xf32>
    %110 = vector.shape_cast %109 : vector<1x8x32xf32> to vector<8x32xf32>
    %cst_85 = arith.constant dense<0.000000e+00> : vector<8x32xf32>
    %111 = tpu.matmul %105, %110, %cst_85 {dimension_numbers = #tpu.dot_dimension_numbers<[1], [0], [0], [1], [0, 0, 1, 1], [], []>} : vector<8x8xf32>, vector<8x32xf32>, vector<8x32xf32> -> vector<8x32xf32>
    %112 = arith.addf %107, %111 : vector<8x32xf32>
    %c0_86 = arith.constant 0 : index
    %c0_87 = arith.constant 0 : index
    %c0_88 = arith.constant 0 : index
    %113 = vector.load %arg22[%c0_86, %c0_87, %c0_88] : memref<1x8x32xf32, #tpu.memory_space<vmem>>, vector<1x8x32xf32>
    %114 = vector.shape_cast %113 : vector<1x8x32xf32> to vector<8x32xf32>
    %115 = vector.shape_cast %112 : vector<8x32xf32> to vector<1x8x32xf32>
    tpu.vector_store %arg22[%c0_86, %c0_87, %c0_88], %115 {strides = array<i32>} : memref<1x8x32xf32, #tpu.memory_space<vmem>>, vector<1x8x32xf32>,
    %c1_i32 = arith.constant 1 : i32
    %c0_i32_89 = arith.constant 0 : i32
    %116 = arith.addi %c0_i32_89, %c1_i32 : i32
    %117 = arith.index_cast %116 : i32 to index
    %c0_90 = arith.constant 0 : index
    %c0_91 = arith.constant 0 : index
    %118 = vector.load %arg19[%117, %c0_90, %c0_91] : memref<4x8x8xf32, #tpu.memory_space<vmem>>, vector<1x8x8xf32>
    %119 = vector.shape_cast %118 : vector<1x8x8xf32> to vector<8x8xf32>
    %c0_i32_92 = arith.constant 0 : i32
    %120 = arith.addi %c0_i32_92, %c1_i32 : i32
    %121 = arith.index_cast %120 : i32 to index
    %c0_93 = arith.constant 0 : index
    %c0_94 = arith.constant 0 : index
    %122 = vector.load %arg20[%121, %c0_93, %c0_94] : memref<4x8x8xf32, #tpu.memory_space<vmem>>, vector<1x8x8xf32>
    %123 = vector.shape_cast %122 : vector<1x8x8xf32> to vector<8x8xf32>
    %c0_i32_95 = arith.constant 0 : i32
    %124 = arith.addi %c0_i32_95, %c1_i32 : i32
    %125 = arith.index_cast %124 : i32 to index
    %c0_96 = arith.constant 0 : index
    %c0_97 = arith.constant 0 : index
    %126 = vector.load %arg21[%125, %c0_96, %c0_97] : memref<4x8x8xf32, #tpu.memory_space<vmem>>, vector<1x8x8xf32>
    %127 = vector.shape_cast %126 : vector<1x8x8xf32> to vector<8x8xf32>
    %cst_98 = arith.constant dense<0.000000e+00> : vector<8x8xf32>
    %128 = tpu.matmul %119, %123, %cst_98 {dimension_numbers = #tpu.dot_dimension_numbers<[1], [1], [0], [0], [0, 0, 1, 0], [], []>} : vector<8x8xf32>, vector<8x8xf32>, vector<8x8xf32> -> vector<8x8xf32>
    %129 = arith.addf %128, %76 : vector<8x8xf32>
    %cst_99 = arith.constant dense<0xFF800000> : vector<8xf32>
    %130 = vector.multi_reduction <maximumf>, %129, %cst_99 [1] : vector<8x8xf32> to vector<8xf32>
    %131 = vector.shape_cast %130 : vector<8xf32> to vector<8x1xf32>
    %132 = vector.broadcast %131 : vector<8x1xf32> to vector<8x8xf32>
    %133 = arith.subf %129, %132 : vector<8x8xf32>
    %134 = math.exp %133 : vector<8x8xf32>
    %cst_100 = arith.constant dense<0.000000e+00> : vector<8xf32>
    %135 = vector.multi_reduction <add>, %134, %cst_100 [1] : vector<8x8xf32> to vector<8xf32>
    %136 = vector.shape_cast %135 : vector<8xf32> to vector<8x1xf32>
    %137 = tpu.reciprocal %136 {approx = true} : vector<8x1xf32> -> vector<8x1xf32>
    %138 = arith.mulf %136, %137 : vector<8x1xf32>
    %cst_101 = arith.constant 2.000000e+00 : f32
    %139 = vector.broadcast %cst_101 : f32 to vector<8x1xf32>
    %140 = arith.subf %139, %138 : vector<8x1xf32>
    %141 = arith.mulf %137, %140 : vector<8x1xf32>
    %142 = vector.broadcast %141 : vector<8x1xf32> to vector<8x8xf32>
    %143 = arith.mulf %134, %142 : vector<8x8xf32>
    %cst_102 = arith.constant dense<0.000000e+00> : vector<8x8xf32>
    %144 = tpu.matmul %143, %127, %cst_102 {dimension_numbers = #tpu.dot_dimension_numbers<[1], [0], [0], [1], [0, 0, 1, 1], [], []>} : vector<8x8xf32>, vector<8x8xf32>, vector<8x8xf32> -> vector<8x8xf32>
    %c0_103 = arith.constant 0 : index
    %c0_104 = arith.constant 0 : index
    %c0_105 = arith.constant 0 : index
    %145 = vector.load %arg22[%c0_103, %c0_104, %c0_105] : memref<1x8x32xf32, #tpu.memory_space<vmem>>, vector<1x8x32xf32>
    %146 = vector.shape_cast %145 : vector<1x8x32xf32> to vector<8x32xf32>
    %147 = arith.index_cast %c1_i32 : i32 to index
    %c0_106 = arith.constant 0 : index
    %c0_107 = arith.constant 0 : index
    %148 = vector.load %arg8[%147, %c0_106, %c0_107] : memref<4x8x32xf32, #tpu.memory_space<vmem>>, vector<1x8x32xf32>
    %149 = vector.shape_cast %148 : vector<1x8x32xf32> to vector<8x32xf32>
    %cst_108 = arith.constant dense<0.000000e+00> : vector<8x32xf32>
    %150 = tpu.matmul %144, %149, %cst_108 {dimension_numbers = #tpu.dot_dimension_numbers<[1], [0], [0], [1], [0, 0, 1, 1], [], []>} : vector<8x8xf32>, vector<8x32xf32>, vector<8x32xf32> -> vector<8x32xf32>
    %151 = arith.addf %146, %150 : vector<8x32xf32>
    %c0_109 = arith.constant 0 : index
    %c0_110 = arith.constant 0 : index
    %c0_111 = arith.constant 0 : index
    %152 = vector.load %arg22[%c0_109, %c0_110, %c0_111] : memref<1x8x32xf32, #tpu.memory_space<vmem>>, vector<1x8x32xf32>
    %153 = vector.shape_cast %152 : vector<1x8x32xf32> to vector<8x32xf32>
    %154 = vector.shape_cast %151 : vector<8x32xf32> to vector<1x8x32xf32>
    tpu.vector_store %arg22[%c0_109, %c0_110, %c0_111], %154 {strides = array<i32>} : memref<1x8x32xf32, #tpu.memory_space<vmem>>, vector<1x8x32xf32>,
    %c2_i32 = arith.constant 2 : i32
    %c0_i32_112 = arith.constant 0 : i32
    %155 = arith.addi %c0_i32_112, %c2_i32 : i32
    %156 = arith.index_cast %155 : i32 to index
    %c0_113 = arith.constant 0 : index
    %c0_114 = arith.constant 0 : index
    %157 = vector.load %arg19[%156, %c0_113, %c0_114] : memref<4x8x8xf32, #tpu.memory_space<vmem>>, vector<1x8x8xf32>
    %158 = vector.shape_cast %157 : vector<1x8x8xf32> to vector<8x8xf32>
    %c0_i32_115 = arith.constant 0 : i32
    %159 = arith.addi %c0_i32_115, %c2_i32 : i32
    %160 = arith.index_cast %159 : i32 to index
    %c0_116 = arith.constant 0 : index
    %c0_117 = arith.constant 0 : index
    %161 = vector.load %arg20[%160, %c0_116, %c0_117] : memref<4x8x8xf32, #tpu.memory_space<vmem>>, vector<1x8x8xf32>
    %162 = vector.shape_cast %161 : vector<1x8x8xf32> to vector<8x8xf32>
    %c0_i32_118 = arith.constant 0 : i32
    %163 = arith.addi %c0_i32_118, %c2_i32 : i32
    %164 = arith.index_cast %163 : i32 to index
    %c0_119 = arith.constant 0 : index
    %c0_120 = arith.constant 0 : index
    %165 = vector.load %arg21[%164, %c0_119, %c0_120] : memref<4x8x8xf32, #tpu.memory_space<vmem>>, vector<1x8x8xf32>
    %166 = vector.shape_cast %165 : vector<1x8x8xf32> to vector<8x8xf32>
    %cst_121 = arith.constant dense<0.000000e+00> : vector<8x8xf32>
    %167 = tpu.matmul %158, %162, %cst_121 {dimension_numbers = #tpu.dot_dimension_numbers<[1], [1], [0], [0], [0, 0, 1, 0], [], []>} : vector<8x8xf32>, vector<8x8xf32>, vector<8x8xf32> -> vector<8x8xf32>
    %168 = arith.addf %167, %76 : vector<8x8xf32>
    %cst_122 = arith.constant dense<0xFF800000> : vector<8xf32>
    %169 = vector.multi_reduction <maximumf>, %168, %cst_122 [1] : vector<8x8xf32> to vector<8xf32>
    %170 = vector.shape_cast %169 : vector<8xf32> to vector<8x1xf32>
    %171 = vector.broadcast %170 : vector<8x1xf32> to vector<8x8xf32>
    %172 = arith.subf %168, %171 : vector<8x8xf32>
    %173 = math.exp %172 : vector<8x8xf32>
    %cst_123 = arith.constant dense<0.000000e+00> : vector<8xf32>
    %174 = vector.multi_reduction <add>, %173, %cst_123 [1] : vector<8x8xf32> to vector<8xf32>
    %175 = vector.shape_cast %174 : vector<8xf32> to vector<8x1xf32>
    %176 = tpu.reciprocal %175 {approx = true} : vector<8x1xf32> -> vector<8x1xf32>
    %177 = arith.mulf %175, %176 : vector<8x1xf32>
    %cst_124 = arith.constant 2.000000e+00 : f32
    %178 = vector.broadcast %cst_124 : f32 to vector<8x1xf32>
    %179 = arith.subf %178, %177 : vector<8x1xf32>
    %180 = arith.mulf %176, %179 : vector<8x1xf32>
    %181 = vector.broadcast %180 : vector<8x1xf32> to vector<8x8xf32>
    %182 = arith.mulf %173, %181 : vector<8x8xf32>
    %cst_125 = arith.constant dense<0.000000e+00> : vector<8x8xf32>
    %183 = tpu.matmul %182, %166, %cst_125 {dimension_numbers = #tpu.dot_dimension_numbers<[1], [0], [0], [1], [0, 0, 1, 1], [], []>} : vector<8x8xf32>, vector<8x8xf32>, vector<8x8xf32> -> vector<8x8xf32>
    %c0_126 = arith.constant 0 : index
    %c0_127 = arith.constant 0 : index
    %c0_128 = arith.constant 0 : index
    %184 = vector.load %arg22[%c0_126, %c0_127, %c0_128] : memref<1x8x32xf32, #tpu.memory_space<vmem>>, vector<1x8x32xf32>
    %185 = vector.shape_cast %184 : vector<1x8x32xf32> to vector<8x32xf32>
    %186 = arith.index_cast %c2_i32 : i32 to index
    %c0_129 = arith.constant 0 : index
    %c0_130 = arith.constant 0 : index
    %187 = vector.load %arg8[%186, %c0_129, %c0_130] : memref<4x8x32xf32, #tpu.memory_space<vmem>>, vector<1x8x32xf32>
    %188 = vector.shape_cast %187 : vector<1x8x32xf32> to vector<8x32xf32>
    %cst_131 = arith.constant dense<0.000000e+00> : vector<8x32xf32>
    %189 = tpu.matmul %183, %188, %cst_131 {dimension_numbers = #tpu.dot_dimension_numbers<[1], [0], [0], [1], [0, 0, 1, 1], [], []>} : vector<8x8xf32>, vector<8x32xf32>, vector<8x32xf32> -> vector<8x32xf32>
    %190 = arith.addf %185, %189 : vector<8x32xf32>
    %c0_132 = arith.constant 0 : index
    %c0_133 = arith.constant 0 : index
    %c0_134 = arith.constant 0 : index
    %191 = vector.load %arg22[%c0_132, %c0_133, %c0_134] : memref<1x8x32xf32, #tpu.memory_space<vmem>>, vector<1x8x32xf32>
    %192 = vector.shape_cast %191 : vector<1x8x32xf32> to vector<8x32xf32>
    %193 = vector.shape_cast %190 : vector<8x32xf32> to vector<1x8x32xf32>
    tpu.vector_store %arg22[%c0_132, %c0_133, %c0_134], %193 {strides = array<i32>} : memref<1x8x32xf32, #tpu.memory_space<vmem>>, vector<1x8x32xf32>,
    %c3_i32 = arith.constant 3 : i32
    %c0_i32_135 = arith.constant 0 : i32
    %194 = arith.addi %c0_i32_135, %c3_i32 : i32
    %195 = arith.index_cast %194 : i32 to index
    %c0_136 = arith.constant 0 : index
    %c0_137 = arith.constant 0 : index
    %196 = vector.load %arg19[%195, %c0_136, %c0_137] : memref<4x8x8xf32, #tpu.memory_space<vmem>>, vector<1x8x8xf32>
    %197 = vector.shape_cast %196 : vector<1x8x8xf32> to vector<8x8xf32>
    %c0_i32_138 = arith.constant 0 : i32
    %198 = arith.addi %c0_i32_138, %c3_i32 : i32
    %199 = arith.index_cast %198 : i32 to index
    %c0_139 = arith.constant 0 : index
    %c0_140 = arith.constant 0 : index
    %200 = vector.load %arg20[%199, %c0_139, %c0_140] : memref<4x8x8xf32, #tpu.memory_space<vmem>>, vector<1x8x8xf32>
    %201 = vector.shape_cast %200 : vector<1x8x8xf32> to vector<8x8xf32>
    %c0_i32_141 = arith.constant 0 : i32
    %202 = arith.addi %c0_i32_141, %c3_i32 : i32
    %203 = arith.index_cast %202 : i32 to index
    %c0_142 = arith.constant 0 : index
    %c0_143 = arith.constant 0 : index
    %204 = vector.load %arg21[%203, %c0_142, %c0_143] : memref<4x8x8xf32, #tpu.memory_space<vmem>>, vector<1x8x8xf32>
    %205 = vector.shape_cast %204 : vector<1x8x8xf32> to vector<8x8xf32>
    %cst_144 = arith.constant dense<0.000000e+00> : vector<8x8xf32>
    %206 = tpu.matmul %197, %201, %cst_144 {dimension_numbers = #tpu.dot_dimension_numbers<[1], [1], [0], [0], [0, 0, 1, 0], [], []>} : vector<8x8xf32>, vector<8x8xf32>, vector<8x8xf32> -> vector<8x8xf32>
    %207 = arith.addf %206, %76 : vector<8x8xf32>
    %cst_145 = arith.constant dense<0xFF800000> : vector<8xf32>
    %208 = vector.multi_reduction <maximumf>, %207, %cst_145 [1] : vector<8x8xf32> to vector<8xf32>
    %209 = vector.shape_cast %208 : vector<8xf32> to vector<8x1xf32>
    %210 = vector.broadcast %209 : vector<8x1xf32> to vector<8x8xf32>
    %211 = arith.subf %207, %210 : vector<8x8xf32>
    %212 = math.exp %211 : vector<8x8xf32>
    %cst_146 = arith.constant dense<0.000000e+00> : vector<8xf32>
    %213 = vector.multi_reduction <add>, %212, %cst_146 [1] : vector<8x8xf32> to vector<8xf32>
    %214 = vector.shape_cast %213 : vector<8xf32> to vector<8x1xf32>
    %215 = tpu.reciprocal %214 {approx = true} : vector<8x1xf32> -> vector<8x1xf32>
    %216 = arith.mulf %214, %215 : vector<8x1xf32>
    %cst_147 = arith.constant 2.000000e+00 : f32
    %217 = vector.broadcast %cst_147 : f32 to vector<8x1xf32>
    %218 = arith.subf %217, %216 : vector<8x1xf32>
    %219 = arith.mulf %215, %218 : vector<8x1xf32>
    %220 = vector.broadcast %219 : vector<8x1xf32> to vector<8x8xf32>
    %221 = arith.mulf %212, %220 : vector<8x8xf32>
    %cst_148 = arith.constant dense<0.000000e+00> : vector<8x8xf32>
    %222 = tpu.matmul %221, %205, %cst_148 {dimension_numbers = #tpu.dot_dimension_numbers<[1], [0], [0], [1], [0, 0, 1, 1], [], []>} : vector<8x8xf32>, vector<8x8xf32>, vector<8x8xf32> -> vector<8x8xf32>
    %c0_149 = arith.constant 0 : index
    %c0_150 = arith.constant 0 : index
    %c0_151 = arith.constant 0 : index
    %223 = vector.load %arg22[%c0_149, %c0_150, %c0_151] : memref<1x8x32xf32, #tpu.memory_space<vmem>>, vector<1x8x32xf32>
    %224 = vector.shape_cast %223 : vector<1x8x32xf32> to vector<8x32xf32>
    %225 = arith.index_cast %c3_i32 : i32 to index
    %c0_152 = arith.constant 0 : index
    %c0_153 = arith.constant 0 : index
    %226 = vector.load %arg8[%225, %c0_152, %c0_153] : memref<4x8x32xf32, #tpu.memory_space<vmem>>, vector<1x8x32xf32>
    %227 = vector.shape_cast %226 : vector<1x8x32xf32> to vector<8x32xf32>
    %cst_154 = arith.constant dense<0.000000e+00> : vector<8x32xf32>
    %228 = tpu.matmul %222, %227, %cst_154 {dimension_numbers = #tpu.dot_dimension_numbers<[1], [0], [0], [1], [0, 0, 1, 1], [], []>} : vector<8x8xf32>, vector<8x32xf32>, vector<8x32xf32> -> vector<8x32xf32>
    %229 = arith.addf %224, %228 : vector<8x32xf32>
    %c0_155 = arith.constant 0 : index
    %c0_156 = arith.constant 0 : index
    %c0_157 = arith.constant 0 : index
    %230 = vector.load %arg22[%c0_155, %c0_156, %c0_157] : memref<1x8x32xf32, #tpu.memory_space<vmem>>, vector<1x8x32xf32>
    %231 = vector.shape_cast %230 : vector<1x8x32xf32> to vector<8x32xf32>
    %232 = vector.shape_cast %229 : vector<8x32xf32> to vector<1x8x32xf32>
    tpu.vector_store %arg22[%c0_155, %c0_156, %c0_157], %232 {strides = array<i32>} : memref<1x8x32xf32, #tpu.memory_space<vmem>>, vector<1x8x32xf32>,
    %c4_i32 = arith.constant 4 : i32
    %c0_158 = arith.constant 0 : index
    %c0_159 = arith.constant 0 : index
    %c0_160 = arith.constant 0 : index
    %233 = vector.load %arg22[%c0_158, %c0_159, %c0_160] : memref<1x8x32xf32, #tpu.memory_space<vmem>>, vector<1x8x32xf32>
    %234 = vector.shape_cast %233 : vector<1x8x32xf32> to vector<8x32xf32>
    %235 = arith.addf %234, %1 : vector<8x32xf32>
    %c0_161 = arith.constant 0 : index
    %c0_162 = arith.constant 0 : index
    %236 = vector.load %arg14[%c0_161, %c0_162] : memref<1x32xf32, #tpu.memory_space<vmem>>, vector<1x32xf32>
    %c0_163 = arith.constant 0 : index
    %c0_164 = arith.constant 0 : index
    %237 = vector.load %arg15[%c0_163, %c0_164] : memref<1x32xf32, #tpu.memory_space<vmem>>, vector<1x32xf32>
    %cst_165 = arith.constant dense<0.000000e+00> : vector<8xf32>
    %238 = vector.multi_reduction <add>, %235, %cst_165 [1] : vector<8x32xf32> to vector<8xf32>
    %239 = vector.shape_cast %238 : vector<8xf32> to vector<8x1xf32>
    %cst_166 = arith.constant 3.200000e+01 : f32
    %240 = vector.broadcast %cst_166 : f32 to vector<8x1xf32>
    %241 = arith.divf %239, %240 : vector<8x1xf32>
    %242 = vector.broadcast %241 : vector<8x1xf32> to vector<8x32xf32>
    %243 = arith.subf %235, %242 : vector<8x32xf32>
    %244 = arith.mulf %243, %243 : vector<8x32xf32>
    %cst_167 = arith.constant dense<0.000000e+00> : vector<8xf32>
    %245 = vector.multi_reduction <add>, %244, %cst_167 [1] : vector<8x32xf32> to vector<8xf32>
    %246 = vector.shape_cast %245 : vector<8xf32> to vector<8x1xf32>
    %cst_168 = arith.constant 3.200000e+01 : f32
    %247 = vector.broadcast %cst_168 : f32 to vector<8x1xf32>
    %248 = arith.divf %246, %247 : vector<8x1xf32>
    %249 = vector.broadcast %241 : vector<8x1xf32> to vector<8x32xf32>
    %250 = arith.subf %235, %249 : vector<8x32xf32>
    %cst_169 = arith.constant 9.99999974E-6 : f32
    %251 = vector.broadcast %cst_169 : f32 to vector<8x1xf32>
    %252 = arith.addf %248, %251 : vector<8x1xf32>
    %253 = math.rsqrt %252 : vector<8x1xf32>
    %254 = vector.broadcast %253 : vector<8x1xf32> to vector<8x32xf32>
    %255 = arith.mulf %250, %254 : vector<8x32xf32>
    %256 = vector.broadcast %236 : vector<1x32xf32> to vector<8x32xf32>
    %257 = arith.mulf %255, %256 : vector<8x32xf32>
    %258 = vector.broadcast %237 : vector<1x32xf32> to vector<8x32xf32>
    %259 = arith.addf %257, %258 : vector<8x32xf32>
    %c0_170 = arith.constant 0 : index
    %c0_171 = arith.constant 0 : index
    %260 = vector.load %arg10[%c0_170, %c0_171] : memref<32x64xf32, #tpu.memory_space<vmem>>, vector<32x64xf32>
    %cst_172 = arith.constant dense<0.000000e+00> : vector<8x64xf32>
    %261 = tpu.matmul %259, %260, %cst_172 {dimension_numbers = #tpu.dot_dimension_numbers<[1], [0], [0], [1], [0, 0, 1, 1], [], []>} : vector<8x32xf32>, vector<32x64xf32>, vector<8x64xf32> -> vector<8x64xf32>
    %c0_173 = arith.constant 0 : index
    %c0_174 = arith.constant 0 : index
    %262 = vector.load %arg11[%c0_173, %c0_174] : memref<1x64xf32, #tpu.memory_space<vmem>>, vector<1x64xf32>
    %263 = vector.broadcast %262 : vector<1x64xf32> to vector<8x64xf32>
    %264 = arith.addf %261, %263 : vector<8x64xf32>
    %cst_175 = arith.constant 0.000000e+00 : f32
    %265 = vector.broadcast %cst_175 : f32 to vector<8x64xf32>
    %266 = arith.maximumf %264, %265 : vector<8x64xf32>
    %c0_176 = arith.constant 0 : index
    %c0_177 = arith.constant 0 : index
    %267 = vector.load %arg12[%c0_176, %c0_177] : memref<64x32xf32, #tpu.memory_space<vmem>>, vector<64x32xf32>
    %cst_178 = arith.constant dense<0.000000e+00> : vector<8x32xf32>
    %268 = tpu.matmul %266, %267, %cst_178 {dimension_numbers = #tpu.dot_dimension_numbers<[1], [0], [0], [1], [0, 0, 1, 1], [], []>} : vector<8x64xf32>, vector<64x32xf32>, vector<8x32xf32> -> vector<8x32xf32>
    %c0_179 = arith.constant 0 : index
    %c0_180 = arith.constant 0 : index
    %269 = vector.load %arg13[%c0_179, %c0_180] : memref<1x32xf32, #tpu.memory_space<vmem>>, vector<1x32xf32>
    %270 = vector.broadcast %269 : vector<1x32xf32> to vector<8x32xf32>
    %271 = arith.addf %268, %270 : vector<8x32xf32>
    %272 = arith.addf %271, %259 : vector<8x32xf32>
    %c0_181 = arith.constant 0 : index
    %c0_182 = arith.constant 0 : index
    %273 = vector.load %arg16[%c0_181, %c0_182] : memref<1x32xf32, #tpu.memory_space<vmem>>, vector<1x32xf32>
    %c0_183 = arith.constant 0 : index
    %c0_184 = arith.constant 0 : index
    %274 = vector.load %arg17[%c0_183, %c0_184] : memref<1x32xf32, #tpu.memory_space<vmem>>, vector<1x32xf32>
    %cst_185 = arith.constant dense<0.000000e+00> : vector<8xf32>
    %275 = vector.multi_reduction <add>, %272, %cst_185 [1] : vector<8x32xf32> to vector<8xf32>
    %276 = vector.shape_cast %275 : vector<8xf32> to vector<8x1xf32>
    %cst_186 = arith.constant 3.200000e+01 : f32
    %277 = vector.broadcast %cst_186 : f32 to vector<8x1xf32>
    %278 = arith.divf %276, %277 : vector<8x1xf32>
    %279 = vector.broadcast %278 : vector<8x1xf32> to vector<8x32xf32>
    %280 = arith.subf %272, %279 : vector<8x32xf32>
    %281 = arith.mulf %280, %280 : vector<8x32xf32>
    %cst_187 = arith.constant dense<0.000000e+00> : vector<8xf32>
    %282 = vector.multi_reduction <add>, %281, %cst_187 [1] : vector<8x32xf32> to vector<8xf32>
    %283 = vector.shape_cast %282 : vector<8xf32> to vector<8x1xf32>
    %cst_188 = arith.constant 3.200000e+01 : f32
    %284 = vector.broadcast %cst_188 : f32 to vector<8x1xf32>
    %285 = arith.divf %283, %284 : vector<8x1xf32>
    %286 = vector.broadcast %278 : vector<8x1xf32> to vector<8x32xf32>
    %287 = arith.subf %272, %286 : vector<8x32xf32>
    %cst_189 = arith.constant 9.99999974E-6 : f32
    %288 = vector.broadcast %cst_189 : f32 to vector<8x1xf32>
    %289 = arith.addf %285, %288 : vector<8x1xf32>
    %290 = math.rsqrt %289 : vector<8x1xf32>
    %291 = vector.broadcast %290 : vector<8x1xf32> to vector<8x32xf32>
    %292 = arith.mulf %287, %291 : vector<8x32xf32>
    %293 = vector.broadcast %273 : vector<1x32xf32> to vector<8x32xf32>
    %294 = arith.mulf %292, %293 : vector<8x32xf32>
    %295 = vector.broadcast %274 : vector<1x32xf32> to vector<8x32xf32>
    %296 = arith.addf %294, %295 : vector<8x32xf32>
    %297 = vector.shape_cast %296 : vector<8x32xf32> to vector<1x8x32xf32>
    %c0_190 = arith.constant 0 : index
    %c0_191 = arith.constant 0 : index
    %c0_192 = arith.constant 0 : index
    %298 = vector.load %arg18[%c0_190, %c0_191, %c0_192] : memref<1x8x32xf32, #tpu.memory_space<vmem>>, vector<1x8x32xf32>
    tpu.vector_store %arg18[%c0_190, %c0_191, %c0_192], %297 {strides = array<i32>} : memref<1x8x32xf32, #tpu.memory_space<vmem>>, vector<1x8x32xf32>,
    return
  }
  func.func @transform_0(%arg0: i32) -> (i32, i32, i32) {
    %c0_i32 = arith.constant 0 : i32
    %c0_i32_0 = arith.constant 0 : i32
    %c0_i32_1 = arith.constant 0 : i32
    return %arg0, %c0_i32, %c0_i32_0 : i32, i32, i32
  }
  func.func @transform_1(%arg0: i32) -> (i32, i32, i32) {
    %c0_i32 = arith.constant 0 : i32
    %c0_i32_0 = arith.constant 0 : i32
    %c0_i32_1 = arith.constant 0 : i32
    return %arg0, %c0_i32, %c0_i32_0 : i32, i32, i32
  }
  func.func @transform_2(%arg0: i32) -> (i32, i32, i32) {
    %c0_i32 = arith.constant 0 : i32
    %c0_i32_0 = arith.constant 0 : i32
    %c0_i32_1 = arith.constant 0 : i32
    return %arg0, %c0_i32, %c0_i32_0 : i32, i32, i32
  }
  func.func @transform_3(%arg0: i32) -> (i32, i32, i32) {
    %c0_i32 = arith.constant 0 : i32
    %c0_i32_0 = arith.constant 0 : i32
    %c0_i32_1 = arith.constant 0 : i32
    return %arg0, %c0_i32, %c0_i32_0 : i32, i32, i32
  }
  func.func @transform_4(%arg0: i32) -> (i32, i32) {
    %c0_i32 = arith.constant 0 : i32
    %c0_i32_0 = arith.constant 0 : i32
    %c0_i32_1 = arith.constant 0 : i32
    return %c0_i32, %c0_i32_0 : i32, i32
  }
  func.func @transform_5(%arg0: i32) -> (i32, i32) {
    %c0_i32 = arith.constant 0 : i32
    %c0_i32_0 = arith.constant 0 : i32
    %c0_i32_1 = arith.constant 0 : i32
    return %c0_i32, %c0_i32_0 : i32, i32
  }
  func.func @transform_6(%arg0: i32) -> (i32, i32) {
    %c0_i32 = arith.constant 0 : i32
    %c0_i32_0 = arith.constant 0 : i32
    %c0_i32_1 = arith.constant 0 : i32
    return %c0_i32, %c0_i32_0 : i32, i32
  }
  func.func @transform_7(%arg0: i32) -> (i32, i32, i32) {
    %c0_i32 = arith.constant 0 : i32
    %c0_i32_0 = arith.constant 0 : i32
    %c0_i32_1 = arith.constant 0 : i32
    %c0_i32_2 = arith.constant 0 : i32
    return %c0_i32, %c0_i32_0, %c0_i32_1 : i32, i32, i32
  }
  func.func @transform_8(%arg0: i32) -> (i32, i32) {
    %c0_i32 = arith.constant 0 : i32
    %c0_i32_0 = arith.constant 0 : i32
    %c0_i32_1 = arith.constant 0 : i32
    return %c0_i32, %c0_i32_0 : i32, i32
  }
  func.func @transform_9(%arg0: i32) -> (i32, i32) {
    %c0_i32 = arith.constant 0 : i32
    %c0_i32_0 = arith.constant 0 : i32
    %c0_i32_1 = arith.constant 0 : i32
    return %c0_i32, %c0_i32_0 : i32, i32
  }
  func.func @transform_10(%arg0: i32) -> (i32, i32) {
    %c0_i32 = arith.constant 0 : i32
    %c0_i32_0 = arith.constant 0 : i32
    %c0_i32_1 = arith.constant 0 : i32
    return %c0_i32, %c0_i32_0 : i32, i32
  }
  func.func @transform_11(%arg0: i32) -> (i32, i32) {
    %c0_i32 = arith.constant 0 : i32
    %c0_i32_0 = arith.constant 0 : i32
    %c0_i32_1 = arith.constant 0 : i32
    return %c0_i32, %c0_i32_0 : i32, i32
  }
  func.func @transform_12(%arg0: i32) -> (i32, i32) {
    %c0_i32 = arith.constant 0 : i32
    %c0_i32_0 = arith.constant 0 : i32
    %c0_i32_1 = arith.constant 0 : i32
    return %c0_i32, %c0_i32_0 : i32, i32
  }
  func.func @transform_13(%arg0: i32) -> (i32, i32) {
    %c0_i32 = arith.constant 0 : i32
    %c0_i32_0 = arith.constant 0 : i32
    %c0_i32_1 = arith.constant 0 : i32
    return %c0_i32, %c0_i32_0 : i32, i32
  }
  func.func @transform_14(%arg0: i32) -> (i32, i32) {
    %c0_i32 = arith.constant 0 : i32
    %c0_i32_0 = arith.constant 0 : i32
    %c0_i32_1 = arith.constant 0 : i32
    return %c0_i32, %c0_i32_0 : i32, i32
  }
  func.func @transform_15(%arg0: i32) -> (i32, i32) {
    %c0_i32 = arith.constant 0 : i32
    %c0_i32_0 = arith.constant 0 : i32
    %c0_i32_1 = arith.constant 0 : i32
    return %c0_i32, %c0_i32_0 : i32, i32
  }
  func.func @transform_16(%arg0: i32) -> (i32, i32) {
    %c0_i32 = arith.constant 0 : i32
    %c0_i32_0 = arith.constant 0 : i32
    %c0_i32_1 = arith.constant 0 : i32
    return %c0_i32, %c0_i32_0 : i32, i32
  }
  func.func @transform_17(%arg0: i32) -> (i32, i32, i32) {
    %c0_i32 = arith.constant 0 : i32
    %c0_i32_0 = arith.constant 0 : i32
    %c0_i32_1 = arith.constant 0 : i32
    return %arg0, %c0_i32, %c0_i32_0 : i32, i32, i32
  }
}

</mosaic_0001>

<llo_original>
// kernel: tpu_custom_call.1
$region0: #{tpu_custom_call.1}
  #allocation0 [shape = 'u32[]', space=smem, size = 0x4, offset = 0x4, fixed_abs, tag = 'smem constant byte address 0x4 - core index']
  #allocation1 [shape = 'u32[144,128]{1,0:T(1,128)}', space=vmem, size = 0x12000, scoped, tag = 'internal scratch']
  #allocation2 [shape = 'f32[4,8,8]{2,1,0:T(8,128)}', space=vmem, size = 0x4000, scoped, tag = 'scratch operand']
  #allocation3 [shape = 'f32[4,8,8]{2,1,0:T(8,128)}', space=vmem, size = 0x4000, scoped, tag = 'scratch operand']
  #allocation4 [shape = 'f32[4,8,8]{2,1,0:T(8,128)}', space=vmem, size = 0x4000, scoped, tag = 'scratch operand']
  #allocation5 [shape = 'f32[1,8,32]{2,1,0:T(8,128)}', space=vmem, size = 0x1000, scoped, tag = 'scratch operand']
  %s0 = inlined_call_operand.vmem [shape: f32[4,8,32], index: 0, kind: input, shape index: {}]
  %s1 = inlined_call_operand.vmem [shape: f32[4,8,32], index: 1, kind: input, shape index: {}]
  %s2 = inlined_call_operand.vmem [shape: f32[4,8,32], index: 2, kind: input, shape index: {}]
  %s3 = inlined_call_operand.hbm [shape: f32[4,1,8], index: 3, kind: input, shape index: {}]
  %s4 = inlined_call_operand.hbm [shape: f32[8,8], index: 4, kind: input, shape index: {}]
  %s5 = inlined_call_operand.vmem [shape: f32[8,8], index: 5, kind: input, shape index: {}]
  %s6 = inlined_call_operand.hbm [shape: f32[8,8], index: 6, kind: input, shape index: {}]
  %s7 = inlined_call_operand.hbm [shape: f32[4,8,32], index: 7, kind: input, shape index: {}]
  %s8 = inlined_call_operand.vmem [shape: f32[1,32], index: 8, kind: input, shape index: {}]
  %s9 = inlined_call_operand.hbm [shape: f32[32,64], index: 9, kind: input, shape index: {}]
  %s10 = inlined_call_operand.vmem [shape: f32[1,64], index: 10, kind: input, shape index: {}]
  %s11 = inlined_call_operand.vmem [shape: f32[64,32], index: 11, kind: input, shape index: {}]
  %s12 = inlined_call_operand.vmem [shape: f32[1,32], index: 12, kind: input, shape index: {}]
  %s13 = inlined_call_operand.vmem [shape: f32[1,32], index: 13, kind: input, shape index: {}]
  %s14 = inlined_call_operand.vmem [shape: f32[1,32], index: 14, kind: input, shape index: {}]
  %s15 = inlined_call_operand.vmem [shape: f32[1,32], index: 15, kind: input, shape index: {}]
  %s16 = inlined_call_operand.vmem [shape: f32[1,32], index: 16, kind: input, shape index: {}]
  %s17 = inlined_call_operand.hbm [shape: f32[4,8,32], index: 17, kind: output, shape index: {}]
  %s18 = sld [smem:[#allocation0]]
  $region121: #{tpu_custom_call.1} parent=0
    _
  %s20 = ssub.s32 1, %s18
  %s21 = scalar_select 0, %s20, %s18
  $region1: #{tpu_custom_call.1} parent=0
    #allocation6 [shape = 'u8[1024]{0}', space=vmem, size = 0x400, scoped, tag = 'input window, operand 3']
    #allocation7 [shape = 's32[2]{0}', space=sflag, size = 0x8, scoped, tag = 'scoped memory for tpu_custom_call.1']
    #allocation8 [shape = 's32[2]{0}', space=sflag, size = 0x8, scoped, tag = 'scoped memory for tpu_custom_call.1']
    #allocation9 [shape = 'u8[4096]{0}', space=vmem, size = 0x1000, scoped, tag = 'input window, operand 4, single buffered']
    #allocation10 [shape = 's32[1]{0}', space=sflag, size = 0x4, scoped, tag = 'scoped memory for tpu_custom_call.1']
    #allocation11 [shape = 'u8[4096]{0}', space=vmem, size = 0x1000, scoped, tag = 'input window, operand 6, single buffered']
    #allocation12 [shape = 'u8[16384]{0}', space=vmem, size = 0x4000, scoped, tag = 'input window, operand 7, single buffered']
    #allocation13 [shape = 's32[1]{0}', space=sflag, size = 0x4, scoped, tag = 'scoped memory for tpu_custom_call.1']
    #allocation14 [shape = 'u8[16384]{0}', space=vmem, size = 0x4000, scoped, tag = 'input window, operand 9, single buffered']
    #allocation15 [shape = 'u8[8192]{0}', space=vmem, size = 0x2000, scoped, tag = 'output window, operand 0']
    %22 = vsyncpa [#allocation7], 0
    %s23 = scalar_lea.sflag [#allocation7], 1
    %24 = vsyncpa %s23, 0
    %25 = vsyncpa [#allocation10], 0
    %26 = vsyncpa [#allocation13], 0
    %27 = vsyncpa [#allocation8], 0
    %s28 = scalar_lea.sflag [#allocation8], 1
    %29 = vsyncpa %s28, 0
    loop: start=0, step=1, limit=6
    $region2: #{tpu_custom_call.1} parent=1 // loop_pre_header
      _
    $region3: #{tpu_custom_call.1} parent=1 // loop_header
      %s31 = sphi 0, %s35
      %p32 = scmp.ge.s32.totalorder %s31, 6
      %s41 = sphi 0, %s43
      %s44 = sphi 0, %s41
      %s45 = sphi 0, %s44
      %s61 = sphi 0, %s45
      %s67 = sphi 0, %s69
      %s70 = sphi 0, %s67
      %s71 = sphi 0, %s70
      %s87 = sphi 0, %s71
      %s93 = sphi 0, %s95
      %s96 = sphi 0, %s93
      %s97 = sphi 0, %s96
      %s113 = sphi 0, %s97
      %s119 = sphi 0, %s121
      %s122 = sphi 0, %s119
      %s123 = sphi 0, %s122
      %s139 = sphi 0, %s123
      %s143 = sphi 0, %s143
      %s145 = sphi 0, %s143
      %s146 = sphi 0, %s145
      %s160 = sphi 0, %s146
      %s164 = sphi 0, %s164
      %s166 = sphi 0, %s164
      %s167 = sphi 0, %s166
      %s181 = sphi 0, %s167
      %s185 = sphi 0, %s185
      %s187 = sphi 0, %s185
      %s188 = sphi 0, %s187
      %s202 = sphi 0, %s188
      %s206 = sphi 0, %s206
      %s208 = sphi 0, %s206
      %s209 = sphi 0, %s208
      %s223 = sphi 0, %s209
      %s227 = sphi 0, %s227
      %s229 = sphi 0, %s227
      %s230 = sphi 0, %s229
      %s244 = sphi 0, %s230
      %s248 = sphi 0, %s248
      %s250 = sphi 0, %s248
      %s251 = sphi 0, %s250
      %s265 = sphi 0, %s251
      %s269 = sphi 0, %s269
      %s271 = sphi 0, %s269
      %s272 = sphi 0, %s271
      %s286 = sphi 0, %s272
      %s290 = sphi 0, %s290
      %s292 = sphi 0, %s290
      %s293 = sphi 0, %s292
      %s307 = sphi 0, %s293
      %s311 = sphi 0, %s311
      %s313 = sphi 0, %s311
      %s314 = sphi 0, %s313
      %s328 = sphi 0, %s314
      %s332 = sphi 0, %s332
      %s334 = sphi 0, %s332
      %s335 = sphi 0, %s334
      %s349 = sphi 0, %s335
      %s353 = sphi 0, %s353
      %s355 = sphi 0, %s353
      %s356 = sphi 0, %s355
      %s370 = sphi 0, %s356
      %s374 = sphi 0, %s374
      %s376 = sphi 0, %s374
      %s377 = sphi 0, %s376
      %s391 = sphi 0, %s377
      %s395 = sphi 0, %s395
      %s397 = sphi 0, %s395
      %s398 = sphi 0, %s397
      %s412 = sphi 0, %s398
      %s418 = sphi 0, %s420
      %s421 = sphi 0, %s418
      %s422 = sphi 0, %s421
      %s438 = sphi 0, %s422
    $region4: #{tpu_custom_call.1} parent=1 // loop_header_branch
      %34 = sbr.rel (%p32) target = $region8
    $region5: #{tpu_custom_call.1} parent=1 // loop_body
      %s36 = ssub.s32 %s31, 1
      %s37 = ssub.s32 %s31, 2
      %s38 = sadd.s32 %s31, 1
      %s39 = ssub.s32 %s31, %s38
      %p40 = scmp.eq.s32.totalorder %s39, 0
      %s42 = sadd.s32 %s41, 1
      %s43 = scalar_select %p40, %s41, %s42
      %p46 = pneg %p40
      %p47 = scmp.eq.s32.totalorder %s31, 3
      %p48 = por %p46, %p47
      %p49 = scmp.ne.s32.totalorder %s41, %s44
      %p50 = scmp.eq.s32.totalorder %s31, 0
      %p51 = por %p49, %p50
      %p52 = scmp.ne.s32.totalorder %s41, %s44
      %p53 = scmp.eq.s32.totalorder %s36, 3
      %p54 = por %p52, %p53
      %p55 = scmp.ne.s32.totalorder %s44, %s45
      %p56 = scmp.eq.s32.totalorder %s36, 0
      %p57 = por %p55, %p56
      %p58 = scmp.ne.s32.totalorder %s44, %s45
      %p59 = scmp.eq.s32.totalorder %s37, 3
      %p60 = por %p58, %p59
      %p62 = scmp.ne.s32.totalorder %s45, %s61
      %p63 = scmp.eq.s32.totalorder %s37, 0
      %p64 = por %p62, %p63
      %s65 = ssub.s32 %s31, %s38
      %p66 = scmp.eq.s32.totalorder %s65, 0
      %s68 = sadd.s32 %s67, 1
      %s69 = scalar_select %p66, %s67, %s68
      %p72 = pneg %p66
      %p73 = scmp.eq.s32.totalorder %s31, 3
      %p74 = por %p72, %p73
      %p75 = scmp.ne.s32.totalorder %s67, %s70
      %p76 = scmp.eq.s32.totalorder %s31, 0
      %p77 = por %p75, %p76
      %p78 = scmp.ne.s32.totalorder %s67, %s70
      %p79 = scmp.eq.s32.totalorder %s36, 3
      %p80 = por %p78, %p79
      %p81 = scmp.ne.s32.totalorder %s70, %s71
      %p82 = scmp.eq.s32.totalorder %s36, 0
      %p83 = por %p81, %p82
      %p84 = scmp.ne.s32.totalorder %s70, %s71
      %p85 = scmp.eq.s32.totalorder %s37, 3
      %p86 = por %p84, %p85
      %p88 = scmp.ne.s32.totalorder %s71, %s87
      %p89 = scmp.eq.s32.totalorder %s37, 0
      %p90 = por %p88, %p89
      %s91 = ssub.s32 %s31, %s38
      %p92 = scmp.eq.s32.totalorder %s91, 0
      %s94 = sadd.s32 %s93, 1
      %s95 = scalar_select %p92, %s93, %s94
      %p98 = pneg %p92
      %p99 = scmp.eq.s32.totalorder %s31, 3
      %p100 = por %p98, %p99
      %p101 = scmp.ne.s32.totalorder %s93, %s96
      %p102 = scmp.eq.s32.totalorder %s31, 0
      %p103 = por %p101, %p102
      %p104 = scmp.ne.s32.totalorder %s93, %s96
      %p105 = scmp.eq.s32.totalorder %s36, 3
      %p106 = por %p104, %p105
      %p107 = scmp.ne.s32.totalorder %s96, %s97
      %p108 = scmp.eq.s32.totalorder %s36, 0
      %p109 = por %p107, %p108
      %p110 = scmp.ne.s32.totalorder %s96, %s97
      %p111 = scmp.eq.s32.totalorder %s37, 3
      %p112 = por %p110, %p111
      %p114 = scmp.ne.s32.totalorder %s97, %s113
      %p115 = scmp.eq.s32.totalorder %s37, 0
      %p116 = por %p114, %p115
      %s117 = ssub.s32 %s31, %s38
      %p118 = scmp.eq.s32.totalorder %s117, 0
      %s120 = sadd.s32 %s119, 1
      %s121 = scalar_select %p118, %s119, %s120
      %p124 = pneg %p118
      %p125 = scmp.eq.s32.totalorder %s31, 3
      %p126 = por %p124, %p125
      %p127 = scmp.ne.s32.totalorder %s119, %s122
      %p128 = scmp.eq.s32.totalorder %s31, 0
      %p129 = por %p127, %p128
      %p130 = scmp.ne.s32.totalorder %s119, %s122
      %p131 = scmp.eq.s32.totalorder %s36, 3
      %p132 = por %p130, %p131
      %p133 = scmp.ne.s32.totalorder %s122, %s123
      %p134 = scmp.eq.s32.totalorder %s36, 0
      %p135 = por %p133, %p134
      %p136 = scmp.ne.s32.totalorder %s122, %s123
      %p137 = scmp.eq.s32.totalorder %s37, 3
      %p138 = por %p136, %p137
      %p140 = scmp.ne.s32.totalorder %s123, %s139
      %p141 = scmp.eq.s32.totalorder %s37, 0
      %p142 = por %p140, %p141
      %s144 = sadd.s32 %s143, 1
      %p147 = scmp.eq.s32.totalorder %s31, 3
      %p148 = scmp.ne.s32.totalorder %s143, %s145
      %p149 = scmp.eq.s32.totalorder %s31, 0
      %p150 = por %p148, %p149
      %p151 = scmp.ne.s32.totalorder %s143, %s145
      %p152 = scmp.eq.s32.totalorder %s36, 3
      %p153 = por %p151, %p152
      %p154 = scmp.ne.s32.totalorder %s145, %s146
      %p155 = scmp.eq.s32.totalorder %s36, 0
      %p156 = por %p154, %p155
      %p157 = scmp.ne.s32.totalorder %s145, %s146
      %p158 = scmp.eq.s32.totalorder %s37, 3
      %p159 = por %p157, %p158
      %p161 = scmp.ne.s32.totalorder %s146, %s160
      %p162 = scmp.eq.s32.totalorder %s37, 0
      %p163 = por %p161, %p162
      %s165 = sadd.s32 %s164, 1
      %p168 = scmp.eq.s32.totalorder %s31, 3
      %p169 = scmp.ne.s32.totalorder %s164, %s166
      %p170 = scmp.eq.s32.totalorder %s31, 0
      %p171 = por %p169, %p170
      %p172 = scmp.ne.s32.totalorder %s164, %s166
      %p173 = scmp.eq.s32.totalorder %s36, 3
      %p174 = por %p172, %p173
      %p175 = scmp.ne.s32.totalorder %s166, %s167
      %p176 = scmp.eq.s32.totalorder %s36, 0
      %p177 = por %p175, %p176
      %p178 = scmp.ne.s32.totalorder %s166, %s167
      %p179 = scmp.eq.s32.totalorder %s37, 3
      %p180 = por %p178, %p179
      %p182 = scmp.ne.s32.totalorder %s167, %s181
      %p183 = scmp.eq.s32.totalorder %s37, 0
      %p184 = por %p182, %p183
      %s186 = sadd.s32 %s185, 1
      %p189 = scmp.eq.s32.totalorder %s31, 3
      %p190 = scmp.ne.s32.totalorder %s185, %s187
      %p191 = scmp.eq.s32.totalorder %s31, 0
      %p192 = por %p190, %p191
      %p193 = scmp.ne.s32.totalorder %s185, %s187
      %p194 = scmp.eq.s32.totalorder %s36, 3
      %p195 = por %p193, %p194
      %p196 = scmp.ne.s32.totalorder %s187, %s188
      %p197 = scmp.eq.s32.totalorder %s36, 0
      %p198 = por %p196, %p197
      %p199 = scmp.ne.s32.totalorder %s187, %s188
      %p200 = scmp.eq.s32.totalorder %s37, 3
      %p201 = por %p199, %p200
      %p203 = scmp.ne.s32.totalorder %s188, %s202
      %p204 = scmp.eq.s32.totalorder %s37, 0
      %p205 = por %p203, %p204
      %s207 = sadd.s32 %s206, 1
      %p210 = scmp.eq.s32.totalorder %s31, 3
      %p211 = scmp.ne.s32.totalorder %s206, %s208
      %p212 = scmp.eq.s32.totalorder %s31, 0
      %p213 = por %p211, %p212
      %p214 = scmp.ne.s32.totalorder %s206, %s208
      %p215 = scmp.eq.s32.totalorder %s36, 3
      %p216 = por %p214, %p215
      %p217 = scmp.ne.s32.totalorder %s208, %s209
      %p218 = scmp.eq.s32.totalorder %s36, 0
      %p219 = por %p217, %p218
      %p220 = scmp.ne.s32.totalorder %s208, %s209
      %p221 = scmp.eq.s32.totalorder %s37, 3
      %p222 = por %p220, %p221
      %p224 = scmp.ne.s32.totalorder %s209, %s223
      %p225 = scmp.eq.s32.totalorder %s37, 0
      %p226 = por %p224, %p225
      %s228 = sadd.s32 %s227, 1
      %p231 = scmp.eq.s32.totalorder %s31, 3
      %p232 = scmp.ne.s32.totalorder %s227, %s229
      %p233 = scmp.eq.s32.totalorder %s31, 0
      %p234 = por %p232, %p233
      %p235 = scmp.ne.s32.totalorder %s227, %s229
      %p236 = scmp.eq.s32.totalorder %s36, 3
      %p237 = por %p235, %p236
      %p238 = scmp.ne.s32.totalorder %s229, %s230
      %p239 = scmp.eq.s32.totalorder %s36, 0
      %p240 = por %p238, %p239
      %p241 = scmp.ne.s32.totalorder %s229, %s230
      %p242 = scmp.eq.s32.totalorder %s37, 3
      %p243 = por %p241, %p242
      %p245 = scmp.ne.s32.totalorder %s230, %s244
      %p246 = scmp.eq.s32.totalorder %s37, 0
      %p247 = por %p245, %p246
      %s249 = sadd.s32 %s248, 1
      %p252 = scmp.eq.s32.totalorder %s31, 3
      %p253 = scmp.ne.s32.totalorder %s248, %s250
      %p254 = scmp.eq.s32.totalorder %s31, 0
      %p255 = por %p253, %p254
      %p256 = scmp.ne.s32.totalorder %s248, %s250
      %p257 = scmp.eq.s32.totalorder %s36, 3
      %p258 = por %p256, %p257
      %p259 = scmp.ne.s32.totalorder %s250, %s251
      %p260 = scmp.eq.s32.totalorder %s36, 0
      %p261 = por %p259, %p260
      %p262 = scmp.ne.s32.totalorder %s250, %s251
      %p263 = scmp.eq.s32.totalorder %s37, 3
      %p264 = por %p262, %p263
      %p266 = scmp.ne.s32.totalorder %s251, %s265
      %p267 = scmp.eq.s32.totalorder %s37, 0
      %p268 = por %p266, %p267
      %s270 = sadd.s32 %s269, 1
      %p273 = scmp.eq.s32.totalorder %s31, 3
      %p274 = scmp.ne.s32.totalorder %s269, %s271
      %p275 = scmp.eq.s32.totalorder %s31, 0
      %p276 = por %p274, %p275
      %p277 = scmp.ne.s32.totalorder %s269, %s271
      %p278 = scmp.eq.s32.totalorder %s36, 3
      %p279 = por %p277, %p278
      %p280 = scmp.ne.s32.totalorder %s271, %s272
      %p281 = scmp.eq.s32.totalorder %s36, 0
      %p282 = por %p280, %p281
      %p283 = scmp.ne.s32.totalorder %s271, %s272
      %p284 = scmp.eq.s32.totalorder %s37, 3
      %p285 = por %p283, %p284
      %p287 = scmp.ne.s32.totalorder %s272, %s286
      %p288 = scmp.eq.s32.totalorder %s37, 0
      %p289 = por %p287, %p288
      %s291 = sadd.s32 %s290, 1
      %p294 = scmp.eq.s32.totalorder %s31, 3
      %p295 = scmp.ne.s32.totalorder %s290, %s292
      %p296 = scmp.eq.s32.totalorder %s31, 0
      %p297 = por %p295, %p296
      %p298 = scmp.ne.s32.totalorder %s290, %s292
      %p299 = scmp.eq.s32.totalorder %s36, 3
      %p300 = por %p298, %p299
      %p301 = scmp.ne.s32.totalorder %s292, %s293
      %p302 = scmp.eq.s32.totalorder %s36, 0
      %p303 = por %p301, %p302
      %p304 = scmp.ne.s32.totalorder %s292, %s293
      %p305 = scmp.eq.s32.totalorder %s37, 3
      %p306 = por %p304, %p305
      %p308 = scmp.ne.s32.totalorder %s293, %s307
      %p309 = scmp.eq.s32.totalorder %s37, 0
      %p310 = por %p308, %p309
      %s312 = sadd.s32 %s311, 1
      %p315 = scmp.eq.s32.totalorder %s31, 3
      %p316 = scmp.ne.s32.totalorder %s311, %s313
      %p317 = scmp.eq.s32.totalorder %s31, 0
      %p318 = por %p316, %p317
      %p319 = scmp.ne.s32.totalorder %s311, %s313
      %p320 = scmp.eq.s32.totalorder %s36, 3
      %p321 = por %p319, %p320
      %p322 = scmp.ne.s32.totalorder %s313, %s314
      %p323 = scmp.eq.s32.totalorder %s36, 0
      %p324 = por %p322, %p323
      %p325 = scmp.ne.s32.totalorder %s313, %s314
      %p326 = scmp.eq.s32.totalorder %s37, 3
      %p327 = por %p325, %p326
      %p329 = scmp.ne.s32.totalorder %s314, %s328
      %p330 = scmp.eq.s32.totalorder %s37, 0
      %p331 = por %p329, %p330
      %s333 = sadd.s32 %s332, 1
      %p336 = scmp.eq.s32.totalorder %s31, 3
      %p337 = scmp.ne.s32.totalorder %s332, %s334
      %p338 = scmp.eq.s32.totalorder %s31, 0
      %p339 = por %p337, %p338
      %p340 = scmp.ne.s32.totalorder %s332, %s334
      %p341 = scmp.eq.s32.totalorder %s36, 3
      %p342 = por %p340, %p341
      %p343 = scmp.ne.s32.totalorder %s334, %s335
      %p344 = scmp.eq.s32.totalorder %s36, 0
      %p345 = por %p343, %p344
      %p346 = scmp.ne.s32.totalorder %s334, %s335
      %p347 = scmp.eq.s32.totalorder %s37, 3
      %p348 = por %p346, %p347
      %p350 = scmp.ne.s32.totalorder %s335, %s349
      %p351 = scmp.eq.s32.totalorder %s37, 0
      %p352 = por %p350, %p351
      %s354 = sadd.s32 %s353, 1
      %p357 = scmp.eq.s32.totalorder %s31, 3
      %p358 = scmp.ne.s32.totalorder %s353, %s355
      %p359 = scmp.eq.s32.totalorder %s31, 0
      %p360 = por %p358, %p359
      %p361 = scmp.ne.s32.totalorder %s353, %s355
      %p362 = scmp.eq.s32.totalorder %s36, 3
      %p363 = por %p361, %p362
      %p364 = scmp.ne.s32.totalorder %s355, %s356
      %p365 = scmp.eq.s32.totalorder %s36, 0
      %p366 = por %p364, %p365
      %p367 = scmp.ne.s32.totalorder %s355, %s356
      %p368 = scmp.eq.s32.totalorder %s37, 3
      %p369 = por %p367, %p368
      %p371 = scmp.ne.s32.totalorder %s356, %s370
      %p372 = scmp.eq.s32.totalorder %s37, 0
      %p373 = por %p371, %p372
      %s375 = sadd.s32 %s374, 1
      %p378 = scmp.eq.s32.totalorder %s31, 3
      %p379 = scmp.ne.s32.totalorder %s374, %s376
      %p380 = scmp.eq.s32.totalorder %s31, 0
      %p381 = por %p379, %p380
      %p382 = scmp.ne.s32.totalorder %s374, %s376
      %p383 = scmp.eq.s32.totalorder %s36, 3
      %p384 = por %p382, %p383
      %p385 = scmp.ne.s32.totalorder %s376, %s377
      %p386 = scmp.eq.s32.totalorder %s36, 0
      %p387 = por %p385, %p386
      %p388 = scmp.ne.s32.totalorder %s376, %s377
      %p389 = scmp.eq.s32.totalorder %s37, 3
      %p390 = por %p388, %p389
      %p392 = scmp.ne.s32.totalorder %s377, %s391
      %p393 = scmp.eq.s32.totalorder %s37, 0
      %p394 = por %p392, %p393
      %s396 = sadd.s32 %s395, 1
      %p399 = scmp.eq.s32.totalorder %s31, 3
      %p400 = scmp.ne.s32.totalorder %s395, %s397
      %p401 = scmp.eq.s32.totalorder %s31, 0
      %p402 = por %p400, %p401
      %p403 = scmp.ne.s32.totalorder %s395, %s397
      %p404 = scmp.eq.s32.totalorder %s36, 3
      %p405 = por %p403, %p404
      %p406 = scmp.ne.s32.totalorder %s397, %s398
      %p407 = scmp.eq.s32.totalorder %s36, 0
      %p408 = por %p406, %p407
      %p409 = scmp.ne.s32.totalorder %s397, %s398
      %p410 = scmp.eq.s32.totalorder %s37, 3
      %p411 = por %p409, %p410
      %p413 = scmp.ne.s32.totalorder %s398, %s412
      %p414 = scmp.eq.s32.totalorder %s37, 0
      %p415 = por %p413, %p414
      %s416 = ssub.s32 %s31, %s38
      %p417 = scmp.eq.s32.totalorder %s416, 0
      %s419 = sadd.s32 %s418, 1
      %s420 = scalar_select %p417, %s418, %s419
      %p423 = pneg %p417
      %p424 = scmp.eq.s32.totalorder %s31, 3
      %p425 = por %p423, %p424
      %p426 = scmp.ne.s32.totalorder %s418, %s421
      %p427 = scmp.eq.s32.totalorder %s31, 0
      %p428 = por %p426, %p427
      %p429 = scmp.ne.s32.totalorder %s418, %s421
      %p430 = scmp.eq.s32.totalorder %s36, 3
      %p431 = por %p429, %p430
      %p432 = scmp.ne.s32.totalorder %s421, %s422
      %p433 = scmp.eq.s32.totalorder %s36, 0
      %p434 = por %p432, %p433
      %p435 = scmp.ne.s32.totalorder %s421, %s422
      %p436 = scmp.eq.s32.totalorder %s37, 3
      %p437 = por %p435, %p436
      %p439 = scmp.ne.s32.totalorder %s422, %s438
      %p440 = scmp.eq.s32.totalorder %s37, 0
      %p441 = por %p439, %p440
      %p442 = scmp.le.s32.totalorder 1, %s31
      %p443 = scmp.lt.s32.totalorder %s31, 5
      %p444 = pnand %p442, %p443
      %p445 = pneg %p444
      // Predicated region
      $region9: #{tpu_custom_call.1} parent=5 // pred_check
        _
      $region10: #{tpu_custom_call.1} parent=5 // pred_check_branch
        %447 = sbr.rel (%p444) target = $region12
      $region11: #{tpu_custom_call.1} parent=5 // pred_region
        %s448 = ssub.s32 %s31, 1
        // Predicated region
        $region13: #{tpu_custom_call.1} parent=11 // pred_check
          %p449 = pneg %p156
        $region14: #{tpu_custom_call.1} parent=11 // pred_check_branch
          %451 = sbr.rel (%p449) target = $region16
        $region15: #{tpu_custom_call.1} parent=11 // pred_region
          %s453 = ssub.s32 128, 128
          %454 = vsyncadd [#allocation10], %s453
          %s456 = sshll.u32 [#allocation9], 4
          %s457 = int_to_ptr.vmem [resolvable:$true] %s456
          %459 = dma.hbm_to_vmem [thread:$0]  %s4, 128, %s457, [#allocation10]
        $region16: #{tpu_custom_call.1} parent=11 // pred_fallthru
          _
        // Predicated region
        $region17: #{tpu_custom_call.1} parent=11 // pred_check
          %p460 = pneg %p177
        $region18: #{tpu_custom_call.1} parent=11 // pred_check_branch
          %462 = sbr.rel (%p460) target = $region20
        $region19: #{tpu_custom_call.1} parent=11 // pred_region
          _
        $region20: #{tpu_custom_call.1} parent=11 // pred_fallthru
          _
        // Predicated region
        $region21: #{tpu_custom_call.1} parent=11 // pred_check
          %p463 = pneg %p198
        $region22: #{tpu_custom_call.1} parent=11 // pred_check_branch
          %465 = sbr.rel (%p463) target = $region24
        $region23: #{tpu_custom_call.1} parent=11 // pred_region
          %s467 = ssub.s32 128, 128
          %468 = vsyncadd [#allocation10], %s467
          %s470 = sshll.u32 [#allocation11], 4
          %s471 = int_to_ptr.vmem [resolvable:$true] %s470
          %473 = dma.hbm_to_vmem [thread:$0]  %s6, 128, %s471, [#allocation10]
        $region24: #{tpu_custom_call.1} parent=11 // pred_fallthru
          _
        // Predicated region
        $region25: #{tpu_custom_call.1} parent=11 // pred_check
          %p474 = pneg %p219
        $region26: #{tpu_custom_call.1} parent=11 // pred_check_branch
          %476 = sbr.rel (%p474) target = $region28
        $region27: #{tpu_custom_call.1} parent=11 // pred_region
          %s478 = ssub.s32 512, 512
          %479 = vsyncadd [#allocation13], %s478
          %s480 = sshll.u32 [#allocation12], 4
          %s481 = int_to_ptr.vmem [resolvable:$true] %s480
          %486 = dma.hbm_to_vmem [thread:$0]  %s7, 512, %s481, [#allocation13], 128, 128, 8
        $region28: #{tpu_custom_call.1} parent=11 // pred_fallthru
          _
        // Predicated region
        $region29: #{tpu_custom_call.1} parent=11 // pred_check
          %p487 = pneg %p240
        $region30: #{tpu_custom_call.1} parent=11 // pred_check_branch
          %489 = sbr.rel (%p487) target = $region32
        $region31: #{tpu_custom_call.1} parent=11 // pred_region
          _
        $region32: #{tpu_custom_call.1} parent=11 // pred_fallthru
          _
        // Predicated region
        $region33: #{tpu_custom_call.1} parent=11 // pred_check
          %p490 = pneg %p261
        $region34: #{tpu_custom_call.1} parent=11 // pred_check_branch
          %492 = sbr.rel (%p490) target = $region36
        $region35: #{tpu_custom_call.1} parent=11 // pred_region
          %s494 = ssub.s32 512, 512
          %495 = vsyncadd [#allocation13], %s494
          %s496 = sshll.u32 [#allocation14], 4
          %s497 = int_to_ptr.vmem [resolvable:$true] %s496
          %502 = dma.hbm_to_vmem [thread:$0]  %s9, 512, %s497, [#allocation13], 128, 128, 8
        $region36: #{tpu_custom_call.1} parent=11 // pred_fallthru
          _
        // Predicated region
        $region37: #{tpu_custom_call.1} parent=11 // pred_check
          %p503 = pneg %p282
        $region38: #{tpu_custom_call.1} parent=11 // pred_check_branch
          %505 = sbr.rel (%p503) target = $region40
        $region39: #{tpu_custom_call.1} parent=11 // pred_region
          _
        $region40: #{tpu_custom_call.1} parent=11 // pred_fallthru
          _
        // Predicated region
        $region41: #{tpu_custom_call.1} parent=11 // pred_check
          %p506 = pneg %p303
        $region42: #{tpu_custom_call.1} parent=11 // pred_check_branch
          %508 = sbr.rel (%p506) target = $region44
        $region43: #{tpu_custom_call.1} parent=11 // pred_region
          _
        $region44: #{tpu_custom_call.1} parent=11 // pred_fallthru
          _
        // Predicated region
        $region45: #{tpu_custom_call.1} parent=11 // pred_check
          %p509 = pneg %p324
        $region46: #{tpu_custom_call.1} parent=11 // pred_check_branch
          %511 = sbr.rel (%p509) target = $region48
        $region47: #{tpu_custom_call.1} parent=11 // pred_region
          _
        $region48: #{tpu_custom_call.1} parent=11 // pred_fallthru
          _
        // Predicated region
        $region49: #{tpu_custom_call.1} parent=11 // pred_check
          %p512 = pneg %p345
        $region50: #{tpu_custom_call.1} parent=11 // pred_check_branch
          %514 = sbr.rel (%p512) target = $region52
        $region51: #{tpu_custom_call.1} parent=11 // pred_region
          _
        $region52: #{tpu_custom_call.1} parent=11 // pred_fallthru
          _
        // Predicated region
        $region53: #{tpu_custom_call.1} parent=11 // pred_check
          %p515 = pneg %p366
        $region54: #{tpu_custom_call.1} parent=11 // pred_check_branch
          %517 = sbr.rel (%p515) target = $region56
        $region55: #{tpu_custom_call.1} parent=11 // pred_region
          _
        $region56: #{tpu_custom_call.1} parent=11 // pred_fallthru
          _
        // Predicated region
        $region57: #{tpu_custom_call.1} parent=11 // pred_check
          %p518 = pneg %p387
        $region58: #{tpu_custom_call.1} parent=11 // pred_check_branch
          %520 = sbr.rel (%p518) target = $region60
        $region59: #{tpu_custom_call.1} parent=11 // pred_region
          _
        $region60: #{tpu_custom_call.1} parent=11 // pred_fallthru
          _
        // Predicated region
        $region61: #{tpu_custom_call.1} parent=11 // pred_check
          %p521 = pneg %p408
        $region62: #{tpu_custom_call.1} parent=11 // pred_check_branch
          %523 = sbr.rel (%p521) target = $region64
        $region63: #{tpu_custom_call.1} parent=11 // pred_region
          _
        $region64: #{tpu_custom_call.1} parent=11 // pred_fallthru
          _
      $region12: #{tpu_custom_call.1} parent=5 // pred_fallthru
        _
      %p524 = scmp.lt.s32.totalorder %s31, 4
      // Predicated region
      $region65: #{tpu_custom_call.1} parent=5 // pred_check
        %p525 = pneg %p524
      $region66: #{tpu_custom_call.1} parent=5 // pred_check_branch
        %527 = sbr.rel (%p525) target = $region68
      $region67: #{tpu_custom_call.1} parent=5 // pred_region
        // Predicated region
        $region69: #{tpu_custom_call.1} parent=67 // pred_check
          %p528 = pneg %p51
        $region70: #{tpu_custom_call.1} parent=67 // pred_check_branch
          %530 = sbr.rel (%p528) target = $region72
        $region71: #{tpu_custom_call.1} parent=67 // pred_region
          %p531 = scmp.lt.s32.totalorder %s31, 3
          %s532 = scalar_select %p531, %s31, 3
          %s533 = smul.addr %s532, 8
          %s534 = scalar_lea.vmem %s0, %s533
        $region72: #{tpu_custom_call.1} parent=67 // pred_fallthru
          _
        // Predicated region
        $region73: #{tpu_custom_call.1} parent=67 // pred_check
          %p535 = pneg %p77
        $region74: #{tpu_custom_call.1} parent=67 // pred_check_branch
          %537 = sbr.rel (%p535) target = $region76
        $region75: #{tpu_custom_call.1} parent=67 // pred_region
          %p538 = scmp.lt.s32.totalorder %s31, 3
          %s539 = scalar_select %p538, %s31, 3
          %s540 = smul.addr %s539, 8
          %s541 = scalar_lea.vmem %s1, %s540
        $region76: #{tpu_custom_call.1} parent=67 // pred_fallthru
          _
        // Predicated region
        $region77: #{tpu_custom_call.1} parent=67 // pred_check
          %p542 = pneg %p103
        $region78: #{tpu_custom_call.1} parent=67 // pred_check_branch
          %544 = sbr.rel (%p542) target = $region80
        $region79: #{tpu_custom_call.1} parent=67 // pred_region
          %p545 = scmp.lt.s32.totalorder %s31, 3
          %s546 = scalar_select %p545, %s31, 3
          %s547 = smul.addr %s546, 8
          %s548 = scalar_lea.vmem %s2, %s547
        $region80: #{tpu_custom_call.1} parent=67 // pred_fallthru
          _
        // Predicated region
        $region81: #{tpu_custom_call.1} parent=67 // pred_check
          %p549 = pneg %p129
        $region82: #{tpu_custom_call.1} parent=67 // pred_check_branch
          %551 = sbr.rel (%p549) target = $region84
        $region83: #{tpu_custom_call.1} parent=67 // pred_region
          %s552 = sand.u32 %s119, 1
          %s553 = scalar_lea.sflag [#allocation7], %s552
          %s554 = sand.u32 %s119, 1
          %s555 = scalar_lea.vmem [#allocation6], %s554
          %s557 = ssub.s32 16, 16
          %558 = vsyncadd %s553, %s557
          %s559 = smul.addr %s31, 16
          %s560 = scalar_lea.hbm %s3, %s559
          %s562 = sshll.u32 %s555, 4
          %s563 = int_to_ptr.vmem [resolvable:$true] %s562
          %565 = dma.hbm_to_vmem [thread:$0]  %s560, 16, %s563, %s553
        $region84: #{tpu_custom_call.1} parent=67 // pred_fallthru
          _
      $region68: #{tpu_custom_call.1} parent=5 // pred_fallthru
        _
      %p566 = scmp.le.s32.totalorder 1, %s31
      %p567 = scmp.lt.s32.totalorder %s31, 5
      %p568 = pnand %p566, %p567
      %p569 = pneg %p568
      // Predicated region
      $region85: #{tpu_custom_call.1} parent=5 // pred_check
        _
      $region86: #{tpu_custom_call.1} parent=5 // pred_check_branch
        %571 = sbr.rel (%p568) target = $region88
      $region87: #{tpu_custom_call.1} parent=5 // pred_region
        %s572 = ssub.s32 %s31, 1
        %s573 = sand.u32 %s122, 1
        %s574 = scalar_lea.sflag [#allocation7], %s573
        %s575 = sand.u32 %s122, 1
        %s576 = scalar_lea.vmem [#allocation6], %s575
        // Predicated region
        $region89: #{tpu_custom_call.1} parent=87 // pred_check
          %p577 = pneg %p135
        $region90: #{tpu_custom_call.1} parent=87 // pred_check_branch
          %579 = sbr.rel (%p577) target = $region92
        $region91: #{tpu_custom_call.1} parent=87 // pred_region
          %580 = dma.done %s574, 16
        $region92: #{tpu_custom_call.1} parent=87 // pred_fallthru
          _
        // Predicated region
        $region93: #{tpu_custom_call.1} parent=87 // pred_check
          %p581 = pneg %p156
        $region94: #{tpu_custom_call.1} parent=87 // pred_check_branch
          %583 = sbr.rel (%p581) target = $region96
        $region95: #{tpu_custom_call.1} parent=87 // pred_region
          %584 = dma.done [#allocation10], 128
        $region96: #{tpu_custom_call.1} parent=87 // pred_fallthru
          _
        // Predicated region
        $region97: #{tpu_custom_call.1} parent=87 // pred_check
          %p585 = pneg %p198
        $region98: #{tpu_custom_call.1} parent=87 // pred_check_branch
          %587 = sbr.rel (%p585) target = $region100
        $region99: #{tpu_custom_call.1} parent=87 // pred_region
          %588 = dma.done [#allocation10], 128
        $region100: #{tpu_custom_call.1} parent=87 // pred_fallthru
          _
        // Predicated region
        $region101: #{tpu_custom_call.1} parent=87 // pred_check
          %p589 = pneg %p219
        $region102: #{tpu_custom_call.1} parent=87 // pred_check_branch
          %591 = sbr.rel (%p589) target = $region104
        $region103: #{tpu_custom_call.1} parent=87 // pred_region
          %592 = dma.done [#allocation13], 512
        $region104: #{tpu_custom_call.1} parent=87 // pred_fallthru
          _
        // Predicated region
        $region105: #{tpu_custom_call.1} parent=87 // pred_check
          %p593 = pneg %p261
        $region106: #{tpu_custom_call.1} parent=87 // pred_check_branch
          %595 = sbr.rel (%p593) target = $region108
        $region107: #{tpu_custom_call.1} parent=87 // pred_region
          %596 = dma.done [#allocation13], 512
        $region108: #{tpu_custom_call.1} parent=87 // pred_fallthru
          _
        %p597 = scmp.lt.s32.totalorder %s36, 3
        %s598 = scalar_select %p597, %s36, 3
        %s599 = smul.addr %s598, 8
        %s600 = scalar_lea.vmem %s0, %s599
        %p601 = pneg %p57
        %p602 = pneg %p54
        %p603 = scmp.lt.s32.totalorder %s36, 3
        %s604 = scalar_select %p603, %s36, 3
        %s605 = smul.addr %s604, 8
        %s606 = scalar_lea.vmem %s1, %s605
        %p607 = pneg %p83
        %p608 = pneg %p80
        %p609 = scmp.lt.s32.totalorder %s36, 3
        %s610 = scalar_select %p609, %s36, 3
        %s611 = smul.addr %s610, 8
        %s612 = scalar_lea.vmem %s2, %s611
        %p613 = pneg %p109
        %p614 = pneg %p106
        %s615 = sand.u32 %s122, 1
        %s616 = scalar_lea.sflag [#allocation7], %s615
        %s617 = sand.u32 %s122, 1
        %s618 = scalar_lea.vmem [#allocation6], %s617
        %p619 = pneg %p135
        %p620 = pneg %p132
        %p621 = pneg %p156
        %p622 = pneg %p153
        %p623 = pneg %p177
        %p624 = pneg %p174
        %p625 = pneg %p198
        %p626 = pneg %p195
        %p627 = pneg %p219
        %p628 = pneg %p216
        %p629 = pneg %p240
        %p630 = pneg %p237
        %p631 = pneg %p261
        %p632 = pneg %p258
        %p633 = pneg %p282
        %p634 = pneg %p279
        %p635 = pneg %p303
        %p636 = pneg %p300
        %p637 = pneg %p324
        %p638 = pneg %p321
        %p639 = pneg %p345
        %p640 = pneg %p342
        %p641 = pneg %p366
        %p642 = pneg %p363
        %p643 = pneg %p387
        %p644 = pneg %p384
        %p645 = pneg %p408
        %p646 = pneg %p405
        %p647 = pneg %p434
        %p648 = pneg %p431
        %s649 = sand.u32 %s421, 1
        %s650 = scalar_lea.sflag [#allocation8], %s649
        %s651 = sand.u32 %s421, 1
        %s652 = smul.addr %s651, 8
        %s653 = scalar_lea.vmem [#allocation15], %s652
        %p654 = scmp.lt.s32.totalorder %s36, 3
        %s655 = scalar_select %p654, %s36, 3
        %s656 = smul.addr %s655, 8
        %s657 = scalar_lea.vmem %s0, %s656
        %p658 = scmp.lt.s32.totalorder %s36, 3
        %s659 = scalar_select %p658, %s36, 3
        %s660 = smul.addr %s659, 8
        %s661 = scalar_lea.vmem %s1, %s660
        %p662 = scmp.lt.s32.totalorder %s36, 3
        %s663 = scalar_select %p662, %s36, 3
        %s664 = smul.addr %s663, 8
        %s665 = scalar_lea.vmem %s2, %s664
        %v666 = vld [vmem:[%s657] sm:$0xff]
        %v667 = vld [vmem:[%s661] sm:$0xff]
        %v668 = vld [vmem:[%s665] sm:$0xff]
        %v669 = vld [vmem:[#allocation9] sm:$0xff]
        %v670 = vld [vmem:[%s5] sm:$0xff]
        %v671 = vld [vmem:[#allocation11] sm:$0xff]
        %vm672 = vcmask 64512
        %v674 = vsel %vm672, %v666, 0
        %676 = vmatprep.subr.mxu0 0.0
        %677 = vmatpush1.msra.mxu0 0.0
        %678 = vmatprep.subr.mxu0 0.0
        %679 = vmatpush1.msra.mxu0 0.0
        %680 = vmatprep.subr.mxu0 0.0
        %681 = vmatpush1.msra.mxu0 0.0
        %682 = vmatprep.subr.mxu0 0.0
        %683 = vmatpush1.msra.mxu0 0.0
        %684 = vmatprep.subr.mxu0 0.0
        %685 = vmatpush1.msra.mxu0 0.0
        %686 = vmatprep.subr.mxu0 0.0
        %687 = vmatpush1.msra.mxu0 0.0
        %688 = vmatprep.subr.mxu0 0.0
        %689 = vmatpush1.msra.mxu0 0.0
        %690 = vmatprep.subr.mxu0 0.0
        %691 = vmatpush1.msra.mxu0 0.0
        %692 = vmatprep.subr.mxu0 0.0
        %693 = vmatpush1.msra.mxu0 0.0
        %694 = vmatprep.subr.mxu0 0.0
        %695 = vmatpush1.msra.mxu0 0.0
        %696 = vmatprep.subr.mxu0 0.0
        %697 = vmatpush1.msra.mxu0 0.0
        %698 = vmatprep.subr.mxu0 0.0
        %699 = vmatpush1.msra.mxu0 0.0
        %700 = vmatprep.subr.mxu0 0.0
        %701 = vmatpush1.msra.mxu0 0.0
        %702 = vmatprep.subr.mxu0 0.0
        %703 = vmatpush1.msra.mxu0 0.0
        %704 = vmatprep.subr.mxu0 0.0
        %705 = vmatpush1.msra.mxu0 0.0
        %706 = vmatprep.subr.mxu0 0.0
        %707 = vmatpush1.msra.mxu0 %v669
        %708 = vmatprep.subr.mxu0 0.0
        %709 = vmatpush2.msra.mxu0 0.0
        %710 = vmatprep.subr.mxu0 0.0
        %711 = vmatpush2.msra.mxu0 0.0
        %712 = vmatprep.subr.mxu0 0.0
        %713 = vmatpush2.msra.mxu0 0.0
        %714 = vmatprep.subr.mxu0 0.0
        %715 = vmatpush2.msra.mxu0 0.0
        %716 = vmatprep.subr.mxu0 0.0
        %717 = vmatpush2.msra.mxu0 0.0
        %718 = vmatprep.subr.mxu0 0.0
        %719 = vmatpush2.msra.mxu0 0.0
        %720 = vmatprep.subr.mxu0 0.0
        %721 = vmatpush2.msra.mxu0 0.0
        %722 = vmatprep.subr.mxu0 0.0
        %723 = vmatpush2.msra.mxu0 0.0
        %724 = vmatprep.subr.mxu0 0.0
        %725 = vmatpush2.msra.mxu0 0.0
        %726 = vmatprep.subr.mxu0 0.0
        %727 = vmatpush2.msra.mxu0 0.0
        %728 = vmatprep.subr.mxu0 0.0
        %729 = vmatpush2.msra.mxu0 0.0
        %730 = vmatprep.subr.mxu0 0.0
        %731 = vmatpush2.msra.mxu0 0.0
        %732 = vmatprep.subr.mxu0 0.0
        %733 = vmatpush2.msra.mxu0 0.0
        %734 = vmatprep.subr.mxu0 0.0
        %735 = vmatpush2.msra.mxu0 0.0
        %736 = vmatprep.subr.mxu0 0.0
        %737 = vmatpush2.msra.mxu0 0.0
        %738 = vmatprep.subr.mxu0 0.0
        %739 = vmatpush2.msra.mxu0 0.0
        %740 = vmatprep.mubr.f32.mxu0 0.0
        %741 = vmatmul.mubr.f32.gmra.mxu0 %v674
        %v742 = vpop.f32.mrf.mxu0
        %v743 = vadd.f32 0.0, %v742
        %v744 = vpop.f32.mrf.mxu0
        %745 = vdwg.mxu0
        %v747 = vsel %vm672, %v667, 0
        %749 = vmatprep.subr.mxu0 0.0
        %750 = vmatpush1.msra.mxu0 0.0
        %751 = vmatprep.subr.mxu0 0.0
        %752 = vmatpush1.msra.mxu0 0.0
        %753 = vmatprep.subr.mxu0 0.0
        %754 = vmatpush1.msra.mxu0 0.0
        %755 = vmatprep.subr.mxu0 0.0
        %756 = vmatpush1.msra.mxu0 0.0
        %757 = vmatprep.subr.mxu0 0.0
        %758 = vmatpush1.msra.mxu0 0.0
        %759 = vmatprep.subr.mxu0 0.0
        %760 = vmatpush1.msra.mxu0 0.0
        %761 = vmatprep.subr.mxu0 0.0
        %762 = vmatpush1.msra.mxu0 0.0
        %763 = vmatprep.subr.mxu0 0.0
        %764 = vmatpush1.msra.mxu0 0.0
        %765 = vmatprep.subr.mxu0 0.0
        %766 = vmatpush1.msra.mxu0 0.0
        %767 = vmatprep.subr.mxu0 0.0
        %768 = vmatpush1.msra.mxu0 0.0
        %769 = vmatprep.subr.mxu0 0.0
        %770 = vmatpush1.msra.mxu0 0.0
        %771 = vmatprep.subr.mxu0 0.0
        %772 = vmatpush1.msra.mxu0 0.0
        %773 = vmatprep.subr.mxu0 0.0
        %774 = vmatpush1.msra.mxu0 0.0
        %775 = vmatprep.subr.mxu0 0.0
        %776 = vmatpush1.msra.mxu0 0.0
        %777 = vmatprep.subr.mxu0 0.0
        %778 = vmatpush1.msra.mxu0 0.0
        %779 = vmatprep.subr.mxu0 0.0
        %780 = vmatpush1.msra.mxu0 %v670
        %781 = vmatprep.subr.mxu0 0.0
        %782 = vmatpush2.msra.mxu0 0.0
        %783 = vmatprep.subr.mxu0 0.0
        %784 = vmatpush2.msra.mxu0 0.0
        %785 = vmatprep.subr.mxu0 0.0
        %786 = vmatpush2.msra.mxu0 0.0
        %787 = vmatprep.subr.mxu0 0.0
        %788 = vmatpush2.msra.mxu0 0.0
        %789 = vmatprep.subr.mxu0 0.0
        %790 = vmatpush2.msra.mxu0 0.0
        %791 = vmatprep.subr.mxu0 0.0
        %792 = vmatpush2.msra.mxu0 0.0
        %793 = vmatprep.subr.mxu0 0.0
        %794 = vmatpush2.msra.mxu0 0.0
        %795 = vmatprep.subr.mxu0 0.0
        %796 = vmatpush2.msra.mxu0 0.0
        %797 = vmatprep.subr.mxu0 0.0
        %798 = vmatpush2.msra.mxu0 0.0
        %799 = vmatprep.subr.mxu0 0.0
        %800 = vmatpush2.msra.mxu0 0.0
        %801 = vmatprep.subr.mxu0 0.0
        %802 = vmatpush2.msra.mxu0 0.0
        %803 = vmatprep.subr.mxu0 0.0
        %804 = vmatpush2.msra.mxu0 0.0
        %805 = vmatprep.subr.mxu0 0.0
        %806 = vmatpush2.msra.mxu0 0.0
        %807 = vmatprep.subr.mxu0 0.0
        %808 = vmatpush2.msra.mxu0 0.0
        %809 = vmatprep.subr.mxu0 0.0
        %810 = vmatpush2.msra.mxu0 0.0
        %811 = vmatprep.subr.mxu0 0.0
        %812 = vmatpush2.msra.mxu0 0.0
        %813 = vmatprep.mubr.f32.mxu0 0.0
        %814 = vmatmul.mubr.f32.gmra.mxu0 %v747
        %v815 = vpop.f32.mrf.mxu0
        %v816 = vadd.f32 0.0, %v815
        %v817 = vpop.f32.mrf.mxu0
        %818 = vdwg.mxu0
        %v820 = vsel %vm672, %v668, 0
        %822 = vmatprep.subr.mxu0 0.0
        %823 = vmatpush1.msra.mxu0 0.0
        %824 = vmatprep.subr.mxu0 0.0
        %825 = vmatpush1.msra.mxu0 0.0
        %826 = vmatprep.subr.mxu0 0.0
        %827 = vmatpush1.msra.mxu0 0.0
        %828 = vmatprep.subr.mxu0 0.0
        %829 = vmatpush1.msra.mxu0 0.0
        %830 = vmatprep.subr.mxu0 0.0
        %831 = vmatpush1.msra.mxu0 0.0
        %832 = vmatprep.subr.mxu0 0.0
        %833 = vmatpush1.msra.mxu0 0.0
        %834 = vmatprep.subr.mxu0 0.0
        %835 = vmatpush1.msra.mxu0 0.0
        %836 = vmatprep.subr.mxu0 0.0
        %837 = vmatpush1.msra.mxu0 0.0
        %838 = vmatprep.subr.mxu0 0.0
        %839 = vmatpush1.msra.mxu0 0.0
        %840 = vmatprep.subr.mxu0 0.0
        %841 = vmatpush1.msra.mxu0 0.0
        %842 = vmatprep.subr.mxu0 0.0
        %843 = vmatpush1.msra.mxu0 0.0
        %844 = vmatprep.subr.mxu0 0.0
        %845 = vmatpush1.msra.mxu0 0.0
        %846 = vmatprep.subr.mxu0 0.0
        %847 = vmatpush1.msra.mxu0 0.0
        %848 = vmatprep.subr.mxu0 0.0
        %849 = vmatpush1.msra.mxu0 0.0
        %850 = vmatprep.subr.mxu0 0.0
        %851 = vmatpush1.msra.mxu0 0.0
        %852 = vmatprep.subr.mxu0 0.0
        %853 = vmatpush1.msra.mxu0 %v671
        %854 = vmatprep.subr.mxu0 0.0
        %855 = vmatpush2.msra.mxu0 0.0
        %856 = vmatprep.subr.mxu0 0.0
        %857 = vmatpush2.msra.mxu0 0.0
        %858 = vmatprep.subr.mxu0 0.0
        %859 = vmatpush2.msra.mxu0 0.0
        %860 = vmatprep.subr.mxu0 0.0
        %861 = vmatpush2.msra.mxu0 0.0
        %862 = vmatprep.subr.mxu0 0.0
        %863 = vmatpush2.msra.mxu0 0.0
        %864 = vmatprep.subr.mxu0 0.0
        %865 = vmatpush2.msra.mxu0 0.0
        %866 = vmatprep.subr.mxu0 0.0
        %867 = vmatpush2.msra.mxu0 0.0
        %868 = vmatprep.subr.mxu0 0.0
        %869 = vmatpush2.msra.mxu0 0.0
        %870 = vmatprep.subr.mxu0 0.0
        %871 = vmatpush2.msra.mxu0 0.0
        %872 = vmatprep.subr.mxu0 0.0
        %873 = vmatpush2.msra.mxu0 0.0
        %874 = vmatprep.subr.mxu0 0.0
        %875 = vmatpush2.msra.mxu0 0.0
        %876 = vmatprep.subr.mxu0 0.0
        %877 = vmatpush2.msra.mxu0 0.0
        %878 = vmatprep.subr.mxu0 0.0
        %879 = vmatpush2.msra.mxu0 0.0
        %880 = vmatprep.subr.mxu0 0.0
        %881 = vmatpush2.msra.mxu0 0.0
        %882 = vmatprep.subr.mxu0 0.0
        %883 = vmatpush2.msra.mxu0 0.0
        %884 = vmatprep.subr.mxu0 0.0
        %885 = vmatpush2.msra.mxu0 0.0
        %886 = vmatprep.mubr.f32.mxu0 0.0
        %887 = vmatmul.mubr.f32.gmra.mxu0 %v820
        %v888 = vpop.f32.mrf.mxu0
        %v889 = vadd.f32 0.0, %v888
        %v890 = vpop.f32.mrf.mxu0
        %891 = vdwg.mxu0
        %892 = vst.msk [vmem:[#allocation2] sm:$0xff] %vm672, %v743
        %893 = vst.msk [vmem:[#allocation3] sm:$0xff] %vm672, %v816
        %894 = vst.msk [vmem:[#allocation4] sm:$0xff] %vm672, %v889
        %895 = vrot.lane.b32.xlu0 %v666, 120
        %v896 = vpop.permute.xlu0 %895
        %v897 = vsel %vm672, %v896, 0
        %899 = vmatprep.subr.mxu0 0.0
        %900 = vmatpush1.msra.mxu0 0.0
        %901 = vmatprep.subr.mxu0 0.0
        %902 = vmatpush1.msra.mxu0 0.0
        %903 = vmatprep.subr.mxu0 0.0
        %904 = vmatpush1.msra.mxu0 0.0
        %905 = vmatprep.subr.mxu0 0.0
        %906 = vmatpush1.msra.mxu0 0.0
        %907 = vmatprep.subr.mxu0 0.0
        %908 = vmatpush1.msra.mxu0 0.0
        %909 = vmatprep.subr.mxu0 0.0
        %910 = vmatpush1.msra.mxu0 0.0
        %911 = vmatprep.subr.mxu0 0.0
        %912 = vmatpush1.msra.mxu0 0.0
        %913 = vmatprep.subr.mxu0 0.0
        %914 = vmatpush1.msra.mxu0 0.0
        %915 = vmatprep.subr.mxu0 0.0
        %916 = vmatpush1.msra.mxu0 0.0
        %917 = vmatprep.subr.mxu0 0.0
        %918 = vmatpush1.msra.mxu0 0.0
        %919 = vmatprep.subr.mxu0 0.0
        %920 = vmatpush1.msra.mxu0 0.0
        %921 = vmatprep.subr.mxu0 0.0
        %922 = vmatpush1.msra.mxu0 0.0
        %923 = vmatprep.subr.mxu0 0.0
        %924 = vmatpush1.msra.mxu0 0.0
        %925 = vmatprep.subr.mxu0 0.0
        %926 = vmatpush1.msra.mxu0 0.0
        %927 = vmatprep.subr.mxu0 0.0
        %928 = vmatpush1.msra.mxu0 0.0
        %929 = vmatprep.subr.mxu0 0.0
        %930 = vmatpush1.msra.mxu0 %v669
        %931 = vmatprep.subr.mxu0 0.0
        %932 = vmatpush2.msra.mxu0 0.0
        %933 = vmatprep.subr.mxu0 0.0
        %934 = vmatpush2.msra.mxu0 0.0
        %935 = vmatprep.subr.mxu0 0.0
        %936 = vmatpush2.msra.mxu0 0.0
        %937 = vmatprep.subr.mxu0 0.0
        %938 = vmatpush2.msra.mxu0 0.0
        %939 = vmatprep.subr.mxu0 0.0
        %940 = vmatpush2.msra.mxu0 0.0
        %941 = vmatprep.subr.mxu0 0.0
        %942 = vmatpush2.msra.mxu0 0.0
        %943 = vmatprep.subr.mxu0 0.0
        %944 = vmatpush2.msra.mxu0 0.0
        %945 = vmatprep.subr.mxu0 0.0
        %946 = vmatpush2.msra.mxu0 0.0
        %947 = vmatprep.subr.mxu0 0.0
        %948 = vmatpush2.msra.mxu0 0.0
        %949 = vmatprep.subr.mxu0 0.0
        %950 = vmatpush2.msra.mxu0 0.0
        %951 = vmatprep.subr.mxu0 0.0
        %952 = vmatpush2.msra.mxu0 0.0
        %953 = vmatprep.subr.mxu0 0.0
        %954 = vmatpush2.msra.mxu0 0.0
        %955 = vmatprep.subr.mxu0 0.0
        %956 = vmatpush2.msra.mxu0 0.0
        %957 = vmatprep.subr.mxu0 0.0
        %958 = vmatpush2.msra.mxu0 0.0
        %959 = vmatprep.subr.mxu0 0.0
        %960 = vmatpush2.msra.mxu0 0.0
        %961 = vmatprep.subr.mxu0 0.0
        %962 = vmatpush2.msra.mxu0 0.0
        %963 = vmatprep.mubr.f32.mxu0 0.0
        %964 = vmatmul.mubr.f32.gmra.mxu0 %v897
        %v965 = vpop.f32.mrf.mxu0
        %v966 = vadd.f32 0.0, %v965
        %v967 = vpop.f32.mrf.mxu0
        %968 = vdwg.mxu0
        %969 = vrot.lane.b32.xlu0 %v667, 120
        %v970 = vpop.permute.xlu0 %969
        %v971 = vsel %vm672, %v970, 0
        %973 = vmatprep.subr.mxu0 0.0
        %974 = vmatpush1.msra.mxu0 0.0
        %975 = vmatprep.subr.mxu0 0.0
        %976 = vmatpush1.msra.mxu0 0.0
        %977 = vmatprep.subr.mxu0 0.0
        %978 = vmatpush1.msra.mxu0 0.0
        %979 = vmatprep.subr.mxu0 0.0
        %980 = vmatpush1.msra.mxu0 0.0
        %981 = vmatprep.subr.mxu0 0.0
        %982 = vmatpush1.msra.mxu0 0.0
        %983 = vmatprep.subr.mxu0 0.0
        %984 = vmatpush1.msra.mxu0 0.0
        %985 = vmatprep.subr.mxu0 0.0
        %986 = vmatpush1.msra.mxu0 0.0
        %987 = vmatprep.subr.mxu0 0.0
        %988 = vmatpush1.msra.mxu0 0.0
        %989 = vmatprep.subr.mxu0 0.0
        %990 = vmatpush1.msra.mxu0 0.0
        %991 = vmatprep.subr.mxu0 0.0
        %992 = vmatpush1.msra.mxu0 0.0
        %993 = vmatprep.subr.mxu0 0.0
        %994 = vmatpush1.msra.mxu0 0.0
        %995 = vmatprep.subr.mxu0 0.0
        %996 = vmatpush1.msra.mxu0 0.0
        %997 = vmatprep.subr.mxu0 0.0
        %998 = vmatpush1.msra.mxu0 0.0
        %999 = vmatprep.subr.mxu0 0.0
        %1000 = vmatpush1.msra.mxu0 0.0
        %1001 = vmatprep.subr.mxu0 0.0
        %1002 = vmatpush1.msra.mxu0 0.0
        %1003 = vmatprep.subr.mxu0 0.0
        %1004 = vmatpush1.msra.mxu0 %v670
        %1005 = vmatprep.subr.mxu0 0.0
        %1006 = vmatpush2.msra.mxu0 0.0
        %1007 = vmatprep.subr.mxu0 0.0
        %1008 = vmatpush2.msra.mxu0 0.0
        %1009 = vmatprep.subr.mxu0 0.0
        %1010 = vmatpush2.msra.mxu0 0.0
        %1011 = vmatprep.subr.mxu0 0.0
        %1012 = vmatpush2.msra.mxu0 0.0
        %1013 = vmatprep.subr.mxu0 0.0
        %1014 = vmatpush2.msra.mxu0 0.0
        %1015 = vmatprep.subr.mxu0 0.0
        %1016 = vmatpush2.msra.mxu0 0.0
        %1017 = vmatprep.subr.mxu0 0.0
        %1018 = vmatpush2.msra.mxu0 0.0
        %1019 = vmatprep.subr.mxu0 0.0
        %1020 = vmatpush2.msra.mxu0 0.0
        %1021 = vmatprep.subr.mxu0 0.0
        %1022 = vmatpush2.msra.mxu0 0.0
        %1023 = vmatprep.subr.mxu0 0.0
        %1024 = vmatpush2.msra.mxu0 0.0
        %1025 = vmatprep.subr.mxu0 0.0
        %1026 = vmatpush2.msra.mxu0 0.0
        %1027 = vmatprep.subr.mxu0 0.0
        %1028 = vmatpush2.msra.mxu0 0.0
        %1029 = vmatprep.subr.mxu0 0.0
        %1030 = vmatpush2.msra.mxu0 0.0
        %1031 = vmatprep.subr.mxu0 0.0
        %1032 = vmatpush2.msra.mxu0 0.0
        %1033 = vmatprep.subr.mxu0 0.0
        %1034 = vmatpush2.msra.mxu0 0.0
        %1035 = vmatprep.subr.mxu0 0.0
        %1036 = vmatpush2.msra.mxu0 0.0
        %1037 = vmatprep.mubr.f32.mxu0 0.0
        %1038 = vmatmul.mubr.f32.gmra.mxu0 %v971
        %v1039 = vpop.f32.mrf.mxu0
        %v1040 = vadd.f32 0.0, %v1039
        %v1041 = vpop.f32.mrf.mxu0
        %1042 = vdwg.mxu0
        %1043 = vrot.lane.b32.xlu0 %v668, 120
        %v1044 = vpop.permute.xlu0 %1043
        %v1045 = vsel %vm672, %v1044, 0
        %1047 = vmatprep.subr.mxu0 0.0
        %1048 = vmatpush1.msra.mxu0 0.0
        %1049 = vmatprep.subr.mxu0 0.0
        %1050 = vmatpush1.msra.mxu0 0.0
        %1051 = vmatprep.subr.mxu0 0.0
        %1052 = vmatpush1.msra.mxu0 0.0
        %1053 = vmatprep.subr.mxu0 0.0
        %1054 = vmatpush1.msra.mxu0 0.0
        %1055 = vmatprep.subr.mxu0 0.0
        %1056 = vmatpush1.msra.mxu0 0.0
        %1057 = vmatprep.subr.mxu0 0.0
        %1058 = vmatpush1.msra.mxu0 0.0
        %1059 = vmatprep.subr.mxu0 0.0
        %1060 = vmatpush1.msra.mxu0 0.0
        %1061 = vmatprep.subr.mxu0 0.0
        %1062 = vmatpush1.msra.mxu0 0.0
        %1063 = vmatprep.subr.mxu0 0.0
        %1064 = vmatpush1.msra.mxu0 0.0
        %1065 = vmatprep.subr.mxu0 0.0
        %1066 = vmatpush1.msra.mxu0 0.0
        %1067 = vmatprep.subr.mxu0 0.0
        %1068 = vmatpush1.msra.mxu0 0.0
        %1069 = vmatprep.subr.mxu0 0.0
        %1070 = vmatpush1.msra.mxu0 0.0
        %1071 = vmatprep.subr.mxu0 0.0
        %1072 = vmatpush1.msra.mxu0 0.0
        %1073 = vmatprep.subr.mxu0 0.0
        %1074 = vmatpush1.msra.mxu0 0.0
        %1075 = vmatprep.subr.mxu0 0.0
        %1076 = vmatpush1.msra.mxu0 0.0
        %1077 = vmatprep.subr.mxu0 0.0
        %1078 = vmatpush1.msra.mxu0 %v671
        %1079 = vmatprep.subr.mxu0 0.0
        %1080 = vmatpush2.msra.mxu0 0.0
        %1081 = vmatprep.subr.mxu0 0.0
        %1082 = vmatpush2.msra.mxu0 0.0
        %1083 = vmatprep.subr.mxu0 0.0
        %1084 = vmatpush2.msra.mxu0 0.0
        %1085 = vmatprep.subr.mxu0 0.0
        %1086 = vmatpush2.msra.mxu0 0.0
        %1087 = vmatprep.subr.mxu0 0.0
        %1088 = vmatpush2.msra.mxu0 0.0
        %1089 = vmatprep.subr.mxu0 0.0
        %1090 = vmatpush2.msra.mxu0 0.0
        %1091 = vmatprep.subr.mxu0 0.0
        %1092 = vmatpush2.msra.mxu0 0.0
        %1093 = vmatprep.subr.mxu0 0.0
        %1094 = vmatpush2.msra.mxu0 0.0
        %1095 = vmatprep.subr.mxu0 0.0
        %1096 = vmatpush2.msra.mxu0 0.0
        %1097 = vmatprep.subr.mxu0 0.0
        %1098 = vmatpush2.msra.mxu0 0.0
        %1099 = vmatprep.subr.mxu0 0.0
        %1100 = vmatpush2.msra.mxu0 0.0
        %1101 = vmatprep.subr.mxu0 0.0
        %1102 = vmatpush2.msra.mxu0 0.0
        %1103 = vmatprep.subr.mxu0 0.0
        %1104 = vmatpush2.msra.mxu0 0.0
        %1105 = vmatprep.subr.mxu0 0.0
        %1106 = vmatpush2.msra.mxu0 0.0
        %1107 = vmatprep.subr.mxu0 0.0
        %1108 = vmatpush2.msra.mxu0 0.0
        %1109 = vmatprep.subr.mxu0 0.0
        %1110 = vmatpush2.msra.mxu0 0.0
        %1111 = vmatprep.mubr.f32.mxu0 0.0
        %1112 = vmatmul.mubr.f32.gmra.mxu0 %v1045
        %v1113 = vpop.f32.mrf.mxu0
        %v1114 = vadd.f32 0.0, %v1113
        %v1115 = vpop.f32.mrf.mxu0
        %1116 = vdwg.mxu0
        %s1117 = scalar_lea.vmem [#allocation2], 8
        %1118 = vst.msk [vmem:[%s1117] sm:$0xff] %vm672, %v966
        %s1119 = scalar_lea.vmem [#allocation3], 8
        %1120 = vst.msk [vmem:[%s1119] sm:$0xff] %vm672, %v1040
        %s1121 = scalar_lea.vmem [#allocation4], 8
        %1122 = vst.msk [vmem:[%s1121] sm:$0xff] %vm672, %v1114
        %1123 = vrot.lane.b32.xlu0 %v666, 112
        %v1124 = vpop.permute.xlu0 %1123
        %v1125 = vsel %vm672, %v1124, 0
        %1127 = vmatprep.subr.mxu0 0.0
        %1128 = vmatpush1.msra.mxu0 0.0
        %1129 = vmatprep.subr.mxu0 0.0
        %1130 = vmatpush1.msra.mxu0 0.0
        %1131 = vmatprep.subr.mxu0 0.0
        %1132 = vmatpush1.msra.mxu0 0.0
        %1133 = vmatprep.subr.mxu0 0.0
        %1134 = vmatpush1.msra.mxu0 0.0
        %1135 = vmatprep.subr.mxu0 0.0
        %1136 = vmatpush1.msra.mxu0 0.0
        %1137 = vmatprep.subr.mxu0 0.0
        %1138 = vmatpush1.msra.mxu0 0.0
        %1139 = vmatprep.subr.mxu0 0.0
        %1140 = vmatpush1.msra.mxu0 0.0
        %1141 = vmatprep.subr.mxu0 0.0
        %1142 = vmatpush1.msra.mxu0 0.0
        %1143 = vmatprep.subr.mxu0 0.0
        %1144 = vmatpush1.msra.mxu0 0.0
        %1145 = vmatprep.subr.mxu0 0.0
        %1146 = vmatpush1.msra.mxu0 0.0
        %1147 = vmatprep.subr.mxu0 0.0
        %1148 = vmatpush1.msra.mxu0 0.0
        %1149 = vmatprep.subr.mxu0 0.0
        %1150 = vmatpush1.msra.mxu0 0.0
        %1151 = vmatprep.subr.mxu0 0.0
        %1152 = vmatpush1.msra.mxu0 0.0
        %1153 = vmatprep.subr.mxu0 0.0
        %1154 = vmatpush1.msra.mxu0 0.0
        %1155 = vmatprep.subr.mxu0 0.0
        %1156 = vmatpush1.msra.mxu0 0.0
        %1157 = vmatprep.subr.mxu0 0.0
        %1158 = vmatpush1.msra.mxu0 %v669
        %1159 = vmatprep.subr.mxu0 0.0
        %1160 = vmatpush2.msra.mxu0 0.0
        %1161 = vmatprep.subr.mxu0 0.0
        %1162 = vmatpush2.msra.mxu0 0.0
        %1163 = vmatprep.subr.mxu0 0.0
        %1164 = vmatpush2.msra.mxu0 0.0
        %1165 = vmatprep.subr.mxu0 0.0
        %1166 = vmatpush2.msra.mxu0 0.0
        %1167 = vmatprep.subr.mxu0 0.0
        %1168 = vmatpush2.msra.mxu0 0.0
        %1169 = vmatprep.subr.mxu0 0.0
        %1170 = vmatpush2.msra.mxu0 0.0
        %1171 = vmatprep.subr.mxu0 0.0
        %1172 = vmatpush2.msra.mxu0 0.0
        %1173 = vmatprep.subr.mxu0 0.0
        %1174 = vmatpush2.msra.mxu0 0.0
        %1175 = vmatprep.subr.mxu0 0.0
        %1176 = vmatpush2.msra.mxu0 0.0
        %1177 = vmatprep.subr.mxu0 0.0
        %1178 = vmatpush2.msra.mxu0 0.0
        %1179 = vmatprep.subr.mxu0 0.0
        %1180 = vmatpush2.msra.mxu0 0.0
        %1181 = vmatprep.subr.mxu0 0.0
        %1182 = vmatpush2.msra.mxu0 0.0
        %1183 = vmatprep.subr.mxu0 0.0
        %1184 = vmatpush2.msra.mxu0 0.0
        %1185 = vmatprep.subr.mxu0 0.0
        %1186 = vmatpush2.msra.mxu0 0.0
        %1187 = vmatprep.subr.mxu0 0.0
        %1188 = vmatpush2.msra.mxu0 0.0
        %1189 = vmatprep.subr.mxu0 0.0
        %1190 = vmatpush2.msra.mxu0 0.0
        %1191 = vmatprep.mubr.f32.mxu0 0.0
        %1192 = vmatmul.mubr.f32.gmra.mxu0 %v1125
        %v1193 = vpop.f32.mrf.mxu0
        %v1194 = vadd.f32 0.0, %v1193
        %v1195 = vpop.f32.mrf.mxu0
        %1196 = vdwg.mxu0
        %1197 = vrot.lane.b32.xlu0 %v667, 112
        %v1198 = vpop.permute.xlu0 %1197
        %v1199 = vsel %vm672, %v1198, 0
        %1201 = vmatprep.subr.mxu0 0.0
        %1202 = vmatpush1.msra.mxu0 0.0
        %1203 = vmatprep.subr.mxu0 0.0
        %1204 = vmatpush1.msra.mxu0 0.0
        %1205 = vmatprep.subr.mxu0 0.0
        %1206 = vmatpush1.msra.mxu0 0.0
        %1207 = vmatprep.subr.mxu0 0.0
        %1208 = vmatpush1.msra.mxu0 0.0
        %1209 = vmatprep.subr.mxu0 0.0
        %1210 = vmatpush1.msra.mxu0 0.0
        %1211 = vmatprep.subr.mxu0 0.0
        %1212 = vmatpush1.msra.mxu0 0.0
        %1213 = vmatprep.subr.mxu0 0.0
        %1214 = vmatpush1.msra.mxu0 0.0
        %1215 = vmatprep.subr.mxu0 0.0
        %1216 = vmatpush1.msra.mxu0 0.0
        %1217 = vmatprep.subr.mxu0 0.0
        %1218 = vmatpush1.msra.mxu0 0.0
        %1219 = vmatprep.subr.mxu0 0.0
        %1220 = vmatpush1.msra.mxu0 0.0
        %1221 = vmatprep.subr.mxu0 0.0
        %1222 = vmatpush1.msra.mxu0 0.0
        %1223 = vmatprep.subr.mxu0 0.0
        %1224 = vmatpush1.msra.mxu0 0.0
        %1225 = vmatprep.subr.mxu0 0.0
        %1226 = vmatpush1.msra.mxu0 0.0
        %1227 = vmatprep.subr.mxu0 0.0
        %1228 = vmatpush1.msra.mxu0 0.0
        %1229 = vmatprep.subr.mxu0 0.0
        %1230 = vmatpush1.msra.mxu0 0.0
        %1231 = vmatprep.subr.mxu0 0.0
        %1232 = vmatpush1.msra.mxu0 %v670
        %1233 = vmatprep.subr.mxu0 0.0
        %1234 = vmatpush2.msra.mxu0 0.0
        %1235 = vmatprep.subr.mxu0 0.0
        %1236 = vmatpush2.msra.mxu0 0.0
        %1237 = vmatprep.subr.mxu0 0.0
        %1238 = vmatpush2.msra.mxu0 0.0
        %1239 = vmatprep.subr.mxu0 0.0
        %1240 = vmatpush2.msra.mxu0 0.0
        %1241 = vmatprep.subr.mxu0 0.0
        %1242 = vmatpush2.msra.mxu0 0.0
        %1243 = vmatprep.subr.mxu0 0.0
        %1244 = vmatpush2.msra.mxu0 0.0
        %1245 = vmatprep.subr.mxu0 0.0
        %1246 = vmatpush2.msra.mxu0 0.0
        %1247 = vmatprep.subr.mxu0 0.0
        %1248 = vmatpush2.msra.mxu0 0.0
        %1249 = vmatprep.subr.mxu0 0.0
        %1250 = vmatpush2.msra.mxu0 0.0
        %1251 = vmatprep.subr.mxu0 0.0
        %1252 = vmatpush2.msra.mxu0 0.0
        %1253 = vmatprep.subr.mxu0 0.0
        %1254 = vmatpush2.msra.mxu0 0.0
        %1255 = vmatprep.subr.mxu0 0.0
        %1256 = vmatpush2.msra.mxu0 0.0
        %1257 = vmatprep.subr.mxu0 0.0
        %1258 = vmatpush2.msra.mxu0 0.0
        %1259 = vmatprep.subr.mxu0 0.0
        %1260 = vmatpush2.msra.mxu0 0.0
        %1261 = vmatprep.subr.mxu0 0.0
        %1262 = vmatpush2.msra.mxu0 0.0
        %1263 = vmatprep.subr.mxu0 0.0
        %1264 = vmatpush2.msra.mxu0 0.0
        %1265 = vmatprep.mubr.f32.mxu0 0.0
        %1266 = vmatmul.mubr.f32.gmra.mxu0 %v1199
        %v1267 = vpop.f32.mrf.mxu0
        %v1268 = vadd.f32 0.0, %v1267
        %v1269 = vpop.f32.mrf.mxu0
        %1270 = vdwg.mxu0
        %1271 = vrot.lane.b32.xlu0 %v668, 112
        %v1272 = vpop.permute.xlu0 %1271
        %v1273 = vsel %vm672, %v1272, 0
        %1275 = vmatprep.subr.mxu0 0.0
        %1276 = vmatpush1.msra.mxu0 0.0
        %1277 = vmatprep.subr.mxu0 0.0
        %1278 = vmatpush1.msra.mxu0 0.0
        %1279 = vmatprep.subr.mxu0 0.0
        %1280 = vmatpush1.msra.mxu0 0.0
        %1281 = vmatprep.subr.mxu0 0.0
        %1282 = vmatpush1.msra.mxu0 0.0
        %1283 = vmatprep.subr.mxu0 0.0
        %1284 = vmatpush1.msra.mxu0 0.0
        %1285 = vmatprep.subr.mxu0 0.0
        %1286 = vmatpush1.msra.mxu0 0.0
        %1287 = vmatprep.subr.mxu0 0.0
        %1288 = vmatpush1.msra.mxu0 0.0
        %1289 = vmatprep.subr.mxu0 0.0
        %1290 = vmatpush1.msra.mxu0 0.0
        %1291 = vmatprep.subr.mxu0 0.0
        %1292 = vmatpush1.msra.mxu0 0.0
        %1293 = vmatprep.subr.mxu0 0.0
        %1294 = vmatpush1.msra.mxu0 0.0
        %1295 = vmatprep.subr.mxu0 0.0
        %1296 = vmatpush1.msra.mxu0 0.0
        %1297 = vmatprep.subr.mxu0 0.0
        %1298 = vmatpush1.msra.mxu0 0.0
        %1299 = vmatprep.subr.mxu0 0.0
        %1300 = vmatpush1.msra.mxu0 0.0
        %1301 = vmatprep.subr.mxu0 0.0
        %1302 = vmatpush1.msra.mxu0 0.0
        %1303 = vmatprep.subr.mxu0 0.0
        %1304 = vmatpush1.msra.mxu0 0.0
        %1305 = vmatprep.subr.mxu0 0.0
        %1306 = vmatpush1.msra.mxu0 %v671
        %1307 = vmatprep.subr.mxu0 0.0
        %1308 = vmatpush2.msra.mxu0 0.0
        %1309 = vmatprep.subr.mxu0 0.0
        %1310 = vmatpush2.msra.mxu0 0.0
        %1311 = vmatprep.subr.mxu0 0.0
        %1312 = vmatpush2.msra.mxu0 0.0
        %1313 = vmatprep.subr.mxu0 0.0
        %1314 = vmatpush2.msra.mxu0 0.0
        %1315 = vmatprep.subr.mxu0 0.0
        %1316 = vmatpush2.msra.mxu0 0.0
        %1317 = vmatprep.subr.mxu0 0.0
        %1318 = vmatpush2.msra.mxu0 0.0
        %1319 = vmatprep.subr.mxu0 0.0
        %1320 = vmatpush2.msra.mxu0 0.0
        %1321 = vmatprep.subr.mxu0 0.0
        %1322 = vmatpush2.msra.mxu0 0.0
        %1323 = vmatprep.subr.mxu0 0.0
        %1324 = vmatpush2.msra.mxu0 0.0
        %1325 = vmatprep.subr.mxu0 0.0
        %1326 = vmatpush2.msra.mxu0 0.0
        %1327 = vmatprep.subr.mxu0 0.0
        %1328 = vmatpush2.msra.mxu0 0.0
        %1329 = vmatprep.subr.mxu0 0.0
        %1330 = vmatpush2.msra.mxu0 0.0
        %1331 = vmatprep.subr.mxu0 0.0
        %1332 = vmatpush2.msra.mxu0 0.0
        %1333 = vmatprep.subr.mxu0 0.0
        %1334 = vmatpush2.msra.mxu0 0.0
        %1335 = vmatprep.subr.mxu0 0.0
        %1336 = vmatpush2.msra.mxu0 0.0
        %1337 = vmatprep.subr.mxu0 0.0
        %1338 = vmatpush2.msra.mxu0 0.0
        %1339 = vmatprep.mubr.f32.mxu0 0.0
        %1340 = vmatmul.mubr.f32.gmra.mxu0 %v1273
        %v1341 = vpop.f32.mrf.mxu0
        %v1342 = vadd.f32 0.0, %v1341
        %v1343 = vpop.f32.mrf.mxu0
        %1344 = vdwg.mxu0
        %s1345 = scalar_lea.vmem [#allocation2], 16
        %1346 = vst.msk [vmem:[%s1345] sm:$0xff] %vm672, %v1194
        %s1347 = scalar_lea.vmem [#allocation3], 16
        %1348 = vst.msk [vmem:[%s1347] sm:$0xff] %vm672, %v1268
        %s1349 = scalar_lea.vmem [#allocation4], 16
        %1350 = vst.msk [vmem:[%s1349] sm:$0xff] %vm672, %v1342
        %1351 = vrot.lane.b32.xlu0 %v666, 104
        %v1352 = vpop.permute.xlu0 %1351
        %v1353 = vsel %vm672, %v1352, 0
        %1355 = vmatprep.subr.mxu0 0.0
        %1356 = vmatpush1.msra.mxu0 0.0
        %1357 = vmatprep.subr.mxu0 0.0
        %1358 = vmatpush1.msra.mxu0 0.0
        %1359 = vmatprep.subr.mxu0 0.0
        %1360 = vmatpush1.msra.mxu0 0.0
        %1361 = vmatprep.subr.mxu0 0.0
        %1362 = vmatpush1.msra.mxu0 0.0
        %1363 = vmatprep.subr.mxu0 0.0
        %1364 = vmatpush1.msra.mxu0 0.0
        %1365 = vmatprep.subr.mxu0 0.0
        %1366 = vmatpush1.msra.mxu0 0.0
        %1367 = vmatprep.subr.mxu0 0.0
        %1368 = vmatpush1.msra.mxu0 0.0
        %1369 = vmatprep.subr.mxu0 0.0
        %1370 = vmatpush1.msra.mxu0 0.0
        %1371 = vmatprep.subr.mxu0 0.0
        %1372 = vmatpush1.msra.mxu0 0.0
        %1373 = vmatprep.subr.mxu0 0.0
        %1374 = vmatpush1.msra.mxu0 0.0
        %1375 = vmatprep.subr.mxu0 0.0
        %1376 = vmatpush1.msra.mxu0 0.0
        %1377 = vmatprep.subr.mxu0 0.0
        %1378 = vmatpush1.msra.mxu0 0.0
        %1379 = vmatprep.subr.mxu0 0.0
        %1380 = vmatpush1.msra.mxu0 0.0
        %1381 = vmatprep.subr.mxu0 0.0
        %1382 = vmatpush1.msra.mxu0 0.0
        %1383 = vmatprep.subr.mxu0 0.0
        %1384 = vmatpush1.msra.mxu0 0.0
        %1385 = vmatprep.subr.mxu0 0.0
        %1386 = vmatpush1.msra.mxu0 %v669
        %1387 = vmatprep.subr.mxu0 0.0
        %1388 = vmatpush2.msra.mxu0 0.0
        %1389 = vmatprep.subr.mxu0 0.0
        %1390 = vmatpush2.msra.mxu0 0.0
        %1391 = vmatprep.subr.mxu0 0.0
        %1392 = vmatpush2.msra.mxu0 0.0
        %1393 = vmatprep.subr.mxu0 0.0
        %1394 = vmatpush2.msra.mxu0 0.0
        %1395 = vmatprep.subr.mxu0 0.0
        %1396 = vmatpush2.msra.mxu0 0.0
        %1397 = vmatprep.subr.mxu0 0.0
        %1398 = vmatpush2.msra.mxu0 0.0
        %1399 = vmatprep.subr.mxu0 0.0
        %1400 = vmatpush2.msra.mxu0 0.0
        %1401 = vmatprep.subr.mxu0 0.0
        %1402 = vmatpush2.msra.mxu0 0.0
        %1403 = vmatprep.subr.mxu0 0.0
        %1404 = vmatpush2.msra.mxu0 0.0
        %1405 = vmatprep.subr.mxu0 0.0
        %1406 = vmatpush2.msra.mxu0 0.0
        %1407 = vmatprep.subr.mxu0 0.0
        %1408 = vmatpush2.msra.mxu0 0.0
        %1409 = vmatprep.subr.mxu0 0.0
        %1410 = vmatpush2.msra.mxu0 0.0
        %1411 = vmatprep.subr.mxu0 0.0
        %1412 = vmatpush2.msra.mxu0 0.0
        %1413 = vmatprep.subr.mxu0 0.0
        %1414 = vmatpush2.msra.mxu0 0.0
        %1415 = vmatprep.subr.mxu0 0.0
        %1416 = vmatpush2.msra.mxu0 0.0
        %1417 = vmatprep.subr.mxu0 0.0
        %1418 = vmatpush2.msra.mxu0 0.0
        %1419 = vmatprep.mubr.f32.mxu0 0.0
        %1420 = vmatmul.mubr.f32.gmra.mxu0 %v1353
        %v1421 = vpop.f32.mrf.mxu0
        %v1422 = vadd.f32 0.0, %v1421
        %v1423 = vpop.f32.mrf.mxu0
        %1424 = vdwg.mxu0
        %1425 = vrot.lane.b32.xlu0 %v667, 104
        %v1426 = vpop.permute.xlu0 %1425
        %v1427 = vsel %vm672, %v1426, 0
        %1429 = vmatprep.subr.mxu0 0.0
        %1430 = vmatpush1.msra.mxu0 0.0
        %1431 = vmatprep.subr.mxu0 0.0
        %1432 = vmatpush1.msra.mxu0 0.0
        %1433 = vmatprep.subr.mxu0 0.0
        %1434 = vmatpush1.msra.mxu0 0.0
        %1435 = vmatprep.subr.mxu0 0.0
        %1436 = vmatpush1.msra.mxu0 0.0
        %1437 = vmatprep.subr.mxu0 0.0
        %1438 = vmatpush1.msra.mxu0 0.0
        %1439 = vmatprep.subr.mxu0 0.0
        %1440 = vmatpush1.msra.mxu0 0.0
        %1441 = vmatprep.subr.mxu0 0.0
        %1442 = vmatpush1.msra.mxu0 0.0
        %1443 = vmatprep.subr.mxu0 0.0
        %1444 = vmatpush1.msra.mxu0 0.0
        %1445 = vmatprep.subr.mxu0 0.0
        %1446 = vmatpush1.msra.mxu0 0.0
        %1447 = vmatprep.subr.mxu0 0.0
        %1448 = vmatpush1.msra.mxu0 0.0
        %1449 = vmatprep.subr.mxu0 0.0
        %1450 = vmatpush1.msra.mxu0 0.0
        %1451 = vmatprep.subr.mxu0 0.0
        %1452 = vmatpush1.msra.mxu0 0.0
        %1453 = vmatprep.subr.mxu0 0.0
        %1454 = vmatpush1.msra.mxu0 0.0
        %1455 = vmatprep.subr.mxu0 0.0
        %1456 = vmatpush1.msra.mxu0 0.0
        %1457 = vmatprep.subr.mxu0 0.0
        %1458 = vmatpush1.msra.mxu0 0.0
        %1459 = vmatprep.subr.mxu0 0.0
        %1460 = vmatpush1.msra.mxu0 %v670
        %1461 = vmatprep.subr.mxu0 0.0
        %1462 = vmatpush2.msra.mxu0 0.0
        %1463 = vmatprep.subr.mxu0 0.0
        %1464 = vmatpush2.msra.mxu0 0.0
        %1465 = vmatprep.subr.mxu0 0.0
        %1466 = vmatpush2.msra.mxu0 0.0
        %1467 = vmatprep.subr.mxu0 0.0
        %1468 = vmatpush2.msra.mxu0 0.0
        %1469 = vmatprep.subr.mxu0 0.0
        %1470 = vmatpush2.msra.mxu0 0.0
        %1471 = vmatprep.subr.mxu0 0.0
        %1472 = vmatpush2.msra.mxu0 0.0
        %1473 = vmatprep.subr.mxu0 0.0
        %1474 = vmatpush2.msra.mxu0 0.0
        %1475 = vmatprep.subr.mxu0 0.0
        %1476 = vmatpush2.msra.mxu0 0.0
        %1477 = vmatprep.subr.mxu0 0.0
        %1478 = vmatpush2.msra.mxu0 0.0
        %1479 = vmatprep.subr.mxu0 0.0
        %1480 = vmatpush2.msra.mxu0 0.0
        %1481 = vmatprep.subr.mxu0 0.0
        %1482 = vmatpush2.msra.mxu0 0.0
        %1483 = vmatprep.subr.mxu0 0.0
        %1484 = vmatpush2.msra.mxu0 0.0
        %1485 = vmatprep.subr.mxu0 0.0
        %1486 = vmatpush2.msra.mxu0 0.0
        %1487 = vmatprep.subr.mxu0 0.0
        %1488 = vmatpush2.msra.mxu0 0.0
        %1489 = vmatprep.subr.mxu0 0.0
        %1490 = vmatpush2.msra.mxu0 0.0
        %1491 = vmatprep.subr.mxu0 0.0
        %1492 = vmatpush2.msra.mxu0 0.0
        %1493 = vmatprep.mubr.f32.mxu0 0.0
        %1494 = vmatmul.mubr.f32.gmra.mxu0 %v1427
        %v1495 = vpop.f32.mrf.mxu0
        %v1496 = vadd.f32 0.0, %v1495
        %v1497 = vpop.f32.mrf.mxu0
        %1498 = vdwg.mxu0
        %1499 = vrot.lane.b32.xlu0 %v668, 104
        %v1500 = vpop.permute.xlu0 %1499
        %v1501 = vsel %vm672, %v1500, 0
        %1503 = vmatprep.subr.mxu0 0.0
        %1504 = vmatpush1.msra.mxu0 0.0
        %1505 = vmatprep.subr.mxu0 0.0
        %1506 = vmatpush1.msra.mxu0 0.0
        %1507 = vmatprep.subr.mxu0 0.0
        %1508 = vmatpush1.msra.mxu0 0.0
        %1509 = vmatprep.subr.mxu0 0.0
        %1510 = vmatpush1.msra.mxu0 0.0
        %1511 = vmatprep.subr.mxu0 0.0
        %1512 = vmatpush1.msra.mxu0 0.0
        %1513 = vmatprep.subr.mxu0 0.0
        %1514 = vmatpush1.msra.mxu0 0.0
        %1515 = vmatprep.subr.mxu0 0.0
        %1516 = vmatpush1.msra.mxu0 0.0
        %1517 = vmatprep.subr.mxu0 0.0
        %1518 = vmatpush1.msra.mxu0 0.0
        %1519 = vmatprep.subr.mxu0 0.0
        %1520 = vmatpush1.msra.mxu0 0.0
        %1521 = vmatprep.subr.mxu0 0.0
        %1522 = vmatpush1.msra.mxu0 0.0
        %1523 = vmatprep.subr.mxu0 0.0
        %1524 = vmatpush1.msra.mxu0 0.0
        %1525 = vmatprep.subr.mxu0 0.0
        %1526 = vmatpush1.msra.mxu0 0.0
        %1527 = vmatprep.subr.mxu0 0.0
        %1528 = vmatpush1.msra.mxu0 0.0
        %1529 = vmatprep.subr.mxu0 0.0
        %1530 = vmatpush1.msra.mxu0 0.0
        %1531 = vmatprep.subr.mxu0 0.0
        %1532 = vmatpush1.msra.mxu0 0.0
        %1533 = vmatprep.subr.mxu0 0.0
        %1534 = vmatpush1.msra.mxu0 %v671
        %1535 = vmatprep.subr.mxu0 0.0
        %1536 = vmatpush2.msra.mxu0 0.0
        %1537 = vmatprep.subr.mxu0 0.0
        %1538 = vmatpush2.msra.mxu0 0.0
        %1539 = vmatprep.subr.mxu0 0.0
        %1540 = vmatpush2.msra.mxu0 0.0
        %1541 = vmatprep.subr.mxu0 0.0
        %1542 = vmatpush2.msra.mxu0 0.0
        %1543 = vmatprep.subr.mxu0 0.0
        %1544 = vmatpush2.msra.mxu0 0.0
        %1545 = vmatprep.subr.mxu0 0.0
        %1546 = vmatpush2.msra.mxu0 0.0
        %1547 = vmatprep.subr.mxu0 0.0
        %1548 = vmatpush2.msra.mxu0 0.0
        %1549 = vmatprep.subr.mxu0 0.0
        %1550 = vmatpush2.msra.mxu0 0.0
        %1551 = vmatprep.subr.mxu0 0.0
        %1552 = vmatpush2.msra.mxu0 0.0
        %1553 = vmatprep.subr.mxu0 0.0
        %1554 = vmatpush2.msra.mxu0 0.0
        %1555 = vmatprep.subr.mxu0 0.0
        %1556 = vmatpush2.msra.mxu0 0.0
        %1557 = vmatprep.subr.mxu0 0.0
        %1558 = vmatpush2.msra.mxu0 0.0
        %1559 = vmatprep.subr.mxu0 0.0
        %1560 = vmatpush2.msra.mxu0 0.0
        %1561 = vmatprep.subr.mxu0 0.0
        %1562 = vmatpush2.msra.mxu0 0.0
        %1563 = vmatprep.subr.mxu0 0.0
        %1564 = vmatpush2.msra.mxu0 0.0
        %1565 = vmatprep.subr.mxu0 0.0
        %1566 = vmatpush2.msra.mxu0 0.0
        %1567 = vmatprep.mubr.f32.mxu0 0.0
        %1568 = vmatmul.mubr.f32.gmra.mxu0 %v1501
        %v1569 = vpop.f32.mrf.mxu0
        %v1570 = vadd.f32 0.0, %v1569
        %v1571 = vpop.f32.mrf.mxu0
        %1572 = vdwg.mxu0
        %s1573 = scalar_lea.vmem [#allocation2], 24
        %1574 = vst.msk [vmem:[%s1573] sm:$0xff] %vm672, %v1422
        %s1575 = scalar_lea.vmem [#allocation3], 24
        %1576 = vst.msk [vmem:[%s1575] sm:$0xff] %vm672, %v1496
        %s1577 = scalar_lea.vmem [#allocation4], 24
        %1578 = vst.msk [vmem:[%s1577] sm:$0xff] %vm672, %v1570
        %v1579 = vld [vmem:[%s8] sm:$0x1]
        %v1581 = vlaneseq
        %v1582 = vshrl.u32 %v1581, 7
        %v1583 = vsub.s32 0, %v1582
        %v1584 = vrot.slane %v1579, %v1583
        %vm1586 = vcmask 261120
        %1587 = vst.msk [vmem:[#allocation5] sm:$0xff] %vm1586, %v1584
        %v1588 = vld [vmem:[%s576] sm:$0x1]
        %v1590 = vlaneseq
        %v1591 = vshrl.u32 %v1590, 7
        %v1592 = vsub.s32 0, %v1591
        %v1593 = vrot.slane %v1588, %v1592
        %v1595 = vld [vmem:[#allocation2] sm:$0xff]
        %v1596 = vld [vmem:[#allocation3] sm:$0xff]
        %v1597 = vld [vmem:[#allocation4] sm:$0xff]
        %v1599 = vsel %vm672, %v1595, 0
        %v1602 = vsel %vm672, %v1596, 0
        %1604 = vmatprep.subr.mxu0 0.0
        %1605 = vmatpush1.xpose.msra.mxu0 0.0
        %1606 = vmatprep.subr.mxu0 0.0
        %1607 = vmatpush1.xpose.msra.mxu0 0.0
        %1608 = vmatprep.subr.mxu0 0.0
        %1609 = vmatpush1.xpose.msra.mxu0 0.0
        %1610 = vmatprep.subr.mxu0 0.0
        %1611 = vmatpush1.xpose.msra.mxu0 0.0
        %1612 = vmatprep.subr.mxu0 0.0
        %1613 = vmatpush1.xpose.msra.mxu0 0.0
        %1614 = vmatprep.subr.mxu0 0.0
        %1615 = vmatpush1.xpose.msra.mxu0 0.0
        %1616 = vmatprep.subr.mxu0 0.0
        %1617 = vmatpush1.xpose.msra.mxu0 0.0
        %1618 = vmatprep.subr.mxu0 0.0
        %1619 = vmatpush1.xpose.msra.mxu0 0.0
        %1620 = vmatprep.subr.mxu0 0.0
        %1621 = vmatpush1.xpose.msra.mxu0 0.0
        %1622 = vmatprep.subr.mxu0 0.0
        %1623 = vmatpush1.xpose.msra.mxu0 0.0
        %1624 = vmatprep.subr.mxu0 0.0
        %1625 = vmatpush1.xpose.msra.mxu0 0.0
        %1626 = vmatprep.subr.mxu0 0.0
        %1627 = vmatpush1.xpose.msra.mxu0 0.0
        %1628 = vmatprep.subr.mxu0 0.0
        %1629 = vmatpush1.xpose.msra.mxu0 0.0
        %1630 = vmatprep.subr.mxu0 0.0
        %1631 = vmatpush1.xpose.msra.mxu0 0.0
        %1632 = vmatprep.subr.mxu0 0.0
        %1633 = vmatpush1.xpose.msra.mxu0 0.0
        %1634 = vmatprep.subr.mxu0 0.0
        %1635 = vmatpush1.xpose.msra.mxu0 %v1602
        %1636 = vmatprep.subr.mxu0 0.0
        %1637 = vmatpush2.xpose.msra.mxu0 0.0
        %1638 = vmatprep.subr.mxu0 0.0
        %1639 = vmatpush2.xpose.msra.mxu0 0.0
        %1640 = vmatprep.subr.mxu0 0.0
        %1641 = vmatpush2.xpose.msra.mxu0 0.0
        %1642 = vmatprep.subr.mxu0 0.0
        %1643 = vmatpush2.xpose.msra.mxu0 0.0
        %1644 = vmatprep.subr.mxu0 0.0
        %1645 = vmatpush2.xpose.msra.mxu0 0.0
        %1646 = vmatprep.subr.mxu0 0.0
        %1647 = vmatpush2.xpose.msra.mxu0 0.0
        %1648 = vmatprep.subr.mxu0 0.0
        %1649 = vmatpush2.xpose.msra.mxu0 0.0
        %1650 = vmatprep.subr.mxu0 0.0
        %1651 = vmatpush2.xpose.msra.mxu0 0.0
        %1652 = vmatprep.subr.mxu0 0.0
        %1653 = vmatpush2.xpose.msra.mxu0 0.0
        %1654 = vmatprep.subr.mxu0 0.0
        %1655 = vmatpush2.xpose.msra.mxu0 0.0
        %1656 = vmatprep.subr.mxu0 0.0
        %1657 = vmatpush2.xpose.msra.mxu0 0.0
        %1658 = vmatprep.subr.mxu0 0.0
        %1659 = vmatpush2.xpose.msra.mxu0 0.0
        %1660 = vmatprep.subr.mxu0 0.0
        %1661 = vmatpush2.xpose.msra.mxu0 0.0
        %1662 = vmatprep.subr.mxu0 0.0
        %1663 = vmatpush2.xpose.msra.mxu0 0.0
        %1664 = vmatprep.subr.mxu0 0.0
        %1665 = vmatpush2.xpose.msra.mxu0 0.0
        %1666 = vmatprep.subr.mxu0 0.0
        %1667 = vmatpush2.xpose.msra.mxu0 0.0
        %1668 = vmatprep.mubr.f32.mxu0 0.0
        %1669 = vmatmul.mubr.f32.gmra.mxu0 %v1599
        %v1670 = vpop.f32.mrf.mxu0
        %v1671 = vadd.f32 %v1593, %v1670
        %v1672 = vpop.f32.mrf.mxu0
        %1673 = vdwg.mxu0
        %v1674 = vsel %vm672, %v1671, -inf
        %1675 = vmax.xlane.f32.xlu0 %v1674
        %v1676 = vpop.xlane.xlu0 %1675
        %v1677 = vsub.f32 %v1671, %v1676
        %v1678 = vmul.f32 %v1677, 1.442695
        %v1679 = vpow.pop %v1678
        %v1680 = vsel %vm672, %v1679, 0.0
        %1681 = vadd.xlane.f32.xlu0 %v1680
        %v1682 = vpop.xlane.xlu0 %1681
        %v1683 = vrcp.pop %v1682
        %v1684 = vmul.f32 %v1682, %v1683
        %v1685 = vsub.f32 2.0, %v1684
        %v1686 = vmul.f32 %v1683, %v1685
        %v1687 = vmul.f32 %v1679, %v1686
        %v1689 = vsel %vm672, %v1687, 0
        %1691 = vmatprep.subr.mxu0 0.0
        %1692 = vmatpush1.msra.mxu0 0.0
        %1693 = vmatprep.subr.mxu0 0.0
        %1694 = vmatpush1.msra.mxu0 0.0
        %1695 = vmatprep.subr.mxu0 0.0
        %1696 = vmatpush1.msra.mxu0 0.0
        %1697 = vmatprep.subr.mxu0 0.0
        %1698 = vmatpush1.msra.mxu0 0.0
        %1699 = vmatprep.subr.mxu0 0.0
        %1700 = vmatpush1.msra.mxu0 0.0
        %1701 = vmatprep.subr.mxu0 0.0
        %1702 = vmatpush1.msra.mxu0 0.0
        %1703 = vmatprep.subr.mxu0 0.0
        %1704 = vmatpush1.msra.mxu0 0.0
        %1705 = vmatprep.subr.mxu0 0.0
        %1706 = vmatpush1.msra.mxu0 0.0
        %1707 = vmatprep.subr.mxu0 0.0
        %1708 = vmatpush1.msra.mxu0 0.0
        %1709 = vmatprep.subr.mxu0 0.0
        %1710 = vmatpush1.msra.mxu0 0.0
        %1711 = vmatprep.subr.mxu0 0.0
        %1712 = vmatpush1.msra.mxu0 0.0
        %1713 = vmatprep.subr.mxu0 0.0
        %1714 = vmatpush1.msra.mxu0 0.0
        %1715 = vmatprep.subr.mxu0 0.0
        %1716 = vmatpush1.msra.mxu0 0.0
        %1717 = vmatprep.subr.mxu0 0.0
        %1718 = vmatpush1.msra.mxu0 0.0
        %1719 = vmatprep.subr.mxu0 0.0
        %1720 = vmatpush1.msra.mxu0 0.0
        %1721 = vmatprep.subr.mxu0 0.0
        %1722 = vmatpush1.msra.mxu0 %v1597
        %1723 = vmatprep.subr.mxu0 0.0
        %1724 = vmatpush2.msra.mxu0 0.0
        %1725 = vmatprep.subr.mxu0 0.0
        %1726 = vmatpush2.msra.mxu0 0.0
        %1727 = vmatprep.subr.mxu0 0.0
        %1728 = vmatpush2.msra.mxu0 0.0
        %1729 = vmatprep.subr.mxu0 0.0
        %1730 = vmatpush2.msra.mxu0 0.0
        %1731 = vmatprep.subr.mxu0 0.0
        %1732 = vmatpush2.msra.mxu0 0.0
        %1733 = vmatprep.subr.mxu0 0.0
        %1734 = vmatpush2.msra.mxu0 0.0
        %1735 = vmatprep.subr.mxu0 0.0
        %1736 = vmatpush2.msra.mxu0 0.0
        %1737 = vmatprep.subr.mxu0 0.0
        %1738 = vmatpush2.msra.mxu0 0.0
        %1739 = vmatprep.subr.mxu0 0.0
        %1740 = vmatpush2.msra.mxu0 0.0
        %1741 = vmatprep.subr.mxu0 0.0
        %1742 = vmatpush2.msra.mxu0 0.0
        %1743 = vmatprep.subr.mxu0 0.0
        %1744 = vmatpush2.msra.mxu0 0.0
        %1745 = vmatprep.subr.mxu0 0.0
        %1746 = vmatpush2.msra.mxu0 0.0
        %1747 = vmatprep.subr.mxu0 0.0
        %1748 = vmatpush2.msra.mxu0 0.0
        %1749 = vmatprep.subr.mxu0 0.0
        %1750 = vmatpush2.msra.mxu0 0.0
        %1751 = vmatprep.subr.mxu0 0.0
        %1752 = vmatpush2.msra.mxu0 0.0
        %1753 = vmatprep.subr.mxu0 0.0
        %1754 = vmatpush2.msra.mxu0 0.0
        %1755 = vmatprep.mubr.f32.mxu0 0.0
        %1756 = vmatmul.mubr.f32.gmra.mxu0 %v1689
        %v1757 = vpop.f32.mrf.mxu0
        %v1758 = vadd.f32 0.0, %v1757
        %v1759 = vpop.f32.mrf.mxu0
        %1760 = vdwg.mxu0
        %v1761 = vld [vmem:[#allocation5] sm:$0xff]
        %v1762 = vld [vmem:[#allocation12] sm:$0xff]
        %v1764 = vsel %vm672, %v1758, 0
        %1766 = vmatprep.subr.mxu0 0.0
        %1767 = vmatpush1.msra.mxu0 0.0
        %1768 = vmatprep.subr.mxu0 0.0
        %1769 = vmatpush1.msra.mxu0 0.0
        %1770 = vmatprep.subr.mxu0 0.0
        %1771 = vmatpush1.msra.mxu0 0.0
        %1772 = vmatprep.subr.mxu0 0.0
        %1773 = vmatpush1.msra.mxu0 0.0
        %1774 = vmatprep.subr.mxu0 0.0
        %1775 = vmatpush1.msra.mxu0 0.0
        %1776 = vmatprep.subr.mxu0 0.0
        %1777 = vmatpush1.msra.mxu0 0.0
        %1778 = vmatprep.subr.mxu0 0.0
        %1779 = vmatpush1.msra.mxu0 0.0
        %1780 = vmatprep.subr.mxu0 0.0
        %1781 = vmatpush1.msra.mxu0 0.0
        %1782 = vmatprep.subr.mxu0 0.0
        %1783 = vmatpush1.msra.mxu0 0.0
        %1784 = vmatprep.subr.mxu0 0.0
        %1785 = vmatpush1.msra.mxu0 0.0
        %1786 = vmatprep.subr.mxu0 0.0
        %1787 = vmatpush1.msra.mxu0 0.0
        %1788 = vmatprep.subr.mxu0 0.0
        %1789 = vmatpush1.msra.mxu0 0.0
        %1790 = vmatprep.subr.mxu0 0.0
        %1791 = vmatpush1.msra.mxu0 0.0
        %1792 = vmatprep.subr.mxu0 0.0
        %1793 = vmatpush1.msra.mxu0 0.0
        %1794 = vmatprep.subr.mxu0 0.0
        %1795 = vmatpush1.msra.mxu0 0.0
        %1796 = vmatprep.subr.mxu0 0.0
        %1797 = vmatpush1.msra.mxu0 %v1762
        %1798 = vmatprep.subr.mxu0 0.0
        %1799 = vmatpush2.msra.mxu0 0.0
        %1800 = vmatprep.subr.mxu0 0.0
        %1801 = vmatpush2.msra.mxu0 0.0
        %1802 = vmatprep.subr.mxu0 0.0
        %1803 = vmatpush2.msra.mxu0 0.0
        %1804 = vmatprep.subr.mxu0 0.0
        %1805 = vmatpush2.msra.mxu0 0.0
        %1806 = vmatprep.subr.mxu0 0.0
        %1807 = vmatpush2.msra.mxu0 0.0
        %1808 = vmatprep.subr.mxu0 0.0
        %1809 = vmatpush2.msra.mxu0 0.0
        %1810 = vmatprep.subr.mxu0 0.0
        %1811 = vmatpush2.msra.mxu0 0.0
        %1812 = vmatprep.subr.mxu0 0.0
        %1813 = vmatpush2.msra.mxu0 0.0
        %1814 = vmatprep.subr.mxu0 0.0
        %1815 = vmatpush2.msra.mxu0 0.0
        %1816 = vmatprep.subr.mxu0 0.0
        %1817 = vmatpush2.msra.mxu0 0.0
        %1818 = vmatprep.subr.mxu0 0.0
        %1819 = vmatpush2.msra.mxu0 0.0
        %1820 = vmatprep.subr.mxu0 0.0
        %1821 = vmatpush2.msra.mxu0 0.0
        %1822 = vmatprep.subr.mxu0 0.0
        %1823 = vmatpush2.msra.mxu0 0.0
        %1824 = vmatprep.subr.mxu0 0.0
        %1825 = vmatpush2.msra.mxu0 0.0
        %1826 = vmatprep.subr.mxu0 0.0
        %1827 = vmatpush2.msra.mxu0 0.0
        %1828 = vmatprep.subr.mxu0 0.0
        %1829 = vmatpush2.msra.mxu0 0.0
        %1830 = vmatprep.mubr.f32.mxu0 0.0
        %1831 = vmatmul.mubr.f32.gmra.mxu0 %v1764
        %v1832 = vpop.f32.mrf.mxu0
        %v1833 = vadd.f32 0.0, %v1832
        %v1834 = vpop.f32.mrf.mxu0
        %1835 = vdwg.mxu0
        %v1836 = vadd.f32 %v1761, %v1833
        %1837 = vst.msk [vmem:[#allocation5] sm:$0xff] %vm1586, %v1836
        %v1838 = vld [vmem:[%s1117] sm:$0xff]
        %v1839 = vld [vmem:[%s1119] sm:$0xff]
        %v1840 = vld [vmem:[%s1121] sm:$0xff]
        %v1842 = vsel %vm672, %v1838, 0
        %v1845 = vsel %vm672, %v1839, 0
        %1847 = vmatprep.subr.mxu0 0.0
        %1848 = vmatpush1.xpose.msra.mxu0 0.0
        %1849 = vmatprep.subr.mxu0 0.0
        %1850 = vmatpush1.xpose.msra.mxu0 0.0
        %1851 = vmatprep.subr.mxu0 0.0
        %1852 = vmatpush1.xpose.msra.mxu0 0.0
        %1853 = vmatprep.subr.mxu0 0.0
        %1854 = vmatpush1.xpose.msra.mxu0 0.0
        %1855 = vmatprep.subr.mxu0 0.0
        %1856 = vmatpush1.xpose.msra.mxu0 0.0
        %1857 = vmatprep.subr.mxu0 0.0
        %1858 = vmatpush1.xpose.msra.mxu0 0.0
        %1859 = vmatprep.subr.mxu0 0.0
        %1860 = vmatpush1.xpose.msra.mxu0 0.0
        %1861 = vmatprep.subr.mxu0 0.0
        %1862 = vmatpush1.xpose.msra.mxu0 0.0
        %1863 = vmatprep.subr.mxu0 0.0
        %1864 = vmatpush1.xpose.msra.mxu0 0.0
        %1865 = vmatprep.subr.mxu0 0.0
        %1866 = vmatpush1.xpose.msra.mxu0 0.0
        %1867 = vmatprep.subr.mxu0 0.0
        %1868 = vmatpush1.xpose.msra.mxu0 0.0
        %1869 = vmatprep.subr.mxu0 0.0
        %1870 = vmatpush1.xpose.msra.mxu0 0.0
        %1871 = vmatprep.subr.mxu0 0.0
        %1872 = vmatpush1.xpose.msra.mxu0 0.0
        %1873 = vmatprep.subr.mxu0 0.0
        %1874 = vmatpush1.xpose.msra.mxu0 0.0
        %1875 = vmatprep.subr.mxu0 0.0
        %1876 = vmatpush1.xpose.msra.mxu0 0.0
        %1877 = vmatprep.subr.mxu0 0.0
        %1878 = vmatpush1.xpose.msra.mxu0 %v1845
        %1879 = vmatprep.subr.mxu0 0.0
        %1880 = vmatpush2.xpose.msra.mxu0 0.0
        %1881 = vmatprep.subr.mxu0 0.0
        %1882 = vmatpush2.xpose.msra.mxu0 0.0
        %1883 = vmatprep.subr.mxu0 0.0
        %1884 = vmatpush2.xpose.msra.mxu0 0.0
        %1885 = vmatprep.subr.mxu0 0.0
        %1886 = vmatpush2.xpose.msra.mxu0 0.0
        %1887 = vmatprep.subr.mxu0 0.0
        %1888 = vmatpush2.xpose.msra.mxu0 0.0
        %1889 = vmatprep.subr.mxu0 0.0
        %1890 = vmatpush2.xpose.msra.mxu0 0.0
        %1891 = vmatprep.subr.mxu0 0.0
        %1892 = vmatpush2.xpose.msra.mxu0 0.0
        %1893 = vmatprep.subr.mxu0 0.0
        %1894 = vmatpush2.xpose.msra.mxu0 0.0
        %1895 = vmatprep.subr.mxu0 0.0
        %1896 = vmatpush2.xpose.msra.mxu0 0.0
        %1897 = vmatprep.subr.mxu0 0.0
        %1898 = vmatpush2.xpose.msra.mxu0 0.0
        %1899 = vmatprep.subr.mxu0 0.0
        %1900 = vmatpush2.xpose.msra.mxu0 0.0
        %1901 = vmatprep.subr.mxu0 0.0
        %1902 = vmatpush2.xpose.msra.mxu0 0.0
        %1903 = vmatprep.subr.mxu0 0.0
        %1904 = vmatpush2.xpose.msra.mxu0 0.0
        %1905 = vmatprep.subr.mxu0 0.0
        %1906 = vmatpush2.xpose.msra.mxu0 0.0
        %1907 = vmatprep.subr.mxu0 0.0
        %1908 = vmatpush2.xpose.msra.mxu0 0.0
        %1909 = vmatprep.subr.mxu0 0.0
        %1910 = vmatpush2.xpose.msra.mxu0 0.0
        %1911 = vmatprep.mubr.f32.mxu0 0.0
        %1912 = vmatmul.mubr.f32.gmra.mxu0 %v1842
        %v1913 = vpop.f32.mrf.mxu0
        %v1914 = vadd.f32 %v1593, %v1913
        %v1915 = vpop.f32.mrf.mxu0
        %1916 = vdwg.mxu0
        %v1917 = vsel %vm672, %v1914, -inf
        %1918 = vmax.xlane.f32.xlu0 %v1917
        %v1919 = vpop.xlane.xlu0 %1918
        %v1920 = vsub.f32 %v1914, %v1919
        %v1921 = vmul.f32 %v1920, 1.442695
        %v1922 = vpow.pop %v1921
        %v1923 = vsel %vm672, %v1922, 0.0
        %1924 = vadd.xlane.f32.xlu0 %v1923
        %v1925 = vpop.xlane.xlu0 %1924
        %v1926 = vrcp.pop %v1925
        %v1927 = vmul.f32 %v1925, %v1926
        %v1928 = vsub.f32 2.0, %v1927
        %v1929 = vmul.f32 %v1926, %v1928
        %v1930 = vmul.f32 %v1922, %v1929
        %v1932 = vsel %vm672, %v1930, 0
        %1934 = vmatprep.subr.mxu0 0.0
        %1935 = vmatpush1.msra.mxu0 0.0
        %1936 = vmatprep.subr.mxu0 0.0
        %1937 = vmatpush1.msra.mxu0 0.0
        %1938 = vmatprep.subr.mxu0 0.0
        %1939 = vmatpush1.msra.mxu0 0.0
        %1940 = vmatprep.subr.mxu0 0.0
        %1941 = vmatpush1.msra.mxu0 0.0
        %1942 = vmatprep.subr.mxu0 0.0
        %1943 = vmatpush1.msra.mxu0 0.0
        %1944 = vmatprep.subr.mxu0 0.0
        %1945 = vmatpush1.msra.mxu0 0.0
        %1946 = vmatprep.subr.mxu0 0.0
        %1947 = vmatpush1.msra.mxu0 0.0
        %1948 = vmatprep.subr.mxu0 0.0
        %1949 = vmatpush1.msra.mxu0 0.0
        %1950 = vmatprep.subr.mxu0 0.0
        %1951 = vmatpush1.msra.mxu0 0.0
        %1952 = vmatprep.subr.mxu0 0.0
        %1953 = vmatpush1.msra.mxu0 0.0
        %1954 = vmatprep.subr.mxu0 0.0
        %1955 = vmatpush1.msra.mxu0 0.0
        %1956 = vmatprep.subr.mxu0 0.0
        %1957 = vmatpush1.msra.mxu0 0.0
        %1958 = vmatprep.subr.mxu0 0.0
        %1959 = vmatpush1.msra.mxu0 0.0
        %1960 = vmatprep.subr.mxu0 0.0
        %1961 = vmatpush1.msra.mxu0 0.0
        %1962 = vmatprep.subr.mxu0 0.0
        %1963 = vmatpush1.msra.mxu0 0.0
        %1964 = vmatprep.subr.mxu0 0.0
        %1965 = vmatpush1.msra.mxu0 %v1840
        %1966 = vmatprep.subr.mxu0 0.0
        %1967 = vmatpush2.msra.mxu0 0.0
        %1968 = vmatprep.subr.mxu0 0.0
        %1969 = vmatpush2.msra.mxu0 0.0
        %1970 = vmatprep.subr.mxu0 0.0
        %1971 = vmatpush2.msra.mxu0 0.0
        %1972 = vmatprep.subr.mxu0 0.0
        %1973 = vmatpush2.msra.mxu0 0.0
        %1974 = vmatprep.subr.mxu0 0.0
        %1975 = vmatpush2.msra.mxu0 0.0
        %1976 = vmatprep.subr.mxu0 0.0
        %1977 = vmatpush2.msra.mxu0 0.0
        %1978 = vmatprep.subr.mxu0 0.0
        %1979 = vmatpush2.msra.mxu0 0.0
        %1980 = vmatprep.subr.mxu0 0.0
        %1981 = vmatpush2.msra.mxu0 0.0
        %1982 = vmatprep.subr.mxu0 0.0
        %1983 = vmatpush2.msra.mxu0 0.0
        %1984 = vmatprep.subr.mxu0 0.0
        %1985 = vmatpush2.msra.mxu0 0.0
        %1986 = vmatprep.subr.mxu0 0.0
        %1987 = vmatpush2.msra.mxu0 0.0
        %1988 = vmatprep.subr.mxu0 0.0
        %1989 = vmatpush2.msra.mxu0 0.0
        %1990 = vmatprep.subr.mxu0 0.0
        %1991 = vmatpush2.msra.mxu0 0.0
        %1992 = vmatprep.subr.mxu0 0.0
        %1993 = vmatpush2.msra.mxu0 0.0
        %1994 = vmatprep.subr.mxu0 0.0
        %1995 = vmatpush2.msra.mxu0 0.0
        %1996 = vmatprep.subr.mxu0 0.0
        %1997 = vmatpush2.msra.mxu0 0.0
        %1998 = vmatprep.mubr.f32.mxu0 0.0
        %1999 = vmatmul.mubr.f32.gmra.mxu0 %v1932
        %v2000 = vpop.f32.mrf.mxu0
        %v2001 = vadd.f32 0.0, %v2000
        %v2002 = vpop.f32.mrf.mxu0
        %2003 = vdwg.mxu0
        %v2004 = vld [vmem:[#allocation5] sm:$0xff]
        %s2005 = scalar_lea.vmem [#allocation12], 8
        %v2006 = vld [vmem:[%s2005] sm:$0xff]
        %v2008 = vsel %vm672, %v2001, 0
        %2010 = vmatprep.subr.mxu0 0.0
        %2011 = vmatpush1.msra.mxu0 0.0
        %2012 = vmatprep.subr.mxu0 0.0
        %2013 = vmatpush1.msra.mxu0 0.0
        %2014 = vmatprep.subr.mxu0 0.0
        %2015 = vmatpush1.msra.mxu0 0.0
        %2016 = vmatprep.subr.mxu0 0.0
        %2017 = vmatpush1.msra.mxu0 0.0
        %2018 = vmatprep.subr.mxu0 0.0
        %2019 = vmatpush1.msra.mxu0 0.0
        %2020 = vmatprep.subr.mxu0 0.0
        %2021 = vmatpush1.msra.mxu0 0.0
        %2022 = vmatprep.subr.mxu0 0.0
        %2023 = vmatpush1.msra.mxu0 0.0
        %2024 = vmatprep.subr.mxu0 0.0
        %2025 = vmatpush1.msra.mxu0 0.0
        %2026 = vmatprep.subr.mxu0 0.0
        %2027 = vmatpush1.msra.mxu0 0.0
        %2028 = vmatprep.subr.mxu0 0.0
        %2029 = vmatpush1.msra.mxu0 0.0
        %2030 = vmatprep.subr.mxu0 0.0
        %2031 = vmatpush1.msra.mxu0 0.0
        %2032 = vmatprep.subr.mxu0 0.0
        %2033 = vmatpush1.msra.mxu0 0.0
        %2034 = vmatprep.subr.mxu0 0.0
        %2035 = vmatpush1.msra.mxu0 0.0
        %2036 = vmatprep.subr.mxu0 0.0
        %2037 = vmatpush1.msra.mxu0 0.0
        %2038 = vmatprep.subr.mxu0 0.0
        %2039 = vmatpush1.msra.mxu0 0.0
        %2040 = vmatprep.subr.mxu0 0.0
        %2041 = vmatpush1.msra.mxu0 %v2006
        %2042 = vmatprep.subr.mxu0 0.0
        %2043 = vmatpush2.msra.mxu0 0.0
        %2044 = vmatprep.subr.mxu0 0.0
        %2045 = vmatpush2.msra.mxu0 0.0
        %2046 = vmatprep.subr.mxu0 0.0
        %2047 = vmatpush2.msra.mxu0 0.0
        %2048 = vmatprep.subr.mxu0 0.0
        %2049 = vmatpush2.msra.mxu0 0.0
        %2050 = vmatprep.subr.mxu0 0.0
        %2051 = vmatpush2.msra.mxu0 0.0
        %2052 = vmatprep.subr.mxu0 0.0
        %2053 = vmatpush2.msra.mxu0 0.0
        %2054 = vmatprep.subr.mxu0 0.0
        %2055 = vmatpush2.msra.mxu0 0.0
        %2056 = vmatprep.subr.mxu0 0.0
        %2057 = vmatpush2.msra.mxu0 0.0
        %2058 = vmatprep.subr.mxu0 0.0
        %2059 = vmatpush2.msra.mxu0 0.0
        %2060 = vmatprep.subr.mxu0 0.0
        %2061 = vmatpush2.msra.mxu0 0.0
        %2062 = vmatprep.subr.mxu0 0.0
        %2063 = vmatpush2.msra.mxu0 0.0
        %2064 = vmatprep.subr.mxu0 0.0
        %2065 = vmatpush2.msra.mxu0 0.0
        %2066 = vmatprep.subr.mxu0 0.0
        %2067 = vmatpush2.msra.mxu0 0.0
        %2068 = vmatprep.subr.mxu0 0.0
        %2069 = vmatpush2.msra.mxu0 0.0
        %2070 = vmatprep.subr.mxu0 0.0
        %2071 = vmatpush2.msra.mxu0 0.0
        %2072 = vmatprep.subr.mxu0 0.0
        %2073 = vmatpush2.msra.mxu0 0.0
        %2074 = vmatprep.mubr.f32.mxu0 0.0
        %2075 = vmatmul.mubr.f32.gmra.mxu0 %v2008
        %v2076 = vpop.f32.mrf.mxu0
        %v2077 = vadd.f32 0.0, %v2076
        %v2078 = vpop.f32.mrf.mxu0
        %2079 = vdwg.mxu0
        %v2080 = vadd.f32 %v2004, %v2077
        %2081 = vst.msk [vmem:[#allocation5] sm:$0xff] %vm1586, %v2080
        %v2082 = vld [vmem:[%s1345] sm:$0xff]
        %v2083 = vld [vmem:[%s1347] sm:$0xff]
        %v2084 = vld [vmem:[%s1349] sm:$0xff]
        %v2086 = vsel %vm672, %v2082, 0
        %v2089 = vsel %vm672, %v2083, 0
        %2091 = vmatprep.subr.mxu0 0.0
        %2092 = vmatpush1.xpose.msra.mxu0 0.0
        %2093 = vmatprep.subr.mxu0 0.0
        %2094 = vmatpush1.xpose.msra.mxu0 0.0
        %2095 = vmatprep.subr.mxu0 0.0
        %2096 = vmatpush1.xpose.msra.mxu0 0.0
        %2097 = vmatprep.subr.mxu0 0.0
        %2098 = vmatpush1.xpose.msra.mxu0 0.0
        %2099 = vmatprep.subr.mxu0 0.0
        %2100 = vmatpush1.xpose.msra.mxu0 0.0
        %2101 = vmatprep.subr.mxu0 0.0
        %2102 = vmatpush1.xpose.msra.mxu0 0.0
        %2103 = vmatprep.subr.mxu0 0.0
        %2104 = vmatpush1.xpose.msra.mxu0 0.0
        %2105 = vmatprep.subr.mxu0 0.0
        %2106 = vmatpush1.xpose.msra.mxu0 0.0
        %2107 = vmatprep.subr.mxu0 0.0
        %2108 = vmatpush1.xpose.msra.mxu0 0.0
        %2109 = vmatprep.subr.mxu0 0.0
        %2110 = vmatpush1.xpose.msra.mxu0 0.0
        %2111 = vmatprep.subr.mxu0 0.0
        %2112 = vmatpush1.xpose.msra.mxu0 0.0
        %2113 = vmatprep.subr.mxu0 0.0
        %2114 = vmatpush1.xpose.msra.mxu0 0.0
        %2115 = vmatprep.subr.mxu0 0.0
        %2116 = vmatpush1.xpose.msra.mxu0 0.0
        %2117 = vmatprep.subr.mxu0 0.0
        %2118 = vmatpush1.xpose.msra.mxu0 0.0
        %2119 = vmatprep.subr.mxu0 0.0
        %2120 = vmatpush1.xpose.msra.mxu0 0.0
        %2121 = vmatprep.subr.mxu0 0.0
        %2122 = vmatpush1.xpose.msra.mxu0 %v2089
        %2123 = vmatprep.subr.mxu0 0.0
        %2124 = vmatpush2.xpose.msra.mxu0 0.0
        %2125 = vmatprep.subr.mxu0 0.0
        %2126 = vmatpush2.xpose.msra.mxu0 0.0
        %2127 = vmatprep.subr.mxu0 0.0
        %2128 = vmatpush2.xpose.msra.mxu0 0.0
        %2129 = vmatprep.subr.mxu0 0.0
        %2130 = vmatpush2.xpose.msra.mxu0 0.0
        %2131 = vmatprep.subr.mxu0 0.0
        %2132 = vmatpush2.xpose.msra.mxu0 0.0
        %2133 = vmatprep.subr.mxu0 0.0
        %2134 = vmatpush2.xpose.msra.mxu0 0.0
        %2135 = vmatprep.subr.mxu0 0.0
        %2136 = vmatpush2.xpose.msra.mxu0 0.0
        %2137 = vmatprep.subr.mxu0 0.0
        %2138 = vmatpush2.xpose.msra.mxu0 0.0
        %2139 = vmatprep.subr.mxu0 0.0
        %2140 = vmatpush2.xpose.msra.mxu0 0.0
        %2141 = vmatprep.subr.mxu0 0.0
        %2142 = vmatpush2.xpose.msra.mxu0 0.0
        %2143 = vmatprep.subr.mxu0 0.0
        %2144 = vmatpush2.xpose.msra.mxu0 0.0
        %2145 = vmatprep.subr.mxu0 0.0
        %2146 = vmatpush2.xpose.msra.mxu0 0.0
        %2147 = vmatprep.subr.mxu0 0.0
        %2148 = vmatpush2.xpose.msra.mxu0 0.0
        %2149 = vmatprep.subr.mxu0 0.0
        %2150 = vmatpush2.xpose.msra.mxu0 0.0
        %2151 = vmatprep.subr.mxu0 0.0
        %2152 = vmatpush2.xpose.msra.mxu0 0.0
        %2153 = vmatprep.subr.mxu0 0.0
        %2154 = vmatpush2.xpose.msra.mxu0 0.0
        %2155 = vmatprep.mubr.f32.mxu0 0.0
        %2156 = vmatmul.mubr.f32.gmra.mxu0 %v2086
        %v2157 = vpop.f32.mrf.mxu0
        %v2158 = vadd.f32 %v1593, %v2157
        %v2159 = vpop.f32.mrf.mxu0
        %2160 = vdwg.mxu0
        %v2161 = vsel %vm672, %v2158, -inf
        %2162 = vmax.xlane.f32.xlu0 %v2161
        %v2163 = vpop.xlane.xlu0 %2162
        %v2164 = vsub.f32 %v2158, %v2163
        %v2165 = vmul.f32 %v2164, 1.442695
        %v2166 = vpow.pop %v2165
        %v2167 = vsel %vm672, %v2166, 0.0
        %2168 = vadd.xlane.f32.xlu0 %v2167
        %v2169 = vpop.xlane.xlu0 %2168
        %v2170 = vrcp.pop %v2169
        %v2171 = vmul.f32 %v2169, %v2170
        %v2172 = vsub.f32 2.0, %v2171
        %v2173 = vmul.f32 %v2170, %v2172
        %v2174 = vmul.f32 %v2166, %v2173
        %v2176 = vsel %vm672, %v2174, 0
        %2178 = vmatprep.subr.mxu0 0.0
        %2179 = vmatpush1.msra.mxu0 0.0
        %2180 = vmatprep.subr.mxu0 0.0
        %2181 = vmatpush1.msra.mxu0 0.0
        %2182 = vmatprep.subr.mxu0 0.0
        %2183 = vmatpush1.msra.mxu0 0.0
        %2184 = vmatprep.subr.mxu0 0.0
        %2185 = vmatpush1.msra.mxu0 0.0
        %2186 = vmatprep.subr.mxu0 0.0
        %2187 = vmatpush1.msra.mxu0 0.0
        %2188 = vmatprep.subr.mxu0 0.0
        %2189 = vmatpush1.msra.mxu0 0.0
        %2190 = vmatprep.subr.mxu0 0.0
        %2191 = vmatpush1.msra.mxu0 0.0
        %2192 = vmatprep.subr.mxu0 0.0
        %2193 = vmatpush1.msra.mxu0 0.0
        %2194 = vmatprep.subr.mxu0 0.0
        %2195 = vmatpush1.msra.mxu0 0.0
        %2196 = vmatprep.subr.mxu0 0.0
        %2197 = vmatpush1.msra.mxu0 0.0
        %2198 = vmatprep.subr.mxu0 0.0
        %2199 = vmatpush1.msra.mxu0 0.0
        %2200 = vmatprep.subr.mxu0 0.0
        %2201 = vmatpush1.msra.mxu0 0.0
        %2202 = vmatprep.subr.mxu0 0.0
        %2203 = vmatpush1.msra.mxu0 0.0
        %2204 = vmatprep.subr.mxu0 0.0
        %2205 = vmatpush1.msra.mxu0 0.0
        %2206 = vmatprep.subr.mxu0 0.0
        %2207 = vmatpush1.msra.mxu0 0.0
        %2208 = vmatprep.subr.mxu0 0.0
        %2209 = vmatpush1.msra.mxu0 %v2084
        %2210 = vmatprep.subr.mxu0 0.0
        %2211 = vmatpush2.msra.mxu0 0.0
        %2212 = vmatprep.subr.mxu0 0.0
        %2213 = vmatpush2.msra.mxu0 0.0
        %2214 = vmatprep.subr.mxu0 0.0
        %2215 = vmatpush2.msra.mxu0 0.0
        %2216 = vmatprep.subr.mxu0 0.0
        %2217 = vmatpush2.msra.mxu0 0.0
        %2218 = vmatprep.subr.mxu0 0.0
        %2219 = vmatpush2.msra.mxu0 0.0
        %2220 = vmatprep.subr.mxu0 0.0
        %2221 = vmatpush2.msra.mxu0 0.0
        %2222 = vmatprep.subr.mxu0 0.0
        %2223 = vmatpush2.msra.mxu0 0.0
        %2224 = vmatprep.subr.mxu0 0.0
        %2225 = vmatpush2.msra.mxu0 0.0
        %2226 = vmatprep.subr.mxu0 0.0
        %2227 = vmatpush2.msra.mxu0 0.0
        %2228 = vmatprep.subr.mxu0 0.0
        %2229 = vmatpush2.msra.mxu0 0.0
        %2230 = vmatprep.subr.mxu0 0.0
        %2231 = vmatpush2.msra.mxu0 0.0
        %2232 = vmatprep.subr.mxu0 0.0
        %2233 = vmatpush2.msra.mxu0 0.0
        %2234 = vmatprep.subr.mxu0 0.0
        %2235 = vmatpush2.msra.mxu0 0.0
        %2236 = vmatprep.subr.mxu0 0.0
        %2237 = vmatpush2.msra.mxu0 0.0
        %2238 = vmatprep.subr.mxu0 0.0
        %2239 = vmatpush2.msra.mxu0 0.0
        %2240 = vmatprep.subr.mxu0 0.0
        %2241 = vmatpush2.msra.mxu0 0.0
        %2242 = vmatprep.mubr.f32.mxu0 0.0
        %2243 = vmatmul.mubr.f32.gmra.mxu0 %v2176
        %v2244 = vpop.f32.mrf.mxu0
        %v2245 = vadd.f32 0.0, %v2244
        %v2246 = vpop.f32.mrf.mxu0
        %2247 = vdwg.mxu0
        %v2248 = vld [vmem:[#allocation5] sm:$0xff]
        %s2249 = scalar_lea.vmem [#allocation12], 16
        %v2250 = vld [vmem:[%s2249] sm:$0xff]
        %v2252 = vsel %vm672, %v2245, 0
        %2254 = vmatprep.subr.mxu0 0.0
        %2255 = vmatpush1.msra.mxu0 0.0
        %2256 = vmatprep.subr.mxu0 0.0
        %2257 = vmatpush1.msra.mxu0 0.0
        %2258 = vmatprep.subr.mxu0 0.0
        %2259 = vmatpush1.msra.mxu0 0.0
        %2260 = vmatprep.subr.mxu0 0.0
        %2261 = vmatpush1.msra.mxu0 0.0
        %2262 = vmatprep.subr.mxu0 0.0
        %2263 = vmatpush1.msra.mxu0 0.0
        %2264 = vmatprep.subr.mxu0 0.0
        %2265 = vmatpush1.msra.mxu0 0.0
        %2266 = vmatprep.subr.mxu0 0.0
        %2267 = vmatpush1.msra.mxu0 0.0
        %2268 = vmatprep.subr.mxu0 0.0
        %2269 = vmatpush1.msra.mxu0 0.0
        %2270 = vmatprep.subr.mxu0 0.0
        %2271 = vmatpush1.msra.mxu0 0.0
        %2272 = vmatprep.subr.mxu0 0.0
        %2273 = vmatpush1.msra.mxu0 0.0
        %2274 = vmatprep.subr.mxu0 0.0
        %2275 = vmatpush1.msra.mxu0 0.0
        %2276 = vmatprep.subr.mxu0 0.0
        %2277 = vmatpush1.msra.mxu0 0.0
        %2278 = vmatprep.subr.mxu0 0.0
        %2279 = vmatpush1.msra.mxu0 0.0
        %2280 = vmatprep.subr.mxu0 0.0
        %2281 = vmatpush1.msra.mxu0 0.0
        %2282 = vmatprep.subr.mxu0 0.0
        %2283 = vmatpush1.msra.mxu0 0.0
        %2284 = vmatprep.subr.mxu0 0.0
        %2285 = vmatpush1.msra.mxu0 %v2250
        %2286 = vmatprep.subr.mxu0 0.0
        %2287 = vmatpush2.msra.mxu0 0.0
        %2288 = vmatprep.subr.mxu0 0.0
        %2289 = vmatpush2.msra.mxu0 0.0
        %2290 = vmatprep.subr.mxu0 0.0
        %2291 = vmatpush2.msra.mxu0 0.0
        %2292 = vmatprep.subr.mxu0 0.0
        %2293 = vmatpush2.msra.mxu0 0.0
        %2294 = vmatprep.subr.mxu0 0.0
        %2295 = vmatpush2.msra.mxu0 0.0
        %2296 = vmatprep.subr.mxu0 0.0
        %2297 = vmatpush2.msra.mxu0 0.0
        %2298 = vmatprep.subr.mxu0 0.0
        %2299 = vmatpush2.msra.mxu0 0.0
        %2300 = vmatprep.subr.mxu0 0.0
        %2301 = vmatpush2.msra.mxu0 0.0
        %2302 = vmatprep.subr.mxu0 0.0
        %2303 = vmatpush2.msra.mxu0 0.0
        %2304 = vmatprep.subr.mxu0 0.0
        %2305 = vmatpush2.msra.mxu0 0.0
        %2306 = vmatprep.subr.mxu0 0.0
        %2307 = vmatpush2.msra.mxu0 0.0
        %2308 = vmatprep.subr.mxu0 0.0
        %2309 = vmatpush2.msra.mxu0 0.0
        %2310 = vmatprep.subr.mxu0 0.0
        %2311 = vmatpush2.msra.mxu0 0.0
        %2312 = vmatprep.subr.mxu0 0.0
        %2313 = vmatpush2.msra.mxu0 0.0
        %2314 = vmatprep.subr.mxu0 0.0
        %2315 = vmatpush2.msra.mxu0 0.0
        %2316 = vmatprep.subr.mxu0 0.0
        %2317 = vmatpush2.msra.mxu0 0.0
        %2318 = vmatprep.mubr.f32.mxu0 0.0
        %2319 = vmatmul.mubr.f32.gmra.mxu0 %v2252
        %v2320 = vpop.f32.mrf.mxu0
        %v2321 = vadd.f32 0.0, %v2320
        %v2322 = vpop.f32.mrf.mxu0
        %2323 = vdwg.mxu0
        %v2324 = vadd.f32 %v2248, %v2321
        %2325 = vst.msk [vmem:[#allocation5] sm:$0xff] %vm1586, %v2324
        %v2326 = vld [vmem:[%s1573] sm:$0xff]
        %v2327 = vld [vmem:[%s1575] sm:$0xff]
        %v2328 = vld [vmem:[%s1577] sm:$0xff]
        %v2330 = vsel %vm672, %v2326, 0
        %v2333 = vsel %vm672, %v2327, 0
        %2335 = vmatprep.subr.mxu0 0.0
        %2336 = vmatpush1.xpose.msra.mxu0 0.0
        %2337 = vmatprep.subr.mxu0 0.0
        %2338 = vmatpush1.xpose.msra.mxu0 0.0
        %2339 = vmatprep.subr.mxu0 0.0
        %2340 = vmatpush1.xpose.msra.mxu0 0.0
        %2341 = vmatprep.subr.mxu0 0.0
        %2342 = vmatpush1.xpose.msra.mxu0 0.0
        %2343 = vmatprep.subr.mxu0 0.0
        %2344 = vmatpush1.xpose.msra.mxu0 0.0
        %2345 = vmatprep.subr.mxu0 0.0
        %2346 = vmatpush1.xpose.msra.mxu0 0.0
        %2347 = vmatprep.subr.mxu0 0.0
        %2348 = vmatpush1.xpose.msra.mxu0 0.0
        %2349 = vmatprep.subr.mxu0 0.0
        %2350 = vmatpush1.xpose.msra.mxu0 0.0
        %2351 = vmatprep.subr.mxu0 0.0
        %2352 = vmatpush1.xpose.msra.mxu0 0.0
        %2353 = vmatprep.subr.mxu0 0.0
        %2354 = vmatpush1.xpose.msra.mxu0 0.0
        %2355 = vmatprep.subr.mxu0 0.0
        %2356 = vmatpush1.xpose.msra.mxu0 0.0
        %2357 = vmatprep.subr.mxu0 0.0
        %2358 = vmatpush1.xpose.msra.mxu0 0.0
        %2359 = vmatprep.subr.mxu0 0.0
        %2360 = vmatpush1.xpose.msra.mxu0 0.0
        %2361 = vmatprep.subr.mxu0 0.0
        %2362 = vmatpush1.xpose.msra.mxu0 0.0
        %2363 = vmatprep.subr.mxu0 0.0
        %2364 = vmatpush1.xpose.msra.mxu0 0.0
        %2365 = vmatprep.subr.mxu0 0.0
        %2366 = vmatpush1.xpose.msra.mxu0 %v2333
        %2367 = vmatprep.subr.mxu0 0.0
        %2368 = vmatpush2.xpose.msra.mxu0 0.0
        %2369 = vmatprep.subr.mxu0 0.0
        %2370 = vmatpush2.xpose.msra.mxu0 0.0
        %2371 = vmatprep.subr.mxu0 0.0
        %2372 = vmatpush2.xpose.msra.mxu0 0.0
        %2373 = vmatprep.subr.mxu0 0.0
        %2374 = vmatpush2.xpose.msra.mxu0 0.0
        %2375 = vmatprep.subr.mxu0 0.0
        %2376 = vmatpush2.xpose.msra.mxu0 0.0
        %2377 = vmatprep.subr.mxu0 0.0
        %2378 = vmatpush2.xpose.msra.mxu0 0.0
        %2379 = vmatprep.subr.mxu0 0.0
        %2380 = vmatpush2.xpose.msra.mxu0 0.0
        %2381 = vmatprep.subr.mxu0 0.0
        %2382 = vmatpush2.xpose.msra.mxu0 0.0
        %2383 = vmatprep.subr.mxu0 0.0
        %2384 = vmatpush2.xpose.msra.mxu0 0.0
        %2385 = vmatprep.subr.mxu0 0.0
        %2386 = vmatpush2.xpose.msra.mxu0 0.0
        %2387 = vmatprep.subr.mxu0 0.0
        %2388 = vmatpush2.xpose.msra.mxu0 0.0
        %2389 = vmatprep.subr.mxu0 0.0
        %2390 = vmatpush2.xpose.msra.mxu0 0.0
        %2391 = vmatprep.subr.mxu0 0.0
        %2392 = vmatpush2.xpose.msra.mxu0 0.0
        %2393 = vmatprep.subr.mxu0 0.0
        %2394 = vmatpush2.xpose.msra.mxu0 0.0
        %2395 = vmatprep.subr.mxu0 0.0
        %2396 = vmatpush2.xpose.msra.mxu0 0.0
        %2397 = vmatprep.subr.mxu0 0.0
        %2398 = vmatpush2.xpose.msra.mxu0 0.0
        %2399 = vmatprep.mubr.f32.mxu0 0.0
        %2400 = vmatmul.mubr.f32.gmra.mxu0 %v2330
        %v2401 = vpop.f32.mrf.mxu0
        %v2402 = vadd.f32 %v1593, %v2401
        %v2403 = vpop.f32.mrf.mxu0
        %2404 = vdwg.mxu0
        %v2405 = vsel %vm672, %v2402, -inf
        %2406 = vmax.xlane.f32.xlu0 %v2405
        %v2407 = vpop.xlane.xlu0 %2406
        %v2408 = vsub.f32 %v2402, %v2407
        %v2409 = vmul.f32 %v2408, 1.442695
        %v2410 = vpow.pop %v2409
        %v2411 = vsel %vm672, %v2410, 0.0
        %2412 = vadd.xlane.f32.xlu0 %v2411
        %v2413 = vpop.xlane.xlu0 %2412
        %v2414 = vrcp.pop %v2413
        %v2415 = vmul.f32 %v2413, %v2414
        %v2416 = vsub.f32 2.0, %v2415
        %v2417 = vmul.f32 %v2414, %v2416
        %v2418 = vmul.f32 %v2410, %v2417
        %v2420 = vsel %vm672, %v2418, 0
        %2422 = vmatprep.subr.mxu0 0.0
        %2423 = vmatpush1.msra.mxu0 0.0
        %2424 = vmatprep.subr.mxu0 0.0
        %2425 = vmatpush1.msra.mxu0 0.0
        %2426 = vmatprep.subr.mxu0 0.0
        %2427 = vmatpush1.msra.mxu0 0.0
        %2428 = vmatprep.subr.mxu0 0.0
        %2429 = vmatpush1.msra.mxu0 0.0
        %2430 = vmatprep.subr.mxu0 0.0
        %2431 = vmatpush1.msra.mxu0 0.0
        %2432 = vmatprep.subr.mxu0 0.0
        %2433 = vmatpush1.msra.mxu0 0.0
        %2434 = vmatprep.subr.mxu0 0.0
        %2435 = vmatpush1.msra.mxu0 0.0
        %2436 = vmatprep.subr.mxu0 0.0
        %2437 = vmatpush1.msra.mxu0 0.0
        %2438 = vmatprep.subr.mxu0 0.0
        %2439 = vmatpush1.msra.mxu0 0.0
        %2440 = vmatprep.subr.mxu0 0.0
        %2441 = vmatpush1.msra.mxu0 0.0
        %2442 = vmatprep.subr.mxu0 0.0
        %2443 = vmatpush1.msra.mxu0 0.0
        %2444 = vmatprep.subr.mxu0 0.0
        %2445 = vmatpush1.msra.mxu0 0.0
        %2446 = vmatprep.subr.mxu0 0.0
        %2447 = vmatpush1.msra.mxu0 0.0
        %2448 = vmatprep.subr.mxu0 0.0
        %2449 = vmatpush1.msra.mxu0 0.0
        %2450 = vmatprep.subr.mxu0 0.0
        %2451 = vmatpush1.msra.mxu0 0.0
        %2452 = vmatprep.subr.mxu0 0.0
        %2453 = vmatpush1.msra.mxu0 %v2328
        %2454 = vmatprep.subr.mxu0 0.0
        %2455 = vmatpush2.msra.mxu0 0.0
        %2456 = vmatprep.subr.mxu0 0.0
        %2457 = vmatpush2.msra.mxu0 0.0
        %2458 = vmatprep.subr.mxu0 0.0
        %2459 = vmatpush2.msra.mxu0 0.0
        %2460 = vmatprep.subr.mxu0 0.0
        %2461 = vmatpush2.msra.mxu0 0.0
        %2462 = vmatprep.subr.mxu0 0.0
        %2463 = vmatpush2.msra.mxu0 0.0
        %2464 = vmatprep.subr.mxu0 0.0
        %2465 = vmatpush2.msra.mxu0 0.0
        %2466 = vmatprep.subr.mxu0 0.0
        %2467 = vmatpush2.msra.mxu0 0.0
        %2468 = vmatprep.subr.mxu0 0.0
        %2469 = vmatpush2.msra.mxu0 0.0
        %2470 = vmatprep.subr.mxu0 0.0
        %2471 = vmatpush2.msra.mxu0 0.0
        %2472 = vmatprep.subr.mxu0 0.0
        %2473 = vmatpush2.msra.mxu0 0.0
        %2474 = vmatprep.subr.mxu0 0.0
        %2475 = vmatpush2.msra.mxu0 0.0
        %2476 = vmatprep.subr.mxu0 0.0
        %2477 = vmatpush2.msra.mxu0 0.0
        %2478 = vmatprep.subr.mxu0 0.0
        %2479 = vmatpush2.msra.mxu0 0.0
        %2480 = vmatprep.subr.mxu0 0.0
        %2481 = vmatpush2.msra.mxu0 0.0
        %2482 = vmatprep.subr.mxu0 0.0
        %2483 = vmatpush2.msra.mxu0 0.0
        %2484 = vmatprep.subr.mxu0 0.0
        %2485 = vmatpush2.msra.mxu0 0.0
        %2486 = vmatprep.mubr.f32.mxu0 0.0
        %2487 = vmatmul.mubr.f32.gmra.mxu0 %v2420
        %v2488 = vpop.f32.mrf.mxu0
        %v2489 = vadd.f32 0.0, %v2488
        %v2490 = vpop.f32.mrf.mxu0
        %2491 = vdwg.mxu0
        %v2492 = vld [vmem:[#allocation5] sm:$0xff]
        %s2493 = scalar_lea.vmem [#allocation12], 24
        %v2494 = vld [vmem:[%s2493] sm:$0xff]
        %v2496 = vsel %vm672, %v2489, 0
        %2498 = vmatprep.subr.mxu0 0.0
        %2499 = vmatpush1.msra.mxu0 0.0
        %2500 = vmatprep.subr.mxu0 0.0
        %2501 = vmatpush1.msra.mxu0 0.0
        %2502 = vmatprep.subr.mxu0 0.0
        %2503 = vmatpush1.msra.mxu0 0.0
        %2504 = vmatprep.subr.mxu0 0.0
        %2505 = vmatpush1.msra.mxu0 0.0
        %2506 = vmatprep.subr.mxu0 0.0
        %2507 = vmatpush1.msra.mxu0 0.0
        %2508 = vmatprep.subr.mxu0 0.0
        %2509 = vmatpush1.msra.mxu0 0.0
        %2510 = vmatprep.subr.mxu0 0.0
        %2511 = vmatpush1.msra.mxu0 0.0
        %2512 = vmatprep.subr.mxu0 0.0
        %2513 = vmatpush1.msra.mxu0 0.0
        %2514 = vmatprep.subr.mxu0 0.0
        %2515 = vmatpush1.msra.mxu0 0.0
        %2516 = vmatprep.subr.mxu0 0.0
        %2517 = vmatpush1.msra.mxu0 0.0
        %2518 = vmatprep.subr.mxu0 0.0
        %2519 = vmatpush1.msra.mxu0 0.0
        %2520 = vmatprep.subr.mxu0 0.0
        %2521 = vmatpush1.msra.mxu0 0.0
        %2522 = vmatprep.subr.mxu0 0.0
        %2523 = vmatpush1.msra.mxu0 0.0
        %2524 = vmatprep.subr.mxu0 0.0
        %2525 = vmatpush1.msra.mxu0 0.0
        %2526 = vmatprep.subr.mxu0 0.0
        %2527 = vmatpush1.msra.mxu0 0.0
        %2528 = vmatprep.subr.mxu0 0.0
        %2529 = vmatpush1.msra.mxu0 %v2494
        %2530 = vmatprep.subr.mxu0 0.0
        %2531 = vmatpush2.msra.mxu0 0.0
        %2532 = vmatprep.subr.mxu0 0.0
        %2533 = vmatpush2.msra.mxu0 0.0
        %2534 = vmatprep.subr.mxu0 0.0
        %2535 = vmatpush2.msra.mxu0 0.0
        %2536 = vmatprep.subr.mxu0 0.0
        %2537 = vmatpush2.msra.mxu0 0.0
        %2538 = vmatprep.subr.mxu0 0.0
        %2539 = vmatpush2.msra.mxu0 0.0
        %2540 = vmatprep.subr.mxu0 0.0
        %2541 = vmatpush2.msra.mxu0 0.0
        %2542 = vmatprep.subr.mxu0 0.0
        %2543 = vmatpush2.msra.mxu0 0.0
        %2544 = vmatprep.subr.mxu0 0.0
        %2545 = vmatpush2.msra.mxu0 0.0
        %2546 = vmatprep.subr.mxu0 0.0
        %2547 = vmatpush2.msra.mxu0 0.0
        %2548 = vmatprep.subr.mxu0 0.0
        %2549 = vmatpush2.msra.mxu0 0.0
        %2550 = vmatprep.subr.mxu0 0.0
        %2551 = vmatpush2.msra.mxu0 0.0
        %2552 = vmatprep.subr.mxu0 0.0
        %2553 = vmatpush2.msra.mxu0 0.0
        %2554 = vmatprep.subr.mxu0 0.0
        %2555 = vmatpush2.msra.mxu0 0.0
        %2556 = vmatprep.subr.mxu0 0.0
        %2557 = vmatpush2.msra.mxu0 0.0
        %2558 = vmatprep.subr.mxu0 0.0
        %2559 = vmatpush2.msra.mxu0 0.0
        %2560 = vmatprep.subr.mxu0 0.0
        %2561 = vmatpush2.msra.mxu0 0.0
        %2562 = vmatprep.mubr.f32.mxu0 0.0
        %2563 = vmatmul.mubr.f32.gmra.mxu0 %v2496
        %v2564 = vpop.f32.mrf.mxu0
        %v2565 = vadd.f32 0.0, %v2564
        %v2566 = vpop.f32.mrf.mxu0
        %2567 = vdwg.mxu0
        %v2568 = vadd.f32 %v2492, %v2565
        %2569 = vst.msk [vmem:[#allocation5] sm:$0xff] %vm1586, %v2568
        %v2570 = vld [vmem:[#allocation5] sm:$0xff]
        %v2571 = vadd.f32 %v2570, %v666
        %v2572 = vld [vmem:[%s13] sm:$0x1]
        %v2573 = vld [vmem:[%s14] sm:$0x1]
        %v2574 = vsel %vm1586, %v2571, 0.0
        %2575 = vadd.xlane.f32.xlu0 %v2574
        %v2576 = vpop.xlane.xlu0 %2575
        %v2577 = vrcp.pop 32.0
        %v2578 = vmul.f32 %v2576, %v2577
        %v2579 = vsub.f32 %v2571, %v2578
        %v2580 = vmul.f32 %v2579, %v2579
        %v2581 = vsel %vm1586, %v2580, 0.0
        %2582 = vadd.xlane.f32.xlu0 %v2581
        %v2583 = vpop.xlane.xlu0 %2582
        %v2584 = vmul.f32 %v2583, %v2577
        %v2585 = vadd.f32 %v2584, 1e-05
        %v2586 = vrsqrt.pop %v2585
        %v2587 = vmul.f32 %v2579, %v2586
        %v2589 = vlaneseq
        %v2590 = vshrl.u32 %v2589, 7
        %v2591 = vsub.s32 0, %v2590
        %v2592 = vrot.slane %v2572, %v2591
        %v2594 = vmul.f32 %v2587, %v2592
        %v2596 = vlaneseq
        %v2597 = vshrl.u32 %v2596, 7
        %v2598 = vsub.s32 0, %v2597
        %v2599 = vrot.slane %v2573, %v2598
        %v2601 = vadd.f32 %v2594, %v2599
        %v2602 = vld [vmem:[#allocation14] sm:$0xff]
        %v2603 = vld [vmem:[#allocation14 + $0x8] sm:$0xff]
        %v2604 = vld [vmem:[#allocation14 + $0x10] sm:$0xff]
        %v2605 = vld [vmem:[#allocation14 + $0x18] sm:$0xff]
        %v2606 = vld [vmem:[%s10] sm:$0x1]
        %v2608 = vlaneseq
        %v2609 = vshrl.u32 %v2608, 7
        %v2610 = vsub.s32 0, %v2609
        %v2611 = vrot.slane %v2606, %v2610
        %v2614 = vsel %vm1586, %v2601, 0
        %2616 = vmatprep.subr.mxu0 0.0
        %2617 = vmatpush1.msra.mxu0 0.0
        %2618 = vmatprep.subr.mxu0 0.0
        %2619 = vmatpush1.msra.mxu0 0.0
        %2620 = vmatprep.subr.mxu0 0.0
        %2621 = vmatpush1.msra.mxu0 0.0
        %2622 = vmatprep.subr.mxu0 0.0
        %2623 = vmatpush1.msra.mxu0 0.0
        %2624 = vmatprep.subr.mxu0 0.0
        %2625 = vmatpush1.msra.mxu0 0.0
        %2626 = vmatprep.subr.mxu0 0.0
        %2627 = vmatpush1.msra.mxu0 0.0
        %2628 = vmatprep.subr.mxu0 0.0
        %2629 = vmatpush1.msra.mxu0 0.0
        %2630 = vmatprep.subr.mxu0 0.0
        %2631 = vmatpush1.msra.mxu0 0.0
        %2632 = vmatprep.subr.mxu0 0.0
        %2633 = vmatpush1.msra.mxu0 0.0
        %2634 = vmatprep.subr.mxu0 0.0
        %2635 = vmatpush1.msra.mxu0 0.0
        %2636 = vmatprep.subr.mxu0 0.0
        %2637 = vmatpush1.msra.mxu0 0.0
        %2638 = vmatprep.subr.mxu0 0.0
        %2639 = vmatpush1.msra.mxu0 0.0
        %2640 = vmatprep.subr.mxu0 0.0
        %2641 = vmatpush1.msra.mxu0 %v2605
        %2642 = vmatprep.subr.mxu0 0.0
        %2643 = vmatpush1.msra.mxu0 %v2604
        %2644 = vmatprep.subr.mxu0 0.0
        %2645 = vmatpush1.msra.mxu0 %v2603
        %2646 = vmatprep.subr.mxu0 0.0
        %2647 = vmatpush1.msra.mxu0 %v2602
        %2648 = vmatprep.subr.mxu0 0.0
        %2649 = vmatpush2.msra.mxu0 0.0
        %2650 = vmatprep.subr.mxu0 0.0
        %2651 = vmatpush2.msra.mxu0 0.0
        %2652 = vmatprep.subr.mxu0 0.0
        %2653 = vmatpush2.msra.mxu0 0.0
        %2654 = vmatprep.subr.mxu0 0.0
        %2655 = vmatpush2.msra.mxu0 0.0
        %2656 = vmatprep.subr.mxu0 0.0
        %2657 = vmatpush2.msra.mxu0 0.0
        %2658 = vmatprep.subr.mxu0 0.0
        %2659 = vmatpush2.msra.mxu0 0.0
        %2660 = vmatprep.subr.mxu0 0.0
        %2661 = vmatpush2.msra.mxu0 0.0
        %2662 = vmatprep.subr.mxu0 0.0
        %2663 = vmatpush2.msra.mxu0 0.0
        %2664 = vmatprep.subr.mxu0 0.0
        %2665 = vmatpush2.msra.mxu0 0.0
        %2666 = vmatprep.subr.mxu0 0.0
        %2667 = vmatpush2.msra.mxu0 0.0
        %2668 = vmatprep.subr.mxu0 0.0
        %2669 = vmatpush2.msra.mxu0 0.0
        %2670 = vmatprep.subr.mxu0 0.0
        %2671 = vmatpush2.msra.mxu0 0.0
        %2672 = vmatprep.subr.mxu0 0.0
        %2673 = vmatpush2.msra.mxu0 0.0
        %2674 = vmatprep.subr.mxu0 0.0
        %2675 = vmatpush2.msra.mxu0 0.0
        %2676 = vmatprep.subr.mxu0 0.0
        %2677 = vmatpush2.msra.mxu0 0.0
        %2678 = vmatprep.subr.mxu0 0.0
        %2679 = vmatpush2.msra.mxu0 0.0
        %2680 = vmatprep.mubr.f32.mxu0 0.0
        %2681 = vmatmul.mubr.f32.gmra.mxu0 %v2614
        %v2682 = vpop.f32.mrf.mxu0
        %v2683 = vadd.f32 %v2611, %v2682
        %v2684 = vpop.f32.mrf.mxu0
        %2685 = vdwg.mxu0
        %v2686 = vmax.f32 %v2683, 0.0
        %v2687 = vld [vmem:[%s11] sm:$0xff]
        %v2688 = vld [vmem:[%s11 + $0x8] sm:$0xff]
        %v2689 = vld [vmem:[%s11 + $0x10] sm:$0xff]
        %v2690 = vld [vmem:[%s11 + $0x18] sm:$0xff]
        %v2691 = vld [vmem:[%s11 + $0x20] sm:$0xff]
        %v2692 = vld [vmem:[%s11 + $0x28] sm:$0xff]
        %v2693 = vld [vmem:[%s11 + $0x30] sm:$0xff]
        %v2694 = vld [vmem:[%s11 + $0x38] sm:$0xff]
        %v2695 = vld [vmem:[%s12] sm:$0x1]
        %v2697 = vlaneseq
        %v2698 = vshrl.u32 %v2697, 7
        %v2699 = vsub.s32 0, %v2698
        %v2700 = vrot.slane %v2695, %v2699
        %vm2702 = vcmask 523264
        %v2704 = vsel %vm2702, %v2686, 0
        %2706 = vmatprep.subr.mxu0 0.0
        %2707 = vmatpush1.msra.mxu0 0.0
        %2708 = vmatprep.subr.mxu0 0.0
        %2709 = vmatpush1.msra.mxu0 0.0
        %2710 = vmatprep.subr.mxu0 0.0
        %2711 = vmatpush1.msra.mxu0 0.0
        %2712 = vmatprep.subr.mxu0 0.0
        %2713 = vmatpush1.msra.mxu0 0.0
        %2714 = vmatprep.subr.mxu0 0.0
        %2715 = vmatpush1.msra.mxu0 0.0
        %2716 = vmatprep.subr.mxu0 0.0
        %2717 = vmatpush1.msra.mxu0 0.0
        %2718 = vmatprep.subr.mxu0 0.0
        %2719 = vmatpush1.msra.mxu0 0.0
        %2720 = vmatprep.subr.mxu0 0.0
        %2721 = vmatpush1.msra.mxu0 0.0
        %2722 = vmatprep.subr.mxu0 0.0
        %2723 = vmatpush1.msra.mxu0 %v2694
        %2724 = vmatprep.subr.mxu0 0.0
        %2725 = vmatpush1.msra.mxu0 %v2693
        %2726 = vmatprep.subr.mxu0 0.0
        %2727 = vmatpush1.msra.mxu0 %v2692
        %2728 = vmatprep.subr.mxu0 0.0
        %2729 = vmatpush1.msra.mxu0 %v2691
        %2730 = vmatprep.subr.mxu0 0.0
        %2731 = vmatpush1.msra.mxu0 %v2690
        %2732 = vmatprep.subr.mxu0 0.0
        %2733 = vmatpush1.msra.mxu0 %v2689
        %2734 = vmatprep.subr.mxu0 0.0
        %2735 = vmatpush1.msra.mxu0 %v2688
        %2736 = vmatprep.subr.mxu0 0.0
        %2737 = vmatpush1.msra.mxu0 %v2687
        %2738 = vmatprep.subr.mxu0 0.0
        %2739 = vmatpush2.msra.mxu0 0.0
        %2740 = vmatprep.subr.mxu0 0.0
        %2741 = vmatpush2.msra.mxu0 0.0
        %2742 = vmatprep.subr.mxu0 0.0
        %2743 = vmatpush2.msra.mxu0 0.0
        %2744 = vmatprep.subr.mxu0 0.0
        %2745 = vmatpush2.msra.mxu0 0.0
        %2746 = vmatprep.subr.mxu0 0.0
        %2747 = vmatpush2.msra.mxu0 0.0
        %2748 = vmatprep.subr.mxu0 0.0
        %2749 = vmatpush2.msra.mxu0 0.0
        %2750 = vmatprep.subr.mxu0 0.0
        %2751 = vmatpush2.msra.mxu0 0.0
        %2752 = vmatprep.subr.mxu0 0.0
        %2753 = vmatpush2.msra.mxu0 0.0
        %2754 = vmatprep.subr.mxu0 0.0
        %2755 = vmatpush2.msra.mxu0 0.0
        %2756 = vmatprep.subr.mxu0 0.0
        %2757 = vmatpush2.msra.mxu0 0.0
        %2758 = vmatprep.subr.mxu0 0.0
        %2759 = vmatpush2.msra.mxu0 0.0
        %2760 = vmatprep.subr.mxu0 0.0
        %2761 = vmatpush2.msra.mxu0 0.0
        %2762 = vmatprep.subr.mxu0 0.0
        %2763 = vmatpush2.msra.mxu0 0.0
        %2764 = vmatprep.subr.mxu0 0.0
        %2765 = vmatpush2.msra.mxu0 0.0
        %2766 = vmatprep.subr.mxu0 0.0
        %2767 = vmatpush2.msra.mxu0 0.0
        %2768 = vmatprep.subr.mxu0 0.0
        %2769 = vmatpush2.msra.mxu0 0.0
        %2770 = vmatprep.mubr.f32.mxu0 0.0
        %2771 = vmatmul.mubr.f32.gmra.mxu0 %v2704
        %v2772 = vpop.f32.mrf.mxu0
        %v2773 = vadd.f32 %v2700, %v2772
        %v2774 = vpop.f32.mrf.mxu0
        %2775 = vdwg.mxu0
        %v2776 = vadd.f32 %v2773, %v2601
        %v2777 = vld [vmem:[%s15] sm:$0x1]
        %v2778 = vld [vmem:[%s16] sm:$0x1]
        %v2779 = vsel %vm1586, %v2776, 0.0
        %2780 = vadd.xlane.f32.xlu0 %v2779
        %v2781 = vpop.xlane.xlu0 %2780
        %v2782 = vmul.f32 %v2781, %v2577
        %v2783 = vsub.f32 %v2776, %v2782
        %v2784 = vmul.f32 %v2783, %v2783
        %v2785 = vsel %vm1586, %v2784, 0.0
        %2786 = vadd.xlane.f32.xlu0 %v2785
        %v2787 = vpop.xlane.xlu0 %2786
        %v2788 = vmul.f32 %v2787, %v2577
        %v2789 = vadd.f32 %v2788, 1e-05
        %v2790 = vrsqrt.pop %v2789
        %v2791 = vmul.f32 %v2783, %v2790
        %v2793 = vlaneseq
        %v2794 = vshrl.u32 %v2793, 7
        %v2795 = vsub.s32 0, %v2794
        %v2796 = vrot.slane %v2777, %v2795
        %v2798 = vmul.f32 %v2791, %v2796
        %v2800 = vlaneseq
        %v2801 = vshrl.u32 %v2800, 7
        %v2802 = vsub.s32 0, %v2801
        %v2803 = vrot.slane %v2778, %v2802
        %v2805 = vadd.f32 %v2798, %v2803
        %2806 = vst.msk [vmem:[%s653] sm:$0xff] %vm1586, %v2805
        %s2807 = sand.u32 %s421, 1
        %s2808 = scalar_lea.sflag [#allocation8], %s2807
        %s2809 = sand.u32 %s421, 1
        %s2810 = smul.addr %s2809, 8
        %s2811 = scalar_lea.vmem [#allocation15], %s2810
        // Predicated region
        $region109: #{tpu_custom_call.1} parent=87 // pred_check
          %p2812 = pneg %p431
        $region110: #{tpu_custom_call.1} parent=87 // pred_check_branch
          %2814 = sbr.rel (%p2812) target = $region112
        $region111: #{tpu_custom_call.1} parent=87 // pred_region
          %s2816 = ssub.s32 128, 128
          %2817 = vsyncadd %s2808, %s2816
          %s2818 = smul.addr %s36, 128
          %s2819 = scalar_lea.hbm %s17, %s2818
          %s2821 = sshll.u32 %s2811, 4
          %s2822 = int_to_ptr.vmem [resolvable:$true] %s2821
          %2824 = dma.vmem_to_hbm [thread:$0]  %s2822, 128, %s2819, %s2808
        $region112: #{tpu_custom_call.1} parent=87 // pred_fallthru
          _
      $region88: #{tpu_custom_call.1} parent=5 // pred_fallthru
        _
      %p2825 = scmp.le.s32.totalorder 2, %s31
      // Predicated region
      $region113: #{tpu_custom_call.1} parent=5 // pred_check
        %p2826 = pneg %p2825
      $region114: #{tpu_custom_call.1} parent=5 // pred_check_branch
        %2828 = sbr.rel (%p2826) target = $region116
      $region115: #{tpu_custom_call.1} parent=5 // pred_region
        %s2829 = ssub.s32 %s31, 2
        // Predicated region
        $region117: #{tpu_custom_call.1} parent=115 // pred_check
          %p2830 = pneg %p437
        $region118: #{tpu_custom_call.1} parent=115 // pred_check_branch
          %2832 = sbr.rel (%p2830) target = $region120
        $region119: #{tpu_custom_call.1} parent=115 // pred_region
          %s2833 = sand.u32 %s422, 1
          %s2834 = scalar_lea.sflag [#allocation8], %s2833
          %s2835 = sand.u32 %s422, 1
          %s2836 = smul.addr %s2835, 8
          %s2837 = scalar_lea.vmem [#allocation15], %s2836
          %2838 = dma.done %s2834, 128
        $region120: #{tpu_custom_call.1} parent=115 // pred_fallthru
          _
      $region116: #{tpu_custom_call.1} parent=5 // pred_fallthru
        _
    $region6: #{tpu_custom_call.1} parent=1 // loop_footer
      %s35 = sadd.s32 1, %s31
    $region7: #{tpu_custom_call.1} parent=1 // loop_footer_branch
      %30 = sbr.rel target = $region3
    $region8: #{tpu_custom_call.1} parent=1 // loop_exit
      _
    %2839 = vsyncpa [#allocation7], 1
    %s2840 = scalar_lea.sflag [#allocation7], 1
    %2841 = vsyncpa %s2840, 1
    %2842 = vsyncpa [#allocation10], 1
    %2843 = vsyncpa [#allocation13], 1
    %2844 = vsyncpa [#allocation8], 1
    %s2845 = scalar_lea.sflag [#allocation8], 1
    %2846 = vsyncpa %s2845, 1

// kernel: tpu_custom_call.1
$region0: #{tpu_custom_call.1}
  #allocation0 [shape = 'u32[]', space=smem, size = 0x4, offset = 0x4, fixed_abs, tag = 'smem constant byte address 0x4 - core index']
  #allocation1 [shape = 'u32[144,128]{1,0:T(1,128)}', space=vmem, size = 0x12000, scoped, tag = 'internal scratch']
  #allocation2 [shape = 'f32[4,8,8]{2,1,0:T(8,128)}', space=vmem, size = 0x4000, scoped, tag = 'scratch operand']
  #allocation3 [shape = 'f32[4,8,8]{2,1,0:T(8,128)}', space=vmem, size = 0x4000, scoped, tag = 'scratch operand']
  #allocation4 [shape = 'f32[4,8,8]{2,1,0:T(8,128)}', space=vmem, size = 0x4000, scoped, tag = 'scratch operand']
  #allocation5 [shape = 'f32[1,8,32]{2,1,0:T(8,128)}', space=vmem, size = 0x1000, scoped, tag = 'scratch operand']
  %s0 = inlined_call_operand.vmem [shape: f32[4,8,32], index: 0, kind: input, shape index: {}]
  %s1 = inlined_call_operand.vmem [shape: f32[4,8,32], index: 1, kind: input, shape index: {}]
  %s2 = inlined_call_operand.vmem [shape: f32[4,8,32], index: 2, kind: input, shape index: {}]
  %s3 = inlined_call_operand.hbm [shape: f32[4,1,8], index: 3, kind: input, shape index: {}]
  %s4 = inlined_call_operand.hbm [shape: f32[8,8], index: 4, kind: input, shape index: {}]
  %s5 = inlined_call_operand.vmem [shape: f32[8,8], index: 5, kind: input, shape index: {}]
  %s6 = inlined_call_operand.hbm [shape: f32[8,8], index: 6, kind: input, shape index: {}]
  %s7 = inlined_call_operand.hbm [shape: f32[4,8,32], index: 7, kind: input, shape index: {}]
  %s8 = inlined_call_operand.vmem [shape: f32[1,32], index: 8, kind: input, shape index: {}]
  %s9 = inlined_call_operand.hbm [shape: f32[32,64], index: 9, kind: input, shape index: {}]
  %s10 = inlined_call_operand.vmem [shape: f32[1,64], index: 10, kind: input, shape index: {}]
  %s11 = inlined_call_operand.vmem [shape: f32[64,32], index: 11, kind: input, shape index: {}]
  %s12 = inlined_call_operand.vmem [shape: f32[1,32], index: 12, kind: input, shape index: {}]
  %s13 = inlined_call_operand.vmem [shape: f32[1,32], index: 13, kind: input, shape index: {}]
  %s14 = inlined_call_operand.vmem [shape: f32[1,32], index: 14, kind: input, shape index: {}]
  %s15 = inlined_call_operand.vmem [shape: f32[1,32], index: 15, kind: input, shape index: {}]
  %s16 = inlined_call_operand.vmem [shape: f32[1,32], index: 16, kind: input, shape index: {}]
  %s17 = inlined_call_operand.hbm [shape: f32[4,8,32], index: 17, kind: output, shape index: {}]
  %s18 = sld [smem:[#allocation0]]
  $region121: #{tpu_custom_call.1} parent=0
    _
  %s20 = ssub.s32 1, %s18
  %s21 = scalar_select 0, %s20, %s18
  $region1: #{tpu_custom_call.1} parent=0
    #allocation6 [shape = 'u8[1024]{0}', space=vmem, size = 0x400, scoped, tag = 'input window, operand 3']
    #allocation7 [shape = 's32[2]{0}', space=sflag, size = 0x8, scoped, tag = 'scoped memory for tpu_custom_call.1']
    #allocation8 [shape = 's32[2]{0}', space=sflag, size = 0x8, scoped, tag = 'scoped memory for tpu_custom_call.1']
    #allocation9 [shape = 'u8[4096]{0}', space=vmem, size = 0x1000, scoped, tag = 'input window, operand 4, single buffered']
    #allocation10 [shape = 's32[1]{0}', space=sflag, size = 0x4, scoped, tag = 'scoped memory for tpu_custom_call.1']
    #allocation11 [shape = 'u8[4096]{0}', space=vmem, size = 0x1000, scoped, tag = 'input window, operand 6, single buffered']
    #allocation12 [shape = 'u8[16384]{0}', space=vmem, size = 0x4000, scoped, tag = 'input window, operand 7, single buffered']
    #allocation13 [shape = 's32[1]{0}', space=sflag, size = 0x4, scoped, tag = 'scoped memory for tpu_custom_call.1']
    #allocation14 [shape = 'u8[16384]{0}', space=vmem, size = 0x4000, scoped, tag = 'input window, operand 9, single buffered']
    #allocation15 [shape = 'u8[8192]{0}', space=vmem, size = 0x2000, scoped, tag = 'output window, operand 0']
    %22 = vsyncpa [#allocation7], 0
    %s23 = scalar_lea.sflag [#allocation7], 1
    %24 = vsyncpa %s23, 0
    %25 = vsyncpa [#allocation10], 0
    %26 = vsyncpa [#allocation13], 0
    %27 = vsyncpa [#allocation8], 0
    %s28 = scalar_lea.sflag [#allocation8], 1
    %29 = vsyncpa %s28, 0
    loop: start=0, step=1, limit=6
    $region2: #{tpu_custom_call.1} parent=1 // loop_pre_header
      _
    $region3: #{tpu_custom_call.1} parent=1 // loop_header
      %s31 = sphi 0, %s35
      %p32 = scmp.ge.s32.totalorder %s31, 6
      %s41 = sphi 0, %s43
      %s44 = sphi 0, %s41
      %s45 = sphi 0, %s44
      %s61 = sphi 0, %s45
      %s67 = sphi 0, %s69
      %s70 = sphi 0, %s67
      %s71 = sphi 0, %s70
      %s87 = sphi 0, %s71
      %s93 = sphi 0, %s95
      %s96 = sphi 0, %s93
      %s97 = sphi 0, %s96
      %s113 = sphi 0, %s97
      %s119 = sphi 0, %s121
      %s122 = sphi 0, %s119
      %s123 = sphi 0, %s122
      %s139 = sphi 0, %s123
      %s143 = sphi 0, %s143
      %s145 = sphi 0, %s143
      %s146 = sphi 0, %s145
      %s160 = sphi 0, %s146
      %s164 = sphi 0, %s164
      %s166 = sphi 0, %s164
      %s167 = sphi 0, %s166
      %s181 = sphi 0, %s167
      %s185 = sphi 0, %s185
      %s187 = sphi 0, %s185
      %s188 = sphi 0, %s187
      %s202 = sphi 0, %s188
      %s206 = sphi 0, %s206
      %s208 = sphi 0, %s206
      %s209 = sphi 0, %s208
      %s223 = sphi 0, %s209
      %s227 = sphi 0, %s227
      %s229 = sphi 0, %s227
      %s230 = sphi 0, %s229
      %s244 = sphi 0, %s230
      %s248 = sphi 0, %s248
      %s250 = sphi 0, %s248
      %s251 = sphi 0, %s250
      %s265 = sphi 0, %s251
      %s269 = sphi 0, %s269
      %s271 = sphi 0, %s269
      %s272 = sphi 0, %s271
      %s286 = sphi 0, %s272
      %s290 = sphi 0, %s290
      %s292 = sphi 0, %s290
      %s293 = sphi 0, %s292
      %s307 = sphi 0, %s293
      %s311 = sphi 0, %s311
      %s313 = sphi 0, %s311
      %s314 = sphi 0, %s313
      %s328 = sphi 0, %s314
      %s332 = sphi 0, %s332
      %s334 = sphi 0, %s332
      %s335 = sphi 0, %s334
      %s349 = sphi 0, %s335
      %s353 = sphi 0, %s353
      %s355 = sphi 0, %s353
      %s356 = sphi 0, %s355
      %s370 = sphi 0, %s356
      %s374 = sphi 0, %s374
      %s376 = sphi 0, %s374
      %s377 = sphi 0, %s376
      %s391 = sphi 0, %s377
      %s395 = sphi 0, %s395
      %s397 = sphi 0, %s395
      %s398 = sphi 0, %s397
      %s412 = sphi 0, %s398
      %s418 = sphi 0, %s420
      %s421 = sphi 0, %s418
      %s422 = sphi 0, %s421
      %s438 = sphi 0, %s422
    $region4: #{tpu_custom_call.1} parent=1 // loop_header_branch
      %34 = sbr.rel (%p32) target = $region8
    $region5: #{tpu_custom_call.1} parent=1 // loop_body
      %s36 = ssub.s32 %s31, 1
      %s37 = ssub.s32 %s31, 2
      %s38 = sadd.s32 %s31, 1
      %s39 = ssub.s32 %s31, %s38
      %p40 = scmp.eq.s32.totalorder %s39, 0
      %s42 = sadd.s32 %s41, 1
      %s43 = scalar_select %p40, %s41, %s42
      %p46 = pneg %p40
      %p47 = scmp.eq.s32.totalorder %s31, 3
      %p48 = por %p46, %p47
      %p49 = scmp.ne.s32.totalorder %s41, %s44
      %p50 = scmp.eq.s32.totalorder %s31, 0
      %p51 = por %p49, %p50
      %p52 = scmp.ne.s32.totalorder %s41, %s44
      %p53 = scmp.eq.s32.totalorder %s36, 3
      %p54 = por %p52, %p53
      %p55 = scmp.ne.s32.totalorder %s44, %s45
      %p56 = scmp.eq.s32.totalorder %s36, 0
      %p57 = por %p55, %p56
      %p58 = scmp.ne.s32.totalorder %s44, %s45
      %p59 = scmp.eq.s32.totalorder %s37, 3
      %p60 = por %p58, %p59
      %p62 = scmp.ne.s32.totalorder %s45, %s61
      %p63 = scmp.eq.s32.totalorder %s37, 0
      %p64 = por %p62, %p63
      %s65 = ssub.s32 %s31, %s38
      %p66 = scmp.eq.s32.totalorder %s65, 0
      %s68 = sadd.s32 %s67, 1
      %s69 = scalar_select %p66, %s67, %s68
      %p72 = pneg %p66
      %p73 = scmp.eq.s32.totalorder %s31, 3
      %p74 = por %p72, %p73
      %p75 = scmp.ne.s32.totalorder %s67, %s70
      %p76 = scmp.eq.s32.totalorder %s31, 0
      %p77 = por %p75, %p76
      %p78 = scmp.ne.s32.totalorder %s67, %s70
      %p79 = scmp.eq.s32.totalorder %s36, 3
      %p80 = por %p78, %p79
      %p81 = scmp.ne.s32.totalorder %s70, %s71
      %p82 = scmp.eq.s32.totalorder %s36, 0
      %p83 = por %p81, %p82
      %p84 = scmp.ne.s32.totalorder %s70, %s71
      %p85 = scmp.eq.s32.totalorder %s37, 3
      %p86 = por %p84, %p85
      %p88 = scmp.ne.s32.totalorder %s71, %s87
      %p89 = scmp.eq.s32.totalorder %s37, 0
      %p90 = por %p88, %p89
      %s91 = ssub.s32 %s31, %s38
      %p92 = scmp.eq.s32.totalorder %s91, 0
      %s94 = sadd.s32 %s93, 1
      %s95 = scalar_select %p92, %s93, %s94
      %p98 = pneg %p92
      %p99 = scmp.eq.s32.totalorder %s31, 3
      %p100 = por %p98, %p99
      %p101 = scmp.ne.s32.totalorder %s93, %s96
      %p102 = scmp.eq.s32.totalorder %s31, 0
      %p103 = por %p101, %p102
      %p104 = scmp.ne.s32.totalorder %s93, %s96
      %p105 = scmp.eq.s32.totalorder %s36, 3
      %p106 = por %p104, %p105
      %p107 = scmp.ne.s32.totalorder %s96, %s97
      %p108 = scmp.eq.s32.totalorder %s36, 0
      %p109 = por %p107, %p108
      %p110 = scmp.ne.s32.totalorder %s96, %s97
      %p111 = scmp.eq.s32.totalorder %s37, 3
      %p112 = por %p110, %p111
      %p114 = scmp.ne.s32.totalorder %s97, %s113
      %p115 = scmp.eq.s32.totalorder %s37, 0
      %p116 = por %p114, %p115
      %s117 = ssub.s32 %s31, %s38
      %p118 = scmp.eq.s32.totalorder %s117, 0
      %s120 = sadd.s32 %s119, 1
      %s121 = scalar_select %p118, %s119, %s120
      %p124 = pneg %p118
      %p125 = scmp.eq.s32.totalorder %s31, 3
      %p126 = por %p124, %p125
      %p127 = scmp.ne.s32.totalorder %s119, %s122
      %p128 = scmp.eq.s32.totalorder %s31, 0
      %p129 = por %p127, %p128
      %p130 = scmp.ne.s32.totalorder %s119, %s122
      %p131 = scmp.eq.s32.totalorder %s36, 3
      %p132 = por %p130, %p131
      %p133 = scmp.ne.s32.totalorder %s122, %s123
      %p134 = scmp.eq.s32.totalorder %s36, 0
      %p135 = por %p133, %p134
      %p136 = scmp.ne.s32.totalorder %s122, %s123
      %p137 = scmp.eq.s32.totalorder %s37, 3
      %p138 = por %p136, %p137
      %p140 = scmp.ne.s32.totalorder %s123, %s139
      %p141 = scmp.eq.s32.totalorder %s37, 0
      %p142 = por %p140, %p141
      %s144 = sadd.s32 %s143, 1
      %p147 = scmp.eq.s32.totalorder %s31, 3
      %p148 = scmp.ne.s32.totalorder %s143, %s145
      %p149 = scmp.eq.s32.totalorder %s31, 0
      %p150 = por %p148, %p149
      %p151 = scmp.ne.s32.totalorder %s143, %s145
      %p152 = scmp.eq.s32.totalorder %s36, 3
      %p153 = por %p151, %p152
      %p154 = scmp.ne.s32.totalorder %s145, %s146
      %p155 = scmp.eq.s32.totalorder %s36, 0
      %p156 = por %p154, %p155
      %p157 = scmp.ne.s32.totalorder %s145, %s146
      %p158 = scmp.eq.s32.totalorder %s37, 3
      %p159 = por %p157, %p158
      %p161 = scmp.ne.s32.totalorder %s146, %s160
      %p162 = scmp.eq.s32.totalorder %s37, 0
      %p163 = por %p161, %p162
      %s165 = sadd.s32 %s164, 1
      %p168 = scmp.eq.s32.totalorder %s31, 3
      %p169 = scmp.ne.s32.totalorder %s164, %s166
      %p170 = scmp.eq.s32.totalorder %s31, 0
      %p171 = por %p169, %p170
      %p172 = scmp.ne.s32.totalorder %s164, %s166
      %p173 = scmp.eq.s32.totalorder %s36, 3
      %p174 = por %p172, %p173
      %p175 = scmp.ne.s32.totalorder %s166, %s167
      %p176 = scmp.eq.s32.totalorder %s36, 0
      %p177 = por %p175, %p176
      %p178 = scmp.ne.s32.totalorder %s166, %s167
      %p179 = scmp.eq.s32.totalorder %s37, 3
      %p180 = por %p178, %p179
      %p182 = scmp.ne.s32.totalorder %s167, %s181
      %p183 = scmp.eq.s32.totalorder %s37, 0
      %p184 = por %p182, %p183
      %s186 = sadd.s32 %s185, 1
      %p189 = scmp.eq.s32.totalorder %s31, 3
      %p190 = scmp.ne.s32.totalorder %s185, %s187
      %p191 = scmp.eq.s32.totalorder %s31, 0
      %p192 = por %p190, %p191
      %p193 = scmp.ne.s32.totalorder %s185, %s187
      %p194 = scmp.eq.s32.totalorder %s36, 3
      %p195 = por %p193, %p194
      %p196 = scmp.ne.s32.totalorder %s187, %s188
      %p197 = scmp.eq.s32.totalorder %s36, 0
      %p198 = por %p196, %p197
      %p199 = scmp.ne.s32.totalorder %s187, %s188
      %p200 = scmp.eq.s32.totalorder %s37, 3
      %p201 = por %p199, %p200
      %p203 = scmp.ne.s32.totalorder %s188, %s202
      %p204 = scmp.eq.s32.totalorder %s37, 0
      %p205 = por %p203, %p204
      %s207 = sadd.s32 %s206, 1
      %p210 = scmp.eq.s32.totalorder %s31, 3
      %p211 = scmp.ne.s32.totalorder %s206, %s208
      %p212 = scmp.eq.s32.totalorder %s31, 0
      %p213 = por %p211, %p212
      %p214 = scmp.ne.s32.totalorder %s206, %s208
      %p215 = scmp.eq.s32.totalorder %s36, 3
      %p216 = por %p214, %p215
      %p217 = scmp.ne.s32.totalorder %s208, %s209
      %p218 = scmp.eq.s32.totalorder %s36, 0
      %p219 = por %p217, %p218
      %p220 = scmp.ne.s32.totalorder %s208, %s209
      %p221 = scmp.eq.s32.totalorder %s37, 3
      %p222 = por %p220, %p221
      %p224 = scmp.ne.s32.totalorder %s209, %s223
      %p225 = scmp.eq.s32.totalorder %s37, 0
      %p226 = por %p224, %p225
      %s228 = sadd.s32 %s227, 1
      %p231 = scmp.eq.s32.totalorder %s31, 3
      %p232 = scmp.ne.s32.totalorder %s227, %s229
      %p233 = scmp.eq.s32.totalorder %s31, 0
      %p234 = por %p232, %p233
      %p235 = scmp.ne.s32.totalorder %s227, %s229
      %p236 = scmp.eq.s32.totalorder %s36, 3
      %p237 = por %p235, %p236
      %p238 = scmp.ne.s32.totalorder %s229, %s230
      %p239 = scmp.eq.s32.totalorder %s36, 0
      %p240 = por %p238, %p239
      %p241 = scmp.ne.s32.totalorder %s229, %s230
      %p242 = scmp.eq.s32.totalorder %s37, 3
      %p243 = por %p241, %p242
      %p245 = scmp.ne.s32.totalorder %s230, %s244
      %p246 = scmp.eq.s32.totalorder %s37, 0
      %p247 = por %p245, %p246
      %s249 = sadd.s32 %s248, 1
      %p252 = scmp.eq.s32.totalorder %s31, 3
      %p253 = scmp.ne.s32.totalorder %s248, %s250
      %p254 = scmp.eq.s32.totalorder %s31, 0
      %p255 = por %p253, %p254
      %p256 = scmp.ne.s32.totalorder %s248, %s250
      %p257 = scmp.eq.s32.totalorder %s36, 3
      %p258 = por %p256, %p257
      %p259 = scmp.ne.s32.totalorder %s250, %s251
      %p260 = scmp.eq.s32.totalorder %s36, 0
      %p261 = por %p259, %p260
      %p262 = scmp.ne.s32.totalorder %s250, %s251
      %p263 = scmp.eq.s32.totalorder %s37, 3
      %p264 = por %p262, %p263
      %p266 = scmp.ne.s32.totalorder %s251, %s265
      %p267 = scmp.eq.s32.totalorder %s37, 0
      %p268 = por %p266, %p267
      %s270 = sadd.s32 %s269, 1
      %p273 = scmp.eq.s32.totalorder %s31, 3
      %p274 = scmp.ne.s32.totalorder %s269, %s271
      %p275 = scmp.eq.s32.totalorder %s31, 0
      %p276 = por %p274, %p275
      %p277 = scmp.ne.s32.totalorder %s269, %s271
      %p278 = scmp.eq.s32.totalorder %s36, 3
      %p279 = por %p277, %p278
      %p280 = scmp.ne.s32.totalorder %s271, %s272
      %p281 = scmp.eq.s32.totalorder %s36, 0
      %p282 = por %p280, %p281
      %p283 = scmp.ne.s32.totalorder %s271, %s272
      %p284 = scmp.eq.s32.totalorder %s37, 3
      %p285 = por %p283, %p284
      %p287 = scmp.ne.s32.totalorder %s272, %s286
      %p288 = scmp.eq.s32.totalorder %s37, 0
      %p289 = por %p287, %p288
      %s291 = sadd.s32 %s290, 1
      %p294 = scmp.eq.s32.totalorder %s31, 3
      %p295 = scmp.ne.s32.totalorder %s290, %s292
      %p296 = scmp.eq.s32.totalorder %s31, 0
      %p297 = por %p295, %p296
      %p298 = scmp.ne.s32.totalorder %s290, %s292
      %p299 = scmp.eq.s32.totalorder %s36, 3
      %p300 = por %p298, %p299
      %p301 = scmp.ne.s32.totalorder %s292, %s293
      %p302 = scmp.eq.s32.totalorder %s36, 0
      %p303 = por %p301, %p302
      %p304 = scmp.ne.s32.totalorder %s292, %s293
      %p305 = scmp.eq.s32.totalorder %s37, 3
      %p306 = por %p304, %p305
      %p308 = scmp.ne.s32.totalorder %s293, %s307
      %p309 = scmp.eq.s32.totalorder %s37, 0
      %p310 = por %p308, %p309
      %s312 = sadd.s32 %s311, 1
      %p315 = scmp.eq.s32.totalorder %s31, 3
      %p316 = scmp.ne.s32.totalorder %s311, %s313
      %p317 = scmp.eq.s32.totalorder %s31, 0
      %p318 = por %p316, %p317
      %p319 = scmp.ne.s32.totalorder %s311, %s313
      %p320 = scmp.eq.s32.totalorder %s36, 3
      %p321 = por %p319, %p320
      %p322 = scmp.ne.s32.totalorder %s313, %s314
      %p323 = scmp.eq.s32.totalorder %s36, 0
      %p324 = por %p322, %p323
      %p325 = scmp.ne.s32.totalorder %s313, %s314
      %p326 = scmp.eq.s32.totalorder %s37, 3
      %p327 = por %p325, %p326
      %p329 = scmp.ne.s32.totalorder %s314, %s328
      %p330 = scmp.eq.s32.totalorder %s37, 0
      %p331 = por %p329, %p330
      %s333 = sadd.s32 %s332, 1
      %p336 = scmp.eq.s32.totalorder %s31, 3
      %p337 = scmp.ne.s32.totalorder %s332, %s334
      %p338 = scmp.eq.s32.totalorder %s31, 0
      %p339 = por %p337, %p338
      %p340 = scmp.ne.s32.totalorder %s332, %s334
      %p341 = scmp.eq.s32.totalorder %s36, 3
      %p342 = por %p340, %p341
      %p343 = scmp.ne.s32.totalorder %s334, %s335
      %p344 = scmp.eq.s32.totalorder %s36, 0
      %p345 = por %p343, %p344
      %p346 = scmp.ne.s32.totalorder %s334, %s335
      %p347 = scmp.eq.s32.totalorder %s37, 3
      %p348 = por %p346, %p347
      %p350 = scmp.ne.s32.totalorder %s335, %s349
      %p351 = scmp.eq.s32.totalorder %s37, 0
      %p352 = por %p350, %p351
      %s354 = sadd.s32 %s353, 1
      %p357 = scmp.eq.s32.totalorder %s31, 3
      %p358 = scmp.ne.s32.totalorder %s353, %s355
      %p359 = scmp.eq.s32.totalorder %s31, 0
      %p360 = por %p358, %p359
      %p361 = scmp.ne.s32.totalorder %s353, %s355
      %p362 = scmp.eq.s32.totalorder %s36, 3
      %p363 = por %p361, %p362
      %p364 = scmp.ne.s32.totalorder %s355, %s356
      %p365 = scmp.eq.s32.totalorder %s36, 0
      %p366 = por %p364, %p365
      %p367 = scmp.ne.s32.totalorder %s355, %s356
      %p368 = scmp.eq.s32.totalorder %s37, 3
      %p369 = por %p367, %p368
      %p371 = scmp.ne.s32.totalorder %s356, %s370
      %p372 = scmp.eq.s32.totalorder %s37, 0
      %p373 = por %p371, %p372
      %s375 = sadd.s32 %s374, 1
      %p378 = scmp.eq.s32.totalorder %s31, 3
      %p379 = scmp.ne.s32.totalorder %s374, %s376
      %p380 = scmp.eq.s32.totalorder %s31, 0
      %p381 = por %p379, %p380
      %p382 = scmp.ne.s32.totalorder %s374, %s376
      %p383 = scmp.eq.s32.totalorder %s36, 3
      %p384 = por %p382, %p383
      %p385 = scmp.ne.s32.totalorder %s376, %s377
      %p386 = scmp.eq.s32.totalorder %s36, 0
      %p387 = por %p385, %p386
      %p388 = scmp.ne.s32.totalorder %s376, %s377
      %p389 = scmp.eq.s32.totalorder %s37, 3
      %p390 = por %p388, %p389
      %p392 = scmp.ne.s32.totalorder %s377, %s391
      %p393 = scmp.eq.s32.totalorder %s37, 0
      %p394 = por %p392, %p393
      %s396 = sadd.s32 %s395, 1
      %p399 = scmp.eq.s32.totalorder %s31, 3
      %p400 = scmp.ne.s32.totalorder %s395, %s397
      %p401 = scmp.eq.s32.totalorder %s31, 0
      %p402 = por %p400, %p401
      %p403 = scmp.ne.s32.totalorder %s395, %s397
      %p404 = scmp.eq.s32.totalorder %s36, 3
      %p405 = por %p403, %p404
      %p406 = scmp.ne.s32.totalorder %s397, %s398
      %p407 = scmp.eq.s32.totalorder %s36, 0
      %p408 = por %p406, %p407
      %p409 = scmp.ne.s32.totalorder %s397, %s398
      %p410 = scmp.eq.s32.totalorder %s37, 3
      %p411 = por %p409, %p410
      %p413 = scmp.ne.s32.totalorder %s398, %s412
      %p414 = scmp.eq.s32.totalorder %s37, 0
      %p415 = por %p413, %p414
      %s416 = ssub.s32 %s31, %s38
      %p417 = scmp.eq.s32.totalorder %s416, 0
      %s419 = sadd.s32 %s418, 1
      %s420 = scalar_select %p417, %s418, %s419
      %p423 = pneg %p417
      %p424 = scmp.eq.s32.totalorder %s31, 3
      %p425 = por %p423, %p424
      %p426 = scmp.ne.s32.totalorder %s418, %s421
      %p427 = scmp.eq.s32.totalorder %s31, 0
      %p428 = por %p426, %p427
      %p429 = scmp.ne.s32.totalorder %s418, %s421
      %p430 = scmp.eq.s32.totalorder %s36, 3
      %p431 = por %p429, %p430
      %p432 = scmp.ne.s32.totalorder %s421, %s422
      %p433 = scmp.eq.s32.totalorder %s36, 0
      %p434 = por %p432, %p433
      %p435 = scmp.ne.s32.totalorder %s421, %s422
      %p436 = scmp.eq.s32.totalorder %s37, 3
      %p437 = por %p435, %p436
      %p439 = scmp.ne.s32.totalorder %s422, %s438
      %p440 = scmp.eq.s32.totalorder %s37, 0
      %p441 = por %p439, %p440
      %p442 = scmp.le.s32.totalorder 1, %s31
      %p443 = scmp.lt.s32.totalorder %s31, 5
      %p444 = pnand %p442, %p443
      %p445 = pneg %p444
      // Predicated region
      $region9: #{tpu_custom_call.1} parent=5 // pred_check
        _
      $region10: #{tpu_custom_call.1} parent=5 // pred_check_branch
        %447 = sbr.rel (%p444) target = $region12
      $region11: #{tpu_custom_call.1} parent=5 // pred_region
        %s448 = ssub.s32 %s31, 1
        // Predicated region
        $region13: #{tpu_custom_call.1} parent=11 // pred_check
          %p449 = pneg %p156
        $region14: #{tpu_custom_call.1} parent=11 // pred_check_branch
          %451 = sbr.rel (%p449) target = $region16
        $region15: #{tpu_custom_call.1} parent=11 // pred_region
          %s453 = ssub.s32 128, 128
          %454 = vsyncadd [#allocation10], %s453
          %s456 = sshll.u32 [#allocation9], 4
          %s457 = int_to_ptr.vmem [resolvable:$true] %s456
          %459 = dma.hbm_to_vmem [thread:$0]  %s4, 128, %s457, [#allocation10]
        $region16: #{tpu_custom_call.1} parent=11 // pred_fallthru
          _
        // Predicated region
        $region17: #{tpu_custom_call.1} parent=11 // pred_check
          %p460 = pneg %p177
        $region18: #{tpu_custom_call.1} parent=11 // pred_check_branch
          %462 = sbr.rel (%p460) target = $region20
        $region19: #{tpu_custom_call.1} parent=11 // pred_region
          _
        $region20: #{tpu_custom_call.1} parent=11 // pred_fallthru
          _
        // Predicated region
        $region21: #{tpu_custom_call.1} parent=11 // pred_check
          %p463 = pneg %p198
        $region22: #{tpu_custom_call.1} parent=11 // pred_check_branch
          %465 = sbr.rel (%p463) target = $region24
        $region23: #{tpu_custom_call.1} parent=11 // pred_region
          %s467 = ssub.s32 128, 128
          %468 = vsyncadd [#allocation10], %s467
          %s470 = sshll.u32 [#allocation11], 4
          %s471 = int_to_ptr.vmem [resolvable:$true] %s470
          %473 = dma.hbm_to_vmem [thread:$0]  %s6, 128, %s471, [#allocation10]
        $region24: #{tpu_custom_call.1} parent=11 // pred_fallthru
          _
        // Predicated region
        $region25: #{tpu_custom_call.1} parent=11 // pred_check
          %p474 = pneg %p219
        $region26: #{tpu_custom_call.1} parent=11 // pred_check_branch
          %476 = sbr.rel (%p474) target = $region28
        $region27: #{tpu_custom_call.1} parent=11 // pred_region
          %s478 = ssub.s32 512, 512
          %479 = vsyncadd [#allocation13], %s478
          %s480 = sshll.u32 [#allocation12], 4
          %s481 = int_to_ptr.vmem [resolvable:$true] %s480
          %486 = dma.hbm_to_vmem [thread:$0]  %s7, 512, %s481, [#allocation13], 128, 128, 8
        $region28: #{tpu_custom_call.1} parent=11 // pred_fallthru
          _
        // Predicated region
        $region29: #{tpu_custom_call.1} parent=11 // pred_check
          %p487 = pneg %p240
        $region30: #{tpu_custom_call.1} parent=11 // pred_check_branch
          %489 = sbr.rel (%p487) target = $region32
        $region31: #{tpu_custom_call.1} parent=11 // pred_region
          _
        $region32: #{tpu_custom_call.1} parent=11 // pred_fallthru
          _
        // Predicated region
        $region33: #{tpu_custom_call.1} parent=11 // pred_check
          %p490 = pneg %p261
        $region34: #{tpu_custom_call.1} parent=11 // pred_check_branch
          %492 = sbr.rel (%p490) target = $region36
        $region35: #{tpu_custom_call.1} parent=11 // pred_region
          %s494 = ssub.s32 512, 512
          %495 = vsyncadd [#allocation13], %s494
          %s496 = sshll.u32 [#allocation14], 4
          %s497 = int_to_ptr.vmem [resolvable:$true] %s496
          %502 = dma.hbm_to_vmem [thread:$0]  %s9, 512, %s497, [#allocation13], 128, 128, 8
        $region36: #{tpu_custom_call.1} parent=11 // pred_fallthru
          _
        // Predicated region
        $region37: #{tpu_custom_call.1} parent=11 // pred_check
          %p503 = pneg %p282
        $region38: #{tpu_custom_call.1} parent=11 // pred_check_branch
          %505 = sbr.rel (%p503) target = $region40
        $region39: #{tpu_custom_call.1} parent=11 // pred_region
          _
        $region40: #{tpu_custom_call.1} parent=11 // pred_fallthru
          _
        // Predicated region
        $region41: #{tpu_custom_call.1} parent=11 // pred_check
          %p506 = pneg %p303
        $region42: #{tpu_custom_call.1} parent=11 // pred_check_branch
          %508 = sbr.rel (%p506) target = $region44
        $region43: #{tpu_custom_call.1} parent=11 // pred_region
          _
        $region44: #{tpu_custom_call.1} parent=11 // pred_fallthru
          _
        // Predicated region
        $region45: #{tpu_custom_call.1} parent=11 // pred_check
          %p509 = pneg %p324
        $region46: #{tpu_custom_call.1} parent=11 // pred_check_branch
          %511 = sbr.rel (%p509) target = $region48
        $region47: #{tpu_custom_call.1} parent=11 // pred_region
          _
        $region48: #{tpu_custom_call.1} parent=11 // pred_fallthru
          _
        // Predicated region
        $region49: #{tpu_custom_call.1} parent=11 // pred_check
          %p512 = pneg %p345
        $region50: #{tpu_custom_call.1} parent=11 // pred_check_branch
          %514 = sbr.rel (%p512) target = $region52
        $region51: #{tpu_custom_call.1} parent=11 // pred_region
          _
        $region52: #{tpu_custom_call.1} parent=11 // pred_fallthru
          _
        // Predicated region
        $region53: #{tpu_custom_call.1} parent=11 // pred_check
          %p515 = pneg %p366
        $region54: #{tpu_custom_call.1} parent=11 // pred_check_branch
          %517 = sbr.rel (%p515) target = $region56
        $region55: #{tpu_custom_call.1} parent=11 // pred_region
          _
        $region56: #{tpu_custom_call.1} parent=11 // pred_fallthru
          _
        // Predicated region
        $region57: #{tpu_custom_call.1} parent=11 // pred_check
          %p518 = pneg %p387
        $region58: #{tpu_custom_call.1} parent=11 // pred_check_branch
          %520 = sbr.rel (%p518) target = $region60
        $region59: #{tpu_custom_call.1} parent=11 // pred_region
          _
        $region60: #{tpu_custom_call.1} parent=11 // pred_fallthru
          _
        // Predicated region
        $region61: #{tpu_custom_call.1} parent=11 // pred_check
          %p521 = pneg %p408
        $region62: #{tpu_custom_call.1} parent=11 // pred_check_branch
          %523 = sbr.rel (%p521) target = $region64
        $region63: #{tpu_custom_call.1} parent=11 // pred_region
          _
        $region64: #{tpu_custom_call.1} parent=11 // pred_fallthru
          _
      $region12: #{tpu_custom_call.1} parent=5 // pred_fallthru
        _
      %p524 = scmp.lt.s32.totalorder %s31, 4
      // Predicated region
      $region65: #{tpu_custom_call.1} parent=5 // pred_check
        %p525 = pneg %p524
      $region66: #{tpu_custom_call.1} parent=5 // pred_check_branch
        %527 = sbr.rel (%p525) target = $region68
      $region67: #{tpu_custom_call.1} parent=5 // pred_region
        // Predicated region
        $region69: #{tpu_custom_call.1} parent=67 // pred_check
          %p528 = pneg %p51
        $region70: #{tpu_custom_call.1} parent=67 // pred_check_branch
          %530 = sbr.rel (%p528) target = $region72
        $region71: #{tpu_custom_call.1} parent=67 // pred_region
          %p531 = scmp.lt.s32.totalorder %s31, 3
          %s532 = scalar_select %p531, %s31, 3
          %s533 = smul.addr %s532, 8
          %s534 = scalar_lea.vmem %s0, %s533
        $region72: #{tpu_custom_call.1} parent=67 // pred_fallthru
          _
        // Predicated region
        $region73: #{tpu_custom_call.1} parent=67 // pred_check
          %p535 = pneg %p77
        $region74: #{tpu_custom_call.1} parent=67 // pred_check_branch
          %537 = sbr.rel (%p535) target = $region76
        $region75: #{tpu_custom_call.1} parent=67 // pred_region
          %p538 = scmp.lt.s32.totalorder %s31, 3
          %s539 = scalar_select %p538, %s31, 3
          %s540 = smul.addr %s539, 8
          %s541 = scalar_lea.vmem %s1, %s540
        $region76: #{tpu_custom_call.1} parent=67 // pred_fallthru
          _
        // Predicated region
        $region77: #{tpu_custom_call.1} parent=67 // pred_check
          %p542 = pneg %p103
        $region78: #{tpu_custom_call.1} parent=67 // pred_check_branch
          %544 = sbr.rel (%p542) target = $region80
        $region79: #{tpu_custom_call.1} parent=67 // pred_region
          %p545 = scmp.lt.s32.totalorder %s31, 3
          %s546 = scalar_select %p545, %s31, 3
          %s547 = smul.addr %s546, 8
          %s548 = scalar_lea.vmem %s2, %s547
        $region80: #{tpu_custom_call.1} parent=67 // pred_fallthru
          _
        // Predicated region
        $region81: #{tpu_custom_call.1} parent=67 // pred_check
          %p549 = pneg %p129
        $region82: #{tpu_custom_call.1} parent=67 // pred_check_branch
          %551 = sbr.rel (%p549) target = $region84
        $region83: #{tpu_custom_call.1} parent=67 // pred_region
          %s552 = sand.u32 %s119, 1
          %s553 = scalar_lea.sflag [#allocation7], %s552
          %s554 = sand.u32 %s119, 1
          %s555 = scalar_lea.vmem [#allocation6], %s554
          %s557 = ssub.s32 16, 16
          %558 = vsyncadd %s553, %s557
          %s559 = smul.addr %s31, 16
          %s560 = scalar_lea.hbm %s3, %s559
          %s562 = sshll.u32 %s555, 4
          %s563 = int_to_ptr.vmem [resolvable:$true] %s562
          %565 = dma.hbm_to_vmem [thread:$0]  %s560, 16, %s563, %s553
        $region84: #{tpu_custom_call.1} parent=67 // pred_fallthru
          _
      $region68: #{tpu_custom_call.1} parent=5 // pred_fallthru
        _
      %p566 = scmp.le.s32.totalorder 1, %s31
      %p567 = scmp.lt.s32.totalorder %s31, 5
      %p568 = pnand %p566, %p567
      %p569 = pneg %p568
      // Predicated region
      $region85: #{tpu_custom_call.1} parent=5 // pred_check
        _
      $region86: #{tpu_custom_call.1} parent=5 // pred_check_branch
        %571 = sbr.rel (%p568) target = $region88
      $region87: #{tpu_custom_call.1} parent=5 // pred_region
        %s572 = ssub.s32 %s31, 1
        %s573 = sand.u32 %s122, 1
        %s574 = scalar_lea.sflag [#allocation7], %s573
        %s575 = sand.u32 %s122, 1
        %s576 = scalar_lea.vmem [#allocation6], %s575
        // Predicated region
        $region89: #{tpu_custom_call.1} parent=87 // pred_check
          %p577 = pneg %p135
        $region90: #{tpu_custom_call.1} parent=87 // pred_check_branch
          %579 = sbr.rel (%p577) target = $region92
        $region91: #{tpu_custom_call.1} parent=87 // pred_region
          %580 = dma.done %s574, 16
        $region92: #{tpu_custom_call.1} parent=87 // pred_fallthru
          _
        // Predicated region
        $region93: #{tpu_custom_call.1} parent=87 // pred_check
          %p581 = pneg %p156
        $region94: #{tpu_custom_call.1} parent=87 // pred_check_branch
          %583 = sbr.rel (%p581) target = $region96
        $region95: #{tpu_custom_call.1} parent=87 // pred_region
          %584 = dma.done [#allocation10], 128
        $region96: #{tpu_custom_call.1} parent=87 // pred_fallthru
          _
        // Predicated region
        $region97: #{tpu_custom_call.1} parent=87 // pred_check
          %p585 = pneg %p198
        $region98: #{tpu_custom_call.1} parent=87 // pred_check_branch
          %587 = sbr.rel (%p585) target = $region100
        $region99: #{tpu_custom_call.1} parent=87 // pred_region
          %588 = dma.done [#allocation10], 128
        $region100: #{tpu_custom_call.1} parent=87 // pred_fallthru
          _
        // Predicated region
        $region101: #{tpu_custom_call.1} parent=87 // pred_check
          %p589 = pneg %p219
        $region102: #{tpu_custom_call.1} parent=87 // pred_check_branch
          %591 = sbr.rel (%p589) target = $region104
        $region103: #{tpu_custom_call.1} parent=87 // pred_region
          %592 = dma.done [#allocation13], 512
        $region104: #{tpu_custom_call.1} parent=87 // pred_fallthru
          _
        // Predicated region
        $region105: #{tpu_custom_call.1} parent=87 // pred_check
          %p593 = pneg %p261
        $region106: #{tpu_custom_call.1} parent=87 // pred_check_branch
          %595 = sbr.rel (%p593) target = $region108
        $region107: #{tpu_custom_call.1} parent=87 // pred_region
          %596 = dma.done [#allocation13], 512
        $region108: #{tpu_custom_call.1} parent=87 // pred_fallthru
          _
        %p597 = scmp.lt.s32.totalorder %s36, 3
        %s598 = scalar_select %p597, %s36, 3
        %s599 = smul.addr %s598, 8
        %s600 = scalar_lea.vmem %s0, %s599
        %p601 = pneg %p57
        %p602 = pneg %p54
        %p603 = scmp.lt.s32.totalorder %s36, 3
        %s604 = scalar_select %p603, %s36, 3
        %s605 = smul.addr %s604, 8
        %s606 = scalar_lea.vmem %s1, %s605
        %p607 = pneg %p83
        %p608 = pneg %p80
        %p609 = scmp.lt.s32.totalorder %s36, 3
        %s610 = scalar_select %p609, %s36, 3
        %s611 = smul.addr %s610, 8
        %s612 = scalar_lea.vmem %s2, %s611
        %p613 = pneg %p109
        %p614 = pneg %p106
        %s615 = sand.u32 %s122, 1
        %s616 = scalar_lea.sflag [#allocation7], %s615
        %s617 = sand.u32 %s122, 1
        %s618 = scalar_lea.vmem [#allocation6], %s617
        %p619 = pneg %p135
        %p620 = pneg %p132
        %p621 = pneg %p156
        %p622 = pneg %p153
        %p623 = pneg %p177
        %p624 = pneg %p174
        %p625 = pneg %p198
        %p626 = pneg %p195
        %p627 = pneg %p219
        %p628 = pneg %p216
        %p629 = pneg %p240
        %p630 = pneg %p237
        %p631 = pneg %p261
        %p632 = pneg %p258
        %p633 = pneg %p282
        %p634 = pneg %p279
        %p635 = pneg %p303
        %p636 = pneg %p300
        %p637 = pneg %p324
        %p638 = pneg %p321
        %p639 = pneg %p345
        %p640 = pneg %p342
        %p641 = pneg %p366
        %p642 = pneg %p363
        %p643 = pneg %p387
        %p644 = pneg %p384
        %p645 = pneg %p408
        %p646 = pneg %p405
        %p647 = pneg %p434
        %p648 = pneg %p431
        %s649 = sand.u32 %s421, 1
        %s650 = scalar_lea.sflag [#allocation8], %s649
        %s651 = sand.u32 %s421, 1
        %s652 = smul.addr %s651, 8
        %s653 = scalar_lea.vmem [#allocation15], %s652
        %p654 = scmp.lt.s32.totalorder %s36, 3
        %s655 = scalar_select %p654, %s36, 3
        %s656 = smul.addr %s655, 8
        %s657 = scalar_lea.vmem %s0, %s656
        %p658 = scmp.lt.s32.totalorder %s36, 3
        %s659 = scalar_select %p658, %s36, 3
        %s660 = smul.addr %s659, 8
        %s661 = scalar_lea.vmem %s1, %s660
        %p662 = scmp.lt.s32.totalorder %s36, 3
        %s663 = scalar_select %p662, %s36, 3
        %s664 = smul.addr %s663, 8
        %s665 = scalar_lea.vmem %s2, %s664
        %v666 = vld [vmem:[%s657] sm:$0xff]
        %v667 = vld [vmem:[%s661] sm:$0xff]
        %v668 = vld [vmem:[%s665] sm:$0xff]
        %v669 = vld [vmem:[#allocation9] sm:$0xff]
        %v670 = vld [vmem:[%s5] sm:$0xff]
        %v671 = vld [vmem:[#allocation11] sm:$0xff]
        %vm672 = vcmask 64512
        %v674 = vsel %vm672, %v666, 0
        %676 = vmatprep.subr.mxu0 0.0
        %677 = vmatpush1.msra.mxu0 0.0
        %678 = vmatprep.subr.mxu0 0.0
        %679 = vmatpush1.msra.mxu0 0.0
        %680 = vmatprep.subr.mxu0 0.0
        %681 = vmatpush1.msra.mxu0 0.0
        %682 = vmatprep.subr.mxu0 0.0
        %683 = vmatpush1.msra.mxu0 0.0
        %684 = vmatprep.subr.mxu0 0.0
        %685 = vmatpush1.msra.mxu0 0.0
        %686 = vmatprep.subr.mxu0 0.0
        %687 = vmatpush1.msra.mxu0 0.0
        %688 = vmatprep.subr.mxu0 0.0
        %689 = vmatpush1.msra.mxu0 0.0
        %690 = vmatprep.subr.mxu0 0.0
        %691 = vmatpush1.msra.mxu0 0.0
        %692 = vmatprep.subr.mxu0 0.0
        %693 = vmatpush1.msra.mxu0 0.0
        %694 = vmatprep.subr.mxu0 0.0
        %695 = vmatpush1.msra.mxu0 0.0
        %696 = vmatprep.subr.mxu0 0.0
        %697 = vmatpush1.msra.mxu0 0.0
        %698 = vmatprep.subr.mxu0 0.0
        %699 = vmatpush1.msra.mxu0 0.0
        %700 = vmatprep.subr.mxu0 0.0
        %701 = vmatpush1.msra.mxu0 0.0
        %702 = vmatprep.subr.mxu0 0.0
        %703 = vmatpush1.msra.mxu0 0.0
        %704 = vmatprep.subr.mxu0 0.0
        %705 = vmatpush1.msra.mxu0 0.0
        %706 = vmatprep.subr.mxu0 0.0
        %707 = vmatpush1.msra.mxu0 %v669
        %708 = vmatprep.subr.mxu0 0.0
        %709 = vmatpush2.msra.mxu0 0.0
        %710 = vmatprep.subr.mxu0 0.0
        %711 = vmatpush2.msra.mxu0 0.0
        %712 = vmatprep.subr.mxu0 0.0
        %713 = vmatpush2.msra.mxu0 0.0
        %714 = vmatprep.subr.mxu0 0.0
        %715 = vmatpush2.msra.mxu0 0.0
        %716 = vmatprep.subr.mxu0 0.0
        %717 = vmatpush2.msra.mxu0 0.0
        %718 = vmatprep.subr.mxu0 0.0
        %719 = vmatpush2.msra.mxu0 0.0
        %720 = vmatprep.subr.mxu0 0.0
        %721 = vmatpush2.msra.mxu0 0.0
        %722 = vmatprep.subr.mxu0 0.0
        %723 = vmatpush2.msra.mxu0 0.0
        %724 = vmatprep.subr.mxu0 0.0
        %725 = vmatpush2.msra.mxu0 0.0
        %726 = vmatprep.subr.mxu0 0.0
        %727 = vmatpush2.msra.mxu0 0.0
        %728 = vmatprep.subr.mxu0 0.0
        %729 = vmatpush2.msra.mxu0 0.0
        %730 = vmatprep.subr.mxu0 0.0
        %731 = vmatpush2.msra.mxu0 0.0
        %732 = vmatprep.subr.mxu0 0.0
        %733 = vmatpush2.msra.mxu0 0.0
        %734 = vmatprep.subr.mxu0 0.0
        %735 = vmatpush2.msra.mxu0 0.0
        %736 = vmatprep.subr.mxu0 0.0
        %737 = vmatpush2.msra.mxu0 0.0
        %738 = vmatprep.subr.mxu0 0.0
        %739 = vmatpush2.msra.mxu0 0.0
        %740 = vmatprep.mubr.f32.mxu0 0.0
        %741 = vmatmul.mubr.f32.gmra.mxu0 %v674
        %v742 = vpop.f32.mrf.mxu0
        %v743 = vadd.f32 0.0, %v742
        %v744 = vpop.f32.mrf.mxu0
        %745 = vdwg.mxu0
        %v747 = vsel %vm672, %v667, 0
        %749 = vmatprep.subr.mxu0 0.0
        %750 = vmatpush1.msra.mxu0 0.0
        %751 = vmatprep.subr.mxu0 0.0
        %752 = vmatpush1.msra.mxu0 0.0
        %753 = vmatprep.subr.mxu0 0.0
        %754 = vmatpush1.msra.mxu0 0.0
        %755 = vmatprep.subr.mxu0 0.0
        %756 = vmatpush1.msra.mxu0 0.0
        %757 = vmatprep.subr.mxu0 0.0
        %758 = vmatpush1.msra.mxu0 0.0
        %759 = vmatprep.subr.mxu0 0.0
        %760 = vmatpush1.msra.mxu0 0.0
        %761 = vmatprep.subr.mxu0 0.0
        %762 = vmatpush1.msra.mxu0 0.0
        %763 = vmatprep.subr.mxu0 0.0
        %764 = vmatpush1.msra.mxu0 0.0
        %765 = vmatprep.subr.mxu0 0.0
        %766 = vmatpush1.msra.mxu0 0.0
        %767 = vmatprep.subr.mxu0 0.0
        %768 = vmatpush1.msra.mxu0 0.0
        %769 = vmatprep.subr.mxu0 0.0
        %770 = vmatpush1.msra.mxu0 0.0
        %771 = vmatprep.subr.mxu0 0.0
        %772 = vmatpush1.msra.mxu0 0.0
        %773 = vmatprep.subr.mxu0 0.0
        %774 = vmatpush1.msra.mxu0 0.0
        %775 = vmatprep.subr.mxu0 0.0
        %776 = vmatpush1.msra.mxu0 0.0
        %777 = vmatprep.subr.mxu0 0.0
        %778 = vmatpush1.msra.mxu0 0.0
        %779 = vmatprep.subr.mxu0 0.0
        %780 = vmatpush1.msra.mxu0 %v670
        %781 = vmatprep.subr.mxu0 0.0
        %782 = vmatpush2.msra.mxu0 0.0
        %783 = vmatprep.subr.mxu0 0.0
        %784 = vmatpush2.msra.mxu0 0.0
        %785 = vmatprep.subr.mxu0 0.0
        %786 = vmatpush2.msra.mxu0 0.0
        %787 = vmatprep.subr.mxu0 0.0
        %788 = vmatpush2.msra.mxu0 0.0
        %789 = vmatprep.subr.mxu0 0.0
        %790 = vmatpush2.msra.mxu0 0.0
        %791 = vmatprep.subr.mxu0 0.0
        %792 = vmatpush2.msra.mxu0 0.0
        %793 = vmatprep.subr.mxu0 0.0
        %794 = vmatpush2.msra.mxu0 0.0
        %795 = vmatprep.subr.mxu0 0.0
        %796 = vmatpush2.msra.mxu0 0.0
        %797 = vmatprep.subr.mxu0 0.0
        %798 = vmatpush2.msra.mxu0 0.0
        %799 = vmatprep.subr.mxu0 0.0
        %800 = vmatpush2.msra.mxu0 0.0
        %801 = vmatprep.subr.mxu0 0.0
        %802 = vmatpush2.msra.mxu0 0.0
        %803 = vmatprep.subr.mxu0 0.0
        %804 = vmatpush2.msra.mxu0 0.0
        %805 = vmatprep.subr.mxu0 0.0
        %806 = vmatpush2.msra.mxu0 0.0
        %807 = vmatprep.subr.mxu0 0.0
        %808 = vmatpush2.msra.mxu0 0.0
        %809 = vmatprep.subr.mxu0 0.0
        %810 = vmatpush2.msra.mxu0 0.0
        %811 = vmatprep.subr.mxu0 0.0
        %812 = vmatpush2.msra.mxu0 0.0
        %813 = vmatprep.mubr.f32.mxu0 0.0
        %814 = vmatmul.mubr.f32.gmra.mxu0 %v747
        %v815 = vpop.f32.mrf.mxu0
        %v816 = vadd.f32 0.0, %v815
        %v817 = vpop.f32.mrf.mxu0
        %818 = vdwg.mxu0
        %v820 = vsel %vm672, %v668, 0
        %822 = vmatprep.subr.mxu0 0.0
        %823 = vmatpush1.msra.mxu0 0.0
        %824 = vmatprep.subr.mxu0 0.0
        %825 = vmatpush1.msra.mxu0 0.0
        %826 = vmatprep.subr.mxu0 0.0
        %827 = vmatpush1.msra.mxu0 0.0
        %828 = vmatprep.subr.mxu0 0.0
        %829 = vmatpush1.msra.mxu0 0.0
        %830 = vmatprep.subr.mxu0 0.0
        %831 = vmatpush1.msra.mxu0 0.0
        %832 = vmatprep.subr.mxu0 0.0
        %833 = vmatpush1.msra.mxu0 0.0
        %834 = vmatprep.subr.mxu0 0.0
        %835 = vmatpush1.msra.mxu0 0.0
        %836 = vmatprep.subr.mxu0 0.0
        %837 = vmatpush1.msra.mxu0 0.0
        %838 = vmatprep.subr.mxu0 0.0
        %839 = vmatpush1.msra.mxu0 0.0
        %840 = vmatprep.subr.mxu0 0.0
        %841 = vmatpush1.msra.mxu0 0.0
        %842 = vmatprep.subr.mxu0 0.0
        %843 = vmatpush1.msra.mxu0 0.0
        %844 = vmatprep.subr.mxu0 0.0
        %845 = vmatpush1.msra.mxu0 0.0
        %846 = vmatprep.subr.mxu0 0.0
        %847 = vmatpush1.msra.mxu0 0.0
        %848 = vmatprep.subr.mxu0 0.0
        %849 = vmatpush1.msra.mxu0 0.0
        %850 = vmatprep.subr.mxu0 0.0
        %851 = vmatpush1.msra.mxu0 0.0
        %852 = vmatprep.subr.mxu0 0.0
        %853 = vmatpush1.msra.mxu0 %v671
        %854 = vmatprep.subr.mxu0 0.0
        %855 = vmatpush2.msra.mxu0 0.0
        %856 = vmatprep.subr.mxu0 0.0
        %857 = vmatpush2.msra.mxu0 0.0
        %858 = vmatprep.subr.mxu0 0.0
        %859 = vmatpush2.msra.mxu0 0.0
        %860 = vmatprep.subr.mxu0 0.0
        %861 = vmatpush2.msra.mxu0 0.0
        %862 = vmatprep.subr.mxu0 0.0
        %863 = vmatpush2.msra.mxu0 0.0
        %864 = vmatprep.subr.mxu0 0.0
        %865 = vmatpush2.msra.mxu0 0.0
        %866 = vmatprep.subr.mxu0 0.0
        %867 = vmatpush2.msra.mxu0 0.0
        %868 = vmatprep.subr.mxu0 0.0
        %869 = vmatpush2.msra.mxu0 0.0
        %870 = vmatprep.subr.mxu0 0.0
        %871 = vmatpush2.msra.mxu0 0.0
        %872 = vmatprep.subr.mxu0 0.0
        %873 = vmatpush2.msra.mxu0 0.0
        %874 = vmatprep.subr.mxu0 0.0
        %875 = vmatpush2.msra.mxu0 0.0
        %876 = vmatprep.subr.mxu0 0.0
        %877 = vmatpush2.msra.mxu0 0.0
        %878 = vmatprep.subr.mxu0 0.0
        %879 = vmatpush2.msra.mxu0 0.0
        %880 = vmatprep.subr.mxu0 0.0
        %881 = vmatpush2.msra.mxu0 0.0
        %882 = vmatprep.subr.mxu0 0.0
        %883 = vmatpush2.msra.mxu0 0.0
        %884 = vmatprep.subr.mxu0 0.0
        %885 = vmatpush2.msra.mxu0 0.0
        %886 = vmatprep.mubr.f32.mxu0 0.0
        %887 = vmatmul.mubr.f32.gmra.mxu0 %v820
        %v888 = vpop.f32.mrf.mxu0
        %v889 = vadd.f32 0.0, %v888
        %v890 = vpop.f32.mrf.mxu0
        %891 = vdwg.mxu0
        %892 = vst.msk [vmem:[#allocation2] sm:$0xff] %vm672, %v743
        %893 = vst.msk [vmem:[#allocation3] sm:$0xff] %vm672, %v816
        %894 = vst.msk [vmem:[#allocation4] sm:$0xff] %vm672, %v889
        %895 = vrot.lane.b32.xlu0 %v666, 120
        %v896 = vpop.permute.xlu0 %895
        %v897 = vsel %vm672, %v896, 0
        %899 = vmatprep.subr.mxu0 0.0
        %900 = vmatpush1.msra.mxu0 0.0
        %901 = vmatprep.subr.mxu0 0.0
        %902 = vmatpush1.msra.mxu0 0.0
        %903 = vmatprep.subr.mxu0 0.0
        %904 = vmatpush1.msra.mxu0 0.0
        %905 = vmatprep.subr.mxu0 0.0
        %906 = vmatpush1.msra.mxu0 0.0
        %907 = vmatprep.subr.mxu0 0.0
        %908 = vmatpush1.msra.mxu0 0.0
        %909 = vmatprep.subr.mxu0 0.0
        %910 = vmatpush1.msra.mxu0 0.0
        %911 = vmatprep.subr.mxu0 0.0
        %912 = vmatpush1.msra.mxu0 0.0
        %913 = vmatprep.subr.mxu0 0.0
        %914 = vmatpush1.msra.mxu0 0.0
        %915 = vmatprep.subr.mxu0 0.0
        %916 = vmatpush1.msra.mxu0 0.0
        %917 = vmatprep.subr.mxu0 0.0
        %918 = vmatpush1.msra.mxu0 0.0
        %919 = vmatprep.subr.mxu0 0.0
        %920 = vmatpush1.msra.mxu0 0.0
        %921 = vmatprep.subr.mxu0 0.0
        %922 = vmatpush1.msra.mxu0 0.0
        %923 = vmatprep.subr.mxu0 0.0
        %924 = vmatpush1.msra.mxu0 0.0
        %925 = vmatprep.subr.mxu0 0.0
        %926 = vmatpush1.msra.mxu0 0.0
        %927 = vmatprep.subr.mxu0 0.0
        %928 = vmatpush1.msra.mxu0 0.0
        %929 = vmatprep.subr.mxu0 0.0
        %930 = vmatpush1.msra.mxu0 %v669
        %931 = vmatprep.subr.mxu0 0.0
        %932 = vmatpush2.msra.mxu0 0.0
        %933 = vmatprep.subr.mxu0 0.0
        %934 = vmatpush2.msra.mxu0 0.0
        %935 = vmatprep.subr.mxu0 0.0
        %936 = vmatpush2.msra.mxu0 0.0
        %937 = vmatprep.subr.mxu0 0.0
        %938 = vmatpush2.msra.mxu0 0.0
        %939 = vmatprep.subr.mxu0 0.0
        %940 = vmatpush2.msra.mxu0 0.0
        %941 = vmatprep.subr.mxu0 0.0
        %942 = vmatpush2.msra.mxu0 0.0
        %943 = vmatprep.subr.mxu0 0.0
        %944 = vmatpush2.msra.mxu0 0.0
        %945 = vmatprep.subr.mxu0 0.0
        %946 = vmatpush2.msra.mxu0 0.0
        %947 = vmatprep.subr.mxu0 0.0
        %948 = vmatpush2.msra.mxu0 0.0
        %949 = vmatprep.subr.mxu0 0.0
        %950 = vmatpush2.msra.mxu0 0.0
        %951 = vmatprep.subr.mxu0 0.0
        %952 = vmatpush2.msra.mxu0 0.0
        %953 = vmatprep.subr.mxu0 0.0
        %954 = vmatpush2.msra.mxu0 0.0
        %955 = vmatprep.subr.mxu0 0.0
        %956 = vmatpush2.msra.mxu0 0.0
        %957 = vmatprep.subr.mxu0 0.0
        %958 = vmatpush2.msra.mxu0 0.0
        %959 = vmatprep.subr.mxu0 0.0
        %960 = vmatpush2.msra.mxu0 0.0
        %961 = vmatprep.subr.mxu0 0.0
        %962 = vmatpush2.msra.mxu0 0.0
        %963 = vmatprep.mubr.f32.mxu0 0.0
        %964 = vmatmul.mubr.f32.gmra.mxu0 %v897
        %v965 = vpop.f32.mrf.mxu0
        %v966 = vadd.f32 0.0, %v965
        %v967 = vpop.f32.mrf.mxu0
        %968 = vdwg.mxu0
        %969 = vrot.lane.b32.xlu0 %v667, 120
        %v970 = vpop.permute.xlu0 %969
        %v971 = vsel %vm672, %v970, 0
        %973 = vmatprep.subr.mxu0 0.0
        %974 = vmatpush1.msra.mxu0 0.0
        %975 = vmatprep.subr.mxu0 0.0
        %976 = vmatpush1.msra.mxu0 0.0
        %977 = vmatprep.subr.mxu0 0.0
        %978 = vmatpush1.msra.mxu0 0.0
        %979 = vmatprep.subr.mxu0 0.0
        %980 = vmatpush1.msra.mxu0 0.0
        %981 = vmatprep.subr.mxu0 0.0
        %982 = vmatpush1.msra.mxu0 0.0
        %983 = vmatprep.subr.mxu0 0.0
        %984 = vmatpush1.msra.mxu0 0.0
        %985 = vmatprep.subr.mxu0 0.0
        %986 = vmatpush1.msra.mxu0 0.0
        %987 = vmatprep.subr.mxu0 0.0
        %988 = vmatpush1.msra.mxu0 0.0
        %989 = vmatprep.subr.mxu0 0.0
        %990 = vmatpush1.msra.mxu0 0.0
        %991 = vmatprep.subr.mxu0 0.0
        %992 = vmatpush1.msra.mxu0 0.0
        %993 = vmatprep.subr.mxu0 0.0
        %994 = vmatpush1.msra.mxu0 0.0
        %995 = vmatprep.subr.mxu0 0.0
        %996 = vmatpush1.msra.mxu0 0.0
        %997 = vmatprep.subr.mxu0 0.0
        %998 = vmatpush1.msra.mxu0 0.0
        %999 = vmatprep.subr.mxu0 0.0
        %1000 = vmatpush1.msra.mxu0 0.0
        %1001 = vmatprep.subr.mxu0 0.0
        %1002 = vmatpush1.msra.mxu0 0.0
        %1003 = vmatprep.subr.mxu0 0.0
        %1004 = vmatpush1.msra.mxu0 %v670
        %1005 = vmatprep.subr.mxu0 0.0
        %1006 = vmatpush2.msra.mxu0 0.0
        %1007 = vmatprep.subr.mxu0 0.0
        %1008 = vmatpush2.msra.mxu0 0.0
        %1009 = vmatprep.subr.mxu0 0.0
        %1010 = vmatpush2.msra.mxu0 0.0
        %1011 = vmatprep.subr.mxu0 0.0
        %1012 = vmatpush2.msra.mxu0 0.0
        %1013 = vmatprep.subr.mxu0 0.0
        %1014 = vmatpush2.msra.mxu0 0.0
        %1015 = vmatprep.subr.mxu0 0.0
        %1016 = vmatpush2.msra.mxu0 0.0
        %1017 = vmatprep.subr.mxu0 0.0
        %1018 = vmatpush2.msra.mxu0 0.0
        %1019 = vmatprep.subr.mxu0 0.0
        %1020 = vmatpush2.msra.mxu0 0.0
        %1021 = vmatprep.subr.mxu0 0.0
        %1022 = vmatpush2.msra.mxu0 0.0
        %1023 = vmatprep.subr.mxu0 0.0
        %1024 = vmatpush2.msra.mxu0 0.0
        %1025 = vmatprep.subr.mxu0 0.0
        %1026 = vmatpush2.msra.mxu0 0.0
        %1027 = vmatprep.subr.mxu0 0.0
        %1028 = vmatpush2.msra.mxu0 0.0
        %1029 = vmatprep.subr.mxu0 0.0
        %1030 = vmatpush2.msra.mxu0 0.0
        %1031 = vmatprep.subr.mxu0 0.0
        %1032 = vmatpush2.msra.mxu0 0.0
        %1033 = vmatprep.subr.mxu0 0.0
        %1034 = vmatpush2.msra.mxu0 0.0
        %1035 = vmatprep.subr.mxu0 0.0
        %1036 = vmatpush2.msra.mxu0 0.0
        %1037 = vmatprep.mubr.f32.mxu0 0.0
        %1038 = vmatmul.mubr.f32.gmra.mxu0 %v971
        %v1039 = vpop.f32.mrf.mxu0
        %v1040 = vadd.f32 0.0, %v1039
        %v1041 = vpop.f32.mrf.mxu0
        %1042 = vdwg.mxu0
        %1043 = vrot.lane.b32.xlu0 %v668, 120
        %v1044 = vpop.permute.xlu0 %1043
        %v1045 = vsel %vm672, %v1044, 0
        %1047 = vmatprep.subr.mxu0 0.0
        %1048 = vmatpush1.msra.mxu0 0.0
        %1049 = vmatprep.subr.mxu0 0.0
        %1050 = vmatpush1.msra.mxu0 0.0
        %1051 = vmatprep.subr.mxu0 0.0
        %1052 = vmatpush1.msra.mxu0 0.0
        %1053 = vmatprep.subr.mxu0 0.0
        %1054 = vmatpush1.msra.mxu0 0.0
        %1055 = vmatprep.subr.mxu0 0.0
        %1056 = vmatpush1.msra.mxu0 0.0
        %1057 = vmatprep.subr.mxu0 0.0
        %1058 = vmatpush1.msra.mxu0 0.0
        %1059 = vmatprep.subr.mxu0 0.0
        %1060 = vmatpush1.msra.mxu0 0.0
        %1061 = vmatprep.subr.mxu0 0.0
        %1062 = vmatpush1.msra.mxu0 0.0
        %1063 = vmatprep.subr.mxu0 0.0
        %1064 = vmatpush1.msra.mxu0 0.0
        %1065 = vmatprep.subr.mxu0 0.0
        %1066 = vmatpush1.msra.mxu0 0.0
        %1067 = vmatprep.subr.mxu0 0.0
        %1068 = vmatpush1.msra.mxu0 0.0
        %1069 = vmatprep.subr.mxu0 0.0
        %1070 = vmatpush1.msra.mxu0 0.0
        %1071 = vmatprep.subr.mxu0 0.0
        %1072 = vmatpush1.msra.mxu0 0.0
        %1073 = vmatprep.subr.mxu0 0.0
        %1074 = vmatpush1.msra.mxu0 0.0
        %1075 = vmatprep.subr.mxu0 0.0
        %1076 = vmatpush1.msra.mxu0 0.0
        %1077 = vmatprep.subr.mxu0 0.0
        %1078 = vmatpush1.msra.mxu0 %v671
        %1079 = vmatprep.subr.mxu0 0.0
        %1080 = vmatpush2.msra.mxu0 0.0
        %1081 = vmatprep.subr.mxu0 0.0
        %1082 = vmatpush2.msra.mxu0 0.0
        %1083 = vmatprep.subr.mxu0 0.0
        %1084 = vmatpush2.msra.mxu0 0.0
        %1085 = vmatprep.subr.mxu0 0.0
        %1086 = vmatpush2.msra.mxu0 0.0
        %1087 = vmatprep.subr.mxu0 0.0
        %1088 = vmatpush2.msra.mxu0 0.0
        %1089 = vmatprep.subr.mxu0 0.0
        %1090 = vmatpush2.msra.mxu0 0.0
        %1091 = vmatprep.subr.mxu0 0.0
        %1092 = vmatpush2.msra.mxu0 0.0
        %1093 = vmatprep.subr.mxu0 0.0
        %1094 = vmatpush2.msra.mxu0 0.0
        %1095 = vmatprep.subr.mxu0 0.0
        %1096 = vmatpush2.msra.mxu0 0.0
        %1097 = vmatprep.subr.mxu0 0.0
        %1098 = vmatpush2.msra.mxu0 0.0
        %1099 = vmatprep.subr.mxu0 0.0
        %1100 = vmatpush2.msra.mxu0 0.0
        %1101 = vmatprep.subr.mxu0 0.0
        %1102 = vmatpush2.msra.mxu0 0.0
        %1103 = vmatprep.subr.mxu0 0.0
        %1104 = vmatpush2.msra.mxu0 0.0
        %1105 = vmatprep.subr.mxu0 0.0
        %1106 = vmatpush2.msra.mxu0 0.0
        %1107 = vmatprep.subr.mxu0 0.0
        %1108 = vmatpush2.msra.mxu0 0.0
        %1109 = vmatprep.subr.mxu0 0.0
        %1110 = vmatpush2.msra.mxu0 0.0
        %1111 = vmatprep.mubr.f32.mxu0 0.0
        %1112 = vmatmul.mubr.f32.gmra.mxu0 %v1045
        %v1113 = vpop.f32.mrf.mxu0
        %v1114 = vadd.f32 0.0, %v1113
        %v1115 = vpop.f32.mrf.mxu0
        %1116 = vdwg.mxu0
        %s1117 = scalar_lea.vmem [#allocation2], 8
        %1118 = vst.msk [vmem:[%s1117] sm:$0xff] %vm672, %v966
        %s1119 = scalar_lea.vmem [#allocation3], 8
        %1120 = vst.msk [vmem:[%s1119] sm:$0xff] %vm672, %v1040
        %s1121 = scalar_lea.vmem [#allocation4], 8
        %1122 = vst.msk [vmem:[%s1121] sm:$0xff] %vm672, %v1114
        %1123 = vrot.lane.b32.xlu0 %v666, 112
        %v1124 = vpop.permute.xlu0 %1123
        %v1125 = vsel %vm672, %v1124, 0
        %1127 = vmatprep.subr.mxu0 0.0
        %1128 = vmatpush1.msra.mxu0 0.0
        %1129 = vmatprep.subr.mxu0 0.0
        %1130 = vmatpush1.msra.mxu0 0.0
        %1131 = vmatprep.subr.mxu0 0.0
        %1132 = vmatpush1.msra.mxu0 0.0
        %1133 = vmatprep.subr.mxu0 0.0
        %1134 = vmatpush1.msra.mxu0 0.0
        %1135 = vmatprep.subr.mxu0 0.0
        %1136 = vmatpush1.msra.mxu0 0.0
        %1137 = vmatprep.subr.mxu0 0.0
        %1138 = vmatpush1.msra.mxu0 0.0
        %1139 = vmatprep.subr.mxu0 0.0
        %1140 = vmatpush1.msra.mxu0 0.0
        %1141 = vmatprep.subr.mxu0 0.0
        %1142 = vmatpush1.msra.mxu0 0.0
        %1143 = vmatprep.subr.mxu0 0.0
        %1144 = vmatpush1.msra.mxu0 0.0
        %1145 = vmatprep.subr.mxu0 0.0
        %1146 = vmatpush1.msra.mxu0 0.0
        %1147 = vmatprep.subr.mxu0 0.0
        %1148 = vmatpush1.msra.mxu0 0.0
        %1149 = vmatprep.subr.mxu0 0.0
        %1150 = vmatpush1.msra.mxu0 0.0
        %1151 = vmatprep.subr.mxu0 0.0
        %1152 = vmatpush1.msra.mxu0 0.0
        %1153 = vmatprep.subr.mxu0 0.0
        %1154 = vmatpush1.msra.mxu0 0.0
        %1155 = vmatprep.subr.mxu0 0.0
        %1156 = vmatpush1.msra.mxu0 0.0
        %1157 = vmatprep.subr.mxu0 0.0
        %1158 = vmatpush1.msra.mxu0 %v669
        %1159 = vmatprep.subr.mxu0 0.0
        %1160 = vmatpush2.msra.mxu0 0.0
        %1161 = vmatprep.subr.mxu0 0.0
        %1162 = vmatpush2.msra.mxu0 0.0
        %1163 = vmatprep.subr.mxu0 0.0
        %1164 = vmatpush2.msra.mxu0 0.0
        %1165 = vmatprep.subr.mxu0 0.0
        %1166 = vmatpush2.msra.mxu0 0.0
        %1167 = vmatprep.subr.mxu0 0.0
        %1168 = vmatpush2.msra.mxu0 0.0
        %1169 = vmatprep.subr.mxu0 0.0
        %1170 = vmatpush2.msra.mxu0 0.0
        %1171 = vmatprep.subr.mxu0 0.0
        %1172 = vmatpush2.msra.mxu0 0.0
        %1173 = vmatprep.subr.mxu0 0.0
        %1174 = vmatpush2.msra.mxu0 0.0
        %1175 = vmatprep.subr.mxu0 0.0
        %1176 = vmatpush2.msra.mxu0 0.0
        %1177 = vmatprep.subr.mxu0 0.0
        %1178 = vmatpush2.msra.mxu0 0.0
        %1179 = vmatprep.subr.mxu0 0.0
        %1180 = vmatpush2.msra.mxu0 0.0
        %1181 = vmatprep.subr.mxu0 0.0
        %1182 = vmatpush2.msra.mxu0 0.0
        %1183 = vmatprep.subr.mxu0 0.0
        %1184 = vmatpush2.msra.mxu0 0.0
        %1185 = vmatprep.subr.mxu0 0.0
        %1186 = vmatpush2.msra.mxu0 0.0
        %1187 = vmatprep.subr.mxu0 0.0
        %1188 = vmatpush2.msra.mxu0 0.0
        %1189 = vmatprep.subr.mxu0 0.0
        %1190 = vmatpush2.msra.mxu0 0.0
        %1191 = vmatprep.mubr.f32.mxu0 0.0
        %1192 = vmatmul.mubr.f32.gmra.mxu0 %v1125
        %v1193 = vpop.f32.mrf.mxu0
        %v1194 = vadd.f32 0.0, %v1193
        %v1195 = vpop.f32.mrf.mxu0
        %1196 = vdwg.mxu0
        %1197 = vrot.lane.b32.xlu0 %v667, 112
        %v1198 = vpop.permute.xlu0 %1197
        %v1199 = vsel %vm672, %v1198, 0
        %1201 = vmatprep.subr.mxu0 0.0
        %1202 = vmatpush1.msra.mxu0 0.0
        %1203 = vmatprep.subr.mxu0 0.0
        %1204 = vmatpush1.msra.mxu0 0.0
        %1205 = vmatprep.subr.mxu0 0.0
        %1206 = vmatpush1.msra.mxu0 0.0
        %1207 = vmatprep.subr.mxu0 0.0
        %1208 = vmatpush1.msra.mxu0 0.0
        %1209 = vmatprep.subr.mxu0 0.0
        %1210 = vmatpush1.msra.mxu0 0.0
        %1211 = vmatprep.subr.mxu0 0.0
        %1212 = vmatpush1.msra.mxu0 0.0
        %1213 = vmatprep.subr.mxu0 0.0
        %1214 = vmatpush1.msra.mxu0 0.0
        %1215 = vmatprep.subr.mxu0 0.0
        %1216 = vmatpush1.msra.mxu0 0.0
        %1217 = vmatprep.subr.mxu0 0.0
        %1218 = vmatpush1.msra.mxu0 0.0
        %1219 = vmatprep.subr.mxu0 0.0
        %1220 = vmatpush1.msra.mxu0 0.0
        %1221 = vmatprep.subr.mxu0 0.0
        %1222 = vmatpush1.msra.mxu0 0.0
        %1223 = vmatprep.subr.mxu0 0.0
        %1224 = vmatpush1.msra.mxu0 0.0
        %1225 = vmatprep.subr.mxu0 0.0
        %1226 = vmatpush1.msra.mxu0 0.0
        %1227 = vmatprep.subr.mxu0 0.0
        %1228 = vmatpush1.msra.mxu0 0.0
        %1229 = vmatprep.subr.mxu0 0.0
        %1230 = vmatpush1.msra.mxu0 0.0
        %1231 = vmatprep.subr.mxu0 0.0
        %1232 = vmatpush1.msra.mxu0 %v670
        %1233 = vmatprep.subr.mxu0 0.0
        %1234 = vmatpush2.msra.mxu0 0.0
        %1235 = vmatprep.subr.mxu0 0.0
        %1236 = vmatpush2.msra.mxu0 0.0
        %1237 = vmatprep.subr.mxu0 0.0
        %1238 = vmatpush2.msra.mxu0 0.0
        %1239 = vmatprep.subr.mxu0 0.0
        %1240 = vmatpush2.msra.mxu0 0.0
        %1241 = vmatprep.subr.mxu0 0.0
        %1242 = vmatpush2.msra.mxu0 0.0
        %1243 = vmatprep.subr.mxu0 0.0
        %1244 = vmatpush2.msra.mxu0 0.0
        %1245 = vmatprep.subr.mxu0 0.0
        %1246 = vmatpush2.msra.mxu0 0.0
        %1247 = vmatprep.subr.mxu0 0.0
        %1248 = vmatpush2.msra.mxu0 0.0
        %1249 = vmatprep.subr.mxu0 0.0
        %1250 = vmatpush2.msra.mxu0 0.0
        %1251 = vmatprep.subr.mxu0 0.0
        %1252 = vmatpush2.msra.mxu0 0.0
        %1253 = vmatprep.subr.mxu0 0.0
        %1254 = vmatpush2.msra.mxu0 0.0
        %1255 = vmatprep.subr.mxu0 0.0
        %1256 = vmatpush2.msra.mxu0 0.0
        %1257 = vmatprep.subr.mxu0 0.0
        %1258 = vmatpush2.msra.mxu0 0.0
        %1259 = vmatprep.subr.mxu0 0.0
        %1260 = vmatpush2.msra.mxu0 0.0
        %1261 = vmatprep.subr.mxu0 0.0
        %1262 = vmatpush2.msra.mxu0 0.0
        %1263 = vmatprep.subr.mxu0 0.0
        %1264 = vmatpush2.msra.mxu0 0.0
        %1265 = vmatprep.mubr.f32.mxu0 0.0
        %1266 = vmatmul.mubr.f32.gmra.mxu0 %v1199
        %v1267 = vpop.f32.mrf.mxu0
        %v1268 = vadd.f32 0.0, %v1267
        %v1269 = vpop.f32.mrf.mxu0
        %1270 = vdwg.mxu0
        %1271 = vrot.lane.b32.xlu0 %v668, 112
        %v1272 = vpop.permute.xlu0 %1271
        %v1273 = vsel %vm672, %v1272, 0
        %1275 = vmatprep.subr.mxu0 0.0
        %1276 = vmatpush1.msra.mxu0 0.0
        %1277 = vmatprep.subr.mxu0 0.0
        %1278 = vmatpush1.msra.mxu0 0.0
        %1279 = vmatprep.subr.mxu0 0.0
        %1280 = vmatpush1.msra.mxu0 0.0
        %1281 = vmatprep.subr.mxu0 0.0
        %1282 = vmatpush1.msra.mxu0 0.0
        %1283 = vmatprep.subr.mxu0 0.0
        %1284 = vmatpush1.msra.mxu0 0.0
        %1285 = vmatprep.subr.mxu0 0.0
        %1286 = vmatpush1.msra.mxu0 0.0
        %1287 = vmatprep.subr.mxu0 0.0
        %1288 = vmatpush1.msra.mxu0 0.0
        %1289 = vmatprep.subr.mxu0 0.0
        %1290 = vmatpush1.msra.mxu0 0.0
        %1291 = vmatprep.subr.mxu0 0.0
        %1292 = vmatpush1.msra.mxu0 0.0
        %1293 = vmatprep.subr.mxu0 0.0
        %1294 = vmatpush1.msra.mxu0 0.0
        %1295 = vmatprep.subr.mxu0 0.0
        %1296 = vmatpush1.msra.mxu0 0.0
        %1297 = vmatprep.subr.mxu0 0.0
        %1298 = vmatpush1.msra.mxu0 0.0
        %1299 = vmatprep.subr.mxu0 0.0
        %1300 = vmatpush1.msra.mxu0 0.0
        %1301 = vmatprep.subr.mxu0 0.0
        %1302 = vmatpush1.msra.mxu0 0.0
        %1303 = vmatprep.subr.mxu0 0.0
        %1304 = vmatpush1.msra.mxu0 0.0
        %1305 = vmatprep.subr.mxu0 0.0
        %1306 = vmatpush1.msra.mxu0 %v671
        %1307 = vmatprep.subr.mxu0 0.0
        %1308 = vmatpush2.msra.mxu0 0.0
        %1309 = vmatprep.subr.mxu0 0.0
        %1310 = vmatpush2.msra.mxu0 0.0
        %1311 = vmatprep.subr.mxu0 0.0
        %1312 = vmatpush2.msra.mxu0 0.0
        %1313 = vmatprep.subr.mxu0 0.0
        %1314 = vmatpush2.msra.mxu0 0.0
        %1315 = vmatprep.subr.mxu0 0.0
        %1316 = vmatpush2.msra.mxu0 0.0
        %1317 = vmatprep.subr.mxu0 0.0
        %1318 = vmatpush2.msra.mxu0 0.0
        %1319 = vmatprep.subr.mxu0 0.0
        %1320 = vmatpush2.msra.mxu0 0.0
        %1321 = vmatprep.subr.mxu0 0.0
        %1322 = vmatpush2.msra.mxu0 0.0
        %1323 = vmatprep.subr.mxu0 0.0
        %1324 = vmatpush2.msra.mxu0 0.0
        %1325 = vmatprep.subr.mxu0 0.0
        %1326 = vmatpush2.msra.mxu0 0.0
        %1327 = vmatprep.subr.mxu0 0.0
        %1328 = vmatpush2.msra.mxu0 0.0
        %1329 = vmatprep.subr.mxu0 0.0
        %1330 = vmatpush2.msra.mxu0 0.0
        %1331 = vmatprep.subr.mxu0 0.0
        %1332 = vmatpush2.msra.mxu0 0.0
        %1333 = vmatprep.subr.mxu0 0.0
        %1334 = vmatpush2.msra.mxu0 0.0
        %1335 = vmatprep.subr.mxu0 0.0
        %1336 = vmatpush2.msra.mxu0 0.0
        %1337 = vmatprep.subr.mxu0 0.0
        %1338 = vmatpush2.msra.mxu0 0.0
        %1339 = vmatprep.mubr.f32.mxu0 0.0
        %1340 = vmatmul.mubr.f32.gmra.mxu0 %v1273
        %v1341 = vpop.f32.mrf.mxu0
        %v1342 = vadd.f32 0.0, %v1341
        %v1343 = vpop.f32.mrf.mxu0
        %1344 = vdwg.mxu0
        %s1345 = scalar_lea.vmem [#allocation2], 16
        %1346 = vst.msk [vmem:[%s1345] sm:$0xff] %vm672, %v1194
        %s1347 = scalar_lea.vmem [#allocation3], 16
        %1348 = vst.msk [vmem:[%s1347] sm:$0xff] %vm672, %v1268
        %s1349 = scalar_lea.vmem [#allocation4], 16
        %1350 = vst.msk [vmem:[%s1349] sm:$0xff] %vm672, %v1342
        %1351 = vrot.lane.b32.xlu0 %v666, 104
        %v1352 = vpop.permute.xlu0 %1351
        %v1353 = vsel %vm672, %v1352, 0
        %1355 = vmatprep.subr.mxu0 0.0
        %1356 = vmatpush1.msra.mxu0 0.0
        %1357 = vmatprep.subr.mxu0 0.0
        %1358 = vmatpush1.msra.mxu0 0.0
        %1359 = vmatprep.subr.mxu0 0.0
        %1360 = vmatpush1.msra.mxu0 0.0
        %1361 = vmatprep.subr.mxu0 0.0
        %1362 = vmatpush1.msra.mxu0 0.0
        %1363 = vmatprep.subr.mxu0 0.0
        %1364 = vmatpush1.msra.mxu0 0.0
        %1365 = vmatprep.subr.mxu0 0.0
        %1366 = vmatpush1.msra.mxu0 0.0
        %1367 = vmatprep.subr.mxu0 0.0
        %1368 = vmatpush1.msra.mxu0 0.0
        %1369 = vmatprep.subr.mxu0 0.0
        %1370 = vmatpush1.msra.mxu0 0.0
        %1371 = vmatprep.subr.mxu0 0.0
        %1372 = vmatpush1.msra.mxu0 0.0
        %1373 = vmatprep.subr.mxu0 0.0
        %1374 = vmatpush1.msra.mxu0 0.0
        %1375 = vmatprep.subr.mxu0 0.0
        %1376 = vmatpush1.msra.mxu0 0.0
        %1377 = vmatprep.subr.mxu0 0.0
        %1378 = vmatpush1.msra.mxu0 0.0
        %1379 = vmatprep.subr.mxu0 0.0
        %1380 = vmatpush1.msra.mxu0 0.0
        %1381 = vmatprep.subr.mxu0 0.0
        %1382 = vmatpush1.msra.mxu0 0.0
        %1383 = vmatprep.subr.mxu0 0.0
        %1384 = vmatpush1.msra.mxu0 0.0
        %1385 = vmatprep.subr.mxu0 0.0
        %1386 = vmatpush1.msra.mxu0 %v669
        %1387 = vmatprep.subr.mxu0 0.0
        %1388 = vmatpush2.msra.mxu0 0.0
        %1389 = vmatprep.subr.mxu0 0.0
        %1390 = vmatpush2.msra.mxu0 0.0
        %1391 = vmatprep.subr.mxu0 0.0
        %1392 = vmatpush2.msra.mxu0 0.0
        %1393 = vmatprep.subr.mxu0 0.0
        %1394 = vmatpush2.msra.mxu0 0.0
        %1395 = vmatprep.subr.mxu0 0.0
        %1396 = vmatpush2.msra.mxu0 0.0
        %1397 = vmatprep.subr.mxu0 0.0
        %1398 = vmatpush2.msra.mxu0 0.0
        %1399 = vmatprep.subr.mxu0 0.0
        %1400 = vmatpush2.msra.mxu0 0.0
        %1401 = vmatprep.subr.mxu0 0.0
        %1402 = vmatpush2.msra.mxu0 0.0
        %1403 = vmatprep.subr.mxu0 0.0
        %1404 = vmatpush2.msra.mxu0 0.0
        %1405 = vmatprep.subr.mxu0 0.0
        %1406 = vmatpush2.msra.mxu0 0.0
        %1407 = vmatprep.subr.mxu0 0.0
        %1408 = vmatpush2.msra.mxu0 0.0
        %1409 = vmatprep.subr.mxu0 0.0
        %1410 = vmatpush2.msra.mxu0 0.0
        %1411 = vmatprep.subr.mxu0 0.0
        %1412 = vmatpush2.msra.mxu0 0.0
        %1413 = vmatprep.subr.mxu0 0.0
        %1414 = vmatpush2.msra.mxu0 0.0
        %1415 = vmatprep.subr.mxu0 0.0
        %1416 = vmatpush2.msra.mxu0 0.0
        %1417 = vmatprep.subr.mxu0 0.0
        %1418 = vmatpush2.msra.mxu0 0.0
        %1419 = vmatprep.mubr.f32.mxu0 0.0
        %1420 = vmatmul.mubr.f32.gmra.mxu0 %v1353
        %v1421 = vpop.f32.mrf.mxu0
        %v1422 = vadd.f32 0.0, %v1421
        %v1423 = vpop.f32.mrf.mxu0
        %1424 = vdwg.mxu0
        %1425 = vrot.lane.b32.xlu0 %v667, 104
        %v1426 = vpop.permute.xlu0 %1425
        %v1427 = vsel %vm672, %v1426, 0
        %1429 = vmatprep.subr.mxu0 0.0
        %1430 = vmatpush1.msra.mxu0 0.0
        %1431 = vmatprep.subr.mxu0 0.0
        %1432 = vmatpush1.msra.mxu0 0.0
        %1433 = vmatprep.subr.mxu0 0.0
        %1434 = vmatpush1.msra.mxu0 0.0
        %1435 = vmatprep.subr.mxu0 0.0
        %1436 = vmatpush1.msra.mxu0 0.0
        %1437 = vmatprep.subr.mxu0 0.0
        %1438 = vmatpush1.msra.mxu0 0.0
        %1439 = vmatprep.subr.mxu0 0.0
        %1440 = vmatpush1.msra.mxu0 0.0
        %1441 = vmatprep.subr.mxu0 0.0
        %1442 = vmatpush1.msra.mxu0 0.0
        %1443 = vmatprep.subr.mxu0 0.0
        %1444 = vmatpush1.msra.mxu0 0.0
        %1445 = vmatprep.subr.mxu0 0.0
        %1446 = vmatpush1.msra.mxu0 0.0
        %1447 = vmatprep.subr.mxu0 0.0
        %1448 = vmatpush1.msra.mxu0 0.0
        %1449 = vmatprep.subr.mxu0 0.0
        %1450 = vmatpush1.msra.mxu0 0.0
        %1451 = vmatprep.subr.mxu0 0.0
        %1452 = vmatpush1.msra.mxu0 0.0
        %1453 = vmatprep.subr.mxu0 0.0
        %1454 = vmatpush1.msra.mxu0 0.0
        %1455 = vmatprep.subr.mxu0 0.0
        %1456 = vmatpush1.msra.mxu0 0.0
        %1457 = vmatprep.subr.mxu0 0.0
        %1458 = vmatpush1.msra.mxu0 0.0
        %1459 = vmatprep.subr.mxu0 0.0
        %1460 = vmatpush1.msra.mxu0 %v670
        %1461 = vmatprep.subr.mxu0 0.0
        %1462 = vmatpush2.msra.mxu0 0.0
        %1463 = vmatprep.subr.mxu0 0.0
        %1464 = vmatpush2.msra.mxu0 0.0
        %1465 = vmatprep.subr.mxu0 0.0
        %1466 = vmatpush2.msra.mxu0 0.0
        %1467 = vmatprep.subr.mxu0 0.0
        %1468 = vmatpush2.msra.mxu0 0.0
        %1469 = vmatprep.subr.mxu0 0.0
        %1470 = vmatpush2.msra.mxu0 0.0
        %1471 = vmatprep.subr.mxu0 0.0
        %1472 = vmatpush2.msra.mxu0 0.0
        %1473 = vmatprep.subr.mxu0 0.0
        %1474 = vmatpush2.msra.mxu0 0.0
        %1475 = vmatprep.subr.mxu0 0.0
        %1476 = vmatpush2.msra.mxu0 0.0
        %1477 = vmatprep.subr.mxu0 0.0
        %1478 = vmatpush2.msra.mxu0 0.0
        %1479 = vmatprep.subr.mxu0 0.0
        %1480 = vmatpush2.msra.mxu0 0.0
        %1481 = vmatprep.subr.mxu0 0.0
        %1482 = vmatpush2.msra.mxu0 0.0
        %1483 = vmatprep.subr.mxu0 0.0
        %1484 = vmatpush2.msra.mxu0 0.0
        %1485 = vmatprep.subr.mxu0 0.0
        %1486 = vmatpush2.msra.mxu0 0.0
        %1487 = vmatprep.subr.mxu0 0.0
        %1488 = vmatpush2.msra.mxu0 0.0
        %1489 = vmatprep.subr.mxu0 0.0
        %1490 = vmatpush2.msra.mxu0 0.0
        %1491 = vmatprep.subr.mxu0 0.0
        %1492 = vmatpush2.msra.mxu0 0.0
        %1493 = vmatprep.mubr.f32.mxu0 0.0
        %1494 = vmatmul.mubr.f32.gmra.mxu0 %v1427
        %v1495 = vpop.f32.mrf.mxu0
        %v1496 = vadd.f32 0.0, %v1495
        %v1497 = vpop.f32.mrf.mxu0
        %1498 = vdwg.mxu0
        %1499 = vrot.lane.b32.xlu0 %v668, 104
        %v1500 = vpop.permute.xlu0 %1499
        %v1501 = vsel %vm672, %v1500, 0
        %1503 = vmatprep.subr.mxu0 0.0
        %1504 = vmatpush1.msra.mxu0 0.0
        %1505 = vmatprep.subr.mxu0 0.0
        %1506 = vmatpush1.msra.mxu0 0.0
        %1507 = vmatprep.subr.mxu0 0.0
        %1508 = vmatpush1.msra.mxu0 0.0
        %1509 = vmatprep.subr.mxu0 0.0
        %1510 = vmatpush1.msra.mxu0 0.0
        %1511 = vmatprep.subr.mxu0 0.0
        %1512 = vmatpush1.msra.mxu0 0.0
        %1513 = vmatprep.subr.mxu0 0.0
        %1514 = vmatpush1.msra.mxu0 0.0
        %1515 = vmatprep.subr.mxu0 0.0
        %1516 = vmatpush1.msra.mxu0 0.0
        %1517 = vmatprep.subr.mxu0 0.0
        %1518 = vmatpush1.msra.mxu0 0.0
        %1519 = vmatprep.subr.mxu0 0.0
        %1520 = vmatpush1.msra.mxu0 0.0
        %1521 = vmatprep.subr.mxu0 0.0
        %1522 = vmatpush1.msra.mxu0 0.0
        %1523 = vmatprep.subr.mxu0 0.0
        %1524 = vmatpush1.msra.mxu0 0.0
        %1525 = vmatprep.subr.mxu0 0.0
        %1526 = vmatpush1.msra.mxu0 0.0
        %1527 = vmatprep.subr.mxu0 0.0
        %1528 = vmatpush1.msra.mxu0 0.0
        %1529 = vmatprep.subr.mxu0 0.0
        %1530 = vmatpush1.msra.mxu0 0.0
        %1531 = vmatprep.subr.mxu0 0.0
        %1532 = vmatpush1.msra.mxu0 0.0
        %1533 = vmatprep.subr.mxu0 0.0
        %1534 = vmatpush1.msra.mxu0 %v671
        %1535 = vmatprep.subr.mxu0 0.0
        %1536 = vmatpush2.msra.mxu0 0.0
        %1537 = vmatprep.subr.mxu0 0.0
        %1538 = vmatpush2.msra.mxu0 0.0
        %1539 = vmatprep.subr.mxu0 0.0
        %1540 = vmatpush2.msra.mxu0 0.0
        %1541 = vmatprep.subr.mxu0 0.0
        %1542 = vmatpush2.msra.mxu0 0.0
        %1543 = vmatprep.subr.mxu0 0.0
        %1544 = vmatpush2.msra.mxu0 0.0
        %1545 = vmatprep.subr.mxu0 0.0
        %1546 = vmatpush2.msra.mxu0 0.0
        %1547 = vmatprep.subr.mxu0 0.0
        %1548 = vmatpush2.msra.mxu0 0.0
        %1549 = vmatprep.subr.mxu0 0.0
        %1550 = vmatpush2.msra.mxu0 0.0
        %1551 = vmatprep.subr.mxu0 0.0
        %1552 = vmatpush2.msra.mxu0 0.0
        %1553 = vmatprep.subr.mxu0 0.0
        %1554 = vmatpush2.msra.mxu0 0.0
        %1555 = vmatprep.subr.mxu0 0.0
        %1556 = vmatpush2.msra.mxu0 0.0
        %1557 = vmatprep.subr.mxu0 0.0
        %1558 = vmatpush2.msra.mxu0 0.0
        %1559 = vmatprep.subr.mxu0 0.0
        %1560 = vmatpush2.msra.mxu0 0.0
        %1561 = vmatprep.subr.mxu0 0.0
        %1562 = vmatpush2.msra.mxu0 0.0
        %1563 = vmatprep.subr.mxu0 0.0
        %1564 = vmatpush2.msra.mxu0 0.0
        %1565 = vmatprep.subr.mxu0 0.0
        %1566 = vmatpush2.msra.mxu0 0.0
        %1567 = vmatprep.mubr.f32.mxu0 0.0
        %1568 = vmatmul.mubr.f32.gmra.mxu0 %v1501
        %v1569 = vpop.f32.mrf.mxu0
        %v1570 = vadd.f32 0.0, %v1569
        %v1571 = vpop.f32.mrf.mxu0
        %1572 = vdwg.mxu0
        %s1573 = scalar_lea.vmem [#allocation2], 24
        %1574 = vst.msk [vmem:[%s1573] sm:$0xff] %vm672, %v1422
        %s1575 = scalar_lea.vmem [#allocation3], 24
        %1576 = vst.msk [vmem:[%s1575] sm:$0xff] %vm672, %v1496
        %s1577 = scalar_lea.vmem [#allocation4], 24
        %1578 = vst.msk [vmem:[%s1577] sm:$0xff] %vm672, %v1570
        %v1579 = vld [vmem:[%s8] sm:$0x1]
        %v1581 = vlaneseq
        %v1582 = vshrl.u32 %v1581, 7
        %v1583 = vsub.s32 0, %v1582
        %v1584 = vrot.slane %v1579, %v1583
        %vm1586 = vcmask 261120
        %1587 = vst.msk [vmem:[#allocation5] sm:$0xff] %vm1586, %v1584
        %v1588 = vld [vmem:[%s576] sm:$0x1]
        %v1590 = vlaneseq
        %v1591 = vshrl.u32 %v1590, 7
        %v1592 = vsub.s32 0, %v1591
        %v1593 = vrot.slane %v1588, %v1592
        %v1595 = vld [vmem:[#allocation2] sm:$0xff]
        %v1596 = vld [vmem:[#allocation3] sm:$0xff]
        %v1597 = vld [vmem:[#allocation4] sm:$0xff]
        %v1599 = vsel %vm672, %v1595, 0
        %v1602 = vsel %vm672, %v1596, 0
        %1604 = vmatprep.subr.mxu0 0.0
        %1605 = vmatpush1.xpose.msra.mxu0 0.0
        %1606 = vmatprep.subr.mxu0 0.0
        %1607 = vmatpush1.xpose.msra.mxu0 0.0
        %1608 = vmatprep.subr.mxu0 0.0
        %1609 = vmatpush1.xpose.msra.mxu0 0.0
        %1610 = vmatprep.subr.mxu0 0.0
        %1611 = vmatpush1.xpose.msra.mxu0 0.0
        %1612 = vmatprep.subr.mxu0 0.0
        %1613 = vmatpush1.xpose.msra.mxu0 0.0
        %1614 = vmatprep.subr.mxu0 0.0
        %1615 = vmatpush1.xpose.msra.mxu0 0.0
        %1616 = vmatprep.subr.mxu0 0.0
        %1617 = vmatpush1.xpose.msra.mxu0 0.0
        %1618 = vmatprep.subr.mxu0 0.0
        %1619 = vmatpush1.xpose.msra.mxu0 0.0
        %1620 = vmatprep.subr.mxu0 0.0
        %1621 = vmatpush1.xpose.msra.mxu0 0.0
        %1622 = vmatprep.subr.mxu0 0.0
        %1623 = vmatpush1.xpose.msra.mxu0 0.0
        %1624 = vmatprep.subr.mxu0 0.0
        %1625 = vmatpush1.xpose.msra.mxu0 0.0
        %1626 = vmatprep.subr.mxu0 0.0
        %1627 = vmatpush1.xpose.msra.mxu0 0.0
        %1628 = vmatprep.subr.mxu0 0.0
        %1629 = vmatpush1.xpose.msra.mxu0 0.0
        %1630 = vmatprep.subr.mxu0 0.0
        %1631 = vmatpush1.xpose.msra.mxu0 0.0
        %1632 = vmatprep.subr.mxu0 0.0
        %1633 = vmatpush1.xpose.msra.mxu0 0.0
        %1634 = vmatprep.subr.mxu0 0.0
        %1635 = vmatpush1.xpose.msra.mxu0 %v1602
        %1636 = vmatprep.subr.mxu0 0.0
        %1637 = vmatpush2.xpose.msra.mxu0 0.0
        %1638 = vmatprep.subr.mxu0 0.0
        %1639 = vmatpush2.xpose.msra.mxu0 0.0
        %1640 = vmatprep.subr.mxu0 0.0
        %1641 = vmatpush2.xpose.msra.mxu0 0.0
        %1642 = vmatprep.subr.mxu0 0.0
        %1643 = vmatpush2.xpose.msra.mxu0 0.0
        %1644 = vmatprep.subr.mxu0 0.0
        %1645 = vmatpush2.xpose.msra.mxu0 0.0
        %1646 = vmatprep.subr.mxu0 0.0
        %1647 = vmatpush2.xpose.msra.mxu0 0.0
        %1648 = vmatprep.subr.mxu0 0.0
        %1649 = vmatpush2.xpose.msra.mxu0 0.0
        %1650 = vmatprep.subr.mxu0 0.0
        %1651 = vmatpush2.xpose.msra.mxu0 0.0
        %1652 = vmatprep.subr.mxu0 0.0
        %1653 = vmatpush2.xpose.msra.mxu0 0.0
        %1654 = vmatprep.subr.mxu0 0.0
        %1655 = vmatpush2.xpose.msra.mxu0 0.0
        %1656 = vmatprep.subr.mxu0 0.0
        %1657 = vmatpush2.xpose.msra.mxu0 0.0
        %1658 = vmatprep.subr.mxu0 0.0
        %1659 = vmatpush2.xpose.msra.mxu0 0.0
        %1660 = vmatprep.subr.mxu0 0.0
        %1661 = vmatpush2.xpose.msra.mxu0 0.0
        %1662 = vmatprep.subr.mxu0 0.0
        %1663 = vmatpush2.xpose.msra.mxu0 0.0
        %1664 = vmatprep.subr.mxu0 0.0
        %1665 = vmatpush2.xpose.msra.mxu0 0.0
        %1666 = vmatprep.subr.mxu0 0.0
        %1667 = vmatpush2.xpose.msra.mxu0 0.0
        %1668 = vmatprep.mubr.f32.mxu0 0.0
        %1669 = vmatmul.mubr.f32.gmra.mxu0 %v1599
        %v1670 = vpop.f32.mrf.mxu0
        %v1671 = vadd.f32 %v1593, %v1670
        %v1672 = vpop.f32.mrf.mxu0
        %1673 = vdwg.mxu0
        %v1674 = vsel %vm672, %v1671, -inf
        %1675 = vmax.xlane.f32.xlu0 %v1674
        %v1676 = vpop.xlane.xlu0 %1675
        %v1677 = vsub.f32 %v1671, %v1676
        %v1678 = vmul.f32 %v1677, 1.442695
        %v1679 = vpow.pop %v1678
        %v1680 = vsel %vm672, %v1679, 0.0
        %1681 = vadd.xlane.f32.xlu0 %v1680
        %v1682 = vpop.xlane.xlu0 %1681
        %v1683 = vrcp.pop %v1682
        %v1684 = vmul.f32 %v1682, %v1683
        %v1685 = vsub.f32 2.0, %v1684
        %v1686 = vmul.f32 %v1683, %v1685
        %v1687 = vmul.f32 %v1679, %v1686
        %v1689 = vsel %vm672, %v1687, 0
        %1691 = vmatprep.subr.mxu0 0.0
        %1692 = vmatpush1.msra.mxu0 0.0
        %1693 = vmatprep.subr.mxu0 0.0
        %1694 = vmatpush1.msra.mxu0 0.0
        %1695 = vmatprep.subr.mxu0 0.0
        %1696 = vmatpush1.msra.mxu0 0.0
        %1697 = vmatprep.subr.mxu0 0.0
        %1698 = vmatpush1.msra.mxu0 0.0
        %1699 = vmatprep.subr.mxu0 0.0
        %1700 = vmatpush1.msra.mxu0 0.0
        %1701 = vmatprep.subr.mxu0 0.0
        %1702 = vmatpush1.msra.mxu0 0.0
        %1703 = vmatprep.subr.mxu0 0.0
        %1704 = vmatpush1.msra.mxu0 0.0
        %1705 = vmatprep.subr.mxu0 0.0
        %1706 = vmatpush1.msra.mxu0 0.0
        %1707 = vmatprep.subr.mxu0 0.0
        %1708 = vmatpush1.msra.mxu0 0.0
        %1709 = vmatprep.subr.mxu0 0.0
        %1710 = vmatpush1.msra.mxu0 0.0
        %1711 = vmatprep.subr.mxu0 0.0
        %1712 = vmatpush1.msra.mxu0 0.0
        %1713 = vmatprep.subr.mxu0 0.0
        %1714 = vmatpush1.msra.mxu0 0.0
        %1715 = vmatprep.subr.mxu0 0.0
        %1716 = vmatpush1.msra.mxu0 0.0
        %1717 = vmatprep.subr.mxu0 0.0
        %1718 = vmatpush1.msra.mxu0 0.0
        %1719 = vmatprep.subr.mxu0 0.0
        %1720 = vmatpush1.msra.mxu0 0.0
        %1721 = vmatprep.subr.mxu0 0.0
        %1722 = vmatpush1.msra.mxu0 %v1597
        %1723 = vmatprep.subr.mxu0 0.0
        %1724 = vmatpush2.msra.mxu0 0.0
        %1725 = vmatprep.subr.mxu0 0.0
        %1726 = vmatpush2.msra.mxu0 0.0
        %1727 = vmatprep.subr.mxu0 0.0
        %1728 = vmatpush2.msra.mxu0 0.0
        %1729 = vmatprep.subr.mxu0 0.0
        %1730 = vmatpush2.msra.mxu0 0.0
        %1731 = vmatprep.subr.mxu0 0.0
        %1732 = vmatpush2.msra.mxu0 0.0
        %1733 = vmatprep.subr.mxu0 0.0
        %1734 = vmatpush2.msra.mxu0 0.0
        %1735 = vmatprep.subr.mxu0 0.0
        %1736 = vmatpush2.msra.mxu0 0.0
        %1737 = vmatprep.subr.mxu0 0.0
        %1738 = vmatpush2.msra.mxu0 0.0
        %1739 = vmatprep.subr.mxu0 0.0
        %1740 = vmatpush2.msra.mxu0 0.0
        %1741 = vmatprep.subr.mxu0 0.0
        %1742 = vmatpush2.msra.mxu0 0.0
        %1743 = vmatprep.subr.mxu0 0.0
        %1744 = vmatpush2.msra.mxu0 0.0
        %1745 = vmatprep.subr.mxu0 0.0
        %1746 = vmatpush2.msra.mxu0 0.0
        %1747 = vmatprep.subr.mxu0 0.0
        %1748 = vmatpush2.msra.mxu0 0.0
        %1749 = vmatprep.subr.mxu0 0.0
        %1750 = vmatpush2.msra.mxu0 0.0
        %1751 = vmatprep.subr.mxu0 0.0
        %1752 = vmatpush2.msra.mxu0 0.0
        %1753 = vmatprep.subr.mxu0 0.0
        %1754 = vmatpush2.msra.mxu0 0.0
        %1755 = vmatprep.mubr.f32.mxu0 0.0
        %1756 = vmatmul.mubr.f32.gmra.mxu0 %v1689
        %v1757 = vpop.f32.mrf.mxu0
        %v1758 = vadd.f32 0.0, %v1757
        %v1759 = vpop.f32.mrf.mxu0
        %1760 = vdwg.mxu0
        %v1761 = vld [vmem:[#allocation5] sm:$0xff]
        %v1762 = vld [vmem:[#allocation12] sm:$0xff]
        %v1764 = vsel %vm672, %v1758, 0
        %1766 = vmatprep.subr.mxu0 0.0
        %1767 = vmatpush1.msra.mxu0 0.0
        %1768 = vmatprep.subr.mxu0 0.0
        %1769 = vmatpush1.msra.mxu0 0.0
        %1770 = vmatprep.subr.mxu0 0.0
        %1771 = vmatpush1.msra.mxu0 0.0
        %1772 = vmatprep.subr.mxu0 0.0
        %1773 = vmatpush1.msra.mxu0 0.0
        %1774 = vmatprep.subr.mxu0 0.0
        %1775 = vmatpush1.msra.mxu0 0.0
        %1776 = vmatprep.subr.mxu0 0.0
        %1777 = vmatpush1.msra.mxu0 0.0
        %1778 = vmatprep.subr.mxu0 0.0
        %1779 = vmatpush1.msra.mxu0 0.0
        %1780 = vmatprep.subr.mxu0 0.0
        %1781 = vmatpush1.msra.mxu0 0.0
        %1782 = vmatprep.subr.mxu0 0.0
        %1783 = vmatpush1.msra.mxu0 0.0
        %1784 = vmatprep.subr.mxu0 0.0
        %1785 = vmatpush1.msra.mxu0 0.0
        %1786 = vmatprep.subr.mxu0 0.0
        %1787 = vmatpush1.msra.mxu0 0.0
        %1788 = vmatprep.subr.mxu0 0.0
        %1789 = vmatpush1.msra.mxu0 0.0
        %1790 = vmatprep.subr.mxu0 0.0
        %1791 = vmatpush1.msra.mxu0 0.0
        %1792 = vmatprep.subr.mxu0 0.0
        %1793 = vmatpush1.msra.mxu0 0.0
        %1794 = vmatprep.subr.mxu0 0.0
        %1795 = vmatpush1.msra.mxu0 0.0
        %1796 = vmatprep.subr.mxu0 0.0
        %1797 = vmatpush1.msra.mxu0 %v1762
        %1798 = vmatprep.subr.mxu0 0.0
        %1799 = vmatpush2.msra.mxu0 0.0
        %1800 = vmatprep.subr.mxu0 0.0
        %1801 = vmatpush2.msra.mxu0 0.0
        %1802 = vmatprep.subr.mxu0 0.0
        %1803 = vmatpush2.msra.mxu0 0.0
        %1804 = vmatprep.subr.mxu0 0.0
        %1805 = vmatpush2.msra.mxu0 0.0
        %1806 = vmatprep.subr.mxu0 0.0
        %1807 = vmatpush2.msra.mxu0 0.0
        %1808 = vmatprep.subr.mxu0 0.0
        %1809 = vmatpush2.msra.mxu0 0.0
        %1810 = vmatprep.subr.mxu0 0.0
        %1811 = vmatpush2.msra.mxu0 0.0
        %1812 = vmatprep.subr.mxu0 0.0
        %1813 = vmatpush2.msra.mxu0 0.0
        %1814 = vmatprep.subr.mxu0 0.0
        %1815 = vmatpush2.msra.mxu0 0.0
        %1816 = vmatprep.subr.mxu0 0.0
        %1817 = vmatpush2.msra.mxu0 0.0
        %1818 = vmatprep.subr.mxu0 0.0
        %1819 = vmatpush2.msra.mxu0 0.0
        %1820 = vmatprep.subr.mxu0 0.0
        %1821 = vmatpush2.msra.mxu0 0.0
        %1822 = vmatprep.subr.mxu0 0.0
        %1823 = vmatpush2.msra.mxu0 0.0
        %1824 = vmatprep.subr.mxu0 0.0
        %1825 = vmatpush2.msra.mxu0 0.0
        %1826 = vmatprep.subr.mxu0 0.0
        %1827 = vmatpush2.msra.mxu0 0.0
        %1828 = vmatprep.subr.mxu0 0.0
        %1829 = vmatpush2.msra.mxu0 0.0
        %1830 = vmatprep.mubr.f32.mxu0 0.0
        %1831 = vmatmul.mubr.f32.gmra.mxu0 %v1764
        %v1832 = vpop.f32.mrf.mxu0
        %v1833 = vadd.f32 0.0, %v1832
        %v1834 = vpop.f32.mrf.mxu0
        %1835 = vdwg.mxu0
        %v1836 = vadd.f32 %v1761, %v1833
        %1837 = vst.msk [vmem:[#allocation5] sm:$0xff] %vm1586, %v1836
        %v1838 = vld [vmem:[%s1117] sm:$0xff]
        %v1839 = vld [vmem:[%s1119] sm:$0xff]
        %v1840 = vld [vmem:[%s1121] sm:$0xff]
        %v1842 = vsel %vm672, %v1838, 0
        %v1845 = vsel %vm672, %v1839, 0
        %1847 = vmatprep.subr.mxu0 0.0
        %1848 = vmatpush1.xpose.msra.mxu0 0.0
        %1849 = vmatprep.subr.mxu0 0.0
        %1850 = vmatpush1.xpose.msra.mxu0 0.0
        %1851 = vmatprep.subr.mxu0 0.0
        %1852 = vmatpush1.xpose.msra.mxu0 0.0
        %1853 = vmatprep.subr.mxu0 0.0
        %1854 = vmatpush1.xpose.msra.mxu0 0.0
        %1855 = vmatprep.subr.mxu0 0.0
        %1856 = vmatpush1.xpose.msra.mxu0 0.0
        %1857 = vmatprep.subr.mxu0 0.0
        %1858 = vmatpush1.xpose.msra.mxu0 0.0
        %1859 = vmatprep.subr.mxu0 0.0
        %1860 = vmatpush1.xpose.msra.mxu0 0.0
        %1861 = vmatprep.subr.mxu0 0.0
        %1862 = vmatpush1.xpose.msra.mxu0 0.0
        %1863 = vmatprep.subr.mxu0 0.0
        %1864 = vmatpush1.xpose.msra.mxu0 0.0
        %1865 = vmatprep.subr.mxu0 0.0
        %1866 = vmatpush1.xpose.msra.mxu0 0.0
        %1867 = vmatprep.subr.mxu0 0.0
        %1868 = vmatpush1.xpose.msra.mxu0 0.0
        %1869 = vmatprep.subr.mxu0 0.0
        %1870 = vmatpush1.xpose.msra.mxu0 0.0
        %1871 = vmatprep.subr.mxu0 0.0
        %1872 = vmatpush1.xpose.msra.mxu0 0.0
        %1873 = vmatprep.subr.mxu0 0.0
        %1874 = vmatpush1.xpose.msra.mxu0 0.0
        %1875 = vmatprep.subr.mxu0 0.0
        %1876 = vmatpush1.xpose.msra.mxu0 0.0
        %1877 = vmatprep.subr.mxu0 0.0
        %1878 = vmatpush1.xpose.msra.mxu0 %v1845
        %1879 = vmatprep.subr.mxu0 0.0
        %1880 = vmatpush2.xpose.msra.mxu0 0.0
        %1881 = vmatprep.subr.mxu0 0.0
        %1882 = vmatpush2.xpose.msra.mxu0 0.0
        %1883 = vmatprep.subr.mxu0 0.0
        %1884 = vmatpush2.xpose.msra.mxu0 0.0
        %1885 = vmatprep.subr.mxu0 0.0
        %1886 = vmatpush2.xpose.msra.mxu0 0.0
        %1887 = vmatprep.subr.mxu0 0.0
        %1888 = vmatpush2.xpose.msra.mxu0 0.0
        %1889 = vmatprep.subr.mxu0 0.0
        %1890 = vmatpush2.xpose.msra.mxu0 0.0
        %1891 = vmatprep.subr.mxu0 0.0
        %1892 = vmatpush2.xpose.msra.mxu0 0.0
        %1893 = vmatprep.subr.mxu0 0.0
        %1894 = vmatpush2.xpose.msra.mxu0 0.0
        %1895 = vmatprep.subr.mxu0 0.0
        %1896 = vmatpush2.xpose.msra.mxu0 0.0
        %1897 = vmatprep.subr.mxu0 0.0
        %1898 = vmatpush2.xpose.msra.mxu0 0.0
        %1899 = vmatprep.subr.mxu0 0.0
        %1900 = vmatpush2.xpose.msra.mxu0 0.0
        %1901 = vmatprep.subr.mxu0 0.0
        %1902 = vmatpush2.xpose.msra.mxu0 0.0
        %1903 = vmatprep.subr.mxu0 0.0
        %1904 = vmatpush2.xpose.msra.mxu0 0.0
        %1905 = vmatprep.subr.mxu0 0.0
        %1906 = vmatpush2.xpose.msra.mxu0 0.0
        %1907 = vmatprep.subr.mxu0 0.0
        %1908 = vmatpush2.xpose.msra.mxu0 0.0
        %1909 = vmatprep.subr.mxu0 0.0
        %1910 = vmatpush2.xpose.msra.mxu0 0.0
        %1911 = vmatprep.mubr.f32.mxu0 0.0
        %1912 = vmatmul.mubr.f32.gmra.mxu0 %v1842
        %v1913 = vpop.f32.mrf.mxu0
        %v1914 = vadd.f32 %v1593, %v1913
        %v1915 = vpop.f32.mrf.mxu0
        %1916 = vdwg.mxu0
        %v1917 = vsel %vm672, %v1914, -inf
        %1918 = vmax.xlane.f32.xlu0 %v1917
        %v1919 = vpop.xlane.xlu0 %1918
        %v1920 = vsub.f32 %v1914, %v1919
        %v1921 = vmul.f32 %v1920, 1.442695
        %v1922 = vpow.pop %v1921
        %v1923 = vsel %vm672, %v1922, 0.0
        %1924 = vadd.xlane.f32.xlu0 %v1923
        %v1925 = vpop.xlane.xlu0 %1924
        %v1926 = vrcp.pop %v1925
        %v1927 = vmul.f32 %v1925, %v1926
        %v1928 = vsub.f32 2.0, %v1927
        %v1929 = vmul.f32 %v1926, %v1928
        %v1930 = vmul.f32 %v1922, %v1929
        %v1932 = vsel %vm672, %v1930, 0
        %1934 = vmatprep.subr.mxu0 0.0
        %1935 = vmatpush1.msra.mxu0 0.0
        %1936 = vmatprep.subr.mxu0 0.0
        %1937 = vmatpush1.msra.mxu0 0.0
        %1938 = vmatprep.subr.mxu0 0.0
        %1939 = vmatpush1.msra.mxu0 0.0
        %1940 = vmatprep.subr.mxu0 0.0
        %1941 = vmatpush1.msra.mxu0 0.0
        %1942 = vmatprep.subr.mxu0 0.0
        %1943 = vmatpush1.msra.mxu0 0.0
        %1944 = vmatprep.subr.mxu0 0.0
        %1945 = vmatpush1.msra.mxu0 0.0
        %1946 = vmatprep.subr.mxu0 0.0
        %1947 = vmatpush1.msra.mxu0 0.0
        %1948 = vmatprep.subr.mxu0 0.0
        %1949 = vmatpush1.msra.mxu0 0.0
        %1950 = vmatprep.subr.mxu0 0.0
        %1951 = vmatpush1.msra.mxu0 0.0
        %1952 = vmatprep.subr.mxu0 0.0
        %1953 = vmatpush1.msra.mxu0 0.0
        %1954 = vmatprep.subr.mxu0 0.0
        %1955 = vmatpush1.msra.mxu0 0.0
        %1956 = vmatprep.subr.mxu0 0.0
        %1957 = vmatpush1.msra.mxu0 0.0
        %1958 = vmatprep.subr.mxu0 0.0
        %1959 = vmatpush1.msra.mxu0 0.0
        %1960 = vmatprep.subr.mxu0 0.0
        %1961 = vmatpush1.msra.mxu0 0.0
        %1962 = vmatprep.subr.mxu0 0.0
        %1963 = vmatpush1.msra.mxu0 0.0
        %1964 = vmatprep.subr.mxu0 0.0
        %1965 = vmatpush1.msra.mxu0 %v1840
        %1966 = vmatprep.subr.mxu0 0.0
        %1967 = vmatpush2.msra.mxu0 0.0
        %1968 = vmatprep.subr.mxu0 0.0
        %1969 = vmatpush2.msra.mxu0 0.0
        %1970 = vmatprep.subr.mxu0 0.0
        %1971 = vmatpush2.msra.mxu0 0.0
        %1972 = vmatprep.subr.mxu0 0.0
        %1973 = vmatpush2.msra.mxu0 0.0
        %1974 = vmatprep.subr.mxu0 0.0
        %1975 = vmatpush2.msra.mxu0 0.0
        %1976 = vmatprep.subr.mxu0 0.0
        %1977 = vmatpush2.msra.mxu0 0.0
        %1978 = vmatprep.subr.mxu0 0.0
        %1979 = vmatpush2.msra.mxu0 0.0
        %1980 = vmatprep.subr.mxu0 0.0
        %1981 = vmatpush2.msra.mxu0 0.0
        %1982 = vmatprep.subr.mxu0 0.0
        %1983 = vmatpush2.msra.mxu0 0.0
        %1984 = vmatprep.subr.mxu0 0.0
        %1985 = vmatpush2.msra.mxu0 0.0
        %1986 = vmatprep.subr.mxu0 0.0
        %1987 = vmatpush2.msra.mxu0 0.0
        %1988 = vmatprep.subr.mxu0 0.0
        %1989 = vmatpush2.msra.mxu0 0.0
        %1990 = vmatprep.subr.mxu0 0.0
        %1991 = vmatpush2.msra.mxu0 0.0
        %1992 = vmatprep.subr.mxu0 0.0
        %1993 = vmatpush2.msra.mxu0 0.0
        %1994 = vmatprep.subr.mxu0 0.0
        %1995 = vmatpush2.msra.mxu0 0.0
        %1996 = vmatprep.subr.mxu0 0.0
        %1997 = vmatpush2.msra.mxu0 0.0
        %1998 = vmatprep.mubr.f32.mxu0 0.0
        %1999 = vmatmul.mubr.f32.gmra.mxu0 %v1932
        %v2000 = vpop.f32.mrf.mxu0
        %v2001 = vadd.f32 0.0, %v2000
        %v2002 = vpop.f32.mrf.mxu0
        %2003 = vdwg.mxu0
        %v2004 = vld [vmem:[#allocation5] sm:$0xff]
        %s2005 = scalar_lea.vmem [#allocation12], 8
        %v2006 = vld [vmem:[%s2005] sm:$0xff]
        %v2008 = vsel %vm672, %v2001, 0
        %2010 = vmatprep.subr.mxu0 0.0
        %2011 = vmatpush1.msra.mxu0 0.0
        %2012 = vmatprep.subr.mxu0 0.0
        %2013 = vmatpush1.msra.mxu0 0.0
        %2014 = vmatprep.subr.mxu0 0.0
        %2015 = vmatpush1.msra.mxu0 0.0
        %2016 = vmatprep.subr.mxu0 0.0
        %2017 = vmatpush1.msra.mxu0 0.0
        %2018 = vmatprep.subr.mxu0 0.0
        %2019 = vmatpush1.msra.mxu0 0.0
        %2020 = vmatprep.subr.mxu0 0.0
        %2021 = vmatpush1.msra.mxu0 0.0
        %2022 = vmatprep.subr.mxu0 0.0
        %2023 = vmatpush1.msra.mxu0 0.0
        %2024 = vmatprep.subr.mxu0 0.0
        %2025 = vmatpush1.msra.mxu0 0.0
        %2026 = vmatprep.subr.mxu0 0.0
        %2027 = vmatpush1.msra.mxu0 0.0
        %2028 = vmatprep.subr.mxu0 0.0
        %2029 = vmatpush1.msra.mxu0 0.0
        %2030 = vmatprep.subr.mxu0 0.0
        %2031 = vmatpush1.msra.mxu0 0.0
        %2032 = vmatprep.subr.mxu0 0.0
        %2033 = vmatpush1.msra.mxu0 0.0
        %2034 = vmatprep.subr.mxu0 0.0
        %2035 = vmatpush1.msra.mxu0 0.0
        %2036 = vmatprep.subr.mxu0 0.0
        %2037 = vmatpush1.msra.mxu0 0.0
        %2038 = vmatprep.subr.mxu0 0.0
        %2039 = vmatpush1.msra.mxu0 0.0
        %2040 = vmatprep.subr.mxu0 0.0
        %2041 = vmatpush1.msra.mxu0 %v2006
        %2042 = vmatprep.subr.mxu0 0.0
        %2043 = vmatpush2.msra.mxu0 0.0
        %2044 = vmatprep.subr.mxu0 0.0
        %2045 = vmatpush2.msra.mxu0 0.0
        %2046 = vmatprep.subr.mxu0 0.0
        %2047 = vmatpush2.msra.mxu0 0.0
        %2048 = vmatprep.subr.mxu0 0.0
        %2049 = vmatpush2.msra.mxu0 0.0
        %2050 = vmatprep.subr.mxu0 0.0
        %2051 = vmatpush2.msra.mxu0 0.0
        %2052 = vmatprep.subr.mxu0 0.0
        %2053 = vmatpush2.msra.mxu0 0.0
        %2054 = vmatprep.subr.mxu0 0.0
        %2055 = vmatpush2.msra.mxu0 0.0
        %2056 = vmatprep.subr.mxu0 0.0
        %2057 = vmatpush2.msra.mxu0 0.0
        %2058 = vmatprep.subr.mxu0 0.0
        %2059 = vmatpush2.msra.mxu0 0.0
        %2060 = vmatprep.subr.mxu0 0.0
        %2061 = vmatpush2.msra.mxu0 0.0
        %2062 = vmatprep.subr.mxu0 0.0
        %2063 = vmatpush2.msra.mxu0 0.0
        %2064 = vmatprep.subr.mxu0 0.0
        %2065 = vmatpush2.msra.mxu0 0.0
        %2066 = vmatprep.subr.mxu0 0.0
        %2067 = vmatpush2.msra.mxu0 0.0
        %2068 = vmatprep.subr.mxu0 0.0
        %2069 = vmatpush2.msra.mxu0 0.0
        %2070 = vmatprep.subr.mxu0 0.0
        %2071 = vmatpush2.msra.mxu0 0.0
        %2072 = vmatprep.subr.mxu0 0.0
        %2073 = vmatpush2.msra.mxu0 0.0
        %2074 = vmatprep.mubr.f32.mxu0 0.0
        %2075 = vmatmul.mubr.f32.gmra.mxu0 %v2008
        %v2076 = vpop.f32.mrf.mxu0
        %v2077 = vadd.f32 0.0, %v2076
        %v2078 = vpop.f32.mrf.mxu0
        %2079 = vdwg.mxu0
        %v2080 = vadd.f32 %v2004, %v2077
        %2081 = vst.msk [vmem:[#allocation5] sm:$0xff] %vm1586, %v2080
        %v2082 = vld [vmem:[%s1345] sm:$0xff]
        %v2083 = vld [vmem:[%s1347] sm:$0xff]
        %v2084 = vld [vmem:[%s1349] sm:$0xff]
        %v2086 = vsel %vm672, %v2082, 0
        %v2089 = vsel %vm672, %v2083, 0
        %2091 = vmatprep.subr.mxu0 0.0
        %2092 = vmatpush1.xpose.msra.mxu0 0.0
        %2093 = vmatprep.subr.mxu0 0.0
        %2094 = vmatpush1.xpose.msra.mxu0 0.0
        %2095 = vmatprep.subr.mxu0 0.0
        %2096 = vmatpush1.xpose.msra.mxu0 0.0
        %2097 = vmatprep.subr.mxu0 0.0
        %2098 = vmatpush1.xpose.msra.mxu0 0.0
        %2099 = vmatprep.subr.mxu0 0.0
        %2100 = vmatpush1.xpose.msra.mxu0 0.0
        %2101 = vmatprep.subr.mxu0 0.0
        %2102 = vmatpush1.xpose.msra.mxu0 0.0
        %2103 = vmatprep.subr.mxu0 0.0
        %2104 = vmatpush1.xpose.msra.mxu0 0.0
        %2105 = vmatprep.subr.mxu0 0.0
        %2106 = vmatpush1.xpose.msra.mxu0 0.0
        %2107 = vmatprep.subr.mxu0 0.0
        %2108 = vmatpush1.xpose.msra.mxu0 0.0
        %2109 = vmatprep.subr.mxu0 0.0
        %2110 = vmatpush1.xpose.msra.mxu0 0.0
        %2111 = vmatprep.subr.mxu0 0.0
        %2112 = vmatpush1.xpose.msra.mxu0 0.0
        %2113 = vmatprep.subr.mxu0 0.0
        %2114 = vmatpush1.xpose.msra.mxu0 0.0
        %2115 = vmatprep.subr.mxu0 0.0
        %2116 = vmatpush1.xpose.msra.mxu0 0.0
        %2117 = vmatprep.subr.mxu0 0.0
        %2118 = vmatpush1.xpose.msra.mxu0 0.0
        %2119 = vmatprep.subr.mxu0 0.0
        %2120 = vmatpush1.xpose.msra.mxu0 0.0
        %2121 = vmatprep.subr.mxu0 0.0
        %2122 = vmatpush1.xpose.msra.mxu0 %v2089
        %2123 = vmatprep.subr.mxu0 0.0
        %2124 = vmatpush2.xpose.msra.mxu0 0.0
        %2125 = vmatprep.subr.mxu0 0.0
        %2126 = vmatpush2.xpose.msra.mxu0 0.0
        %2127 = vmatprep.subr.mxu0 0.0
        %2128 = vmatpush2.xpose.msra.mxu0 0.0
        %2129 = vmatprep.subr.mxu0 0.0
        %2130 = vmatpush2.xpose.msra.mxu0 0.0
        %2131 = vmatprep.subr.mxu0 0.0
        %2132 = vmatpush2.xpose.msra.mxu0 0.0
        %2133 = vmatprep.subr.mxu0 0.0
        %2134 = vmatpush2.xpose.msra.mxu0 0.0
        %2135 = vmatprep.subr.mxu0 0.0
        %2136 = vmatpush2.xpose.msra.mxu0 0.0
        %2137 = vmatprep.subr.mxu0 0.0
        %2138 = vmatpush2.xpose.msra.mxu0 0.0
        %2139 = vmatprep.subr.mxu0 0.0
        %2140 = vmatpush2.xpose.msra.mxu0 0.0
        %2141 = vmatprep.subr.mxu0 0.0
        %2142 = vmatpush2.xpose.msra.mxu0 0.0
        %2143 = vmatprep.subr.mxu0 0.0
        %2144 = vmatpush2.xpose.msra.mxu0 0.0
        %2145 = vmatprep.subr.mxu0 0.0
        %2146 = vmatpush2.xpose.msra.mxu0 0.0
        %2147 = vmatprep.subr.mxu0 0.0
        %2148 = vmatpush2.xpose.msra.mxu0 0.0
        %2149 = vmatprep.subr.mxu0 0.0
        %2150 = vmatpush2.xpose.msra.mxu0 0.0
        %2151 = vmatprep.subr.mxu0 0.0
        %2152 = vmatpush2.xpose.msra.mxu0 0.0
        %2153 = vmatprep.subr.mxu0 0.0
        %2154 = vmatpush2.xpose.msra.mxu0 0.0
        %2155 = vmatprep.mubr.f32.mxu0 0.0
        %2156 = vmatmul.mubr.f32.gmra.mxu0 %v2086
        %v2157 = vpop.f32.mrf.mxu0
        %v2158 = vadd.f32 %v1593, %v2157
        %v2159 = vpop.f32.mrf.mxu0
        %2160 = vdwg.mxu0
        %v2161 = vsel %vm672, %v2158, -inf
        %2162 = vmax.xlane.f32.xlu0 %v2161
        %v2163 = vpop.xlane.xlu0 %2162
        %v2164 = vsub.f32 %v2158, %v2163
        %v2165 = vmul.f32 %v2164, 1.442695
        %v2166 = vpow.pop %v2165
        %v2167 = vsel %vm672, %v2166, 0.0
        %2168 = vadd.xlane.f32.xlu0 %v2167
        %v2169 = vpop.xlane.xlu0 %2168
        %v2170 = vrcp.pop %v2169
        %v2171 = vmul.f32 %v2169, %v2170
        %v2172 = vsub.f32 2.0, %v2171
        %v2173 = vmul.f32 %v2170, %v2172
        %v2174 = vmul.f32 %v2166, %v2173
        %v2176 = vsel %vm672, %v2174, 0
        %2178 = vmatprep.subr.mxu0 0.0
        %2179 = vmatpush1.msra.mxu0 0.0
        %2180 = vmatprep.subr.mxu0 0.0
        %2181 = vmatpush1.msra.mxu0 0.0
        %2182 = vmatprep.subr.mxu0 0.0
        %2183 = vmatpush1.msra.mxu0 0.0
        %2184 = vmatprep.subr.mxu0 0.0
        %2185 = vmatpush1.msra.mxu0 0.0
        %2186 = vmatprep.subr.mxu0 0.0
        %2187 = vmatpush1.msra.mxu0 0.0
        %2188 = vmatprep.subr.mxu0 0.0
        %2189 = vmatpush1.msra.mxu0 0.0
        %2190 = vmatprep.subr.mxu0 0.0
        %2191 = vmatpush1.msra.mxu0 0.0
        %2192 = vmatprep.subr.mxu0 0.0
        %2193 = vmatpush1.msra.mxu0 0.0
        %2194 = vmatprep.subr.mxu0 0.0
        %2195 = vmatpush1.msra.mxu0 0.0
        %2196 = vmatprep.subr.mxu0 0.0
        %2197 = vmatpush1.msra.mxu0 0.0
        %2198 = vmatprep.subr.mxu0 0.0
        %2199 = vmatpush1.msra.mxu0 0.0
        %2200 = vmatprep.subr.mxu0 0.0
        %2201 = vmatpush1.msra.mxu0 0.0
        %2202 = vmatprep.subr.mxu0 0.0
        %2203 = vmatpush1.msra.mxu0 0.0
        %2204 = vmatprep.subr.mxu0 0.0
        %2205 = vmatpush1.msra.mxu0 0.0
        %2206 = vmatprep.subr.mxu0 0.0
        %2207 = vmatpush1.msra.mxu0 0.0
        %2208 = vmatprep.subr.mxu0 0.0
        %2209 = vmatpush1.msra.mxu0 %v2084
        %2210 = vmatprep.subr.mxu0 0.0
        %2211 = vmatpush2.msra.mxu0 0.0
        %2212 = vmatprep.subr.mxu0 0.0
        %2213 = vmatpush2.msra.mxu0 0.0
        %2214 = vmatprep.subr.mxu0 0.0
        %2215 = vmatpush2.msra.mxu0 0.0
        %2216 = vmatprep.subr.mxu0 0.0
        %2217 = vmatpush2.msra.mxu0 0.0
        %2218 = vmatprep.subr.mxu0 0.0
        %2219 = vmatpush2.msra.mxu0 0.0
        %2220 = vmatprep.subr.mxu0 0.0
        %2221 = vmatpush2.msra.mxu0 0.0
        %2222 = vmatprep.subr.mxu0 0.0
        %2223 = vmatpush2.msra.mxu0 0.0
        %2224 = vmatprep.subr.mxu0 0.0
        %2225 = vmatpush2.msra.mxu0 0.0
        %2226 = vmatprep.subr.mxu0 0.0
        %2227 = vmatpush2.msra.mxu0 0.0
        %2228 = vmatprep.subr.mxu0 0.0
        %2229 = vmatpush2.msra.mxu0 0.0
        %2230 = vmatprep.subr.mxu0 0.0
        %2231 = vmatpush2.msra.mxu0 0.0
        %2232 = vmatprep.subr.mxu0 0.0
        %2233 = vmatpush2.msra.mxu0 0.0
        %2234 = vmatprep.subr.mxu0 0.0
        %2235 = vmatpush2.msra.mxu0 0.0
        %2236 = vmatprep.subr.mxu0 0.0
        %2237 = vmatpush2.msra.mxu0 0.0
        %2238 = vmatprep.subr.mxu0 0.0
        %2239 = vmatpush2.msra.mxu0 0.0
        %2240 = vmatprep.subr.mxu0 0.0
        %2241 = vmatpush2.msra.mxu0 0.0
        %2242 = vmatprep.mubr.f32.mxu0 0.0
        %2243 = vmatmul.mubr.f32.gmra.mxu0 %v2176
        %v2244 = vpop.f32.mrf.mxu0
        %v2245 = vadd.f32 0.0, %v2244
        %v2246 = vpop.f32.mrf.mxu0
        %2247 = vdwg.mxu0
        %v2248 = vld [vmem:[#allocation5] sm:$0xff]
        %s2249 = scalar_lea.vmem [#allocation12], 16
        %v2250 = vld [vmem:[%s2249] sm:$0xff]
        %v2252 = vsel %vm672, %v2245, 0
        %2254 = vmatprep.subr.mxu0 0.0
        %2255 = vmatpush1.msra.mxu0 0.0
        %2256 = vmatprep.subr.mxu0 0.0
        %2257 = vmatpush1.msra.mxu0 0.0
        %2258 = vmatprep.subr.mxu0 0.0
        %2259 = vmatpush1.msra.mxu0 0.0
        %2260 = vmatprep.subr.mxu0 0.0
        %2261 = vmatpush1.msra.mxu0 0.0
        %2262 = vmatprep.subr.mxu0 0.0
        %2263 = vmatpush1.msra.mxu0 0.0
        %2264 = vmatprep.subr.mxu0 0.0
        %2265 = vmatpush1.msra.mxu0 0.0
        %2266 = vmatprep.subr.mxu0 0.0
        %2267 = vmatpush1.msra.mxu0 0.0
        %2268 = vmatprep.subr.mxu0 0.0
        %2269 = vmatpush1.msra.mxu0 0.0
        %2270 = vmatprep.subr.mxu0 0.0
        %2271 = vmatpush1.msra.mxu0 0.0
        %2272 = vmatprep.subr.mxu0 0.0
        %2273 = vmatpush1.msra.mxu0 0.0
        %2274 = vmatprep.subr.mxu0 0.0
        %2275 = vmatpush1.msra.mxu0 0.0
        %2276 = vmatprep.subr.mxu0 0.0
        %2277 = vmatpush1.msra.mxu0 0.0
        %2278 = vmatprep.subr.mxu0 0.0
        %2279 = vmatpush1.msra.mxu0 0.0
        %2280 = vmatprep.subr.mxu0 0.0
        %2281 = vmatpush1.msra.mxu0 0.0
        %2282 = vmatprep.subr.mxu0 0.0
        %2283 = vmatpush1.msra.mxu0 0.0
        %2284 = vmatprep.subr.mxu0 0.0
        %2285 = vmatpush1.msra.mxu0 %v2250
        %2286 = vmatprep.subr.mxu0 0.0
        %2287 = vmatpush2.msra.mxu0 0.0
        %2288 = vmatprep.subr.mxu0 0.0
        %2289 = vmatpush2.msra.mxu0 0.0
        %2290 = vmatprep.subr.mxu0 0.0
        %2291 = vmatpush2.msra.mxu0 0.0
        %2292 = vmatprep.subr.mxu0 0.0
        %2293 = vmatpush2.msra.mxu0 0.0
        %2294 = vmatprep.subr.mxu0 0.0
        %2295 = vmatpush2.msra.mxu0 0.0
        %2296 = vmatprep.subr.mxu0 0.0
        %2297 = vmatpush2.msra.mxu0 0.0
        %2298 = vmatprep.subr.mxu0 0.0
        %2299 = vmatpush2.msra.mxu0 0.0
        %2300 = vmatprep.subr.mxu0 0.0
        %2301 = vmatpush2.msra.mxu0 0.0
        %2302 = vmatprep.subr.mxu0 0.0
        %2303 = vmatpush2.msra.mxu0 0.0
        %2304 = vmatprep.subr.mxu0 0.0
        %2305 = vmatpush2.msra.mxu0 0.0
        %2306 = vmatprep.subr.mxu0 0.0
        %2307 = vmatpush2.msra.mxu0 0.0
        %2308 = vmatprep.subr.mxu0 0.0
        %2309 = vmatpush2.msra.mxu0 0.0
        %2310 = vmatprep.subr.mxu0 0.0
        %2311 = vmatpush2.msra.mxu0 0.0
        %2312 = vmatprep.subr.mxu0 0.0
        %2313 = vmatpush2.msra.mxu0 0.0
        %2314 = vmatprep.subr.mxu0 0.0
        %2315 = vmatpush2.msra.mxu0 0.0
        %2316 = vmatprep.subr.mxu0 0.0
        %2317 = vmatpush2.msra.mxu0 0.0
        %2318 = vmatprep.mubr.f32.mxu0 0.0
        %2319 = vmatmul.mubr.f32.gmra.mxu0 %v2252
        %v2320 = vpop.f32.mrf.mxu0
        %v2321 = vadd.f32 0.0, %v2320
        %v2322 = vpop.f32.mrf.mxu0
        %2323 = vdwg.mxu0
        %v2324 = vadd.f32 %v2248, %v2321
        %2325 = vst.msk [vmem:[#allocation5] sm:$0xff] %vm1586, %v2324
        %v2326 = vld [vmem:[%s1573] sm:$0xff]
        %v2327 = vld [vmem:[%s1575] sm:$0xff]
        %v2328 = vld [vmem:[%s1577] sm:$0xff]
        %v2330 = vsel %vm672, %v2326, 0
        %v2333 = vsel %vm672, %v2327, 0
        %2335 = vmatprep.subr.mxu0 0.0
        %2336 = vmatpush1.xpose.msra.mxu0 0.0
        %2337 = vmatprep.subr.mxu0 0.0
        %2338 = vmatpush1.xpose.msra.mxu0 0.0
        %2339 = vmatprep.subr.mxu0 0.0
        %2340 = vmatpush1.xpose.msra.mxu0 0.0
        %2341 = vmatprep.subr.mxu0 0.0
        %2342 = vmatpush1.xpose.msra.mxu0 0.0
        %2343 = vmatprep.subr.mxu0 0.0
        %2344 = vmatpush1.xpose.msra.mxu0 0.0
        %2345 = vmatprep.subr.mxu0 0.0
        %2346 = vmatpush1.xpose.msra.mxu0 0.0
        %2347 = vmatprep.subr.mxu0 0.0
        %2348 = vmatpush1.xpose.msra.mxu0 0.0
        %2349 = vmatprep.subr.mxu0 0.0
        %2350 = vmatpush1.xpose.msra.mxu0 0.0
        %2351 = vmatprep.subr.mxu0 0.0
        %2352 = vmatpush1.xpose.msra.mxu0 0.0
        %2353 = vmatprep.subr.mxu0 0.0
        %2354 = vmatpush1.xpose.msra.mxu0 0.0
        %2355 = vmatprep.subr.mxu0 0.0
        %2356 = vmatpush1.xpose.msra.mxu0 0.0
        %2357 = vmatprep.subr.mxu0 0.0
        %2358 = vmatpush1.xpose.msra.mxu0 0.0
        %2359 = vmatprep.subr.mxu0 0.0
        %2360 = vmatpush1.xpose.msra.mxu0 0.0
        %2361 = vmatprep.subr.mxu0 0.0
        %2362 = vmatpush1.xpose.msra.mxu0 0.0
        %2363 = vmatprep.subr.mxu0 0.0
        %2364 = vmatpush1.xpose.msra.mxu0 0.0
        %2365 = vmatprep.subr.mxu0 0.0
        %2366 = vmatpush1.xpose.msra.mxu0 %v2333
        %2367 = vmatprep.subr.mxu0 0.0
        %2368 = vmatpush2.xpose.msra.mxu0 0.0
        %2369 = vmatprep.subr.mxu0 0.0
        %2370 = vmatpush2.xpose.msra.mxu0 0.0
        %2371 = vmatprep.subr.mxu0 0.0
        %2372 = vmatpush2.xpose.msra.mxu0 0.0
        %2373 = vmatprep.subr.mxu0 0.0
        %2374 = vmatpush2.xpose.msra.mxu0 0.0
        %2375 = vmatprep.subr.mxu0 0.0
        %2376 = vmatpush2.xpose.msra.mxu0 0.0
        %2377 = vmatprep.subr.mxu0 0.0
        %2378 = vmatpush2.xpose.msra.mxu0 0.0
        %2379 = vmatprep.subr.mxu0 0.0
        %2380 = vmatpush2.xpose.msra.mxu0 0.0
        %2381 = vmatprep.subr.mxu0 0.0
        %2382 = vmatpush2.xpose.msra.mxu0 0.0
        %2383 = vmatprep.subr.mxu0 0.0
        %2384 = vmatpush2.xpose.msra.mxu0 0.0
        %2385 = vmatprep.subr.mxu0 0.0
        %2386 = vmatpush2.xpose.msra.mxu0 0.0
        %2387 = vmatprep.subr.mxu0 0.0
        %2388 = vmatpush2.xpose.msra.mxu0 0.0
        %2389 = vmatprep.subr.mxu0 0.0
        %2390 = vmatpush2.xpose.msra.mxu0 0.0
        %2391 = vmatprep.subr.mxu0 0.0
        %2392 = vmatpush2.xpose.msra.mxu0 0.0
        %2393 = vmatprep.subr.mxu0 0.0
        %2394 = vmatpush2.xpose.msra.mxu0 0.0
        %2395 = vmatprep.subr.mxu0 0.0
        %2396 = vmatpush2.xpose.msra.mxu0 0.0
        %2397 = vmatprep.subr.mxu0 0.0
        %2398 = vmatpush2.xpose.msra.mxu0 0.0
        %2399 = vmatprep.mubr.f32.mxu0 0.0
        %2400 = vmatmul.mubr.f32.gmra.mxu0 %v2330
        %v2401 = vpop.f32.mrf.mxu0
        %v2402 = vadd.f32 %v1593, %v2401
        %v2403 = vpop.f32.mrf.mxu0
        %2404 = vdwg.mxu0
        %v2405 = vsel %vm672, %v2402, -inf
        %2406 = vmax.xlane.f32.xlu0 %v2405
        %v2407 = vpop.xlane.xlu0 %2406
        %v2408 = vsub.f32 %v2402, %v2407
        %v2409 = vmul.f32 %v2408, 1.442695
        %v2410 = vpow.pop %v2409
        %v2411 = vsel %vm672, %v2410, 0.0
        %2412 = vadd.xlane.f32.xlu0 %v2411
        %v2413 = vpop.xlane.xlu0 %2412
        %v2414 = vrcp.pop %v2413
        %v2415 = vmul.f32 %v2413, %v2414
        %v2416 = vsub.f32 2.0, %v2415
        %v2417 = vmul.f32 %v2414, %v2416
        %v2418 = vmul.f32 %v2410, %v2417
        %v2420 = vsel %vm672, %v2418, 0
        %2422 = vmatprep.subr.mxu0 0.0
        %2423 = vmatpush1.msra.mxu0 0.0
        %2424 = vmatprep.subr.mxu0 0.0
        %2425 = vmatpush1.msra.mxu0 0.0
        %2426 = vmatprep.subr.mxu0 0.0
        %2427 = vmatpush1.msra.mxu0 0.0
        %2428 = vmatprep.subr.mxu0 0.0
        %2429 = vmatpush1.msra.mxu0 0.0
        %2430 = vmatprep.subr.mxu0 0.0
        %2431 = vmatpush1.msra.mxu0 0.0
        %2432 = vmatprep.subr.mxu0 0.0
        %2433 = vmatpush1.msra.mxu0 0.0
        %2434 = vmatprep.subr.mxu0 0.0
        %2435 = vmatpush1.msra.mxu0 0.0
        %2436 = vmatprep.subr.mxu0 0.0
        %2437 = vmatpush1.msra.mxu0 0.0
        %2438 = vmatprep.subr.mxu0 0.0
        %2439 = vmatpush1.msra.mxu0 0.0
        %2440 = vmatprep.subr.mxu0 0.0
        %2441 = vmatpush1.msra.mxu0 0.0
        %2442 = vmatprep.subr.mxu0 0.0
        %2443 = vmatpush1.msra.mxu0 0.0
        %2444 = vmatprep.subr.mxu0 0.0
        %2445 = vmatpush1.msra.mxu0 0.0
        %2446 = vmatprep.subr.mxu0 0.0
        %2447 = vmatpush1.msra.mxu0 0.0
        %2448 = vmatprep.subr.mxu0 0.0
        %2449 = vmatpush1.msra.mxu0 0.0
        %2450 = vmatprep.subr.mxu0 0.0
        %2451 = vmatpush1.msra.mxu0 0.0
        %2452 = vmatprep.subr.mxu0 0.0
        %2453 = vmatpush1.msra.mxu0 %v2328
        %2454 = vmatprep.subr.mxu0 0.0
        %2455 = vmatpush2.msra.mxu0 0.0
        %2456 = vmatprep.subr.mxu0 0.0
        %2457 = vmatpush2.msra.mxu0 0.0
        %2458 = vmatprep.subr.mxu0 0.0
        %2459 = vmatpush2.msra.mxu0 0.0
        %2460 = vmatprep.subr.mxu0 0.0
        %2461 = vmatpush2.msra.mxu0 0.0
        %2462 = vmatprep.subr.mxu0 0.0
        %2463 = vmatpush2.msra.mxu0 0.0
        %2464 = vmatprep.subr.mxu0 0.0
        %2465 = vmatpush2.msra.mxu0 0.0
        %2466 = vmatprep.subr.mxu0 0.0
        %2467 = vmatpush2.msra.mxu0 0.0
        %2468 = vmatprep.subr.mxu0 0.0
        %2469 = vmatpush2.msra.mxu0 0.0
        %2470 = vmatprep.subr.mxu0 0.0
        %2471 = vmatpush2.msra.mxu0 0.0
        %2472 = vmatprep.subr.mxu0 0.0
        %2473 = vmatpush2.msra.mxu0 0.0
        %2474 = vmatprep.subr.mxu0 0.0
        %2475 = vmatpush2.msra.mxu0 0.0
        %2476 = vmatprep.subr.mxu0 0.0
        %2477 = vmatpush2.msra.mxu0 0.0
        %2478 = vmatprep.subr.mxu0 0.0
        %2479 = vmatpush2.msra.mxu0 0.0
        %2480 = vmatprep.subr.mxu0 0.0
        %2481 = vmatpush2.msra.mxu0 0.0
        %2482 = vmatprep.subr.mxu0 0.0
        %2483 = vmatpush2.msra.mxu0 0.0
        %2484 = vmatprep.subr.mxu0 0.0
        %2485 = vmatpush2.msra.mxu0 0.0
        %2486 = vmatprep.mubr.f32.mxu0 0.0
        %2487 = vmatmul.mubr.f32.gmra.mxu0 %v2420
        %v2488 = vpop.f32.mrf.mxu0
        %v2489 = vadd.f32 0.0, %v2488
        %v2490 = vpop.f32.mrf.mxu0
        %2491 = vdwg.mxu0
        %v2492 = vld [vmem:[#allocation5] sm:$0xff]
        %s2493 = scalar_lea.vmem [#allocation12], 24
        %v2494 = vld [vmem:[%s2493] sm:$0xff]
        %v2496 = vsel %vm672, %v2489, 0
        %2498 = vmatprep.subr.mxu0 0.0
        %2499 = vmatpush1.msra.mxu0 0.0
        %2500 = vmatprep.subr.mxu0 0.0
        %2501 = vmatpush1.msra.mxu0 0.0
        %2502 = vmatprep.subr.mxu0 0.0
        %2503 = vmatpush1.msra.mxu0 0.0
        %2504 = vmatprep.subr.mxu0 0.0
        %2505 = vmatpush1.msra.mxu0 0.0
        %2506 = vmatprep.subr.mxu0 0.0
        %2507 = vmatpush1.msra.mxu0 0.0
        %2508 = vmatprep.subr.mxu0 0.0
        %2509 = vmatpush1.msra.mxu0 0.0
        %2510 = vmatprep.subr.mxu0 0.0
        %2511 = vmatpush1.msra.mxu0 0.0
        %2512 = vmatprep.subr.mxu0 0.0
        %2513 = vmatpush1.msra.mxu0 0.0
        %2514 = vmatprep.subr.mxu0 0.0
        %2515 = vmatpush1.msra.mxu0 0.0
        %2516 = vmatprep.subr.mxu0 0.0
        %2517 = vmatpush1.msra.mxu0 0.0
        %2518 = vmatprep.subr.mxu0 0.0
        %2519 = vmatpush1.msra.mxu0 0.0
        %2520 = vmatprep.subr.mxu0 0.0
        %2521 = vmatpush1.msra.mxu0 0.0
        %2522 = vmatprep.subr.mxu0 0.0
        %2523 = vmatpush1.msra.mxu0 0.0
        %2524 = vmatprep.subr.mxu0 0.0
        %2525 = vmatpush1.msra.mxu0 0.0
        %2526 = vmatprep.subr.mxu0 0.0
        %2527 = vmatpush1.msra.mxu0 0.0
        %2528 = vmatprep.subr.mxu0 0.0
        %2529 = vmatpush1.msra.mxu0 %v2494
        %2530 = vmatprep.subr.mxu0 0.0
        %2531 = vmatpush2.msra.mxu0 0.0
        %2532 = vmatprep.subr.mxu0 0.0
        %2533 = vmatpush2.msra.mxu0 0.0
        %2534 = vmatprep.subr.mxu0 0.0
        %2535 = vmatpush2.msra.mxu0 0.0
        %2536 = vmatprep.subr.mxu0 0.0
        %2537 = vmatpush2.msra.mxu0 0.0
        %2538 = vmatprep.subr.mxu0 0.0
        %2539 = vmatpush2.msra.mxu0 0.0
        %2540 = vmatprep.subr.mxu0 0.0
        %2541 = vmatpush2.msra.mxu0 0.0
        %2542 = vmatprep.subr.mxu0 0.0
        %2543 = vmatpush2.msra.mxu0 0.0
        %2544 = vmatprep.subr.mxu0 0.0
        %2545 = vmatpush2.msra.mxu0 0.0
        %2546 = vmatprep.subr.mxu0 0.0
        %2547 = vmatpush2.msra.mxu0 0.0
        %2548 = vmatprep.subr.mxu0 0.0
        %2549 = vmatpush2.msra.mxu0 0.0
        %2550 = vmatprep.subr.mxu0 0.0
        %2551 = vmatpush2.msra.mxu0 0.0
        %2552 = vmatprep.subr.mxu0 0.0
        %2553 = vmatpush2.msra.mxu0 0.0
        %2554 = vmatprep.subr.mxu0 0.0
        %2555 = vmatpush2.msra.mxu0 0.0
        %2556 = vmatprep.subr.mxu0 0.0
        %2557 = vmatpush2.msra.mxu0 0.0
        %2558 = vmatprep.subr.mxu0 0.0
        %2559 = vmatpush2.msra.mxu0 0.0
        %2560 = vmatprep.subr.mxu0 0.0
        %2561 = vmatpush2.msra.mxu0 0.0
        %2562 = vmatprep.mubr.f32.mxu0 0.0
        %2563 = vmatmul.mubr.f32.gmra.mxu0 %v2496
        %v2564 = vpop.f32.mrf.mxu0
        %v2565 = vadd.f32 0.0, %v2564
        %v2566 = vpop.f32.mrf.mxu0
        %2567 = vdwg.mxu0
        %v2568 = vadd.f32 %v2492, %v2565
        %2569 = vst.msk [vmem:[#allocation5] sm:$0xff] %vm1586, %v2568
        %v2570 = vld [vmem:[#allocation5] sm:$0xff]
        %v2571 = vadd.f32 %v2570, %v666
        %v2572 = vld [vmem:[%s13] sm:$0x1]
        %v2573 = vld [vmem:[%s14] sm:$0x1]
        %v2574 = vsel %vm1586, %v2571, 0.0
        %2575 = vadd.xlane.f32.xlu0 %v2574
        %v2576 = vpop.xlane.xlu0 %2575
        %v2577 = vrcp.pop 32.0
        %v2578 = vmul.f32 %v2576, %v2577
        %v2579 = vsub.f32 %v2571, %v2578
        %v2580 = vmul.f32 %v2579, %v2579
        %v2581 = vsel %vm1586, %v2580, 0.0
        %2582 = vadd.xlane.f32.xlu0 %v2581
        %v2583 = vpop.xlane.xlu0 %2582
        %v2584 = vmul.f32 %v2583, %v2577
        %v2585 = vadd.f32 %v2584, 1e-05
        %v2586 = vrsqrt.pop %v2585
        %v2587 = vmul.f32 %v2579, %v2586
        %v2589 = vlaneseq
        %v2590 = vshrl.u32 %v2589, 7
        %v2591 = vsub.s32 0, %v2590
        %v2592 = vrot.slane %v2572, %v2591
        %v2594 = vmul.f32 %v2587, %v2592
        %v2596 = vlaneseq
        %v2597 = vshrl.u32 %v2596, 7
        %v2598 = vsub.s32 0, %v2597
        %v2599 = vrot.slane %v2573, %v2598
        %v2601 = vadd.f32 %v2594, %v2599
        %v2602 = vld [vmem:[#allocation14] sm:$0xff]
        %v2603 = vld [vmem:[#allocation14 + $0x8] sm:$0xff]
        %v2604 = vld [vmem:[#allocation14 + $0x10] sm:$0xff]
        %v2605 = vld [vmem:[#allocation14 + $0x18] sm:$0xff]
        %v2606 = vld [vmem:[%s10] sm:$0x1]
        %v2608 = vlaneseq
        %v2609 = vshrl.u32 %v2608, 7
        %v2610 = vsub.s32 0, %v2609
        %v2611 = vrot.slane %v2606, %v2610
        %v2614 = vsel %vm1586, %v2601, 0
        %2616 = vmatprep.subr.mxu0 0.0
        %2617 = vmatpush1.msra.mxu0 0.0
        %2618 = vmatprep.subr.mxu0 0.0
        %2619 = vmatpush1.msra.mxu0 0.0
        %2620 = vmatprep.subr.mxu0 0.0
        %2621 = vmatpush1.msra.mxu0 0.0
        %2622 = vmatprep.subr.mxu0 0.0
        %2623 = vmatpush1.msra.mxu0 0.0
        %2624 = vmatprep.subr.mxu0 0.0
        %2625 = vmatpush1.msra.mxu0 0.0
        %2626 = vmatprep.subr.mxu0 0.0
        %2627 = vmatpush1.msra.mxu0 0.0
        %2628 = vmatprep.subr.mxu0 0.0
        %2629 = vmatpush1.msra.mxu0 0.0
        %2630 = vmatprep.subr.mxu0 0.0
        %2631 = vmatpush1.msra.mxu0 0.0
        %2632 = vmatprep.subr.mxu0 0.0
        %2633 = vmatpush1.msra.mxu0 0.0
        %2634 = vmatprep.subr.mxu0 0.0
        %2635 = vmatpush1.msra.mxu0 0.0
        %2636 = vmatprep.subr.mxu0 0.0
        %2637 = vmatpush1.msra.mxu0 0.0
        %2638 = vmatprep.subr.mxu0 0.0
        %2639 = vmatpush1.msra.mxu0 0.0
        %2640 = vmatprep.subr.mxu0 0.0
        %2641 = vmatpush1.msra.mxu0 %v2605
        %2642 = vmatprep.subr.mxu0 0.0
        %2643 = vmatpush1.msra.mxu0 %v2604
        %2644 = vmatprep.subr.mxu0 0.0
        %2645 = vmatpush1.msra.mxu0 %v2603
        %2646 = vmatprep.subr.mxu0 0.0
        %2647 = vmatpush1.msra.mxu0 %v2602
        %2648 = vmatprep.subr.mxu0 0.0
        %2649 = vmatpush2.msra.mxu0 0.0
        %2650 = vmatprep.subr.mxu0 0.0
        %2651 = vmatpush2.msra.mxu0 0.0
        %2652 = vmatprep.subr.mxu0 0.0
        %2653 = vmatpush2.msra.mxu0 0.0
        %2654 = vmatprep.subr.mxu0 0.0
        %2655 = vmatpush2.msra.mxu0 0.0
        %2656 = vmatprep.subr.mxu0 0.0
        %2657 = vmatpush2.msra.mxu0 0.0
        %2658 = vmatprep.subr.mxu0 0.0
        %2659 = vmatpush2.msra.mxu0 0.0
        %2660 = vmatprep.subr.mxu0 0.0
        %2661 = vmatpush2.msra.mxu0 0.0
        %2662 = vmatprep.subr.mxu0 0.0
        %2663 = vmatpush2.msra.mxu0 0.0
        %2664 = vmatprep.subr.mxu0 0.0
        %2665 = vmatpush2.msra.mxu0 0.0
        %2666 = vmatprep.subr.mxu0 0.0
        %2667 = vmatpush2.msra.mxu0 0.0
        %2668 = vmatprep.subr.mxu0 0.0
        %2669 = vmatpush2.msra.mxu0 0.0
        %2670 = vmatprep.subr.mxu0 0.0
        %2671 = vmatpush2.msra.mxu0 0.0
        %2672 = vmatprep.subr.mxu0 0.0
        %2673 = vmatpush2.msra.mxu0 0.0
        %2674 = vmatprep.subr.mxu0 0.0
        %2675 = vmatpush2.msra.mxu0 0.0
        %2676 = vmatprep.subr.mxu0 0.0
        %2677 = vmatpush2.msra.mxu0 0.0
        %2678 = vmatprep.subr.mxu0 0.0
        %2679 = vmatpush2.msra.mxu0 0.0
        %2680 = vmatprep.mubr.f32.mxu0 0.0
        %2681 = vmatmul.mubr.f32.gmra.mxu0 %v2614
        %v2682 = vpop.f32.mrf.mxu0
        %v2683 = vadd.f32 %v2611, %v2682
        %v2684 = vpop.f32.mrf.mxu0
        %2685 = vdwg.mxu0
        %v2686 = vmax.f32 %v2683, 0.0
        %v2687 = vld [vmem:[%s11] sm:$0xff]
        %v2688 = vld [vmem:[%s11 + $0x8] sm:$0xff]
        %v2689 = vld [vmem:[%s11 + $0x10] sm:$0xff]
        %v2690 = vld [vmem:[%s11 + $0x18] sm:$0xff]
        %v2691 = vld [vmem:[%s11 + $0x20] sm:$0xff]
        %v2692 = vld [vmem:[%s11 + $0x28] sm:$0xff]
        %v2693 = vld [vmem:[%s11 + $0x30] sm:$0xff]
        %v2694 = vld [vmem:[%s11 + $0x38] sm:$0xff]
        %v2695 = vld [vmem:[%s12] sm:$0x1]
        %v2697 = vlaneseq
        %v2698 = vshrl.u32 %v2697, 7
        %v2699 = vsub.s32 0, %v2698
        %v2700 = vrot.slane %v2695, %v2699
        %vm2702 = vcmask 523264
        %v2704 = vsel %vm2702, %v2686, 0
        %2706 = vmatprep.subr.mxu0 0.0
        %2707 = vmatpush1.msra.mxu0 0.0
        %2708 = vmatprep.subr.mxu0 0.0
        %2709 = vmatpush1.msra.mxu0 0.0
        %2710 = vmatprep.subr.mxu0 0.0
        %2711 = vmatpush1.msra.mxu0 0.0
        %2712 = vmatprep.subr.mxu0 0.0
        %2713 = vmatpush1.msra.mxu0 0.0
        %2714 = vmatprep.subr.mxu0 0.0
        %2715 = vmatpush1.msra.mxu0 0.0
        %2716 = vmatprep.subr.mxu0 0.0
        %2717 = vmatpush1.msra.mxu0 0.0
        %2718 = vmatprep.subr.mxu0 0.0
        %2719 = vmatpush1.msra.mxu0 0.0
        %2720 = vmatprep.subr.mxu0 0.0
        %2721 = vmatpush1.msra.mxu0 0.0
        %2722 = vmatprep.subr.mxu0 0.0
        %2723 = vmatpush1.msra.mxu0 %v2694
        %2724 = vmatprep.subr.mxu0 0.0
        %2725 = vmatpush1.msra.mxu0 %v2693
        %2726 = vmatprep.subr.mxu0 0.0
        %2727 = vmatpush1.msra.mxu0 %v2692
        %2728 = vmatprep.subr.mxu0 0.0
        %2729 = vmatpush1.msra.mxu0 %v2691
        %2730 = vmatprep.subr.mxu0 0.0
        %2731 = vmatpush1.msra.mxu0 %v2690
        %2732 = vmatprep.subr.mxu0 0.0
        %2733 = vmatpush1.msra.mxu0 %v2689
        %2734 = vmatprep.subr.mxu0 0.0
        %2735 = vmatpush1.msra.mxu0 %v2688
        %2736 = vmatprep.subr.mxu0 0.0
        %2737 = vmatpush1.msra.mxu0 %v2687
        %2738 = vmatprep.subr.mxu0 0.0
        %2739 = vmatpush2.msra.mxu0 0.0
        %2740 = vmatprep.subr.mxu0 0.0
        %2741 = vmatpush2.msra.mxu0 0.0
        %2742 = vmatprep.subr.mxu0 0.0
        %2743 = vmatpush2.msra.mxu0 0.0
        %2744 = vmatprep.subr.mxu0 0.0
        %2745 = vmatpush2.msra.mxu0 0.0
        %2746 = vmatprep.subr.mxu0 0.0
        %2747 = vmatpush2.msra.mxu0 0.0
        %2748 = vmatprep.subr.mxu0 0.0
        %2749 = vmatpush2.msra.mxu0 0.0
        %2750 = vmatprep.subr.mxu0 0.0
        %2751 = vmatpush2.msra.mxu0 0.0
        %2752 = vmatprep.subr.mxu0 0.0
        %2753 = vmatpush2.msra.mxu0 0.0
        %2754 = vmatprep.subr.mxu0 0.0
        %2755 = vmatpush2.msra.mxu0 0.0
        %2756 = vmatprep.subr.mxu0 0.0
        %2757 = vmatpush2.msra.mxu0 0.0
        %2758 = vmatprep.subr.mxu0 0.0
        %2759 = vmatpush2.msra.mxu0 0.0
        %2760 = vmatprep.subr.mxu0 0.0
        %2761 = vmatpush2.msra.mxu0 0.0
        %2762 = vmatprep.subr.mxu0 0.0
        %2763 = vmatpush2.msra.mxu0 0.0
        %2764 = vmatprep.subr.mxu0 0.0
        %2765 = vmatpush2.msra.mxu0 0.0
        %2766 = vmatprep.subr.mxu0 0.0
        %2767 = vmatpush2.msra.mxu0 0.0
        %2768 = vmatprep.subr.mxu0 0.0
        %2769 = vmatpush2.msra.mxu0 0.0
        %2770 = vmatprep.mubr.f32.mxu0 0.0
        %2771 = vmatmul.mubr.f32.gmra.mxu0 %v2704
        %v2772 = vpop.f32.mrf.mxu0
        %v2773 = vadd.f32 %v2700, %v2772
        %v2774 = vpop.f32.mrf.mxu0
        %2775 = vdwg.mxu0
        %v2776 = vadd.f32 %v2773, %v2601
        %v2777 = vld [vmem:[%s15] sm:$0x1]
        %v2778 = vld [vmem:[%s16] sm:$0x1]
        %v2779 = vsel %vm1586, %v2776, 0.0
        %2780 = vadd.xlane.f32.xlu0 %v2779
        %v2781 = vpop.xlane.xlu0 %2780
        %v2782 = vmul.f32 %v2781, %v2577
        %v2783 = vsub.f32 %v2776, %v2782
        %v2784 = vmul.f32 %v2783, %v2783
        %v2785 = vsel %vm1586, %v2784, 0.0
        %2786 = vadd.xlane.f32.xlu0 %v2785
        %v2787 = vpop.xlane.xlu0 %2786
        %v2788 = vmul.f32 %v2787, %v2577
        %v2789 = vadd.f32 %v2788, 1e-05
        %v2790 = vrsqrt.pop %v2789
        %v2791 = vmul.f32 %v2783, %v2790
        %v2793 = vlaneseq
        %v2794 = vshrl.u32 %v2793, 7
        %v2795 = vsub.s32 0, %v2794
        %v2796 = vrot.slane %v2777, %v2795
        %v2798 = vmul.f32 %v2791, %v2796
        %v2800 = vlaneseq
        %v2801 = vshrl.u32 %v2800, 7
        %v2802 = vsub.s32 0, %v2801
        %v2803 = vrot.slane %v2778, %v2802
        %v2805 = vadd.f32 %v2798, %v2803
        %2806 = vst.msk [vmem:[%s653] sm:$0xff] %vm1586, %v2805
        %s2807 = sand.u32 %s421, 1
        %s2808 = scalar_lea.sflag [#allocation8], %s2807
        %s2809 = sand.u32 %s421, 1
        %s2810 = smul.addr %s2809, 8
        %s2811 = scalar_lea.vmem [#allocation15], %s2810
        // Predicated region
        $region109: #{tpu_custom_call.1} parent=87 // pred_check
          %p2812 = pneg %p431
        $region110: #{tpu_custom_call.1} parent=87 // pred_check_branch
          %2814 = sbr.rel (%p2812) target = $region112
        $region111: #{tpu_custom_call.1} parent=87 // pred_region
          %s2816 = ssub.s32 128, 128
          %2817 = vsyncadd %s2808, %s2816
          %s2818 = smul.addr %s36, 128
          %s2819 = scalar_lea.hbm %s17, %s2818
          %s2821 = sshll.u32 %s2811, 4
          %s2822 = int_to_ptr.vmem [resolvable:$true] %s2821
          %2824 = dma.vmem_to_hbm [thread:$0]  %s2822, 128, %s2819, %s2808
        $region112: #{tpu_custom_call.1} parent=87 // pred_fallthru
          _
      $region88: #{tpu_custom_call.1} parent=5 // pred_fallthru
        _
      %p2825 = scmp.le.s32.totalorder 2, %s31
      // Predicated region
      $region113: #{tpu_custom_call.1} parent=5 // pred_check
        %p2826 = pneg %p2825
      $region114: #{tpu_custom_call.1} parent=5 // pred_check_branch
        %2828 = sbr.rel (%p2826) target = $region116
      $region115: #{tpu_custom_call.1} parent=5 // pred_region
        %s2829 = ssub.s32 %s31, 2
        // Predicated region
        $region117: #{tpu_custom_call.1} parent=115 // pred_check
          %p2830 = pneg %p437
        $region118: #{tpu_custom_call.1} parent=115 // pred_check_branch
          %2832 = sbr.rel (%p2830) target = $region120
        $region119: #{tpu_custom_call.1} parent=115 // pred_region
          %s2833 = sand.u32 %s422, 1
          %s2834 = scalar_lea.sflag [#allocation8], %s2833
          %s2835 = sand.u32 %s422, 1
          %s2836 = smul.addr %s2835, 8
          %s2837 = scalar_lea.vmem [#allocation15], %s2836
          %2838 = dma.done %s2834, 128
        $region120: #{tpu_custom_call.1} parent=115 // pred_fallthru
          _
      $region116: #{tpu_custom_call.1} parent=5 // pred_fallthru
        _
    $region6: #{tpu_custom_call.1} parent=1 // loop_footer
      %s35 = sadd.s32 1, %s31
    $region7: #{tpu_custom_call.1} parent=1 // loop_footer_branch
      %30 = sbr.rel target = $region3
    $region8: #{tpu_custom_call.1} parent=1 // loop_exit
      _
    %2839 = vsyncpa [#allocation7], 1
    %s2840 = scalar_lea.sflag [#allocation7], 1
    %2841 = vsyncpa %s2840, 1
    %2842 = vsyncpa [#allocation10], 1
    %2843 = vsyncpa [#allocation13], 1
    %2844 = vsyncpa [#allocation8], 1
    %s2845 = scalar_lea.sflag [#allocation8], 1
    %2846 = vsyncpa %s2845, 1

</llo_original>
